<compile_context>
chip_gen: v5e
topology: v5e:2x2
jax: 0.10.0
libtpu: 0.0.40
codegen_flags: <defaults>
</compile_context>

<pallas_src>
import functools

import jax
import jax.numpy as jnp
from jax import lax
from jax.experimental import pallas as pl
from jax.experimental.pallas import tpu as pltpu

CIN = 896
CB = 128


# ---------------------------------------------------------------------------
# Pallas kernel: full Block17_B forward for a block of `NB` images.
# ---------------------------------------------------------------------------
def block17_kernel(x_ref,
                   w0_ref, w1a_ref, w1b_ref, w1c_ref,   # BN-folded conv weights (bf16)
                   w2a_ref, w2b_ref,                    # final 1x1 conv, split + scale-folded (bf16)
                   bias_ref, b2_ref,                    # packed BN biases (4,128) / scaled conv2d bias (1,896)
                   o_ref,
                   padw_ref, padh_ref, col_ref,         # VMEM scratch
                   *, H, W, NB):
    M = NB * H * W

    # Activations for the MXU in bf16 (accumulation stays f32).
    x_bf = x_ref[...].reshape(M, CIN).astype(jnp.bfloat16)

    # ---- branch0: 1x1 conv (BN scale folded) + bias + ReLU -----------------
    y0 = jnp.dot(x_bf, w0_ref[...], preferred_element_type=jnp.float32)
    y0 = jnp.maximum(y0 + bias_ref[0:1, :], 0.0)                     # (M,128)

    # ---- branch1.0: 1x1 conv + bias + ReLU ---------------------------------
    y1 = jnp.dot(x_bf, w1a_ref[...], preferred_element_type=jnp.float32)
    y1 = jnp.maximum(y1 + bias_ref[1:2, :], 0.0)
    y1_bf = y1.astype(jnp.bfloat16).reshape(NB, H, W, CB)

    # ---- branch1.1: 1x7 conv along W (pad 3) as ONE im2col matmul ----------
    padw_ref[...] = jnp.zeros_like(padw_ref)
    padw_ref[:, :, 3:3 + W, :] = y1_bf
    for kw in range(7):
        col_ref[:, kw * CB:(kw + 1) * CB] = (
            padw_ref[:, :, kw:kw + W, :].reshape(M, CB))
    y1 = jnp.dot(col_ref[...], w1b_ref[...], preferred_element_type=jnp.float32)
    y1 = jnp.maximum(y1 + bias_ref[2:3, :], 0.0)
    y1_bf = y1.astype(jnp.bfloat16).reshape(NB, H, W, CB)

    # ---- branch1.2: 7x1 conv along H (pad 3) as ONE im2col matmul ----------
    padh_ref[...] = jnp.zeros_like(padh_ref)
    padh_ref[:, 3:3 + H, :, :] = y1_bf
    for kh in range(7):
        col_ref[:, kh * CB:(kh + 1) * CB] = (
            padh_ref[:, kh:kh + H, :, :].reshape(M, CB))
    y1 = jnp.dot(col_ref[...], w1c_ref[...], preferred_element_type=jnp.float32)
    y1 = jnp.maximum(y1 + bias_ref[3:4, :], 0.0)                     # (M,128)

    # ---- final 1x1 conv (split halves, no concat) + residual + ReLU --------
    out = jnp.dot(y0.astype(jnp.bfloat16), w2a_ref[...],
                  preferred_element_type=jnp.float32)
    out = out + jnp.dot(y1.astype(jnp.bfloat16), w2b_ref[...],
                        preferred_element_type=jnp.float32)
    out = out + b2_ref[...]
    # Re-read x for the residual instead of holding the f32 slab live.
    xres = x_ref[...].reshape(M, CIN)
    o_ref[...] = jnp.maximum(out + xres, 0.0).reshape(NB, H, W, CIN)


# ---------------------------------------------------------------------------
# Wrapper: parameter folding + pallas_call.
# ---------------------------------------------------------------------------
def fold_params(p, scale):
    """Fold BN scales into conv weights, fold `scale` into conv2d, pack biases,
    cast MXU operands to bf16. Done once, outside the kernel."""
    fp = {}
    fp["w0"] = (p["w0"] * p["s0"]).astype(jnp.bfloat16)               # (896,128)
    fp["w1a"] = (p["w1a"] * p["s1a"]).astype(jnp.bfloat16)            # (896,128)
    fp["w1b"] = (p["w1b"] * p["s1b"]).reshape(7 * CB, CB).astype(jnp.bfloat16)
    fp["w1c"] = (p["w1c"] * p["s1c"]).reshape(7 * CB, CB).astype(jnp.bfloat16)
    w2s = p["w2"] * scale                                             # (256,896)
    fp["w2a"] = w2s[:CB].astype(jnp.bfloat16)                         # (128,896)
    fp["w2b"] = w2s[CB:].astype(jnp.bfloat16)                         # (128,896)
    fp["b2"] = (p["b2"] * scale).astype(jnp.float32)                  # (1,896)
    fp["bias"] = jnp.concatenate(
        [p["c0"], p["c1a"], p["c1b"], p["c1c"]], axis=0).astype(jnp.float32)  # (4,128)
    return fp


def _pick_batch_block(N, H, W, target_rows=512):
    nb = min(N, max(1, target_rows // (H * W)))
    while N % nb:
        nb -= 1
    return nb


def block17_forward(x_nhwc, fp, *, nb=None):
    N, H, W, C = x_nhwc.shape
    assert C == CIN
    if nb is None:
        nb = _pick_batch_block(N, H, W)
    assert N % nb == 0
    M = nb * H * W

    kernel = functools.partial(block17_kernel, H=H, W=W, NB=nb)

    def wspec(shp):
        return pl.BlockSpec(shp, lambda n: (0,) * len(shp))

    return pl.pallas_call(
        kernel,
        out_shape=jax.ShapeDtypeStruct((N, H, W, CIN), jnp.float32),
        grid_spec=pltpu.PrefetchScalarGridSpec(
            num_scalar_prefetch=0,
            grid=(N // nb,),
            in_specs=[
                pl.BlockSpec((nb, H, W, CIN), lambda n: (n, 0, 0, 0)),  # x
                wspec((CIN, CB)),        # w0
                wspec((CIN, CB)),        # w1a
                wspec((7 * CB, CB)),     # w1b (im2col-flattened)
                wspec((7 * CB, CB)),     # w1c (im2col-flattened)
                wspec((CB, CIN)),        # w2a
                wspec((CB, CIN)),        # w2b
                wspec((4, CB)),          # packed BN biases
                wspec((1, CIN)),         # conv2d bias * scale
            ],
            out_specs=pl.BlockSpec((nb, H, W, CIN), lambda n: (n, 0, 0, 0)),
            scratch_shapes=[
                pltpu.VMEM((nb, H, W + 8, CB), jnp.bfloat16),   # W-padded y1
                pltpu.VMEM((nb, H + 8, W, CB), jnp.bfloat16),   # H-padded y1
                pltpu.VMEM((M, 7 * CB), jnp.bfloat16),          # im2col slab
            ],
        ),
        compiler_params=pltpu.CompilerParams(
            dimension_semantics=("parallel",)),
    )(x_nhwc,
      fp["w0"], fp["w1a"], fp["w1b"], fp["w1c"],
      fp["w2a"], fp["w2b"], fp["bias"], fp["b2"])


# ---------------------------------------------------------------------------
# Pure-JAX f32 reference (uses lax.conv for the 1x7/7x1 convs).
# ---------------------------------------------------------------------------
def ref_forward(x_nhwc, p, scale):
    def bn_relu(y, s, c):
        return jnp.maximum(y * s + c, 0.0)

    y0 = bn_relu(jnp.einsum("nhwc,cd->nhwd", x_nhwc, p["w0"]), p["s0"], p["c0"])
    y1 = bn_relu(jnp.einsum("nhwc,cd->nhwd", x_nhwc, p["w1a"]), p["s1a"], p["c1a"])
    y1 = bn_relu(
        lax.conv_general_dilated(
            y1, p["w1b"][None],                      # (1,7,Cin,Cout) HWIO
            window_strides=(1, 1), padding=((0, 0), (3, 3)),
            dimension_numbers=("NHWC", "HWIO", "NHWC")),
        p["s1b"], p["c1b"])
    y1 = bn_relu(
        lax.conv_general_dilated(
            y1, p["w1c"][:, None],                   # (7,1,Cin,Cout) HWIO
            window_strides=(1, 1), padding=((3, 3), (0, 0)),
            dimension_numbers=("NHWC", "HWIO", "NHWC")),
        p["s1c"], p["c1c"])
    cat = jnp.concatenate([y0, y1], axis=-1)
    out = jnp.einsum("nhwc,cd->nhwd", cat, p["w2"]) + p["b2"]
    return jnp.maximum(out * scale + x_nhwc, 0.0)


# ---------------------------------------------------------------------------
# Deterministic parameter construction (synthetic, matches module shapes).
# ---------------------------------------------------------------------------
def make_bn(key, c, eps=1e-3):
    k1, k2, k3, k4 = jax.random.split(key, 4)
    gamma = jax.random.uniform(k1, (c,), minval=0.5, maxval=1.5)
    beta = jax.random.normal(k2, (c,)) * 0.1
    mean = jax.random.normal(k3, (c,)) * 0.1
    var = jax.random.uniform(k4, (c,), minval=0.5, maxval=1.5)
    s = gamma / jnp.sqrt(var + eps)
    b = beta - mean * s
    return (s.reshape(1, c).astype(jnp.float32),
            b.reshape(1, c).astype(jnp.float32))


def make_params(key):
    ks = jax.random.split(key, 12)
    p = {}
    # branch0: Conv2d(896,128,1) -> (cin, cout)
    p["w0"] = (jax.random.normal(ks[0], (896, 128)) * 0.05).astype(jnp.float32)
    p["s0"], p["c0"] = make_bn(ks[1], 128)
    # branch1.0: Conv2d(896,128,1)
    p["w1a"] = (jax.random.normal(ks[2], (896, 128)) * 0.05).astype(jnp.float32)
    p["s1a"], p["c1a"] = make_bn(ks[3], 128)
    # branch1.1: Conv2d(128,128,(1,7),pad=(0,3)) -> (7, cin, cout)
    p["w1b"] = (jax.random.normal(ks[4], (7, 128, 128)) * 0.05).astype(jnp.float32)
    p["s1b"], p["c1b"] = make_bn(ks[5], 128)
    # branch1.2: Conv2d(128,128,(7,1),pad=(3,0)) -> (7, cin, cout)
    p["w1c"] = (jax.random.normal(ks[6], (7, 128, 128)) * 0.05).astype(jnp.float32)
    p["s1c"], p["c1c"] = make_bn(ks[7], 128)
    # conv2d: Conv2d(256,896,1) with bias -> (cin, cout) + (1, cout)
    p["w2"] = (jax.random.normal(ks[8], (256, 896)) * 0.05).astype(jnp.float32)
    p["b2"] = (jax.random.normal(ks[9], (1, 896)) * 0.05).astype(jnp.float32)
    return p


if __name__ == "__main__":
    key = jax.random.PRNGKey(0)
    kx, kp = jax.random.split(key)

    # PyTorch-style NCHW input: [N=2, C=896, H=8, W=8] (channels fixed by module)
    N, C, H, W = 2, 896, 8, 8
    x_nchw = jax.random.normal(kx, (N, C, H, W), dtype=jnp.float32)
    x_nhwc = jnp.transpose(x_nchw, (0, 2, 3, 1))

    params = make_params(kp)
    scale = 0.17
    folded = fold_params(params, scale)

    out = block17_forward(x_nhwc, folded)
    out = jax.block_until_ready(out)

    ref = jax.block_until_ready(ref_forward(x_nhwc, params, scale))
    assert out.shape == (N, H, W, C)
    # bf16 MXU path: tolerance loosened vs the pure-f32 reference.
    assert jnp.allclose(out, ref, atol=2e-2, rtol=2e-2), (
        float(jnp.max(jnp.abs(out - ref))))

    print("KERNEL_OK")
</pallas_src>

<mosaic_0001>
module attributes {stable_mosaic.version = 11 : i64} {
  func.func @block17_kernel(%arg0: i32, %arg1: memref<2x8x8x896xf32, #tpu.memory_space<vmem>>, %arg2: memref<896x128xbf16, #tpu.memory_space<vmem>>, %arg3: memref<896x128xbf16, #tpu.memory_space<vmem>>, %arg4: memref<896x128xbf16, #tpu.memory_space<vmem>>, %arg5: memref<896x128xbf16, #tpu.memory_space<vmem>>, %arg6: memref<128x896xbf16, #tpu.memory_space<vmem>>, %arg7: memref<128x896xbf16, #tpu.memory_space<vmem>>, %arg8: memref<4x128xf32, #tpu.memory_space<vmem>>, %arg9: memref<1x896xf32, #tpu.memory_space<vmem>>, %arg10: memref<2x8x8x896xf32, #tpu.memory_space<vmem>>, %arg11: memref<2x8x16x128xbf16, #tpu.memory_space<vmem>>, %arg12: memref<2x16x8x128xbf16, #tpu.memory_space<vmem>>, %arg13: memref<128x896xbf16, #tpu.memory_space<vmem>>) attributes {dimension_semantics = [#tpu.dimension_semantics<parallel>], iteration_bounds = array<i64: 1>, scalar_prefetch = 0 : i64, scratch_operands = 3 : i64, tpu.core_type = #tpu.core_type<tc>, window_params = [{transform_indices = @transform_0, window_bounds = array<i64: 2, 8, 8, 896>}, {pipeline_mode = #tpu.pipeline_mode<synchronous>, transform_indices = @transform_1, window_bounds = array<i64: 896, 128>}, {pipeline_mode = #tpu.pipeline_mode<synchronous>, transform_indices = @transform_2, window_bounds = array<i64: 896, 128>}, {pipeline_mode = #tpu.pipeline_mode<synchronous>, transform_indices = @transform_3, window_bounds = array<i64: 896, 128>}, {pipeline_mode = #tpu.pipeline_mode<synchronous>, transform_indices = @transform_4, window_bounds = array<i64: 896, 128>}, {pipeline_mode = #tpu.pipeline_mode<synchronous>, transform_indices = @transform_5, window_bounds = array<i64: 128, 896>}, {pipeline_mode = #tpu.pipeline_mode<synchronous>, transform_indices = @transform_6, window_bounds = array<i64: 128, 896>}, {pipeline_mode = #tpu.pipeline_mode<synchronous>, transform_indices = @transform_7, window_bounds = array<i64: 4, 128>}, {pipeline_mode = #tpu.pipeline_mode<synchronous>, transform_indices = @transform_8, window_bounds = array<i64: 1, 896>}, {transform_indices = @transform_9, window_bounds = array<i64: 2, 8, 8, 896>}]} {
    %c0 = arith.constant 0 : index
    %c0_0 = arith.constant 0 : index
    %c0_1 = arith.constant 0 : index
    %c0_2 = arith.constant 0 : index
    %0 = vector.load %arg1[%c0, %c0_0, %c0_1, %c0_2] : memref<2x8x8x896xf32, #tpu.memory_space<vmem>>, vector<2x8x8x896xf32>
    %1 = vector.shape_cast %0 : vector<2x8x8x896xf32> to vector<128x896xf32>
    %2 = arith.truncf %1 : vector<128x896xf32> to vector<128x896xbf16>
    %c0_3 = arith.constant 0 : index
    %c0_4 = arith.constant 0 : index
    %3 = vector.load %arg2[%c0_3, %c0_4] : memref<896x128xbf16, #tpu.memory_space<vmem>>, vector<896x128xbf16>
    %cst = arith.constant dense<0.000000e+00> : vector<128x128xf32>
    %4 = tpu.matmul %2, %3, %cst {dimension_numbers = #tpu.dot_dimension_numbers<[1], [0], [0], [1], [0, 0, 1, 1], [], []>} : vector<128x896xbf16>, vector<896x128xbf16>, vector<128x128xf32> -> vector<128x128xf32>
    %c0_5 = arith.constant 0 : index
    %c0_6 = arith.constant 0 : index
    %5 = vector.load %arg8[%c0_5, %c0_6] : memref<4x128xf32, #tpu.memory_space<vmem>>, vector<1x128xf32>
    %6 = vector.broadcast %5 : vector<1x128xf32> to vector<128x128xf32>
    %7 = arith.addf %4, %6 : vector<128x128xf32>
    %cst_7 = arith.constant 0.000000e+00 : f32
    %8 = vector.broadcast %cst_7 : f32 to vector<128x128xf32>
    %9 = arith.maximumf %7, %8 : vector<128x128xf32>
    %c0_8 = arith.constant 0 : index
    %c0_9 = arith.constant 0 : index
    %10 = vector.load %arg3[%c0_8, %c0_9] : memref<896x128xbf16, #tpu.memory_space<vmem>>, vector<896x128xbf16>
    %cst_10 = arith.constant dense<0.000000e+00> : vector<128x128xf32>
    %11 = tpu.matmul %2, %10, %cst_10 {dimension_numbers = #tpu.dot_dimension_numbers<[1], [0], [0], [1], [0, 0, 1, 1], [], []>} : vector<128x896xbf16>, vector<896x128xbf16>, vector<128x128xf32> -> vector<128x128xf32>
    %c1 = arith.constant 1 : index
    %c0_11 = arith.constant 0 : index
    %12 = vector.load %arg8[%c1, %c0_11] : memref<4x128xf32, #tpu.memory_space<vmem>>, vector<1x128xf32>
    %13 = vector.broadcast %12 : vector<1x128xf32> to vector<128x128xf32>
    %14 = arith.addf %11, %13 : vector<128x128xf32>
    %cst_12 = arith.constant 0.000000e+00 : f32
    %15 = vector.broadcast %cst_12 : f32 to vector<128x128xf32>
    %16 = arith.maximumf %14, %15 : vector<128x128xf32>
    %17 = arith.truncf %16 : vector<128x128xf32> to vector<128x128xbf16>
    %18 = vector.shape_cast %17 : vector<128x128xbf16> to vector<2x8x8x128xbf16>
    %cst_13 = arith.constant 0.000000e+00 : bf16
    %19 = vector.broadcast %cst_13 : bf16 to vector<2x8x16x128xbf16>
    %c0_14 = arith.constant 0 : index
    %c0_15 = arith.constant 0 : index
    %c0_16 = arith.constant 0 : index
    %c0_17 = arith.constant 0 : index
    %20 = vector.load %arg11[%c0_14, %c0_15, %c0_16, %c0_17] : memref<2x8x16x128xbf16, #tpu.memory_space<vmem>>, vector<2x8x16x128xbf16>
    tpu.vector_store %arg11[%c0_14, %c0_15, %c0_16, %c0_17], %19 {strides = array<i32>} : memref<2x8x16x128xbf16, #tpu.memory_space<vmem>>, vector<2x8x16x128xbf16>,
    %c0_18 = arith.constant 0 : index
    %c0_19 = arith.constant 0 : index
    %c3 = arith.constant 3 : index
    %c0_20 = arith.constant 0 : index
    %21 = vector.load %arg11[%c0_18, %c0_19, %c3, %c0_20] : memref<2x8x16x128xbf16, #tpu.memory_space<vmem>>, vector<2x8x8x128xbf16>
    tpu.vector_store %arg11[%c0_18, %c0_19, %c3, %c0_20], %18 {strides = array<i32>} : memref<2x8x16x128xbf16, #tpu.memory_space<vmem>>, vector<2x8x8x128xbf16>,
    %c0_21 = arith.constant 0 : index
    %c0_22 = arith.constant 0 : index
    %c0_23 = arith.constant 0 : index
    %c0_24 = arith.constant 0 : index
    %22 = vector.load %arg11[%c0_21, %c0_22, %c0_23, %c0_24] : memref<2x8x16x128xbf16, #tpu.memory_space<vmem>>, vector<2x8x8x128xbf16>
    %23 = vector.shape_cast %22 : vector<2x8x8x128xbf16> to vector<128x128xbf16>
    %c0_25 = arith.constant 0 : index
    %c0_26 = arith.constant 0 : index
    %24 = vector.load %arg13[%c0_25, %c0_26] : memref<128x896xbf16, #tpu.memory_space<vmem>>, vector<128x128xbf16>
    tpu.vector_store %arg13[%c0_25, %c0_26], %23 {strides = array<i32>} : memref<128x896xbf16, #tpu.memory_space<vmem>>, vector<128x128xbf16>,
    %c0_27 = arith.constant 0 : index
    %c0_28 = arith.constant 0 : index
    %c1_29 = arith.constant 1 : index
    %c0_30 = arith.constant 0 : index
    %25 = vector.load %arg11[%c0_27, %c0_28, %c1_29, %c0_30] : memref<2x8x16x128xbf16, #tpu.memory_space<vmem>>, vector<2x8x8x128xbf16>
    %26 = vector.shape_cast %25 : vector<2x8x8x128xbf16> to vector<128x128xbf16>
    %c0_31 = arith.constant 0 : index
    %c128 = arith.constant 128 : index
    %27 = vector.load %arg13[%c0_31, %c128] : memref<128x896xbf16, #tpu.memory_space<vmem>>, vector<128x128xbf16>
    tpu.vector_store %arg13[%c0_31, %c128], %26 {strides = array<i32>} : memref<128x896xbf16, #tpu.memory_space<vmem>>, vector<128x128xbf16>,
    %c0_32 = arith.constant 0 : index
    %c0_33 = arith.constant 0 : index
    %c2 = arith.constant 2 : index
    %c0_34 = arith.constant 0 : index
    %28 = vector.load %arg11[%c0_32, %c0_33, %c2, %c0_34] : memref<2x8x16x128xbf16, #tpu.memory_space<vmem>>, vector<2x8x8x128xbf16>
    %29 = vector.shape_cast %28 : vector<2x8x8x128xbf16> to vector<128x128xbf16>
    %c0_35 = arith.constant 0 : index
    %c256 = arith.constant 256 : index
    %30 = vector.load %arg13[%c0_35, %c256] : memref<128x896xbf16, #tpu.memory_space<vmem>>, vector<128x128xbf16>
    tpu.vector_store %arg13[%c0_35, %c256], %29 {strides = array<i32>} : memref<128x896xbf16, #tpu.memory_space<vmem>>, vector<128x128xbf16>,
    %c0_36 = arith.constant 0 : index
    %c0_37 = arith.constant 0 : index
    %c3_38 = arith.constant 3 : index
    %c0_39 = arith.constant 0 : index
    %31 = vector.load %arg11[%c0_36, %c0_37, %c3_38, %c0_39] : memref<2x8x16x128xbf16, #tpu.memory_space<vmem>>, vector<2x8x8x128xbf16>
    %32 = vector.shape_cast %31 : vector<2x8x8x128xbf16> to vector<128x128xbf16>
    %c0_40 = arith.constant 0 : index
    %c384 = arith.constant 384 : index
    %33 = vector.load %arg13[%c0_40, %c384] : memref<128x896xbf16, #tpu.memory_space<vmem>>, vector<128x128xbf16>
    tpu.vector_store %arg13[%c0_40, %c384], %32 {strides = array<i32>} : memref<128x896xbf16, #tpu.memory_space<vmem>>, vector<128x128xbf16>,
    %c0_41 = arith.constant 0 : index
    %c0_42 = arith.constant 0 : index
    %c4 = arith.constant 4 : index
    %c0_43 = arith.constant 0 : index
    %34 = vector.load %arg11[%c0_41, %c0_42, %c4, %c0_43] : memref<2x8x16x128xbf16, #tpu.memory_space<vmem>>, vector<2x8x8x128xbf16>
    %35 = vector.shape_cast %34 : vector<2x8x8x128xbf16> to vector<128x128xbf16>
    %c0_44 = arith.constant 0 : index
    %c512 = arith.constant 512 : index
    %36 = vector.load %arg13[%c0_44, %c512] : memref<128x896xbf16, #tpu.memory_space<vmem>>, vector<128x128xbf16>
    tpu.vector_store %arg13[%c0_44, %c512], %35 {strides = array<i32>} : memref<128x896xbf16, #tpu.memory_space<vmem>>, vector<128x128xbf16>,
    %c0_45 = arith.constant 0 : index
    %c0_46 = arith.constant 0 : index
    %c5 = arith.constant 5 : index
    %c0_47 = arith.constant 0 : index
    %37 = vector.load %arg11[%c0_45, %c0_46, %c5, %c0_47] : memref<2x8x16x128xbf16, #tpu.memory_space<vmem>>, vector<2x8x8x128xbf16>
    %38 = vector.shape_cast %37 : vector<2x8x8x128xbf16> to vector<128x128xbf16>
    %c0_48 = arith.constant 0 : index
    %c640 = arith.constant 640 : index
    %39 = vector.load %arg13[%c0_48, %c640] : memref<128x896xbf16, #tpu.memory_space<vmem>>, vector<128x128xbf16>
    tpu.vector_store %arg13[%c0_48, %c640], %38 {strides = array<i32>} : memref<128x896xbf16, #tpu.memory_space<vmem>>, vector<128x128xbf16>,
    %c0_49 = arith.constant 0 : index
    %c0_50 = arith.constant 0 : index
    %c6 = arith.constant 6 : index
    %c0_51 = arith.constant 0 : index
    %40 = vector.load %arg11[%c0_49, %c0_50, %c6, %c0_51] : memref<2x8x16x128xbf16, #tpu.memory_space<vmem>>, vector<2x8x8x128xbf16>
    %41 = vector.shape_cast %40 : vector<2x8x8x128xbf16> to vector<128x128xbf16>
    %c0_52 = arith.constant 0 : index
    %c768 = arith.constant 768 : index
    %42 = vector.load %arg13[%c0_52, %c768] : memref<128x896xbf16, #tpu.memory_space<vmem>>, vector<128x128xbf16>
    tpu.vector_store %arg13[%c0_52, %c768], %41 {strides = array<i32>} : memref<128x896xbf16, #tpu.memory_space<vmem>>, vector<128x128xbf16>,
    %c0_53 = arith.constant 0 : index
    %c0_54 = arith.constant 0 : index
    %43 = vector.load %arg13[%c0_53, %c0_54] : memref<128x896xbf16, #tpu.memory_space<vmem>>, vector<128x896xbf16>
    %c0_55 = arith.constant 0 : index
    %c0_56 = arith.constant 0 : index
    %44 = vector.load %arg4[%c0_55, %c0_56] : memref<896x128xbf16, #tpu.memory_space<vmem>>, vector<896x128xbf16>
    %cst_57 = arith.constant dense<0.000000e+00> : vector<128x128xf32>
    %45 = tpu.matmul %43, %44, %cst_57 {dimension_numbers = #tpu.dot_dimension_numbers<[1], [0], [0], [1], [0, 0, 1, 1], [], []>} : vector<128x896xbf16>, vector<896x128xbf16>, vector<128x128xf32> -> vector<128x128xf32>
    %c2_58 = arith.constant 2 : index
    %c0_59 = arith.constant 0 : index
    %46 = vector.load %arg8[%c2_58, %c0_59] : memref<4x128xf32, #tpu.memory_space<vmem>>, vector<1x128xf32>
    %47 = vector.broadcast %46 : vector<1x128xf32> to vector<128x128xf32>
    %48 = arith.addf %45, %47 : vector<128x128xf32>
    %cst_60 = arith.constant 0.000000e+00 : f32
    %49 = vector.broadcast %cst_60 : f32 to vector<128x128xf32>
    %50 = arith.maximumf %48, %49 : vector<128x128xf32>
    %51 = arith.truncf %50 : vector<128x128xf32> to vector<128x128xbf16>
    %52 = vector.shape_cast %51 : vector<128x128xbf16> to vector<2x8x8x128xbf16>
    %cst_61 = arith.constant 0.000000e+00 : bf16
    %53 = vector.broadcast %cst_61 : bf16 to vector<2x16x8x128xbf16>
    %c0_62 = arith.constant 0 : index
    %c0_63 = arith.constant 0 : index
    %c0_64 = arith.constant 0 : index
    %c0_65 = arith.constant 0 : index
    %54 = vector.load %arg12[%c0_62, %c0_63, %c0_64, %c0_65] : memref<2x16x8x128xbf16, #tpu.memory_space<vmem>>, vector<2x16x8x128xbf16>
    tpu.vector_store %arg12[%c0_62, %c0_63, %c0_64, %c0_65], %53 {strides = array<i32>} : memref<2x16x8x128xbf16, #tpu.memory_space<vmem>>, vector<2x16x8x128xbf16>,
    %c0_66 = arith.constant 0 : index
    %c3_67 = arith.constant 3 : index
    %c0_68 = arith.constant 0 : index
    %c0_69 = arith.constant 0 : index
    %55 = vector.load %arg12[%c0_66, %c3_67, %c0_68, %c0_69] : memref<2x16x8x128xbf16, #tpu.memory_space<vmem>>, vector<2x8x8x128xbf16>
    tpu.vector_store %arg12[%c0_66, %c3_67, %c0_68, %c0_69], %52 {strides = array<i32>} : memref<2x16x8x128xbf16, #tpu.memory_space<vmem>>, vector<2x8x8x128xbf16>,
    %c0_70 = arith.constant 0 : index
    %c0_71 = arith.constant 0 : index
    %c0_72 = arith.constant 0 : index
    %c0_73 = arith.constant 0 : index
    %56 = vector.load %arg12[%c0_70, %c0_71, %c0_72, %c0_73] : memref<2x16x8x128xbf16, #tpu.memory_space<vmem>>, vector<2x8x8x128xbf16>
    %57 = vector.shape_cast %56 : vector<2x8x8x128xbf16> to vector<128x128xbf16>
    %c0_74 = arith.constant 0 : index
    %c0_75 = arith.constant 0 : index
    %58 = vector.load %arg13[%c0_74, %c0_75] : memref<128x896xbf16, #tpu.memory_space<vmem>>, vector<128x128xbf16>
    tpu.vector_store %arg13[%c0_74, %c0_75], %57 {strides = array<i32>} : memref<128x896xbf16, #tpu.memory_space<vmem>>, vector<128x128xbf16>,
    %c0_76 = arith.constant 0 : index
    %c1_77 = arith.constant 1 : index
    %c0_78 = arith.constant 0 : index
    %c0_79 = arith.constant 0 : index
    %59 = vector.load %arg12[%c0_76, %c1_77, %c0_78, %c0_79] : memref<2x16x8x128xbf16, #tpu.memory_space<vmem>>, vector<2x8x8x128xbf16>
    %60 = vector.shape_cast %59 : vector<2x8x8x128xbf16> to vector<128x128xbf16>
    %c0_80 = arith.constant 0 : index
    %c128_81 = arith.constant 128 : index
    %61 = vector.load %arg13[%c0_80, %c128_81] : memref<128x896xbf16, #tpu.memory_space<vmem>>, vector<128x128xbf16>
    tpu.vector_store %arg13[%c0_80, %c128_81], %60 {strides = array<i32>} : memref<128x896xbf16, #tpu.memory_space<vmem>>, vector<128x128xbf16>,
    %c0_82 = arith.constant 0 : index
    %c2_83 = arith.constant 2 : index
    %c0_84 = arith.constant 0 : index
    %c0_85 = arith.constant 0 : index
    %62 = vector.load %arg12[%c0_82, %c2_83, %c0_84, %c0_85] : memref<2x16x8x128xbf16, #tpu.memory_space<vmem>>, vector<2x8x8x128xbf16>
    %63 = vector.shape_cast %62 : vector<2x8x8x128xbf16> to vector<128x128xbf16>
    %c0_86 = arith.constant 0 : index
    %c256_87 = arith.constant 256 : index
    %64 = vector.load %arg13[%c0_86, %c256_87] : memref<128x896xbf16, #tpu.memory_space<vmem>>, vector<128x128xbf16>
    tpu.vector_store %arg13[%c0_86, %c256_87], %63 {strides = array<i32>} : memref<128x896xbf16, #tpu.memory_space<vmem>>, vector<128x128xbf16>,
    %c0_88 = arith.constant 0 : index
    %c3_89 = arith.constant 3 : index
    %c0_90 = arith.constant 0 : index
    %c0_91 = arith.constant 0 : index
    %65 = vector.load %arg12[%c0_88, %c3_89, %c0_90, %c0_91] : memref<2x16x8x128xbf16, #tpu.memory_space<vmem>>, vector<2x8x8x128xbf16>
    %66 = vector.shape_cast %65 : vector<2x8x8x128xbf16> to vector<128x128xbf16>
    %c0_92 = arith.constant 0 : index
    %c384_93 = arith.constant 384 : index
    %67 = vector.load %arg13[%c0_92, %c384_93] : memref<128x896xbf16, #tpu.memory_space<vmem>>, vector<128x128xbf16>
    tpu.vector_store %arg13[%c0_92, %c384_93], %66 {strides = array<i32>} : memref<128x896xbf16, #tpu.memory_space<vmem>>, vector<128x128xbf16>,
    %c0_94 = arith.constant 0 : index
    %c4_95 = arith.constant 4 : index
    %c0_96 = arith.constant 0 : index
    %c0_97 = arith.constant 0 : index
    %68 = vector.load %arg12[%c0_94, %c4_95, %c0_96, %c0_97] : memref<2x16x8x128xbf16, #tpu.memory_space<vmem>>, vector<2x8x8x128xbf16>
    %69 = vector.shape_cast %68 : vector<2x8x8x128xbf16> to vector<128x128xbf16>
    %c0_98 = arith.constant 0 : index
    %c512_99 = arith.constant 512 : index
    %70 = vector.load %arg13[%c0_98, %c512_99] : memref<128x896xbf16, #tpu.memory_space<vmem>>, vector<128x128xbf16>
    tpu.vector_store %arg13[%c0_98, %c512_99], %69 {strides = array<i32>} : memref<128x896xbf16, #tpu.memory_space<vmem>>, vector<128x128xbf16>,
    %c0_100 = arith.constant 0 : index
    %c5_101 = arith.constant 5 : index
    %c0_102 = arith.constant 0 : index
    %c0_103 = arith.constant 0 : index
    %71 = vector.load %arg12[%c0_100, %c5_101, %c0_102, %c0_103] : memref<2x16x8x128xbf16, #tpu.memory_space<vmem>>, vector<2x8x8x128xbf16>
    %72 = vector.shape_cast %71 : vector<2x8x8x128xbf16> to vector<128x128xbf16>
    %c0_104 = arith.constant 0 : index
    %c640_105 = arith.constant 640 : index
    %73 = vector.load %arg13[%c0_104, %c640_105] : memref<128x896xbf16, #tpu.memory_space<vmem>>, vector<128x128xbf16>
    tpu.vector_store %arg13[%c0_104, %c640_105], %72 {strides = array<i32>} : memref<128x896xbf16, #tpu.memory_space<vmem>>, vector<128x128xbf16>,
    %c0_106 = arith.constant 0 : index
    %c6_107 = arith.constant 6 : index
    %c0_108 = arith.constant 0 : index
    %c0_109 = arith.constant 0 : index
    %74 = vector.load %arg12[%c0_106, %c6_107, %c0_108, %c0_109] : memref<2x16x8x128xbf16, #tpu.memory_space<vmem>>, vector<2x8x8x128xbf16>
    %75 = vector.shape_cast %74 : vector<2x8x8x128xbf16> to vector<128x128xbf16>
    %c0_110 = arith.constant 0 : index
    %c768_111 = arith.constant 768 : index
    %76 = vector.load %arg13[%c0_110, %c768_111] : memref<128x896xbf16, #tpu.memory_space<vmem>>, vector<128x128xbf16>
    tpu.vector_store %arg13[%c0_110, %c768_111], %75 {strides = array<i32>} : memref<128x896xbf16, #tpu.memory_space<vmem>>, vector<128x128xbf16>,
    %c0_112 = arith.constant 0 : index
    %c0_113 = arith.constant 0 : index
    %77 = vector.load %arg13[%c0_112, %c0_113] : memref<128x896xbf16, #tpu.memory_space<vmem>>, vector<128x896xbf16>
    %c0_114 = arith.constant 0 : index
    %c0_115 = arith.constant 0 : index
    %78 = vector.load %arg5[%c0_114, %c0_115] : memref<896x128xbf16, #tpu.memory_space<vmem>>, vector<896x128xbf16>
    %cst_116 = arith.constant dense<0.000000e+00> : vector<128x128xf32>
    %79 = tpu.matmul %77, %78, %cst_116 {dimension_numbers = #tpu.dot_dimension_numbers<[1], [0], [0], [1], [0, 0, 1, 1], [], []>} : vector<128x896xbf16>, vector<896x128xbf16>, vector<128x128xf32> -> vector<128x128xf32>
    %c3_117 = arith.constant 3 : index
    %c0_118 = arith.constant 0 : index
    %80 = vector.load %arg8[%c3_117, %c0_118] : memref<4x128xf32, #tpu.memory_space<vmem>>, vector<1x128xf32>
    %81 = vector.broadcast %80 : vector<1x128xf32> to vector<128x128xf32>
    %82 = arith.addf %79, %81 : vector<128x128xf32>
    %cst_119 = arith.constant 0.000000e+00 : f32
    %83 = vector.broadcast %cst_119 : f32 to vector<128x128xf32>
    %84 = arith.maximumf %82, %83 : vector<128x128xf32>
    %85 = arith.truncf %9 : vector<128x128xf32> to vector<128x128xbf16>
    %c0_120 = arith.constant 0 : index
    %c0_121 = arith.constant 0 : index
    %86 = vector.load %arg6[%c0_120, %c0_121] : memref<128x896xbf16, #tpu.memory_space<vmem>>, vector<128x896xbf16>
    %cst_122 = arith.constant dense<0.000000e+00> : vector<128x896xf32>
    %87 = tpu.matmul %85, %86, %cst_122 {dimension_numbers = #tpu.dot_dimension_numbers<[1], [0], [0], [1], [0, 0, 1, 1], [], []>} : vector<128x128xbf16>, vector<128x896xbf16>, vector<128x896xf32> -> vector<128x896xf32>
    %88 = arith.truncf %84 : vector<128x128xf32> to vector<128x128xbf16>
    %c0_123 = arith.constant 0 : index
    %c0_124 = arith.constant 0 : index
    %89 = vector.load %arg7[%c0_123, %c0_124] : memref<128x896xbf16, #tpu.memory_space<vmem>>, vector<128x896xbf16>
    %cst_125 = arith.constant dense<0.000000e+00> : vector<128x896xf32>
    %90 = tpu.matmul %88, %89, %cst_125 {dimension_numbers = #tpu.dot_dimension_numbers<[1], [0], [0], [1], [0, 0, 1, 1], [], []>} : vector<128x128xbf16>, vector<128x896xbf16>, vector<128x896xf32> -> vector<128x896xf32>
    %91 = arith.addf %87, %90 : vector<128x896xf32>
    %c0_126 = arith.constant 0 : index
    %c0_127 = arith.constant 0 : index
    %92 = vector.load %arg9[%c0_126, %c0_127] : memref<1x896xf32, #tpu.memory_space<vmem>>, vector<1x896xf32>
    %93 = vector.broadcast %92 : vector<1x896xf32> to vector<128x896xf32>
    %94 = arith.addf %91, %93 : vector<128x896xf32>
    %c0_128 = arith.constant 0 : index
    %c0_129 = arith.constant 0 : index
    %c0_130 = arith.constant 0 : index
    %c0_131 = arith.constant 0 : index
    %95 = vector.load %arg1[%c0_128, %c0_129, %c0_130, %c0_131] : memref<2x8x8x896xf32, #tpu.memory_space<vmem>>, vector<2x8x8x896xf32>
    %96 = vector.shape_cast %95 : vector<2x8x8x896xf32> to vector<128x896xf32>
    %97 = arith.addf %94, %96 : vector<128x896xf32>
    %cst_132 = arith.constant 0.000000e+00 : f32
    %98 = vector.broadcast %cst_132 : f32 to vector<128x896xf32>
    %99 = arith.maximumf %97, %98 : vector<128x896xf32>
    %100 = vector.shape_cast %99 : vector<128x896xf32> to vector<2x8x8x896xf32>
    %c0_133 = arith.constant 0 : index
    %c0_134 = arith.constant 0 : index
    %c0_135 = arith.constant 0 : index
    %c0_136 = arith.constant 0 : index
    %101 = vector.load %arg10[%c0_133, %c0_134, %c0_135, %c0_136] : memref<2x8x8x896xf32, #tpu.memory_space<vmem>>, vector<2x8x8x896xf32>
    tpu.vector_store %arg10[%c0_133, %c0_134, %c0_135, %c0_136], %100 {strides = array<i32>} : memref<2x8x8x896xf32, #tpu.memory_space<vmem>>, vector<2x8x8x896xf32>,
    return
  }
  func.func @transform_0(%arg0: i32) -> (i32, i32, i32, i32) {
    %c0_i32 = arith.constant 0 : i32
    %c0_i32_0 = arith.constant 0 : i32
    %c0_i32_1 = arith.constant 0 : i32
    %c0_i32_2 = arith.constant 0 : i32
    return %arg0, %c0_i32, %c0_i32_0, %c0_i32_1 : i32, i32, i32, i32
  }
  func.func @transform_1(%arg0: i32) -> (i32, i32) {
    %c0_i32 = arith.constant 0 : i32
    %c0_i32_0 = arith.constant 0 : i32
    %c0_i32_1 = arith.constant 0 : i32
    return %c0_i32, %c0_i32_0 : i32, i32
  }
  func.func @transform_2(%arg0: i32) -> (i32, i32) {
    %c0_i32 = arith.constant 0 : i32
    %c0_i32_0 = arith.constant 0 : i32
    %c0_i32_1 = arith.constant 0 : i32
    return %c0_i32, %c0_i32_0 : i32, i32
  }
  func.func @transform_3(%arg0: i32) -> (i32, i32) {
    %c0_i32 = arith.constant 0 : i32
    %c0_i32_0 = arith.constant 0 : i32
    %c0_i32_1 = arith.constant 0 : i32
    return %c0_i32, %c0_i32_0 : i32, i32
  }
  func.func @transform_4(%arg0: i32) -> (i32, i32) {
    %c0_i32 = arith.constant 0 : i32
    %c0_i32_0 = arith.constant 0 : i32
    %c0_i32_1 = arith.constant 0 : i32
    return %c0_i32, %c0_i32_0 : i32, i32
  }
  func.func @transform_5(%arg0: i32) -> (i32, i32) {
    %c0_i32 = arith.constant 0 : i32
    %c0_i32_0 = arith.constant 0 : i32
    %c0_i32_1 = arith.constant 0 : i32
    return %c0_i32, %c0_i32_0 : i32, i32
  }
  func.func @transform_6(%arg0: i32) -> (i32, i32) {
    %c0_i32 = arith.constant 0 : i32
    %c0_i32_0 = arith.constant 0 : i32
    %c0_i32_1 = arith.constant 0 : i32
    return %c0_i32, %c0_i32_0 : i32, i32
  }
  func.func @transform_7(%arg0: i32) -> (i32, i32) {
    %c0_i32 = arith.constant 0 : i32
    %c0_i32_0 = arith.constant 0 : i32
    %c0_i32_1 = arith.constant 0 : i32
    return %c0_i32, %c0_i32_0 : i32, i32
  }
  func.func @transform_8(%arg0: i32) -> (i32, i32) {
    %c0_i32 = arith.constant 0 : i32
    %c0_i32_0 = arith.constant 0 : i32
    %c0_i32_1 = arith.constant 0 : i32
    return %c0_i32, %c0_i32_0 : i32, i32
  }
  func.func @transform_9(%arg0: i32) -> (i32, i32, i32, i32) {
    %c0_i32 = arith.constant 0 : i32
    %c0_i32_0 = arith.constant 0 : i32
    %c0_i32_1 = arith.constant 0 : i32
    %c0_i32_2 = arith.constant 0 : i32
    return %arg0, %c0_i32, %c0_i32_0, %c0_i32_1 : i32, i32, i32, i32
  }
}

</mosaic_0001>

<llo_original>
// kernel: tpu_custom_call.1
$region0: #{tpu_custom_call.1}
  #allocation0 [shape = 'u32[]', space=smem, size = 0x4, offset = 0x4, fixed_abs, tag = 'smem constant byte address 0x4 - core index']
  #allocation1 [shape = 'u32[72,128]{1,0:T(1,128)}', space=vmem, size = 0x9000, scoped, tag = 'internal scratch']
  #allocation2 [shape = 'bf16[2,8,16,128]{3,2,1,0:T(8,128)(2,1)}', space=vmem, size = 0x10000, scoped, tag = 'scratch operand']
  #allocation3 [shape = 'bf16[2,16,8,128]{3,2,1,0:T(8,128)(2,1)}', space=vmem, size = 0x10000, scoped, tag = 'scratch operand']
  #allocation4 [shape = 'bf16[128,896]{1,0:T(8,128)(2,1)}', space=vmem, size = 0x38000, scoped, tag = 'scratch operand']
  %s0 = inlined_call_operand.hbm [shape: f32[2,8,8,896], index: 0, kind: input, shape index: {}]
  %s1 = inlined_call_operand.hbm [shape: bf16[896,128], index: 1, kind: input, shape index: {}]
  %s2 = inlined_call_operand.hbm [shape: bf16[896,128], index: 2, kind: input, shape index: {}]
  %s3 = inlined_call_operand.hbm [shape: bf16[896,128], index: 3, kind: input, shape index: {}]
  %s4 = inlined_call_operand.hbm [shape: bf16[896,128], index: 4, kind: input, shape index: {}]
  %s5 = inlined_call_operand.hbm [shape: bf16[128,896], index: 5, kind: input, shape index: {}]
  %s6 = inlined_call_operand.hbm [shape: bf16[128,896], index: 6, kind: input, shape index: {}]
  %s7 = inlined_call_operand.hbm [shape: f32[4,128], index: 7, kind: input, shape index: {}]
  %s8 = inlined_call_operand.vmem [shape: f32[1,896], index: 8, kind: input, shape index: {}]
  %s9 = inlined_call_operand.hbm [shape: f32[2,8,8,896], index: 9, kind: output, shape index: {}]
  %s10 = sld [smem:[#allocation0]]
  $region78: #{tpu_custom_call.1} parent=0
    _
  %s12 = ssub.s32 1, %s10
  %s13 = scalar_select 0, %s12, %s10
  $region1: #{tpu_custom_call.1} parent=0
    #allocation5 [shape = 'u8[458752]{0}', space=vmem, size = 0x70000, scoped, tag = 'input window, operand 0, single buffered']
    #allocation6 [shape = 's32[1]{0}', space=sflag, size = 0x4, scoped, tag = 'scoped memory for tpu_custom_call.1']
    #allocation7 [shape = 's32[1]{0}', space=sflag, size = 0x4, scoped, tag = 'scoped memory for tpu_custom_call.1']
    #allocation8 [shape = 'u8[229376]{0}', space=vmem, size = 0x38000, scoped, tag = 'input window, operand 1, single buffered']
    #allocation9 [shape = 's32[1]{0}', space=sflag, size = 0x4, scoped, tag = 'scoped memory for tpu_custom_call.1']
    #allocation10 [shape = 'u8[229376]{0}', space=vmem, size = 0x38000, scoped, tag = 'input window, operand 2, single buffered']
    #allocation11 [shape = 'u8[229376]{0}', space=vmem, size = 0x38000, scoped, tag = 'input window, operand 3, single buffered']
    #allocation12 [shape = 's32[1]{0}', space=sflag, size = 0x4, scoped, tag = 'scoped memory for tpu_custom_call.1']
    #allocation13 [shape = 'u8[229376]{0}', space=vmem, size = 0x38000, scoped, tag = 'input window, operand 4, single buffered']
    #allocation14 [shape = 'u8[229376]{0}', space=vmem, size = 0x38000, scoped, tag = 'input window, operand 5, single buffered']
    #allocation15 [shape = 's32[1]{0}', space=sflag, size = 0x4, scoped, tag = 'scoped memory for tpu_custom_call.1']
    #allocation16 [shape = 'u8[229376]{0}', space=vmem, size = 0x38000, scoped, tag = 'input window, operand 6, single buffered']
    #allocation17 [shape = 'u8[2048]{0}', space=vmem, size = 0x800, scoped, tag = 'input window, operand 7, single buffered']
    #allocation18 [shape = 's32[1]{0}', space=sflag, size = 0x4, scoped, tag = 'scoped memory for tpu_custom_call.1']
    #allocation19 [shape = 'u8[458752]{0}', space=vmem, size = 0x70000, scoped, tag = 'output window, operand 0, single buffered']
    %14 = vsyncpa [#allocation6], 0
    %15 = vsyncpa [#allocation9], 0
    %16 = vsyncpa [#allocation12], 0
    %17 = vsyncpa [#allocation15], 0
    %18 = vsyncpa [#allocation18], 0
    %19 = vsyncpa [#allocation7], 0
    // Predicated region
    $region2: #{tpu_custom_call.1} parent=1 // pred_check
      _
    $region3: #{tpu_custom_call.1} parent=1 // pred_check_branch
      %21 = sbr.rel (0) target = $region5
    $region4: #{tpu_custom_call.1} parent=1 // pred_region
      %23 = vsyncadd [#allocation6], 0
      %s24 = sshll.u32 %s0, 4
      %s25 = int_to_ptr.hbm [resolvable:$true] %s24
      %s26 = sshll.u32 [#allocation5], 4
      %s27 = int_to_ptr.vmem [resolvable:$true] %s26
      %32 = dma.hbm_to_vmem [thread:$0]  %s25, 14336, %s27, [#allocation6], 896, 896, 56
    $region5: #{tpu_custom_call.1} parent=1 // pred_fallthru
      _
    // Predicated region
    $region6: #{tpu_custom_call.1} parent=1 // pred_check
      _
    $region7: #{tpu_custom_call.1} parent=1 // pred_check_branch
      %34 = sbr.rel (0) target = $region9
    $region8: #{tpu_custom_call.1} parent=1 // pred_region
      %36 = vsyncadd [#allocation9], 0
      %s37 = sshll.u32 %s1, 4
      %s38 = int_to_ptr.hbm [resolvable:$true] %s37
      %s39 = sshll.u32 [#allocation8], 4
      %s40 = int_to_ptr.vmem [resolvable:$true] %s39
      %45 = dma.hbm_to_vmem [thread:$0]  %s38, 7168, %s40, [#allocation9], 64, 64, 4
    $region9: #{tpu_custom_call.1} parent=1 // pred_fallthru
      _
    // Predicated region
    $region10: #{tpu_custom_call.1} parent=1 // pred_check
      _
    $region11: #{tpu_custom_call.1} parent=1 // pred_check_branch
      %47 = sbr.rel (0) target = $region13
    $region12: #{tpu_custom_call.1} parent=1 // pred_region
      %49 = vsyncadd [#allocation9], 0
      %s50 = sshll.u32 %s2, 4
      %s51 = int_to_ptr.hbm [resolvable:$true] %s50
      %s52 = sshll.u32 [#allocation10], 4
      %s53 = int_to_ptr.vmem [resolvable:$true] %s52
      %58 = dma.hbm_to_vmem [thread:$0]  %s51, 7168, %s53, [#allocation9], 64, 64, 4
    $region13: #{tpu_custom_call.1} parent=1 // pred_fallthru
      _
    // Predicated region
    $region14: #{tpu_custom_call.1} parent=1 // pred_check
      _
    $region15: #{tpu_custom_call.1} parent=1 // pred_check_branch
      %60 = sbr.rel (0) target = $region17
    $region16: #{tpu_custom_call.1} parent=1 // pred_region
      %62 = vsyncadd [#allocation12], 0
      %s63 = sshll.u32 %s3, 4
      %s64 = int_to_ptr.hbm [resolvable:$true] %s63
      %s65 = sshll.u32 [#allocation11], 4
      %s66 = int_to_ptr.vmem [resolvable:$true] %s65
      %71 = dma.hbm_to_vmem [thread:$0]  %s64, 7168, %s66, [#allocation12], 64, 64, 4
    $region17: #{tpu_custom_call.1} parent=1 // pred_fallthru
      _
    // Predicated region
    $region18: #{tpu_custom_call.1} parent=1 // pred_check
      _
    $region19: #{tpu_custom_call.1} parent=1 // pred_check_branch
      %73 = sbr.rel (0) target = $region21
    $region20: #{tpu_custom_call.1} parent=1 // pred_region
      %75 = vsyncadd [#allocation12], 0
      %s76 = sshll.u32 %s4, 4
      %s77 = int_to_ptr.hbm [resolvable:$true] %s76
      %s78 = sshll.u32 [#allocation13], 4
      %s79 = int_to_ptr.vmem [resolvable:$true] %s78
      %84 = dma.hbm_to_vmem [thread:$0]  %s77, 7168, %s79, [#allocation12], 64, 64, 4
    $region21: #{tpu_custom_call.1} parent=1 // pred_fallthru
      _
    // Predicated region
    $region22: #{tpu_custom_call.1} parent=1 // pred_check
      _
    $region23: #{tpu_custom_call.1} parent=1 // pred_check_branch
      %86 = sbr.rel (0) target = $region25
    $region24: #{tpu_custom_call.1} parent=1 // pred_region
      %88 = vsyncadd [#allocation15], 0
      %s89 = sshll.u32 %s5, 4
      %s90 = int_to_ptr.hbm [resolvable:$true] %s89
      %s91 = sshll.u32 [#allocation14], 4
      %s92 = int_to_ptr.vmem [resolvable:$true] %s91
      %97 = dma.hbm_to_vmem [thread:$0]  %s90, 7168, %s92, [#allocation15], 448, 448, 28
    $region25: #{tpu_custom_call.1} parent=1 // pred_fallthru
      _
    // Predicated region
    $region26: #{tpu_custom_call.1} parent=1 // pred_check
      _
    $region27: #{tpu_custom_call.1} parent=1 // pred_check_branch
      %99 = sbr.rel (0) target = $region29
    $region28: #{tpu_custom_call.1} parent=1 // pred_region
      %101 = vsyncadd [#allocation15], 0
      %s102 = sshll.u32 %s6, 4
      %s103 = int_to_ptr.hbm [resolvable:$true] %s102
      %s104 = sshll.u32 [#allocation16], 4
      %s105 = int_to_ptr.vmem [resolvable:$true] %s104
      %110 = dma.hbm_to_vmem [thread:$0]  %s103, 7168, %s105, [#allocation15], 448, 448, 28
    $region29: #{tpu_custom_call.1} parent=1 // pred_fallthru
      _
    // Predicated region
    $region30: #{tpu_custom_call.1} parent=1 // pred_check
      _
    $region31: #{tpu_custom_call.1} parent=1 // pred_check_branch
      %112 = sbr.rel (0) target = $region33
    $region32: #{tpu_custom_call.1} parent=1 // pred_region
      %114 = vsyncadd [#allocation18], 0
      %s116 = sshll.u32 %s7, 4
      %s117 = int_to_ptr.hbm [resolvable:$true] %s116
      %s118 = sshll.u32 [#allocation17], 4
      %s119 = int_to_ptr.vmem [resolvable:$true] %s118
      %121 = dma.hbm_to_vmem [thread:$0]  %s117, 64, %s119, [#allocation18]
    $region33: #{tpu_custom_call.1} parent=1 // pred_fallthru
      _
    // Predicated region
    $region34: #{tpu_custom_call.1} parent=1 // pred_check
      _
    $region35: #{tpu_custom_call.1} parent=1 // pred_check_branch
      %123 = sbr.rel (0) target = $region37
    $region36: #{tpu_custom_call.1} parent=1 // pred_region
      _
    $region37: #{tpu_custom_call.1} parent=1 // pred_fallthru
      _
    // Predicated region
    $region38: #{tpu_custom_call.1} parent=1 // pred_check
      _
    $region39: #{tpu_custom_call.1} parent=1 // pred_check_branch
      %125 = sbr.rel (0) target = $region41
    $region40: #{tpu_custom_call.1} parent=1 // pred_region
      %127 = dma.done [#allocation6], 14336
    $region41: #{tpu_custom_call.1} parent=1 // pred_fallthru
      _
    // Predicated region
    $region42: #{tpu_custom_call.1} parent=1 // pred_check
      _
    $region43: #{tpu_custom_call.1} parent=1 // pred_check_branch
      %129 = sbr.rel (0) target = $region45
    $region44: #{tpu_custom_call.1} parent=1 // pred_region
      %131 = dma.done [#allocation9], 7168
    $region45: #{tpu_custom_call.1} parent=1 // pred_fallthru
      _
    // Predicated region
    $region46: #{tpu_custom_call.1} parent=1 // pred_check
      _
    $region47: #{tpu_custom_call.1} parent=1 // pred_check_branch
      %133 = sbr.rel (0) target = $region49
    $region48: #{tpu_custom_call.1} parent=1 // pred_region
      %135 = dma.done [#allocation9], 7168
    $region49: #{tpu_custom_call.1} parent=1 // pred_fallthru
      _
    // Predicated region
    $region50: #{tpu_custom_call.1} parent=1 // pred_check
      _
    $region51: #{tpu_custom_call.1} parent=1 // pred_check_branch
      %137 = sbr.rel (0) target = $region53
    $region52: #{tpu_custom_call.1} parent=1 // pred_region
      %139 = dma.done [#allocation12], 7168
    $region53: #{tpu_custom_call.1} parent=1 // pred_fallthru
      _
    // Predicated region
    $region54: #{tpu_custom_call.1} parent=1 // pred_check
      _
    $region55: #{tpu_custom_call.1} parent=1 // pred_check_branch
      %141 = sbr.rel (0) target = $region57
    $region56: #{tpu_custom_call.1} parent=1 // pred_region
      %143 = dma.done [#allocation12], 7168
    $region57: #{tpu_custom_call.1} parent=1 // pred_fallthru
      _
    // Predicated region
    $region58: #{tpu_custom_call.1} parent=1 // pred_check
      _
    $region59: #{tpu_custom_call.1} parent=1 // pred_check_branch
      %145 = sbr.rel (0) target = $region61
    $region60: #{tpu_custom_call.1} parent=1 // pred_region
      %147 = dma.done [#allocation15], 7168
    $region61: #{tpu_custom_call.1} parent=1 // pred_fallthru
      _
    // Predicated region
    $region62: #{tpu_custom_call.1} parent=1 // pred_check
      _
    $region63: #{tpu_custom_call.1} parent=1 // pred_check_branch
      %149 = sbr.rel (0) target = $region65
    $region64: #{tpu_custom_call.1} parent=1 // pred_region
      %151 = dma.done [#allocation15], 7168
    $region65: #{tpu_custom_call.1} parent=1 // pred_fallthru
      _
    // Predicated region
    $region66: #{tpu_custom_call.1} parent=1 // pred_check
      _
    $region67: #{tpu_custom_call.1} parent=1 // pred_check_branch
      %153 = sbr.rel (0) target = $region69
    $region68: #{tpu_custom_call.1} parent=1 // pred_region
      %155 = dma.done [#allocation18], 64
    $region69: #{tpu_custom_call.1} parent=1 // pred_fallthru
      _
    %v157 = vld [vmem:[#allocation5] sm:$0xff]
    %v158 = vld [vmem:[#allocation5 + $0x8] sm:$0xff]
    %v159 = vld [vmem:[#allocation5 + $0x10] sm:$0xff]
    %v160 = vld [vmem:[#allocation5 + $0x18] sm:$0xff]
    %v161 = vld [vmem:[#allocation5 + $0x20] sm:$0xff]
    %v162 = vld [vmem:[#allocation5 + $0x28] sm:$0xff]
    %v163 = vld [vmem:[#allocation5 + $0x30] sm:$0xff]
    %v164 = vld [vmem:[#allocation5 + $0x38] sm:$0xff]
    %v165 = vld [vmem:[#allocation5 + $0x40] sm:$0xff]
    %v166 = vld [vmem:[#allocation5 + $0x48] sm:$0xff]
    %v167 = vld [vmem:[#allocation5 + $0x50] sm:$0xff]
    %v168 = vld [vmem:[#allocation5 + $0x58] sm:$0xff]
    %v169 = vld [vmem:[#allocation5 + $0x60] sm:$0xff]
    %v170 = vld [vmem:[#allocation5 + $0x68] sm:$0xff]
    %v171 = vld [vmem:[#allocation5 + $0x70] sm:$0xff]
    %v172 = vld [vmem:[#allocation5 + $0x78] sm:$0xff]
    %v173 = vld [vmem:[#allocation5 + $0x80] sm:$0xff]
    %v174 = vld [vmem:[#allocation5 + $0x88] sm:$0xff]
    %v175 = vld [vmem:[#allocation5 + $0x90] sm:$0xff]
    %v176 = vld [vmem:[#allocation5 + $0x98] sm:$0xff]
    %v177 = vld [vmem:[#allocation5 + $0xa0] sm:$0xff]
    %v178 = vld [vmem:[#allocation5 + $0xa8] sm:$0xff]
    %v179 = vld [vmem:[#allocation5 + $0xb0] sm:$0xff]
    %v180 = vld [vmem:[#allocation5 + $0xb8] sm:$0xff]
    %v181 = vld [vmem:[#allocation5 + $0xc0] sm:$0xff]
    %v182 = vld [vmem:[#allocation5 + $0xc8] sm:$0xff]
    %v183 = vld [vmem:[#allocation5 + $0xd0] sm:$0xff]
    %v184 = vld [vmem:[#allocation5 + $0xd8] sm:$0xff]
    %v185 = vld [vmem:[#allocation5 + $0xe0] sm:$0xff]
    %v186 = vld [vmem:[#allocation5 + $0xe8] sm:$0xff]
    %v187 = vld [vmem:[#allocation5 + $0xf0] sm:$0xff]
    %v188 = vld [vmem:[#allocation5 + $0xf8] sm:$0xff]
    %v189 = vld [vmem:[#allocation5 + $0x100] sm:$0xff]
    %v190 = vld [vmem:[#allocation5 + $0x108] sm:$0xff]
    %v191 = vld [vmem:[#allocation5 + $0x110] sm:$0xff]
    %v192 = vld [vmem:[#allocation5 + $0x118] sm:$0xff]
    %v193 = vld [vmem:[#allocation5 + $0x120] sm:$0xff]
    %v194 = vld [vmem:[#allocation5 + $0x128] sm:$0xff]
    %v195 = vld [vmem:[#allocation5 + $0x130] sm:$0xff]
    %v196 = vld [vmem:[#allocation5 + $0x138] sm:$0xff]
    %v197 = vld [vmem:[#allocation5 + $0x140] sm:$0xff]
    %v198 = vld [vmem:[#allocation5 + $0x148] sm:$0xff]
    %v199 = vld [vmem:[#allocation5 + $0x150] sm:$0xff]
    %v200 = vld [vmem:[#allocation5 + $0x158] sm:$0xff]
    %v201 = vld [vmem:[#allocation5 + $0x160] sm:$0xff]
    %v202 = vld [vmem:[#allocation5 + $0x168] sm:$0xff]
    %v203 = vld [vmem:[#allocation5 + $0x170] sm:$0xff]
    %v204 = vld [vmem:[#allocation5 + $0x178] sm:$0xff]
    %v205 = vld [vmem:[#allocation5 + $0x180] sm:$0xff]
    %v206 = vld [vmem:[#allocation5 + $0x188] sm:$0xff]
    %v207 = vld [vmem:[#allocation5 + $0x190] sm:$0xff]
    %v208 = vld [vmem:[#allocation5 + $0x198] sm:$0xff]
    %v209 = vld [vmem:[#allocation5 + $0x1a0] sm:$0xff]
    %v210 = vld [vmem:[#allocation5 + $0x1a8] sm:$0xff]
    %v211 = vld [vmem:[#allocation5 + $0x1b0] sm:$0xff]
    %v212 = vld [vmem:[#allocation5 + $0x1b8] sm:$0xff]
    %v213 = vld [vmem:[#allocation5 + $0x1c0] sm:$0xff]
    %v214 = vld [vmem:[#allocation5 + $0x1c8] sm:$0xff]
    %v215 = vld [vmem:[#allocation5 + $0x1d0] sm:$0xff]
    %v216 = vld [vmem:[#allocation5 + $0x1d8] sm:$0xff]
    %v217 = vld [vmem:[#allocation5 + $0x1e0] sm:$0xff]
    %v218 = vld [vmem:[#allocation5 + $0x1e8] sm:$0xff]
    %v219 = vld [vmem:[#allocation5 + $0x1f0] sm:$0xff]
    %v220 = vld [vmem:[#allocation5 + $0x1f8] sm:$0xff]
    %v221 = vld [vmem:[#allocation5 + $0x200] sm:$0xff]
    %v222 = vld [vmem:[#allocation5 + $0x208] sm:$0xff]
    %v223 = vld [vmem:[#allocation5 + $0x210] sm:$0xff]
    %v224 = vld [vmem:[#allocation5 + $0x218] sm:$0xff]
    %v225 = vld [vmem:[#allocation5 + $0x220] sm:$0xff]
    %v226 = vld [vmem:[#allocation5 + $0x228] sm:$0xff]
    %v227 = vld [vmem:[#allocation5 + $0x230] sm:$0xff]
    %v228 = vld [vmem:[#allocation5 + $0x238] sm:$0xff]
    %v229 = vld [vmem:[#allocation5 + $0x240] sm:$0xff]
    %v230 = vld [vmem:[#allocation5 + $0x248] sm:$0xff]
    %v231 = vld [vmem:[#allocation5 + $0x250] sm:$0xff]
    %v232 = vld [vmem:[#allocation5 + $0x258] sm:$0xff]
    %v233 = vld [vmem:[#allocation5 + $0x260] sm:$0xff]
    %v234 = vld [vmem:[#allocation5 + $0x268] sm:$0xff]
    %v235 = vld [vmem:[#allocation5 + $0x270] sm:$0xff]
    %v236 = vld [vmem:[#allocation5 + $0x278] sm:$0xff]
    %v237 = vld [vmem:[#allocation5 + $0x280] sm:$0xff]
    %v238 = vld [vmem:[#allocation5 + $0x288] sm:$0xff]
    %v239 = vld [vmem:[#allocation5 + $0x290] sm:$0xff]
    %v240 = vld [vmem:[#allocation5 + $0x298] sm:$0xff]
    %v241 = vld [vmem:[#allocation5 + $0x2a0] sm:$0xff]
    %v242 = vld [vmem:[#allocation5 + $0x2a8] sm:$0xff]
    %v243 = vld [vmem:[#allocation5 + $0x2b0] sm:$0xff]
    %v244 = vld [vmem:[#allocation5 + $0x2b8] sm:$0xff]
    %v245 = vld [vmem:[#allocation5 + $0x2c0] sm:$0xff]
    %v246 = vld [vmem:[#allocation5 + $0x2c8] sm:$0xff]
    %v247 = vld [vmem:[#allocation5 + $0x2d0] sm:$0xff]
    %v248 = vld [vmem:[#allocation5 + $0x2d8] sm:$0xff]
    %v249 = vld [vmem:[#allocation5 + $0x2e0] sm:$0xff]
    %v250 = vld [vmem:[#allocation5 + $0x2e8] sm:$0xff]
    %v251 = vld [vmem:[#allocation5 + $0x2f0] sm:$0xff]
    %v252 = vld [vmem:[#allocation5 + $0x2f8] sm:$0xff]
    %v253 = vld [vmem:[#allocation5 + $0x300] sm:$0xff]
    %v254 = vld [vmem:[#allocation5 + $0x308] sm:$0xff]
    %v255 = vld [vmem:[#allocation5 + $0x310] sm:$0xff]
    %v256 = vld [vmem:[#allocation5 + $0x318] sm:$0xff]
    %v257 = vld [vmem:[#allocation5 + $0x320] sm:$0xff]
    %v258 = vld [vmem:[#allocation5 + $0x328] sm:$0xff]
    %v259 = vld [vmem:[#allocation5 + $0x330] sm:$0xff]
    %v260 = vld [vmem:[#allocation5 + $0x338] sm:$0xff]
    %v261 = vld [vmem:[#allocation5 + $0x340] sm:$0xff]
    %v262 = vld [vmem:[#allocation5 + $0x348] sm:$0xff]
    %v263 = vld [vmem:[#allocation5 + $0x350] sm:$0xff]
    %v264 = vld [vmem:[#allocation5 + $0x358] sm:$0xff]
    %v265 = vld [vmem:[#allocation5 + $0x360] sm:$0xff]
    %v266 = vld [vmem:[#allocation5 + $0x368] sm:$0xff]
    %v267 = vld [vmem:[#allocation5 + $0x370] sm:$0xff]
    %v268 = vld [vmem:[#allocation5 + $0x378] sm:$0xff]
    %v269 = vpack.c.bf16 %v164, %v157
    %v270 = vpack.c.bf16 %v165, %v158
    %v271 = vpack.c.bf16 %v166, %v159
    %v272 = vpack.c.bf16 %v167, %v160
    %v273 = vpack.c.bf16 %v168, %v161
    %v274 = vpack.c.bf16 %v169, %v162
    %v275 = vpack.c.bf16 %v170, %v163
    %v276 = vpack.c.bf16 %v178, %v171
    %v277 = vpack.c.bf16 %v179, %v172
    %v278 = vpack.c.bf16 %v180, %v173
    %v279 = vpack.c.bf16 %v181, %v174
    %v280 = vpack.c.bf16 %v182, %v175
    %v281 = vpack.c.bf16 %v183, %v176
    %v282 = vpack.c.bf16 %v184, %v177
    %v283 = vpack.c.bf16 %v192, %v185
    %v284 = vpack.c.bf16 %v193, %v186
    %v285 = vpack.c.bf16 %v194, %v187
    %v286 = vpack.c.bf16 %v195, %v188
    %v287 = vpack.c.bf16 %v196, %v189
    %v288 = vpack.c.bf16 %v197, %v190
    %v289 = vpack.c.bf16 %v198, %v191
    %v290 = vpack.c.bf16 %v206, %v199
    %v291 = vpack.c.bf16 %v207, %v200
    %v292 = vpack.c.bf16 %v208, %v201
    %v293 = vpack.c.bf16 %v209, %v202
    %v294 = vpack.c.bf16 %v210, %v203
    %v295 = vpack.c.bf16 %v211, %v204
    %v296 = vpack.c.bf16 %v212, %v205
    %v297 = vpack.c.bf16 %v220, %v213
    %v298 = vpack.c.bf16 %v221, %v214
    %v299 = vpack.c.bf16 %v222, %v215
    %v300 = vpack.c.bf16 %v223, %v216
    %v301 = vpack.c.bf16 %v224, %v217
    %v302 = vpack.c.bf16 %v225, %v218
    %v303 = vpack.c.bf16 %v226, %v219
    %v304 = vpack.c.bf16 %v234, %v227
    %v305 = vpack.c.bf16 %v235, %v228
    %v306 = vpack.c.bf16 %v236, %v229
    %v307 = vpack.c.bf16 %v237, %v230
    %v308 = vpack.c.bf16 %v238, %v231
    %v309 = vpack.c.bf16 %v239, %v232
    %v310 = vpack.c.bf16 %v240, %v233
    %v311 = vpack.c.bf16 %v248, %v241
    %v312 = vpack.c.bf16 %v249, %v242
    %v313 = vpack.c.bf16 %v250, %v243
    %v314 = vpack.c.bf16 %v251, %v244
    %v315 = vpack.c.bf16 %v252, %v245
    %v316 = vpack.c.bf16 %v253, %v246
    %v317 = vpack.c.bf16 %v254, %v247
    %v318 = vpack.c.bf16 %v262, %v255
    %v319 = vpack.c.bf16 %v263, %v256
    %v320 = vpack.c.bf16 %v264, %v257
    %v321 = vpack.c.bf16 %v265, %v258
    %v322 = vpack.c.bf16 %v266, %v259
    %v323 = vpack.c.bf16 %v267, %v260
    %v324 = vpack.c.bf16 %v268, %v261
    %v325 = vld [vmem:[#allocation8] sm:$0xf]
    %v326 = vld [vmem:[#allocation8 + $0x4] sm:$0xf]
    %v327 = vld [vmem:[#allocation8 + $0x8] sm:$0xf]
    %v328 = vld [vmem:[#allocation8 + $0xc] sm:$0xf]
    %v329 = vld [vmem:[#allocation8 + $0x10] sm:$0xf]
    %v330 = vld [vmem:[#allocation8 + $0x14] sm:$0xf]
    %v331 = vld [vmem:[#allocation8 + $0x18] sm:$0xf]
    %v332 = vld [vmem:[#allocation8 + $0x1c] sm:$0xf]
    %v333 = vld [vmem:[#allocation8 + $0x20] sm:$0xf]
    %v334 = vld [vmem:[#allocation8 + $0x24] sm:$0xf]
    %v335 = vld [vmem:[#allocation8 + $0x28] sm:$0xf]
    %v336 = vld [vmem:[#allocation8 + $0x2c] sm:$0xf]
    %v337 = vld [vmem:[#allocation8 + $0x30] sm:$0xf]
    %v338 = vld [vmem:[#allocation8 + $0x34] sm:$0xf]
    %v339 = vld [vmem:[#allocation8 + $0x38] sm:$0xf]
    %v340 = vld [vmem:[#allocation8 + $0x3c] sm:$0xf]
    %v341 = vld [vmem:[#allocation8 + $0x40] sm:$0xf]
    %v342 = vld [vmem:[#allocation8 + $0x44] sm:$0xf]
    %v343 = vld [vmem:[#allocation8 + $0x48] sm:$0xf]
    %v344 = vld [vmem:[#allocation8 + $0x4c] sm:$0xf]
    %v345 = vld [vmem:[#allocation8 + $0x50] sm:$0xf]
    %v346 = vld [vmem:[#allocation8 + $0x54] sm:$0xf]
    %v347 = vld [vmem:[#allocation8 + $0x58] sm:$0xf]
    %v348 = vld [vmem:[#allocation8 + $0x5c] sm:$0xf]
    %v349 = vld [vmem:[#allocation8 + $0x60] sm:$0xf]
    %v350 = vld [vmem:[#allocation8 + $0x64] sm:$0xf]
    %v351 = vld [vmem:[#allocation8 + $0x68] sm:$0xf]
    %v352 = vld [vmem:[#allocation8 + $0x6c] sm:$0xf]
    %v353 = vld [vmem:[#allocation8 + $0x70] sm:$0xf]
    %v354 = vld [vmem:[#allocation8 + $0x74] sm:$0xf]
    %v355 = vld [vmem:[#allocation8 + $0x78] sm:$0xf]
    %v356 = vld [vmem:[#allocation8 + $0x7c] sm:$0xf]
    %v357 = vld [vmem:[#allocation8 + $0x80] sm:$0xf]
    %v358 = vld [vmem:[#allocation8 + $0x84] sm:$0xf]
    %v359 = vld [vmem:[#allocation8 + $0x88] sm:$0xf]
    %v360 = vld [vmem:[#allocation8 + $0x8c] sm:$0xf]
    %v361 = vld [vmem:[#allocation8 + $0x90] sm:$0xf]
    %v362 = vld [vmem:[#allocation8 + $0x94] sm:$0xf]
    %v363 = vld [vmem:[#allocation8 + $0x98] sm:$0xf]
    %v364 = vld [vmem:[#allocation8 + $0x9c] sm:$0xf]
    %v365 = vld [vmem:[#allocation8 + $0xa0] sm:$0xf]
    %v366 = vld [vmem:[#allocation8 + $0xa4] sm:$0xf]
    %v367 = vld [vmem:[#allocation8 + $0xa8] sm:$0xf]
    %v368 = vld [vmem:[#allocation8 + $0xac] sm:$0xf]
    %v369 = vld [vmem:[#allocation8 + $0xb0] sm:$0xf]
    %v370 = vld [vmem:[#allocation8 + $0xb4] sm:$0xf]
    %v371 = vld [vmem:[#allocation8 + $0xb8] sm:$0xf]
    %v372 = vld [vmem:[#allocation8 + $0xbc] sm:$0xf]
    %v373 = vld [vmem:[#allocation8 + $0xc0] sm:$0xf]
    %v374 = vld [vmem:[#allocation8 + $0xc4] sm:$0xf]
    %v375 = vld [vmem:[#allocation8 + $0xc8] sm:$0xf]
    %v376 = vld [vmem:[#allocation8 + $0xcc] sm:$0xf]
    %v377 = vld [vmem:[#allocation8 + $0xd0] sm:$0xf]
    %v378 = vld [vmem:[#allocation8 + $0xd4] sm:$0xf]
    %v379 = vld [vmem:[#allocation8 + $0xd8] sm:$0xf]
    %v380 = vld [vmem:[#allocation8 + $0xdc] sm:$0xf]
    %v381 = vld [vmem:[#allocation8 + $0xe0] sm:$0xf]
    %v382 = vld [vmem:[#allocation8 + $0xe4] sm:$0xf]
    %v383 = vld [vmem:[#allocation8 + $0xe8] sm:$0xf]
    %v384 = vld [vmem:[#allocation8 + $0xec] sm:$0xf]
    %v385 = vld [vmem:[#allocation8 + $0xf0] sm:$0xf]
    %v386 = vld [vmem:[#allocation8 + $0xf4] sm:$0xf]
    %v387 = vld [vmem:[#allocation8 + $0xf8] sm:$0xf]
    %v388 = vld [vmem:[#allocation8 + $0xfc] sm:$0xf]
    %v389 = vld [vmem:[#allocation8 + $0x100] sm:$0xf]
    %v390 = vld [vmem:[#allocation8 + $0x104] sm:$0xf]
    %v391 = vld [vmem:[#allocation8 + $0x108] sm:$0xf]
    %v392 = vld [vmem:[#allocation8 + $0x10c] sm:$0xf]
    %v393 = vld [vmem:[#allocation8 + $0x110] sm:$0xf]
    %v394 = vld [vmem:[#allocation8 + $0x114] sm:$0xf]
    %v395 = vld [vmem:[#allocation8 + $0x118] sm:$0xf]
    %v396 = vld [vmem:[#allocation8 + $0x11c] sm:$0xf]
    %v397 = vld [vmem:[#allocation8 + $0x120] sm:$0xf]
    %v398 = vld [vmem:[#allocation8 + $0x124] sm:$0xf]
    %v399 = vld [vmem:[#allocation8 + $0x128] sm:$0xf]
    %v400 = vld [vmem:[#allocation8 + $0x12c] sm:$0xf]
    %v401 = vld [vmem:[#allocation8 + $0x130] sm:$0xf]
    %v402 = vld [vmem:[#allocation8 + $0x134] sm:$0xf]
    %v403 = vld [vmem:[#allocation8 + $0x138] sm:$0xf]
    %v404 = vld [vmem:[#allocation8 + $0x13c] sm:$0xf]
    %v405 = vld [vmem:[#allocation8 + $0x140] sm:$0xf]
    %v406 = vld [vmem:[#allocation8 + $0x144] sm:$0xf]
    %v407 = vld [vmem:[#allocation8 + $0x148] sm:$0xf]
    %v408 = vld [vmem:[#allocation8 + $0x14c] sm:$0xf]
    %v409 = vld [vmem:[#allocation8 + $0x150] sm:$0xf]
    %v410 = vld [vmem:[#allocation8 + $0x154] sm:$0xf]
    %v411 = vld [vmem:[#allocation8 + $0x158] sm:$0xf]
    %v412 = vld [vmem:[#allocation8 + $0x15c] sm:$0xf]
    %v413 = vld [vmem:[#allocation8 + $0x160] sm:$0xf]
    %v414 = vld [vmem:[#allocation8 + $0x164] sm:$0xf]
    %v415 = vld [vmem:[#allocation8 + $0x168] sm:$0xf]
    %v416 = vld [vmem:[#allocation8 + $0x16c] sm:$0xf]
    %v417 = vld [vmem:[#allocation8 + $0x170] sm:$0xf]
    %v418 = vld [vmem:[#allocation8 + $0x174] sm:$0xf]
    %v419 = vld [vmem:[#allocation8 + $0x178] sm:$0xf]
    %v420 = vld [vmem:[#allocation8 + $0x17c] sm:$0xf]
    %v421 = vld [vmem:[#allocation8 + $0x180] sm:$0xf]
    %v422 = vld [vmem:[#allocation8 + $0x184] sm:$0xf]
    %v423 = vld [vmem:[#allocation8 + $0x188] sm:$0xf]
    %v424 = vld [vmem:[#allocation8 + $0x18c] sm:$0xf]
    %v425 = vld [vmem:[#allocation8 + $0x190] sm:$0xf]
    %v426 = vld [vmem:[#allocation8 + $0x194] sm:$0xf]
    %v427 = vld [vmem:[#allocation8 + $0x198] sm:$0xf]
    %v428 = vld [vmem:[#allocation8 + $0x19c] sm:$0xf]
    %v429 = vld [vmem:[#allocation8 + $0x1a0] sm:$0xf]
    %v430 = vld [vmem:[#allocation8 + $0x1a4] sm:$0xf]
    %v431 = vld [vmem:[#allocation8 + $0x1a8] sm:$0xf]
    %v432 = vld [vmem:[#allocation8 + $0x1ac] sm:$0xf]
    %v433 = vld [vmem:[#allocation8 + $0x1b0] sm:$0xf]
    %v434 = vld [vmem:[#allocation8 + $0x1b4] sm:$0xf]
    %v435 = vld [vmem:[#allocation8 + $0x1b8] sm:$0xf]
    %v436 = vld [vmem:[#allocation8 + $0x1bc] sm:$0xf]
    %v437 = vld [vmem:[#allocation17] sm:$0x1]
    %v438 = vperm.slane %v437, 0
    %v551 = vunpack.c.l.b16 %v325
    %v552 = vunpack.c.l.b16 %v326
    %v553 = vunpack.c.l.b16 %v327
    %v554 = vunpack.c.l.b16 %v328
    %v555 = vunpack.c.l.b16 %v329
    %v556 = vunpack.c.l.b16 %v330
    %v557 = vunpack.c.l.b16 %v331
    %v558 = vunpack.c.l.b16 %v332
    %v559 = vunpack.c.l.b16 %v333
    %v560 = vunpack.c.l.b16 %v334
    %v561 = vunpack.c.l.b16 %v335
    %v562 = vunpack.c.l.b16 %v336
    %v563 = vunpack.c.l.b16 %v337
    %v564 = vunpack.c.l.b16 %v338
    %v565 = vunpack.c.l.b16 %v339
    %v566 = vunpack.c.l.b16 %v340
    %v567 = vunpack.c.l.b16 %v341
    %v568 = vunpack.c.l.b16 %v342
    %v569 = vunpack.c.l.b16 %v343
    %v570 = vunpack.c.l.b16 %v344
    %v571 = vunpack.c.l.b16 %v345
    %v572 = vunpack.c.l.b16 %v346
    %v573 = vunpack.c.l.b16 %v347
    %v574 = vunpack.c.l.b16 %v348
    %v575 = vunpack.c.l.b16 %v349
    %v576 = vunpack.c.l.b16 %v350
    %v577 = vunpack.c.l.b16 %v351
    %v578 = vunpack.c.l.b16 %v352
    %v579 = vunpack.c.l.b16 %v353
    %v580 = vunpack.c.l.b16 %v354
    %v581 = vunpack.c.l.b16 %v355
    %v582 = vunpack.c.l.b16 %v356
    %v583 = vunpack.c.l.b16 %v357
    %v584 = vunpack.c.l.b16 %v358
    %v585 = vunpack.c.l.b16 %v359
    %v586 = vunpack.c.l.b16 %v360
    %v587 = vunpack.c.l.b16 %v361
    %v588 = vunpack.c.l.b16 %v362
    %v589 = vunpack.c.l.b16 %v363
    %v590 = vunpack.c.l.b16 %v364
    %v591 = vunpack.c.l.b16 %v365
    %v592 = vunpack.c.l.b16 %v366
    %v593 = vunpack.c.l.b16 %v367
    %v594 = vunpack.c.l.b16 %v368
    %v595 = vunpack.c.l.b16 %v369
    %v596 = vunpack.c.l.b16 %v370
    %v597 = vunpack.c.l.b16 %v371
    %v598 = vunpack.c.l.b16 %v372
    %v599 = vunpack.c.l.b16 %v373
    %v600 = vunpack.c.l.b16 %v374
    %v601 = vunpack.c.l.b16 %v375
    %v602 = vunpack.c.l.b16 %v376
    %v603 = vunpack.c.l.b16 %v377
    %v604 = vunpack.c.l.b16 %v378
    %v605 = vunpack.c.l.b16 %v379
    %v606 = vunpack.c.l.b16 %v380
    %v607 = vunpack.c.l.b16 %v381
    %v608 = vunpack.c.l.b16 %v382
    %v609 = vunpack.c.l.b16 %v383
    %v610 = vunpack.c.l.b16 %v384
    %v611 = vunpack.c.l.b16 %v385
    %v612 = vunpack.c.l.b16 %v386
    %v613 = vunpack.c.l.b16 %v387
    %v614 = vunpack.c.l.b16 %v388
    %v615 = vunpack.c.l.b16 %v389
    %v616 = vunpack.c.l.b16 %v390
    %v617 = vunpack.c.l.b16 %v391
    %v618 = vunpack.c.l.b16 %v392
    %v619 = vunpack.c.l.b16 %v393
    %v620 = vunpack.c.l.b16 %v394
    %v621 = vunpack.c.l.b16 %v395
    %v622 = vunpack.c.l.b16 %v396
    %v623 = vunpack.c.l.b16 %v397
    %v624 = vunpack.c.l.b16 %v398
    %v625 = vunpack.c.l.b16 %v399
    %v626 = vunpack.c.l.b16 %v400
    %v627 = vunpack.c.l.b16 %v401
    %v628 = vunpack.c.l.b16 %v402
    %v629 = vunpack.c.l.b16 %v403
    %v630 = vunpack.c.l.b16 %v404
    %v631 = vunpack.c.l.b16 %v405
    %v632 = vunpack.c.l.b16 %v406
    %v633 = vunpack.c.l.b16 %v407
    %v634 = vunpack.c.l.b16 %v408
    %v635 = vunpack.c.l.b16 %v409
    %v636 = vunpack.c.l.b16 %v410
    %v637 = vunpack.c.l.b16 %v411
    %v638 = vunpack.c.l.b16 %v412
    %v639 = vunpack.c.l.b16 %v413
    %v640 = vunpack.c.l.b16 %v414
    %v641 = vunpack.c.l.b16 %v415
    %v642 = vunpack.c.l.b16 %v416
    %v643 = vunpack.c.l.b16 %v417
    %v644 = vunpack.c.l.b16 %v418
    %v645 = vunpack.c.l.b16 %v419
    %v646 = vunpack.c.l.b16 %v420
    %v647 = vunpack.c.l.b16 %v421
    %v648 = vunpack.c.l.b16 %v422
    %v649 = vunpack.c.l.b16 %v423
    %v650 = vunpack.c.l.b16 %v424
    %v651 = vunpack.c.l.b16 %v425
    %v652 = vunpack.c.l.b16 %v426
    %v653 = vunpack.c.l.b16 %v427
    %v654 = vunpack.c.l.b16 %v428
    %v655 = vunpack.c.l.b16 %v429
    %v656 = vunpack.c.l.b16 %v430
    %v657 = vunpack.c.l.b16 %v431
    %v658 = vunpack.c.l.b16 %v432
    %v659 = vunpack.c.l.b16 %v433
    %v660 = vunpack.c.l.b16 %v434
    %v661 = vunpack.c.l.b16 %v435
    %v662 = vunpack.c.l.b16 %v436
    %v663 = vpack.c.b16 %v552, %v551
    %v664 = vpack.c.b16 %v554, %v553
    %v665 = vpack.c.b16 %v556, %v555
    %v666 = vpack.c.b16 %v558, %v557
    %v667 = vpack.c.b16 %v560, %v559
    %v668 = vpack.c.b16 %v562, %v561
    %v669 = vpack.c.b16 %v564, %v563
    %v670 = vpack.c.b16 %v566, %v565
    %v671 = vpack.c.b16 %v568, %v567
    %v672 = vpack.c.b16 %v570, %v569
    %v673 = vpack.c.b16 %v572, %v571
    %v674 = vpack.c.b16 %v574, %v573
    %v675 = vpack.c.b16 %v576, %v575
    %v676 = vpack.c.b16 %v578, %v577
    %v677 = vpack.c.b16 %v580, %v579
    %v678 = vpack.c.b16 %v582, %v581
    %v679 = vpack.c.b16 %v584, %v583
    %v680 = vpack.c.b16 %v586, %v585
    %v681 = vpack.c.b16 %v588, %v587
    %v682 = vpack.c.b16 %v590, %v589
    %v683 = vpack.c.b16 %v592, %v591
    %v684 = vpack.c.b16 %v594, %v593
    %v685 = vpack.c.b16 %v596, %v595
    %v686 = vpack.c.b16 %v598, %v597
    %v687 = vpack.c.b16 %v600, %v599
    %v688 = vpack.c.b16 %v602, %v601
    %v689 = vpack.c.b16 %v604, %v603
    %v690 = vpack.c.b16 %v606, %v605
    %v691 = vpack.c.b16 %v608, %v607
    %v692 = vpack.c.b16 %v610, %v609
    %v693 = vpack.c.b16 %v612, %v611
    %v694 = vpack.c.b16 %v614, %v613
    %v695 = vpack.c.b16 %v616, %v615
    %v696 = vpack.c.b16 %v618, %v617
    %v697 = vpack.c.b16 %v620, %v619
    %v698 = vpack.c.b16 %v622, %v621
    %v699 = vpack.c.b16 %v624, %v623
    %v700 = vpack.c.b16 %v626, %v625
    %v701 = vpack.c.b16 %v628, %v627
    %v702 = vpack.c.b16 %v630, %v629
    %v703 = vpack.c.b16 %v632, %v631
    %v704 = vpack.c.b16 %v634, %v633
    %v705 = vpack.c.b16 %v636, %v635
    %v706 = vpack.c.b16 %v638, %v637
    %v707 = vpack.c.b16 %v640, %v639
    %v708 = vpack.c.b16 %v642, %v641
    %v709 = vpack.c.b16 %v644, %v643
    %v710 = vpack.c.b16 %v646, %v645
    %v711 = vpack.c.b16 %v648, %v647
    %v712 = vpack.c.b16 %v650, %v649
    %v713 = vpack.c.b16 %v652, %v651
    %v714 = vpack.c.b16 %v654, %v653
    %v715 = vpack.c.b16 %v656, %v655
    %v716 = vpack.c.b16 %v658, %v657
    %v717 = vpack.c.b16 %v660, %v659
    %v718 = vpack.c.b16 %v662, %v661
    %775 = vmatpush.bf16.msra.mxu0 %v670
    %776 = vmatpush.bf16.msra.mxu0 %v669
    %777 = vmatpush.bf16.msra.mxu0 %v668
    %778 = vmatpush.bf16.msra.mxu0 %v667
    %779 = vmatpush.bf16.msra.mxu0 %v666
    %780 = vmatpush.bf16.msra.mxu0 %v665
    %781 = vmatpush.bf16.msra.mxu0 %v664
    %782 = vmatpush.bf16.msra.mxu0 %v663
    %783 = vmatmul.bf16.gmra.mxu0 %v269
    %v784 = vpop.f32.mrf.mxu0
    %v785 = vadd.f32 %v438, %v784
    %v786 = vpop.f32.mrf.mxu0
    %v787 = vadd.f32 %v438, %v786
    %788 = vmatmul.bf16.gmra.mxu0 %v276
    %v789 = vpop.f32.mrf.mxu0
    %v790 = vadd.f32 %v438, %v789
    %v791 = vpop.f32.mrf.mxu0
    %v792 = vadd.f32 %v438, %v791
    %793 = vmatmul.bf16.gmra.mxu0 %v283
    %v794 = vpop.f32.mrf.mxu0
    %v795 = vadd.f32 %v438, %v794
    %v796 = vpop.f32.mrf.mxu0
    %v797 = vadd.f32 %v438, %v796
    %798 = vmatmul.bf16.gmra.mxu0 %v290
    %v799 = vpop.f32.mrf.mxu0
    %v800 = vadd.f32 %v438, %v799
    %v801 = vpop.f32.mrf.mxu0
    %v802 = vadd.f32 %v438, %v801
    %803 = vmatmul.bf16.gmra.mxu0 %v297
    %v804 = vpop.f32.mrf.mxu0
    %v805 = vadd.f32 %v438, %v804
    %v806 = vpop.f32.mrf.mxu0
    %v807 = vadd.f32 %v438, %v806
    %808 = vmatmul.bf16.gmra.mxu0 %v304
    %v809 = vpop.f32.mrf.mxu0
    %v810 = vadd.f32 %v438, %v809
    %v811 = vpop.f32.mrf.mxu0
    %v812 = vadd.f32 %v438, %v811
    %813 = vmatmul.bf16.gmra.mxu0 %v311
    %v814 = vpop.f32.mrf.mxu0
    %v815 = vadd.f32 %v438, %v814
    %v816 = vpop.f32.mrf.mxu0
    %v817 = vadd.f32 %v438, %v816
    %818 = vmatmul.bf16.gmra.mxu0 %v318
    %v819 = vpop.f32.mrf.mxu0
    %v820 = vadd.f32 %v438, %v819
    %v821 = vpop.f32.mrf.mxu0
    %v822 = vadd.f32 %v438, %v821
    %823 = vdwg.mxu0
    %824 = vmatpush.bf16.msra.mxu0 %v678
    %825 = vmatpush.bf16.msra.mxu0 %v677
    %826 = vmatpush.bf16.msra.mxu0 %v676
    %827 = vmatpush.bf16.msra.mxu0 %v675
    %828 = vmatpush.bf16.msra.mxu0 %v674
    %829 = vmatpush.bf16.msra.mxu0 %v673
    %830 = vmatpush.bf16.msra.mxu0 %v672
    %831 = vmatpush.bf16.msra.mxu0 %v671
    %832 = vmatmul.bf16.gmra.mxu0 %v270
    %v833 = vpop.f32.mrf.mxu0
    %v834 = vadd.f32 %v785, %v833
    %v835 = vpop.f32.mrf.mxu0
    %v836 = vadd.f32 %v787, %v835
    %837 = vmatmul.bf16.gmra.mxu0 %v277
    %v838 = vpop.f32.mrf.mxu0
    %v839 = vadd.f32 %v790, %v838
    %v840 = vpop.f32.mrf.mxu0
    %v841 = vadd.f32 %v792, %v840
    %842 = vmatmul.bf16.gmra.mxu0 %v284
    %v843 = vpop.f32.mrf.mxu0
    %v844 = vadd.f32 %v795, %v843
    %v845 = vpop.f32.mrf.mxu0
    %v846 = vadd.f32 %v797, %v845
    %847 = vmatmul.bf16.gmra.mxu0 %v291
    %v848 = vpop.f32.mrf.mxu0
    %v849 = vadd.f32 %v800, %v848
    %v850 = vpop.f32.mrf.mxu0
    %v851 = vadd.f32 %v802, %v850
    %852 = vmatmul.bf16.gmra.mxu0 %v298
    %v853 = vpop.f32.mrf.mxu0
    %v854 = vadd.f32 %v805, %v853
    %v855 = vpop.f32.mrf.mxu0
    %v856 = vadd.f32 %v807, %v855
    %857 = vmatmul.bf16.gmra.mxu0 %v305
    %v858 = vpop.f32.mrf.mxu0
    %v859 = vadd.f32 %v810, %v858
    %v860 = vpop.f32.mrf.mxu0
    %v861 = vadd.f32 %v812, %v860
    %862 = vmatmul.bf16.gmra.mxu0 %v312
    %v863 = vpop.f32.mrf.mxu0
    %v864 = vadd.f32 %v815, %v863
    %v865 = vpop.f32.mrf.mxu0
    %v866 = vadd.f32 %v817, %v865
    %867 = vmatmul.bf16.gmra.mxu0 %v319
    %v868 = vpop.f32.mrf.mxu0
    %v869 = vadd.f32 %v820, %v868
    %v870 = vpop.f32.mrf.mxu0
    %v871 = vadd.f32 %v822, %v870
    %872 = vdwg.mxu0
    %873 = vmatpush.bf16.msra.mxu0 %v686
    %874 = vmatpush.bf16.msra.mxu0 %v685
    %875 = vmatpush.bf16.msra.mxu0 %v684
    %876 = vmatpush.bf16.msra.mxu0 %v683
    %877 = vmatpush.bf16.msra.mxu0 %v682
    %878 = vmatpush.bf16.msra.mxu0 %v681
    %879 = vmatpush.bf16.msra.mxu0 %v680
    %880 = vmatpush.bf16.msra.mxu0 %v679
    %881 = vmatmul.bf16.gmra.mxu0 %v271
    %v882 = vpop.f32.mrf.mxu0
    %v883 = vadd.f32 %v834, %v882
    %v884 = vpop.f32.mrf.mxu0
    %v885 = vadd.f32 %v836, %v884
    %886 = vmatmul.bf16.gmra.mxu0 %v278
    %v887 = vpop.f32.mrf.mxu0
    %v888 = vadd.f32 %v839, %v887
    %v889 = vpop.f32.mrf.mxu0
    %v890 = vadd.f32 %v841, %v889
    %891 = vmatmul.bf16.gmra.mxu0 %v285
    %v892 = vpop.f32.mrf.mxu0
    %v893 = vadd.f32 %v844, %v892
    %v894 = vpop.f32.mrf.mxu0
    %v895 = vadd.f32 %v846, %v894
    %896 = vmatmul.bf16.gmra.mxu0 %v292
    %v897 = vpop.f32.mrf.mxu0
    %v898 = vadd.f32 %v849, %v897
    %v899 = vpop.f32.mrf.mxu0
    %v900 = vadd.f32 %v851, %v899
    %901 = vmatmul.bf16.gmra.mxu0 %v299
    %v902 = vpop.f32.mrf.mxu0
    %v903 = vadd.f32 %v854, %v902
    %v904 = vpop.f32.mrf.mxu0
    %v905 = vadd.f32 %v856, %v904
    %906 = vmatmul.bf16.gmra.mxu0 %v306
    %v907 = vpop.f32.mrf.mxu0
    %v908 = vadd.f32 %v859, %v907
    %v909 = vpop.f32.mrf.mxu0
    %v910 = vadd.f32 %v861, %v909
    %911 = vmatmul.bf16.gmra.mxu0 %v313
    %v912 = vpop.f32.mrf.mxu0
    %v913 = vadd.f32 %v864, %v912
    %v914 = vpop.f32.mrf.mxu0
    %v915 = vadd.f32 %v866, %v914
    %916 = vmatmul.bf16.gmra.mxu0 %v320
    %v917 = vpop.f32.mrf.mxu0
    %v918 = vadd.f32 %v869, %v917
    %v919 = vpop.f32.mrf.mxu0
    %v920 = vadd.f32 %v871, %v919
    %921 = vdwg.mxu0
    %922 = vmatpush.bf16.msra.mxu0 %v694
    %923 = vmatpush.bf16.msra.mxu0 %v693
    %924 = vmatpush.bf16.msra.mxu0 %v692
    %925 = vmatpush.bf16.msra.mxu0 %v691
    %926 = vmatpush.bf16.msra.mxu0 %v690
    %927 = vmatpush.bf16.msra.mxu0 %v689
    %928 = vmatpush.bf16.msra.mxu0 %v688
    %929 = vmatpush.bf16.msra.mxu0 %v687
    %930 = vmatmul.bf16.gmra.mxu0 %v272
    %v931 = vpop.f32.mrf.mxu0
    %v932 = vadd.f32 %v883, %v931
    %v933 = vpop.f32.mrf.mxu0
    %v934 = vadd.f32 %v885, %v933
    %935 = vmatmul.bf16.gmra.mxu0 %v279
    %v936 = vpop.f32.mrf.mxu0
    %v937 = vadd.f32 %v888, %v936
    %v938 = vpop.f32.mrf.mxu0
    %v939 = vadd.f32 %v890, %v938
    %940 = vmatmul.bf16.gmra.mxu0 %v286
    %v941 = vpop.f32.mrf.mxu0
    %v942 = vadd.f32 %v893, %v941
    %v943 = vpop.f32.mrf.mxu0
    %v944 = vadd.f32 %v895, %v943
    %945 = vmatmul.bf16.gmra.mxu0 %v293
    %v946 = vpop.f32.mrf.mxu0
    %v947 = vadd.f32 %v898, %v946
    %v948 = vpop.f32.mrf.mxu0
    %v949 = vadd.f32 %v900, %v948
    %950 = vmatmul.bf16.gmra.mxu0 %v300
    %v951 = vpop.f32.mrf.mxu0
    %v952 = vadd.f32 %v903, %v951
    %v953 = vpop.f32.mrf.mxu0
    %v954 = vadd.f32 %v905, %v953
    %955 = vmatmul.bf16.gmra.mxu0 %v307
    %v956 = vpop.f32.mrf.mxu0
    %v957 = vadd.f32 %v908, %v956
    %v958 = vpop.f32.mrf.mxu0
    %v959 = vadd.f32 %v910, %v958
    %960 = vmatmul.bf16.gmra.mxu0 %v314
    %v961 = vpop.f32.mrf.mxu0
    %v962 = vadd.f32 %v913, %v961
    %v963 = vpop.f32.mrf.mxu0
    %v964 = vadd.f32 %v915, %v963
    %965 = vmatmul.bf16.gmra.mxu0 %v321
    %v966 = vpop.f32.mrf.mxu0
    %v967 = vadd.f32 %v918, %v966
    %v968 = vpop.f32.mrf.mxu0
    %v969 = vadd.f32 %v920, %v968
    %970 = vdwg.mxu0
    %971 = vmatpush.bf16.msra.mxu0 %v702
    %972 = vmatpush.bf16.msra.mxu0 %v701
    %973 = vmatpush.bf16.msra.mxu0 %v700
    %974 = vmatpush.bf16.msra.mxu0 %v699
    %975 = vmatpush.bf16.msra.mxu0 %v698
    %976 = vmatpush.bf16.msra.mxu0 %v697
    %977 = vmatpush.bf16.msra.mxu0 %v696
    %978 = vmatpush.bf16.msra.mxu0 %v695
    %979 = vmatmul.bf16.gmra.mxu0 %v273
    %v980 = vpop.f32.mrf.mxu0
    %v981 = vadd.f32 %v932, %v980
    %v982 = vpop.f32.mrf.mxu0
    %v983 = vadd.f32 %v934, %v982
    %984 = vmatmul.bf16.gmra.mxu0 %v280
    %v985 = vpop.f32.mrf.mxu0
    %v986 = vadd.f32 %v937, %v985
    %v987 = vpop.f32.mrf.mxu0
    %v988 = vadd.f32 %v939, %v987
    %989 = vmatmul.bf16.gmra.mxu0 %v287
    %v990 = vpop.f32.mrf.mxu0
    %v991 = vadd.f32 %v942, %v990
    %v992 = vpop.f32.mrf.mxu0
    %v993 = vadd.f32 %v944, %v992
    %994 = vmatmul.bf16.gmra.mxu0 %v294
    %v995 = vpop.f32.mrf.mxu0
    %v996 = vadd.f32 %v947, %v995
    %v997 = vpop.f32.mrf.mxu0
    %v998 = vadd.f32 %v949, %v997
    %999 = vmatmul.bf16.gmra.mxu0 %v301
    %v1000 = vpop.f32.mrf.mxu0
    %v1001 = vadd.f32 %v952, %v1000
    %v1002 = vpop.f32.mrf.mxu0
    %v1003 = vadd.f32 %v954, %v1002
    %1004 = vmatmul.bf16.gmra.mxu0 %v308
    %v1005 = vpop.f32.mrf.mxu0
    %v1006 = vadd.f32 %v957, %v1005
    %v1007 = vpop.f32.mrf.mxu0
    %v1008 = vadd.f32 %v959, %v1007
    %1009 = vmatmul.bf16.gmra.mxu0 %v315
    %v1010 = vpop.f32.mrf.mxu0
    %v1011 = vadd.f32 %v962, %v1010
    %v1012 = vpop.f32.mrf.mxu0
    %v1013 = vadd.f32 %v964, %v1012
    %1014 = vmatmul.bf16.gmra.mxu0 %v322
    %v1015 = vpop.f32.mrf.mxu0
    %v1016 = vadd.f32 %v967, %v1015
    %v1017 = vpop.f32.mrf.mxu0
    %v1018 = vadd.f32 %v969, %v1017
    %1019 = vdwg.mxu0
    %1020 = vmatpush.bf16.msra.mxu0 %v710
    %1021 = vmatpush.bf16.msra.mxu0 %v709
    %1022 = vmatpush.bf16.msra.mxu0 %v708
    %1023 = vmatpush.bf16.msra.mxu0 %v707
    %1024 = vmatpush.bf16.msra.mxu0 %v706
    %1025 = vmatpush.bf16.msra.mxu0 %v705
    %1026 = vmatpush.bf16.msra.mxu0 %v704
    %1027 = vmatpush.bf16.msra.mxu0 %v703
    %1028 = vmatmul.bf16.gmra.mxu0 %v274
    %v1029 = vpop.f32.mrf.mxu0
    %v1030 = vadd.f32 %v981, %v1029
    %v1031 = vpop.f32.mrf.mxu0
    %v1032 = vadd.f32 %v983, %v1031
    %1033 = vmatmul.bf16.gmra.mxu0 %v281
    %v1034 = vpop.f32.mrf.mxu0
    %v1035 = vadd.f32 %v986, %v1034
    %v1036 = vpop.f32.mrf.mxu0
    %v1037 = vadd.f32 %v988, %v1036
    %1038 = vmatmul.bf16.gmra.mxu0 %v288
    %v1039 = vpop.f32.mrf.mxu0
    %v1040 = vadd.f32 %v991, %v1039
    %v1041 = vpop.f32.mrf.mxu0
    %v1042 = vadd.f32 %v993, %v1041
    %1043 = vmatmul.bf16.gmra.mxu0 %v295
    %v1044 = vpop.f32.mrf.mxu0
    %v1045 = vadd.f32 %v996, %v1044
    %v1046 = vpop.f32.mrf.mxu0
    %v1047 = vadd.f32 %v998, %v1046
    %1048 = vmatmul.bf16.gmra.mxu0 %v302
    %v1049 = vpop.f32.mrf.mxu0
    %v1050 = vadd.f32 %v1001, %v1049
    %v1051 = vpop.f32.mrf.mxu0
    %v1052 = vadd.f32 %v1003, %v1051
    %1053 = vmatmul.bf16.gmra.mxu0 %v309
    %v1054 = vpop.f32.mrf.mxu0
    %v1055 = vadd.f32 %v1006, %v1054
    %v1056 = vpop.f32.mrf.mxu0
    %v1057 = vadd.f32 %v1008, %v1056
    %1058 = vmatmul.bf16.gmra.mxu0 %v316
    %v1059 = vpop.f32.mrf.mxu0
    %v1060 = vadd.f32 %v1011, %v1059
    %v1061 = vpop.f32.mrf.mxu0
    %v1062 = vadd.f32 %v1013, %v1061
    %1063 = vmatmul.bf16.gmra.mxu0 %v323
    %v1064 = vpop.f32.mrf.mxu0
    %v1065 = vadd.f32 %v1016, %v1064
    %v1066 = vpop.f32.mrf.mxu0
    %v1067 = vadd.f32 %v1018, %v1066
    %1068 = vdwg.mxu0
    %1069 = vmatpush.bf16.msra.mxu0 %v718
    %1070 = vmatpush.bf16.msra.mxu0 %v717
    %1071 = vmatpush.bf16.msra.mxu0 %v716
    %1072 = vmatpush.bf16.msra.mxu0 %v715
    %1073 = vmatpush.bf16.msra.mxu0 %v714
    %1074 = vmatpush.bf16.msra.mxu0 %v713
    %1075 = vmatpush.bf16.msra.mxu0 %v712
    %1076 = vmatpush.bf16.msra.mxu0 %v711
    %1077 = vmatmul.bf16.gmra.mxu0 %v275
    %v1078 = vpop.f32.mrf.mxu0
    %v1079 = vadd.f32 %v1030, %v1078
    %v1080 = vpop.f32.mrf.mxu0
    %v1081 = vadd.f32 %v1032, %v1080
    %1082 = vmatmul.bf16.gmra.mxu0 %v282
    %v1083 = vpop.f32.mrf.mxu0
    %v1084 = vadd.f32 %v1035, %v1083
    %v1085 = vpop.f32.mrf.mxu0
    %v1086 = vadd.f32 %v1037, %v1085
    %1087 = vmatmul.bf16.gmra.mxu0 %v289
    %v1088 = vpop.f32.mrf.mxu0
    %v1089 = vadd.f32 %v1040, %v1088
    %v1090 = vpop.f32.mrf.mxu0
    %v1091 = vadd.f32 %v1042, %v1090
    %1092 = vmatmul.bf16.gmra.mxu0 %v296
    %v1093 = vpop.f32.mrf.mxu0
    %v1094 = vadd.f32 %v1045, %v1093
    %v1095 = vpop.f32.mrf.mxu0
    %v1096 = vadd.f32 %v1047, %v1095
    %1097 = vmatmul.bf16.gmra.mxu0 %v303
    %v1098 = vpop.f32.mrf.mxu0
    %v1099 = vadd.f32 %v1050, %v1098
    %v1100 = vpop.f32.mrf.mxu0
    %v1101 = vadd.f32 %v1052, %v1100
    %1102 = vmatmul.bf16.gmra.mxu0 %v310
    %v1103 = vpop.f32.mrf.mxu0
    %v1104 = vadd.f32 %v1055, %v1103
    %v1105 = vpop.f32.mrf.mxu0
    %v1106 = vadd.f32 %v1057, %v1105
    %1107 = vmatmul.bf16.gmra.mxu0 %v317
    %v1108 = vpop.f32.mrf.mxu0
    %v1109 = vadd.f32 %v1060, %v1108
    %v1110 = vpop.f32.mrf.mxu0
    %v1111 = vadd.f32 %v1062, %v1110
    %1112 = vmatmul.bf16.gmra.mxu0 %v324
    %v1113 = vpop.f32.mrf.mxu0
    %v1114 = vadd.f32 %v1065, %v1113
    %v1115 = vpop.f32.mrf.mxu0
    %v1116 = vadd.f32 %v1067, %v1115
    %1117 = vdwg.mxu0
    %v1118 = vmax.f32 %v1079, 0.0
    %v1119 = vmax.f32 %v1081, 0.0
    %v1120 = vmax.f32 %v1084, 0.0
    %v1121 = vmax.f32 %v1086, 0.0
    %v1122 = vmax.f32 %v1089, 0.0
    %v1123 = vmax.f32 %v1091, 0.0
    %v1124 = vmax.f32 %v1094, 0.0
    %v1125 = vmax.f32 %v1096, 0.0
    %v1126 = vmax.f32 %v1099, 0.0
    %v1127 = vmax.f32 %v1101, 0.0
    %v1128 = vmax.f32 %v1104, 0.0
    %v1129 = vmax.f32 %v1106, 0.0
    %v1130 = vmax.f32 %v1109, 0.0
    %v1131 = vmax.f32 %v1111, 0.0
    %v1132 = vmax.f32 %v1114, 0.0
    %v1133 = vmax.f32 %v1116, 0.0
    %v1134 = vld [vmem:[#allocation10] sm:$0xf]
    %v1135 = vld [vmem:[#allocation10 + $0x4] sm:$0xf]
    %v1136 = vld [vmem:[#allocation10 + $0x8] sm:$0xf]
    %v1137 = vld [vmem:[#allocation10 + $0xc] sm:$0xf]
    %v1138 = vld [vmem:[#allocation10 + $0x10] sm:$0xf]
    %v1139 = vld [vmem:[#allocation10 + $0x14] sm:$0xf]
    %v1140 = vld [vmem:[#allocation10 + $0x18] sm:$0xf]
    %v1141 = vld [vmem:[#allocation10 + $0x1c] sm:$0xf]
    %v1142 = vld [vmem:[#allocation10 + $0x20] sm:$0xf]
    %v1143 = vld [vmem:[#allocation10 + $0x24] sm:$0xf]
    %v1144 = vld [vmem:[#allocation10 + $0x28] sm:$0xf]
    %v1145 = vld [vmem:[#allocation10 + $0x2c] sm:$0xf]
    %v1146 = vld [vmem:[#allocation10 + $0x30] sm:$0xf]
    %v1147 = vld [vmem:[#allocation10 + $0x34] sm:$0xf]
    %v1148 = vld [vmem:[#allocation10 + $0x38] sm:$0xf]
    %v1149 = vld [vmem:[#allocation10 + $0x3c] sm:$0xf]
    %v1150 = vld [vmem:[#allocation10 + $0x40] sm:$0xf]
    %v1151 = vld [vmem:[#allocation10 + $0x44] sm:$0xf]
    %v1152 = vld [vmem:[#allocation10 + $0x48] sm:$0xf]
    %v1153 = vld [vmem:[#allocation10 + $0x4c] sm:$0xf]
    %v1154 = vld [vmem:[#allocation10 + $0x50] sm:$0xf]
    %v1155 = vld [vmem:[#allocation10 + $0x54] sm:$0xf]
    %v1156 = vld [vmem:[#allocation10 + $0x58] sm:$0xf]
    %v1157 = vld [vmem:[#allocation10 + $0x5c] sm:$0xf]
    %v1158 = vld [vmem:[#allocation10 + $0x60] sm:$0xf]
    %v1159 = vld [vmem:[#allocation10 + $0x64] sm:$0xf]
    %v1160 = vld [vmem:[#allocation10 + $0x68] sm:$0xf]
    %v1161 = vld [vmem:[#allocation10 + $0x6c] sm:$0xf]
    %v1162 = vld [vmem:[#allocation10 + $0x70] sm:$0xf]
    %v1163 = vld [vmem:[#allocation10 + $0x74] sm:$0xf]
    %v1164 = vld [vmem:[#allocation10 + $0x78] sm:$0xf]
    %v1165 = vld [vmem:[#allocation10 + $0x7c] sm:$0xf]
    %v1166 = vld [vmem:[#allocation10 + $0x80] sm:$0xf]
    %v1167 = vld [vmem:[#allocation10 + $0x84] sm:$0xf]
    %v1168 = vld [vmem:[#allocation10 + $0x88] sm:$0xf]
    %v1169 = vld [vmem:[#allocation10 + $0x8c] sm:$0xf]
    %v1170 = vld [vmem:[#allocation10 + $0x90] sm:$0xf]
    %v1171 = vld [vmem:[#allocation10 + $0x94] sm:$0xf]
    %v1172 = vld [vmem:[#allocation10 + $0x98] sm:$0xf]
    %v1173 = vld [vmem:[#allocation10 + $0x9c] sm:$0xf]
    %v1174 = vld [vmem:[#allocation10 + $0xa0] sm:$0xf]
    %v1175 = vld [vmem:[#allocation10 + $0xa4] sm:$0xf]
    %v1176 = vld [vmem:[#allocation10 + $0xa8] sm:$0xf]
    %v1177 = vld [vmem:[#allocation10 + $0xac] sm:$0xf]
    %v1178 = vld [vmem:[#allocation10 + $0xb0] sm:$0xf]
    %v1179 = vld [vmem:[#allocation10 + $0xb4] sm:$0xf]
    %v1180 = vld [vmem:[#allocation10 + $0xb8] sm:$0xf]
    %v1181 = vld [vmem:[#allocation10 + $0xbc] sm:$0xf]
    %v1182 = vld [vmem:[#allocation10 + $0xc0] sm:$0xf]
    %v1183 = vld [vmem:[#allocation10 + $0xc4] sm:$0xf]
    %v1184 = vld [vmem:[#allocation10 + $0xc8] sm:$0xf]
    %v1185 = vld [vmem:[#allocation10 + $0xcc] sm:$0xf]
    %v1186 = vld [vmem:[#allocation10 + $0xd0] sm:$0xf]
    %v1187 = vld [vmem:[#allocation10 + $0xd4] sm:$0xf]
    %v1188 = vld [vmem:[#allocation10 + $0xd8] sm:$0xf]
    %v1189 = vld [vmem:[#allocation10 + $0xdc] sm:$0xf]
    %v1190 = vld [vmem:[#allocation10 + $0xe0] sm:$0xf]
    %v1191 = vld [vmem:[#allocation10 + $0xe4] sm:$0xf]
    %v1192 = vld [vmem:[#allocation10 + $0xe8] sm:$0xf]
    %v1193 = vld [vmem:[#allocation10 + $0xec] sm:$0xf]
    %v1194 = vld [vmem:[#allocation10 + $0xf0] sm:$0xf]
    %v1195 = vld [vmem:[#allocation10 + $0xf4] sm:$0xf]
    %v1196 = vld [vmem:[#allocation10 + $0xf8] sm:$0xf]
    %v1197 = vld [vmem:[#allocation10 + $0xfc] sm:$0xf]
    %v1198 = vld [vmem:[#allocation10 + $0x100] sm:$0xf]
    %v1199 = vld [vmem:[#allocation10 + $0x104] sm:$0xf]
    %v1200 = vld [vmem:[#allocation10 + $0x108] sm:$0xf]
    %v1201 = vld [vmem:[#allocation10 + $0x10c] sm:$0xf]
    %v1202 = vld [vmem:[#allocation10 + $0x110] sm:$0xf]
    %v1203 = vld [vmem:[#allocation10 + $0x114] sm:$0xf]
    %v1204 = vld [vmem:[#allocation10 + $0x118] sm:$0xf]
    %v1205 = vld [vmem:[#allocation10 + $0x11c] sm:$0xf]
    %v1206 = vld [vmem:[#allocation10 + $0x120] sm:$0xf]
    %v1207 = vld [vmem:[#allocation10 + $0x124] sm:$0xf]
    %v1208 = vld [vmem:[#allocation10 + $0x128] sm:$0xf]
    %v1209 = vld [vmem:[#allocation10 + $0x12c] sm:$0xf]
    %v1210 = vld [vmem:[#allocation10 + $0x130] sm:$0xf]
    %v1211 = vld [vmem:[#allocation10 + $0x134] sm:$0xf]
    %v1212 = vld [vmem:[#allocation10 + $0x138] sm:$0xf]
    %v1213 = vld [vmem:[#allocation10 + $0x13c] sm:$0xf]
    %v1214 = vld [vmem:[#allocation10 + $0x140] sm:$0xf]
    %v1215 = vld [vmem:[#allocation10 + $0x144] sm:$0xf]
    %v1216 = vld [vmem:[#allocation10 + $0x148] sm:$0xf]
    %v1217 = vld [vmem:[#allocation10 + $0x14c] sm:$0xf]
    %v1218 = vld [vmem:[#allocation10 + $0x150] sm:$0xf]
    %v1219 = vld [vmem:[#allocation10 + $0x154] sm:$0xf]
    %v1220 = vld [vmem:[#allocation10 + $0x158] sm:$0xf]
    %v1221 = vld [vmem:[#allocation10 + $0x15c] sm:$0xf]
    %v1222 = vld [vmem:[#allocation10 + $0x160] sm:$0xf]
    %v1223 = vld [vmem:[#allocation10 + $0x164] sm:$0xf]
    %v1224 = vld [vmem:[#allocation10 + $0x168] sm:$0xf]
    %v1225 = vld [vmem:[#allocation10 + $0x16c] sm:$0xf]
    %v1226 = vld [vmem:[#allocation10 + $0x170] sm:$0xf]
    %v1227 = vld [vmem:[#allocation10 + $0x174] sm:$0xf]
    %v1228 = vld [vmem:[#allocation10 + $0x178] sm:$0xf]
    %v1229 = vld [vmem:[#allocation10 + $0x17c] sm:$0xf]
    %v1230 = vld [vmem:[#allocation10 + $0x180] sm:$0xf]
    %v1231 = vld [vmem:[#allocation10 + $0x184] sm:$0xf]
    %v1232 = vld [vmem:[#allocation10 + $0x188] sm:$0xf]
    %v1233 = vld [vmem:[#allocation10 + $0x18c] sm:$0xf]
    %v1234 = vld [vmem:[#allocation10 + $0x190] sm:$0xf]
    %v1235 = vld [vmem:[#allocation10 + $0x194] sm:$0xf]
    %v1236 = vld [vmem:[#allocation10 + $0x198] sm:$0xf]
    %v1237 = vld [vmem:[#allocation10 + $0x19c] sm:$0xf]
    %v1238 = vld [vmem:[#allocation10 + $0x1a0] sm:$0xf]
    %v1239 = vld [vmem:[#allocation10 + $0x1a4] sm:$0xf]
    %v1240 = vld [vmem:[#allocation10 + $0x1a8] sm:$0xf]
    %v1241 = vld [vmem:[#allocation10 + $0x1ac] sm:$0xf]
    %v1242 = vld [vmem:[#allocation10 + $0x1b0] sm:$0xf]
    %v1243 = vld [vmem:[#allocation10 + $0x1b4] sm:$0xf]
    %v1244 = vld [vmem:[#allocation10 + $0x1b8] sm:$0xf]
    %v1245 = vld [vmem:[#allocation10 + $0x1bc] sm:$0xf]
    %v1246 = vld [vmem:[#allocation17 + $0x1] sm:$0x1]
    %v1247 = vperm.slane %v1246, 0
    %v1360 = vunpack.c.l.b16 %v1134
    %v1361 = vunpack.c.l.b16 %v1135
    %v1362 = vunpack.c.l.b16 %v1136
    %v1363 = vunpack.c.l.b16 %v1137
    %v1364 = vunpack.c.l.b16 %v1138
    %v1365 = vunpack.c.l.b16 %v1139
    %v1366 = vunpack.c.l.b16 %v1140
    %v1367 = vunpack.c.l.b16 %v1141
    %v1368 = vunpack.c.l.b16 %v1142
    %v1369 = vunpack.c.l.b16 %v1143
    %v1370 = vunpack.c.l.b16 %v1144
    %v1371 = vunpack.c.l.b16 %v1145
    %v1372 = vunpack.c.l.b16 %v1146
    %v1373 = vunpack.c.l.b16 %v1147
    %v1374 = vunpack.c.l.b16 %v1148
    %v1375 = vunpack.c.l.b16 %v1149
    %v1376 = vunpack.c.l.b16 %v1150
    %v1377 = vunpack.c.l.b16 %v1151
    %v1378 = vunpack.c.l.b16 %v1152
    %v1379 = vunpack.c.l.b16 %v1153
    %v1380 = vunpack.c.l.b16 %v1154
    %v1381 = vunpack.c.l.b16 %v1155
    %v1382 = vunpack.c.l.b16 %v1156
    %v1383 = vunpack.c.l.b16 %v1157
    %v1384 = vunpack.c.l.b16 %v1158
    %v1385 = vunpack.c.l.b16 %v1159
    %v1386 = vunpack.c.l.b16 %v1160
    %v1387 = vunpack.c.l.b16 %v1161
    %v1388 = vunpack.c.l.b16 %v1162
    %v1389 = vunpack.c.l.b16 %v1163
    %v1390 = vunpack.c.l.b16 %v1164
    %v1391 = vunpack.c.l.b16 %v1165
    %v1392 = vunpack.c.l.b16 %v1166
    %v1393 = vunpack.c.l.b16 %v1167
    %v1394 = vunpack.c.l.b16 %v1168
    %v1395 = vunpack.c.l.b16 %v1169
    %v1396 = vunpack.c.l.b16 %v1170
    %v1397 = vunpack.c.l.b16 %v1171
    %v1398 = vunpack.c.l.b16 %v1172
    %v1399 = vunpack.c.l.b16 %v1173
    %v1400 = vunpack.c.l.b16 %v1174
    %v1401 = vunpack.c.l.b16 %v1175
    %v1402 = vunpack.c.l.b16 %v1176
    %v1403 = vunpack.c.l.b16 %v1177
    %v1404 = vunpack.c.l.b16 %v1178
    %v1405 = vunpack.c.l.b16 %v1179
    %v1406 = vunpack.c.l.b16 %v1180
    %v1407 = vunpack.c.l.b16 %v1181
    %v1408 = vunpack.c.l.b16 %v1182
    %v1409 = vunpack.c.l.b16 %v1183
    %v1410 = vunpack.c.l.b16 %v1184
    %v1411 = vunpack.c.l.b16 %v1185
    %v1412 = vunpack.c.l.b16 %v1186
    %v1413 = vunpack.c.l.b16 %v1187
    %v1414 = vunpack.c.l.b16 %v1188
    %v1415 = vunpack.c.l.b16 %v1189
    %v1416 = vunpack.c.l.b16 %v1190
    %v1417 = vunpack.c.l.b16 %v1191
    %v1418 = vunpack.c.l.b16 %v1192
    %v1419 = vunpack.c.l.b16 %v1193
    %v1420 = vunpack.c.l.b16 %v1194
    %v1421 = vunpack.c.l.b16 %v1195
    %v1422 = vunpack.c.l.b16 %v1196
    %v1423 = vunpack.c.l.b16 %v1197
    %v1424 = vunpack.c.l.b16 %v1198
    %v1425 = vunpack.c.l.b16 %v1199
    %v1426 = vunpack.c.l.b16 %v1200
    %v1427 = vunpack.c.l.b16 %v1201
    %v1428 = vunpack.c.l.b16 %v1202
    %v1429 = vunpack.c.l.b16 %v1203
    %v1430 = vunpack.c.l.b16 %v1204
    %v1431 = vunpack.c.l.b16 %v1205
    %v1432 = vunpack.c.l.b16 %v1206
    %v1433 = vunpack.c.l.b16 %v1207
    %v1434 = vunpack.c.l.b16 %v1208
    %v1435 = vunpack.c.l.b16 %v1209
    %v1436 = vunpack.c.l.b16 %v1210
    %v1437 = vunpack.c.l.b16 %v1211
    %v1438 = vunpack.c.l.b16 %v1212
    %v1439 = vunpack.c.l.b16 %v1213
    %v1440 = vunpack.c.l.b16 %v1214
    %v1441 = vunpack.c.l.b16 %v1215
    %v1442 = vunpack.c.l.b16 %v1216
    %v1443 = vunpack.c.l.b16 %v1217
    %v1444 = vunpack.c.l.b16 %v1218
    %v1445 = vunpack.c.l.b16 %v1219
    %v1446 = vunpack.c.l.b16 %v1220
    %v1447 = vunpack.c.l.b16 %v1221
    %v1448 = vunpack.c.l.b16 %v1222
    %v1449 = vunpack.c.l.b16 %v1223
    %v1450 = vunpack.c.l.b16 %v1224
    %v1451 = vunpack.c.l.b16 %v1225
    %v1452 = vunpack.c.l.b16 %v1226
    %v1453 = vunpack.c.l.b16 %v1227
    %v1454 = vunpack.c.l.b16 %v1228
    %v1455 = vunpack.c.l.b16 %v1229
    %v1456 = vunpack.c.l.b16 %v1230
    %v1457 = vunpack.c.l.b16 %v1231
    %v1458 = vunpack.c.l.b16 %v1232
    %v1459 = vunpack.c.l.b16 %v1233
    %v1460 = vunpack.c.l.b16 %v1234
    %v1461 = vunpack.c.l.b16 %v1235
    %v1462 = vunpack.c.l.b16 %v1236
    %v1463 = vunpack.c.l.b16 %v1237
    %v1464 = vunpack.c.l.b16 %v1238
    %v1465 = vunpack.c.l.b16 %v1239
    %v1466 = vunpack.c.l.b16 %v1240
    %v1467 = vunpack.c.l.b16 %v1241
    %v1468 = vunpack.c.l.b16 %v1242
    %v1469 = vunpack.c.l.b16 %v1243
    %v1470 = vunpack.c.l.b16 %v1244
    %v1471 = vunpack.c.l.b16 %v1245
    %v1472 = vpack.c.b16 %v1361, %v1360
    %v1473 = vpack.c.b16 %v1363, %v1362
    %v1474 = vpack.c.b16 %v1365, %v1364
    %v1475 = vpack.c.b16 %v1367, %v1366
    %v1476 = vpack.c.b16 %v1369, %v1368
    %v1477 = vpack.c.b16 %v1371, %v1370
    %v1478 = vpack.c.b16 %v1373, %v1372
    %v1479 = vpack.c.b16 %v1375, %v1374
    %v1480 = vpack.c.b16 %v1377, %v1376
    %v1481 = vpack.c.b16 %v1379, %v1378
    %v1482 = vpack.c.b16 %v1381, %v1380
    %v1483 = vpack.c.b16 %v1383, %v1382
    %v1484 = vpack.c.b16 %v1385, %v1384
    %v1485 = vpack.c.b16 %v1387, %v1386
    %v1486 = vpack.c.b16 %v1389, %v1388
    %v1487 = vpack.c.b16 %v1391, %v1390
    %v1488 = vpack.c.b16 %v1393, %v1392
    %v1489 = vpack.c.b16 %v1395, %v1394
    %v1490 = vpack.c.b16 %v1397, %v1396
    %v1491 = vpack.c.b16 %v1399, %v1398
    %v1492 = vpack.c.b16 %v1401, %v1400
    %v1493 = vpack.c.b16 %v1403, %v1402
    %v1494 = vpack.c.b16 %v1405, %v1404
    %v1495 = vpack.c.b16 %v1407, %v1406
    %v1496 = vpack.c.b16 %v1409, %v1408
    %v1497 = vpack.c.b16 %v1411, %v1410
    %v1498 = vpack.c.b16 %v1413, %v1412
    %v1499 = vpack.c.b16 %v1415, %v1414
    %v1500 = vpack.c.b16 %v1417, %v1416
    %v1501 = vpack.c.b16 %v1419, %v1418
    %v1502 = vpack.c.b16 %v1421, %v1420
    %v1503 = vpack.c.b16 %v1423, %v1422
    %v1504 = vpack.c.b16 %v1425, %v1424
    %v1505 = vpack.c.b16 %v1427, %v1426
    %v1506 = vpack.c.b16 %v1429, %v1428
    %v1507 = vpack.c.b16 %v1431, %v1430
    %v1508 = vpack.c.b16 %v1433, %v1432
    %v1509 = vpack.c.b16 %v1435, %v1434
    %v1510 = vpack.c.b16 %v1437, %v1436
    %v1511 = vpack.c.b16 %v1439, %v1438
    %v1512 = vpack.c.b16 %v1441, %v1440
    %v1513 = vpack.c.b16 %v1443, %v1442
    %v1514 = vpack.c.b16 %v1445, %v1444
    %v1515 = vpack.c.b16 %v1447, %v1446
    %v1516 = vpack.c.b16 %v1449, %v1448
    %v1517 = vpack.c.b16 %v1451, %v1450
    %v1518 = vpack.c.b16 %v1453, %v1452
    %v1519 = vpack.c.b16 %v1455, %v1454
    %v1520 = vpack.c.b16 %v1457, %v1456
    %v1521 = vpack.c.b16 %v1459, %v1458
    %v1522 = vpack.c.b16 %v1461, %v1460
    %v1523 = vpack.c.b16 %v1463, %v1462
    %v1524 = vpack.c.b16 %v1465, %v1464
    %v1525 = vpack.c.b16 %v1467, %v1466
    %v1526 = vpack.c.b16 %v1469, %v1468
    %v1527 = vpack.c.b16 %v1471, %v1470
    %1584 = vmatpush.bf16.msra.mxu0 %v1479
    %1585 = vmatpush.bf16.msra.mxu0 %v1478
    %1586 = vmatpush.bf16.msra.mxu0 %v1477
    %1587 = vmatpush.bf16.msra.mxu0 %v1476
    %1588 = vmatpush.bf16.msra.mxu0 %v1475
    %1589 = vmatpush.bf16.msra.mxu0 %v1474
    %1590 = vmatpush.bf16.msra.mxu0 %v1473
    %1591 = vmatpush.bf16.msra.mxu0 %v1472
    %1592 = vmatmul.bf16.gmra.mxu0 %v269
    %v1593 = vpop.f32.mrf.mxu0
    %v1594 = vadd.f32 %v1247, %v1593
    %v1595 = vpop.f32.mrf.mxu0
    %v1596 = vadd.f32 %v1247, %v1595
    %1597 = vmatmul.bf16.gmra.mxu0 %v276
    %v1598 = vpop.f32.mrf.mxu0
    %v1599 = vadd.f32 %v1247, %v1598
    %v1600 = vpop.f32.mrf.mxu0
    %v1601 = vadd.f32 %v1247, %v1600
    %1602 = vmatmul.bf16.gmra.mxu0 %v283
    %v1603 = vpop.f32.mrf.mxu0
    %v1604 = vadd.f32 %v1247, %v1603
    %v1605 = vpop.f32.mrf.mxu0
    %v1606 = vadd.f32 %v1247, %v1605
    %1607 = vmatmul.bf16.gmra.mxu0 %v290
    %v1608 = vpop.f32.mrf.mxu0
    %v1609 = vadd.f32 %v1247, %v1608
    %v1610 = vpop.f32.mrf.mxu0
    %v1611 = vadd.f32 %v1247, %v1610
    %1612 = vmatmul.bf16.gmra.mxu0 %v297
    %v1613 = vpop.f32.mrf.mxu0
    %v1614 = vadd.f32 %v1247, %v1613
    %v1615 = vpop.f32.mrf.mxu0
    %v1616 = vadd.f32 %v1247, %v1615
    %1617 = vmatmul.bf16.gmra.mxu0 %v304
    %v1618 = vpop.f32.mrf.mxu0
    %v1619 = vadd.f32 %v1247, %v1618
    %v1620 = vpop.f32.mrf.mxu0
    %v1621 = vadd.f32 %v1247, %v1620
    %1622 = vmatmul.bf16.gmra.mxu0 %v311
    %v1623 = vpop.f32.mrf.mxu0
    %v1624 = vadd.f32 %v1247, %v1623
    %v1625 = vpop.f32.mrf.mxu0
    %v1626 = vadd.f32 %v1247, %v1625
    %1627 = vmatmul.bf16.gmra.mxu0 %v318
    %v1628 = vpop.f32.mrf.mxu0
    %v1629 = vadd.f32 %v1247, %v1628
    %v1630 = vpop.f32.mrf.mxu0
    %v1631 = vadd.f32 %v1247, %v1630
    %1632 = vdwg.mxu0
    %1633 = vmatpush.bf16.msra.mxu0 %v1487
    %1634 = vmatpush.bf16.msra.mxu0 %v1486
    %1635 = vmatpush.bf16.msra.mxu0 %v1485
    %1636 = vmatpush.bf16.msra.mxu0 %v1484
    %1637 = vmatpush.bf16.msra.mxu0 %v1483
    %1638 = vmatpush.bf16.msra.mxu0 %v1482
    %1639 = vmatpush.bf16.msra.mxu0 %v1481
    %1640 = vmatpush.bf16.msra.mxu0 %v1480
    %1641 = vmatmul.bf16.gmra.mxu0 %v270
    %v1642 = vpop.f32.mrf.mxu0
    %v1643 = vadd.f32 %v1594, %v1642
    %v1644 = vpop.f32.mrf.mxu0
    %v1645 = vadd.f32 %v1596, %v1644
    %1646 = vmatmul.bf16.gmra.mxu0 %v277
    %v1647 = vpop.f32.mrf.mxu0
    %v1648 = vadd.f32 %v1599, %v1647
    %v1649 = vpop.f32.mrf.mxu0
    %v1650 = vadd.f32 %v1601, %v1649
    %1651 = vmatmul.bf16.gmra.mxu0 %v284
    %v1652 = vpop.f32.mrf.mxu0
    %v1653 = vadd.f32 %v1604, %v1652
    %v1654 = vpop.f32.mrf.mxu0
    %v1655 = vadd.f32 %v1606, %v1654
    %1656 = vmatmul.bf16.gmra.mxu0 %v291
    %v1657 = vpop.f32.mrf.mxu0
    %v1658 = vadd.f32 %v1609, %v1657
    %v1659 = vpop.f32.mrf.mxu0
    %v1660 = vadd.f32 %v1611, %v1659
    %1661 = vmatmul.bf16.gmra.mxu0 %v298
    %v1662 = vpop.f32.mrf.mxu0
    %v1663 = vadd.f32 %v1614, %v1662
    %v1664 = vpop.f32.mrf.mxu0
    %v1665 = vadd.f32 %v1616, %v1664
    %1666 = vmatmul.bf16.gmra.mxu0 %v305
    %v1667 = vpop.f32.mrf.mxu0
    %v1668 = vadd.f32 %v1619, %v1667
    %v1669 = vpop.f32.mrf.mxu0
    %v1670 = vadd.f32 %v1621, %v1669
    %1671 = vmatmul.bf16.gmra.mxu0 %v312
    %v1672 = vpop.f32.mrf.mxu0
    %v1673 = vadd.f32 %v1624, %v1672
    %v1674 = vpop.f32.mrf.mxu0
    %v1675 = vadd.f32 %v1626, %v1674
    %1676 = vmatmul.bf16.gmra.mxu0 %v319
    %v1677 = vpop.f32.mrf.mxu0
    %v1678 = vadd.f32 %v1629, %v1677
    %v1679 = vpop.f32.mrf.mxu0
    %v1680 = vadd.f32 %v1631, %v1679
    %1681 = vdwg.mxu0
    %1682 = vmatpush.bf16.msra.mxu0 %v1495
    %1683 = vmatpush.bf16.msra.mxu0 %v1494
    %1684 = vmatpush.bf16.msra.mxu0 %v1493
    %1685 = vmatpush.bf16.msra.mxu0 %v1492
    %1686 = vmatpush.bf16.msra.mxu0 %v1491
    %1687 = vmatpush.bf16.msra.mxu0 %v1490
    %1688 = vmatpush.bf16.msra.mxu0 %v1489
    %1689 = vmatpush.bf16.msra.mxu0 %v1488
    %1690 = vmatmul.bf16.gmra.mxu0 %v271
    %v1691 = vpop.f32.mrf.mxu0
    %v1692 = vadd.f32 %v1643, %v1691
    %v1693 = vpop.f32.mrf.mxu0
    %v1694 = vadd.f32 %v1645, %v1693
    %1695 = vmatmul.bf16.gmra.mxu0 %v278
    %v1696 = vpop.f32.mrf.mxu0
    %v1697 = vadd.f32 %v1648, %v1696
    %v1698 = vpop.f32.mrf.mxu0
    %v1699 = vadd.f32 %v1650, %v1698
    %1700 = vmatmul.bf16.gmra.mxu0 %v285
    %v1701 = vpop.f32.mrf.mxu0
    %v1702 = vadd.f32 %v1653, %v1701
    %v1703 = vpop.f32.mrf.mxu0
    %v1704 = vadd.f32 %v1655, %v1703
    %1705 = vmatmul.bf16.gmra.mxu0 %v292
    %v1706 = vpop.f32.mrf.mxu0
    %v1707 = vadd.f32 %v1658, %v1706
    %v1708 = vpop.f32.mrf.mxu0
    %v1709 = vadd.f32 %v1660, %v1708
    %1710 = vmatmul.bf16.gmra.mxu0 %v299
    %v1711 = vpop.f32.mrf.mxu0
    %v1712 = vadd.f32 %v1663, %v1711
    %v1713 = vpop.f32.mrf.mxu0
    %v1714 = vadd.f32 %v1665, %v1713
    %1715 = vmatmul.bf16.gmra.mxu0 %v306
    %v1716 = vpop.f32.mrf.mxu0
    %v1717 = vadd.f32 %v1668, %v1716
    %v1718 = vpop.f32.mrf.mxu0
    %v1719 = vadd.f32 %v1670, %v1718
    %1720 = vmatmul.bf16.gmra.mxu0 %v313
    %v1721 = vpop.f32.mrf.mxu0
    %v1722 = vadd.f32 %v1673, %v1721
    %v1723 = vpop.f32.mrf.mxu0
    %v1724 = vadd.f32 %v1675, %v1723
    %1725 = vmatmul.bf16.gmra.mxu0 %v320
    %v1726 = vpop.f32.mrf.mxu0
    %v1727 = vadd.f32 %v1678, %v1726
    %v1728 = vpop.f32.mrf.mxu0
    %v1729 = vadd.f32 %v1680, %v1728
    %1730 = vdwg.mxu0
    %1731 = vmatpush.bf16.msra.mxu0 %v1503
    %1732 = vmatpush.bf16.msra.mxu0 %v1502
    %1733 = vmatpush.bf16.msra.mxu0 %v1501
    %1734 = vmatpush.bf16.msra.mxu0 %v1500
    %1735 = vmatpush.bf16.msra.mxu0 %v1499
    %1736 = vmatpush.bf16.msra.mxu0 %v1498
    %1737 = vmatpush.bf16.msra.mxu0 %v1497
    %1738 = vmatpush.bf16.msra.mxu0 %v1496
    %1739 = vmatmul.bf16.gmra.mxu0 %v272
    %v1740 = vpop.f32.mrf.mxu0
    %v1741 = vadd.f32 %v1692, %v1740
    %v1742 = vpop.f32.mrf.mxu0
    %v1743 = vadd.f32 %v1694, %v1742
    %1744 = vmatmul.bf16.gmra.mxu0 %v279
    %v1745 = vpop.f32.mrf.mxu0
    %v1746 = vadd.f32 %v1697, %v1745
    %v1747 = vpop.f32.mrf.mxu0
    %v1748 = vadd.f32 %v1699, %v1747
    %1749 = vmatmul.bf16.gmra.mxu0 %v286
    %v1750 = vpop.f32.mrf.mxu0
    %v1751 = vadd.f32 %v1702, %v1750
    %v1752 = vpop.f32.mrf.mxu0
    %v1753 = vadd.f32 %v1704, %v1752
    %1754 = vmatmul.bf16.gmra.mxu0 %v293
    %v1755 = vpop.f32.mrf.mxu0
    %v1756 = vadd.f32 %v1707, %v1755
    %v1757 = vpop.f32.mrf.mxu0
    %v1758 = vadd.f32 %v1709, %v1757
    %1759 = vmatmul.bf16.gmra.mxu0 %v300
    %v1760 = vpop.f32.mrf.mxu0
    %v1761 = vadd.f32 %v1712, %v1760
    %v1762 = vpop.f32.mrf.mxu0
    %v1763 = vadd.f32 %v1714, %v1762
    %1764 = vmatmul.bf16.gmra.mxu0 %v307
    %v1765 = vpop.f32.mrf.mxu0
    %v1766 = vadd.f32 %v1717, %v1765
    %v1767 = vpop.f32.mrf.mxu0
    %v1768 = vadd.f32 %v1719, %v1767
    %1769 = vmatmul.bf16.gmra.mxu0 %v314
    %v1770 = vpop.f32.mrf.mxu0
    %v1771 = vadd.f32 %v1722, %v1770
    %v1772 = vpop.f32.mrf.mxu0
    %v1773 = vadd.f32 %v1724, %v1772
    %1774 = vmatmul.bf16.gmra.mxu0 %v321
    %v1775 = vpop.f32.mrf.mxu0
    %v1776 = vadd.f32 %v1727, %v1775
    %v1777 = vpop.f32.mrf.mxu0
    %v1778 = vadd.f32 %v1729, %v1777
    %1779 = vdwg.mxu0
    %1780 = vmatpush.bf16.msra.mxu0 %v1511
    %1781 = vmatpush.bf16.msra.mxu0 %v1510
    %1782 = vmatpush.bf16.msra.mxu0 %v1509
    %1783 = vmatpush.bf16.msra.mxu0 %v1508
    %1784 = vmatpush.bf16.msra.mxu0 %v1507
    %1785 = vmatpush.bf16.msra.mxu0 %v1506
    %1786 = vmatpush.bf16.msra.mxu0 %v1505
    %1787 = vmatpush.bf16.msra.mxu0 %v1504
    %1788 = vmatmul.bf16.gmra.mxu0 %v273
    %v1789 = vpop.f32.mrf.mxu0
    %v1790 = vadd.f32 %v1741, %v1789
    %v1791 = vpop.f32.mrf.mxu0
    %v1792 = vadd.f32 %v1743, %v1791
    %1793 = vmatmul.bf16.gmra.mxu0 %v280
    %v1794 = vpop.f32.mrf.mxu0
    %v1795 = vadd.f32 %v1746, %v1794
    %v1796 = vpop.f32.mrf.mxu0
    %v1797 = vadd.f32 %v1748, %v1796
    %1798 = vmatmul.bf16.gmra.mxu0 %v287
    %v1799 = vpop.f32.mrf.mxu0
    %v1800 = vadd.f32 %v1751, %v1799
    %v1801 = vpop.f32.mrf.mxu0
    %v1802 = vadd.f32 %v1753, %v1801
    %1803 = vmatmul.bf16.gmra.mxu0 %v294
    %v1804 = vpop.f32.mrf.mxu0
    %v1805 = vadd.f32 %v1756, %v1804
    %v1806 = vpop.f32.mrf.mxu0
    %v1807 = vadd.f32 %v1758, %v1806
    %1808 = vmatmul.bf16.gmra.mxu0 %v301
    %v1809 = vpop.f32.mrf.mxu0
    %v1810 = vadd.f32 %v1761, %v1809
    %v1811 = vpop.f32.mrf.mxu0
    %v1812 = vadd.f32 %v1763, %v1811
    %1813 = vmatmul.bf16.gmra.mxu0 %v308
    %v1814 = vpop.f32.mrf.mxu0
    %v1815 = vadd.f32 %v1766, %v1814
    %v1816 = vpop.f32.mrf.mxu0
    %v1817 = vadd.f32 %v1768, %v1816
    %1818 = vmatmul.bf16.gmra.mxu0 %v315
    %v1819 = vpop.f32.mrf.mxu0
    %v1820 = vadd.f32 %v1771, %v1819
    %v1821 = vpop.f32.mrf.mxu0
    %v1822 = vadd.f32 %v1773, %v1821
    %1823 = vmatmul.bf16.gmra.mxu0 %v322
    %v1824 = vpop.f32.mrf.mxu0
    %v1825 = vadd.f32 %v1776, %v1824
    %v1826 = vpop.f32.mrf.mxu0
    %v1827 = vadd.f32 %v1778, %v1826
    %1828 = vdwg.mxu0
    %1829 = vmatpush.bf16.msra.mxu0 %v1519
    %1830 = vmatpush.bf16.msra.mxu0 %v1518
    %1831 = vmatpush.bf16.msra.mxu0 %v1517
    %1832 = vmatpush.bf16.msra.mxu0 %v1516
    %1833 = vmatpush.bf16.msra.mxu0 %v1515
    %1834 = vmatpush.bf16.msra.mxu0 %v1514
    %1835 = vmatpush.bf16.msra.mxu0 %v1513
    %1836 = vmatpush.bf16.msra.mxu0 %v1512
    %1837 = vmatmul.bf16.gmra.mxu0 %v274
    %v1838 = vpop.f32.mrf.mxu0
    %v1839 = vadd.f32 %v1790, %v1838
    %v1840 = vpop.f32.mrf.mxu0
    %v1841 = vadd.f32 %v1792, %v1840
    %1842 = vmatmul.bf16.gmra.mxu0 %v281
    %v1843 = vpop.f32.mrf.mxu0
    %v1844 = vadd.f32 %v1795, %v1843
    %v1845 = vpop.f32.mrf.mxu0
    %v1846 = vadd.f32 %v1797, %v1845
    %1847 = vmatmul.bf16.gmra.mxu0 %v288
    %v1848 = vpop.f32.mrf.mxu0
    %v1849 = vadd.f32 %v1800, %v1848
    %v1850 = vpop.f32.mrf.mxu0
    %v1851 = vadd.f32 %v1802, %v1850
    %1852 = vmatmul.bf16.gmra.mxu0 %v295
    %v1853 = vpop.f32.mrf.mxu0
    %v1854 = vadd.f32 %v1805, %v1853
    %v1855 = vpop.f32.mrf.mxu0
    %v1856 = vadd.f32 %v1807, %v1855
    %1857 = vmatmul.bf16.gmra.mxu0 %v302
    %v1858 = vpop.f32.mrf.mxu0
    %v1859 = vadd.f32 %v1810, %v1858
    %v1860 = vpop.f32.mrf.mxu0
    %v1861 = vadd.f32 %v1812, %v1860
    %1862 = vmatmul.bf16.gmra.mxu0 %v309
    %v1863 = vpop.f32.mrf.mxu0
    %v1864 = vadd.f32 %v1815, %v1863
    %v1865 = vpop.f32.mrf.mxu0
    %v1866 = vadd.f32 %v1817, %v1865
    %1867 = vmatmul.bf16.gmra.mxu0 %v316
    %v1868 = vpop.f32.mrf.mxu0
    %v1869 = vadd.f32 %v1820, %v1868
    %v1870 = vpop.f32.mrf.mxu0
    %v1871 = vadd.f32 %v1822, %v1870
    %1872 = vmatmul.bf16.gmra.mxu0 %v323
    %v1873 = vpop.f32.mrf.mxu0
    %v1874 = vadd.f32 %v1825, %v1873
    %v1875 = vpop.f32.mrf.mxu0
    %v1876 = vadd.f32 %v1827, %v1875
    %1877 = vdwg.mxu0
    %1878 = vmatpush.bf16.msra.mxu0 %v1527
    %1879 = vmatpush.bf16.msra.mxu0 %v1526
    %1880 = vmatpush.bf16.msra.mxu0 %v1525
    %1881 = vmatpush.bf16.msra.mxu0 %v1524
    %1882 = vmatpush.bf16.msra.mxu0 %v1523
    %1883 = vmatpush.bf16.msra.mxu0 %v1522
    %1884 = vmatpush.bf16.msra.mxu0 %v1521
    %1885 = vmatpush.bf16.msra.mxu0 %v1520
    %1886 = vmatmul.bf16.gmra.mxu0 %v275
    %v1887 = vpop.f32.mrf.mxu0
    %v1888 = vadd.f32 %v1839, %v1887
    %v1889 = vpop.f32.mrf.mxu0
    %v1890 = vadd.f32 %v1841, %v1889
    %1891 = vmatmul.bf16.gmra.mxu0 %v282
    %v1892 = vpop.f32.mrf.mxu0
    %v1893 = vadd.f32 %v1844, %v1892
    %v1894 = vpop.f32.mrf.mxu0
    %v1895 = vadd.f32 %v1846, %v1894
    %1896 = vmatmul.bf16.gmra.mxu0 %v289
    %v1897 = vpop.f32.mrf.mxu0
    %v1898 = vadd.f32 %v1849, %v1897
    %v1899 = vpop.f32.mrf.mxu0
    %v1900 = vadd.f32 %v1851, %v1899
    %1901 = vmatmul.bf16.gmra.mxu0 %v296
    %v1902 = vpop.f32.mrf.mxu0
    %v1903 = vadd.f32 %v1854, %v1902
    %v1904 = vpop.f32.mrf.mxu0
    %v1905 = vadd.f32 %v1856, %v1904
    %1906 = vmatmul.bf16.gmra.mxu0 %v303
    %v1907 = vpop.f32.mrf.mxu0
    %v1908 = vadd.f32 %v1859, %v1907
    %v1909 = vpop.f32.mrf.mxu0
    %v1910 = vadd.f32 %v1861, %v1909
    %1911 = vmatmul.bf16.gmra.mxu0 %v310
    %v1912 = vpop.f32.mrf.mxu0
    %v1913 = vadd.f32 %v1864, %v1912
    %v1914 = vpop.f32.mrf.mxu0
    %v1915 = vadd.f32 %v1866, %v1914
    %1916 = vmatmul.bf16.gmra.mxu0 %v317
    %v1917 = vpop.f32.mrf.mxu0
    %v1918 = vadd.f32 %v1869, %v1917
    %v1919 = vpop.f32.mrf.mxu0
    %v1920 = vadd.f32 %v1871, %v1919
    %1921 = vmatmul.bf16.gmra.mxu0 %v324
    %v1922 = vpop.f32.mrf.mxu0
    %v1923 = vadd.f32 %v1874, %v1922
    %v1924 = vpop.f32.mrf.mxu0
    %v1925 = vadd.f32 %v1876, %v1924
    %1926 = vdwg.mxu0
    %v1927 = vmax.f32 %v1888, 0.0
    %v1928 = vmax.f32 %v1890, 0.0
    %v1929 = vmax.f32 %v1893, 0.0
    %v1930 = vmax.f32 %v1895, 0.0
    %v1931 = vmax.f32 %v1898, 0.0
    %v1932 = vmax.f32 %v1900, 0.0
    %v1933 = vmax.f32 %v1903, 0.0
    %v1934 = vmax.f32 %v1905, 0.0
    %v1935 = vmax.f32 %v1908, 0.0
    %v1936 = vmax.f32 %v1910, 0.0
    %v1937 = vmax.f32 %v1913, 0.0
    %v1938 = vmax.f32 %v1915, 0.0
    %v1939 = vmax.f32 %v1918, 0.0
    %v1940 = vmax.f32 %v1920, 0.0
    %v1941 = vmax.f32 %v1923, 0.0
    %v1942 = vmax.f32 %v1925, 0.0
    %v1943 = vpack.c.bf16 %v1927, %v1927
    %v1944 = vpack.c.bf16 %v1928, %v1928
    %v1945 = vpack.c.bf16 %v1929, %v1929
    %v1946 = vpack.c.bf16 %v1930, %v1930
    %v1947 = vpack.c.bf16 %v1931, %v1931
    %v1948 = vpack.c.bf16 %v1932, %v1932
    %v1949 = vpack.c.bf16 %v1933, %v1933
    %v1950 = vpack.c.bf16 %v1934, %v1934
    %v1951 = vpack.c.bf16 %v1935, %v1935
    %v1952 = vpack.c.bf16 %v1936, %v1936
    %v1953 = vpack.c.bf16 %v1937, %v1937
    %v1954 = vpack.c.bf16 %v1938, %v1938
    %v1955 = vpack.c.bf16 %v1939, %v1939
    %v1956 = vpack.c.bf16 %v1940, %v1940
    %v1957 = vpack.c.bf16 %v1941, %v1941
    %v1958 = vpack.c.bf16 %v1942, %v1942
    %1959 = vst [vmem:[#allocation2] sm:$0xf] 0
    %1960 = vst [vmem:[#allocation2 + $0x4] sm:$0xf] 0
    %1961 = vst [vmem:[#allocation2 + $0x8] sm:$0xf] 0
    %1962 = vst [vmem:[#allocation2 + $0xc] sm:$0xf] 0
    %1963 = vst [vmem:[#allocation2 + $0x10] sm:$0xf] 0
    %1964 = vst [vmem:[#allocation2 + $0x14] sm:$0xf] 0
    %1965 = vst [vmem:[#allocation2 + $0x18] sm:$0xf] 0
    %1966 = vst [vmem:[#allocation2 + $0x1c] sm:$0xf] 0
    %1967 = vst [vmem:[#allocation2 + $0x20] sm:$0xf] 0
    %1968 = vst [vmem:[#allocation2 + $0x24] sm:$0xf] 0
    %1969 = vst [vmem:[#allocation2 + $0x28] sm:$0xf] 0
    %1970 = vst [vmem:[#allocation2 + $0x2c] sm:$0xf] 0
    %1971 = vst [vmem:[#allocation2 + $0x30] sm:$0xf] 0
    %1972 = vst [vmem:[#allocation2 + $0x34] sm:$0xf] 0
    %1973 = vst [vmem:[#allocation2 + $0x38] sm:$0xf] 0
    %1974 = vst [vmem:[#allocation2 + $0x3c] sm:$0xf] 0
    %1975 = vst [vmem:[#allocation2 + $0x40] sm:$0xf] 0
    %1976 = vst [vmem:[#allocation2 + $0x44] sm:$0xf] 0
    %1977 = vst [vmem:[#allocation2 + $0x48] sm:$0xf] 0
    %1978 = vst [vmem:[#allocation2 + $0x4c] sm:$0xf] 0
    %1979 = vst [vmem:[#allocation2 + $0x50] sm:$0xf] 0
    %1980 = vst [vmem:[#allocation2 + $0x54] sm:$0xf] 0
    %1981 = vst [vmem:[#allocation2 + $0x58] sm:$0xf] 0
    %1982 = vst [vmem:[#allocation2 + $0x5c] sm:$0xf] 0
    %1983 = vst [vmem:[#allocation2 + $0x60] sm:$0xf] 0
    %1984 = vst [vmem:[#allocation2 + $0x64] sm:$0xf] 0
    %1985 = vst [vmem:[#allocation2 + $0x68] sm:$0xf] 0
    %1986 = vst [vmem:[#allocation2 + $0x6c] sm:$0xf] 0
    %1987 = vst [vmem:[#allocation2 + $0x70] sm:$0xf] 0
    %1988 = vst [vmem:[#allocation2 + $0x74] sm:$0xf] 0
    %1989 = vst [vmem:[#allocation2 + $0x78] sm:$0xf] 0
    %1990 = vst [vmem:[#allocation2 + $0x7c] sm:$0xf] 0
    %v1992 = vshrl.u32 %v1943, 16
    %v1994 = vrot.slane %v1992, 6
    %v1995 = vshll.u32 %v1943, 16
    %v1997 = vrot.slane %v1995, 7
    %v1998 = vor.u32 %v1994, %v1997
    %v1999 = vrot.slane %v1998, 4
    %v2001 = vshrl.u32 %v1944, 16
    %v2003 = vrot.slane %v2001, 6
    %v2004 = vshll.u32 %v1944, 16
    %v2006 = vrot.slane %v2004, 7
    %v2007 = vor.u32 %v2003, %v2006
    %v2008 = vrot.slane %v2007, 4
    %v2010 = vshrl.u32 %v1945, 16
    %v2012 = vrot.slane %v2010, 6
    %v2013 = vshll.u32 %v1945, 16
    %v2015 = vrot.slane %v2013, 7
    %v2016 = vor.u32 %v2012, %v2015
    %v2017 = vrot.slane %v2016, 4
    %v2019 = vshrl.u32 %v1946, 16
    %v2021 = vrot.slane %v2019, 6
    %v2022 = vshll.u32 %v1946, 16
    %v2024 = vrot.slane %v2022, 7
    %v2025 = vor.u32 %v2021, %v2024
    %v2026 = vrot.slane %v2025, 4
    %v2028 = vshrl.u32 %v1947, 16
    %v2030 = vrot.slane %v2028, 6
    %v2031 = vshll.u32 %v1947, 16
    %v2033 = vrot.slane %v2031, 7
    %v2034 = vor.u32 %v2030, %v2033
    %v2035 = vrot.slane %v2034, 4
    %v2037 = vshrl.u32 %v1948, 16
    %v2039 = vrot.slane %v2037, 6
    %v2040 = vshll.u32 %v1948, 16
    %v2042 = vrot.slane %v2040, 7
    %v2043 = vor.u32 %v2039, %v2042
    %v2044 = vrot.slane %v2043, 4
    %v2046 = vshrl.u32 %v1949, 16
    %v2048 = vrot.slane %v2046, 6
    %v2049 = vshll.u32 %v1949, 16
    %v2051 = vrot.slane %v2049, 7
    %v2052 = vor.u32 %v2048, %v2051
    %v2053 = vrot.slane %v2052, 4
    %v2055 = vshrl.u32 %v1950, 16
    %v2057 = vrot.slane %v2055, 6
    %v2058 = vshll.u32 %v1950, 16
    %v2060 = vrot.slane %v2058, 7
    %v2061 = vor.u32 %v2057, %v2060
    %v2062 = vrot.slane %v2061, 4
    %v2064 = vshrl.u32 %v1951, 16
    %v2066 = vrot.slane %v2064, 6
    %v2067 = vshll.u32 %v1951, 16
    %v2069 = vrot.slane %v2067, 7
    %v2070 = vor.u32 %v2066, %v2069
    %v2071 = vrot.slane %v2070, 4
    %v2073 = vshrl.u32 %v1952, 16
    %v2075 = vrot.slane %v2073, 6
    %v2076 = vshll.u32 %v1952, 16
    %v2078 = vrot.slane %v2076, 7
    %v2079 = vor.u32 %v2075, %v2078
    %v2080 = vrot.slane %v2079, 4
    %v2082 = vshrl.u32 %v1953, 16
    %v2084 = vrot.slane %v2082, 6
    %v2085 = vshll.u32 %v1953, 16
    %v2087 = vrot.slane %v2085, 7
    %v2088 = vor.u32 %v2084, %v2087
    %v2089 = vrot.slane %v2088, 4
    %v2091 = vshrl.u32 %v1954, 16
    %v2093 = vrot.slane %v2091, 6
    %v2094 = vshll.u32 %v1954, 16
    %v2096 = vrot.slane %v2094, 7
    %v2097 = vor.u32 %v2093, %v2096
    %v2098 = vrot.slane %v2097, 4
    %v2100 = vshrl.u32 %v1955, 16
    %v2102 = vrot.slane %v2100, 6
    %v2103 = vshll.u32 %v1955, 16
    %v2105 = vrot.slane %v2103, 7
    %v2106 = vor.u32 %v2102, %v2105
    %v2107 = vrot.slane %v2106, 4
    %v2109 = vshrl.u32 %v1956, 16
    %v2111 = vrot.slane %v2109, 6
    %v2112 = vshll.u32 %v1956, 16
    %v2114 = vrot.slane %v2112, 7
    %v2115 = vor.u32 %v2111, %v2114
    %v2116 = vrot.slane %v2115, 4
    %v2118 = vshrl.u32 %v1957, 16
    %v2120 = vrot.slane %v2118, 6
    %v2121 = vshll.u32 %v1957, 16
    %v2123 = vrot.slane %v2121, 7
    %v2124 = vor.u32 %v2120, %v2123
    %v2125 = vrot.slane %v2124, 4
    %v2127 = vshrl.u32 %v1958, 16
    %v2129 = vrot.slane %v2127, 6
    %v2130 = vshll.u32 %v1958, 16
    %v2132 = vrot.slane %v2130, 7
    %v2133 = vor.u32 %v2129, %v2132
    %v2134 = vrot.slane %v2133, 4
    %vm2167 = vcmask 1043457
    %vm2168 = vsmask.f32 7942
    %vm2169 = vmand %vm2167, %vm2168
    %v2170 = vld [vmem:[#allocation2] sm:$0xe]
    %v2171 = vsel %vm2169, %v1998, %v2170
    %2172 = vst [vmem:[#allocation2] sm:$0xe] %v2171
    %vm2173 = vcmask 1041408
    %vm2174 = vsmask.f32 1280
    %vm2175 = vmand %vm2173, %vm2174
    %v2176 = vld [vmem:[#allocation2 + $0x4] sm:$0x3]
    %v2177 = vsel %vm2175, %v1999, %v2176
    %2178 = vst [vmem:[#allocation2 + $0x4] sm:$0x3] %v2177
    %v2179 = vld [vmem:[#allocation2 + $0x8] sm:$0xe]
    %v2180 = vsel %vm2169, %v2007, %v2179
    %2181 = vst [vmem:[#allocation2 + $0x8] sm:$0xe] %v2180
    %v2182 = vld [vmem:[#allocation2 + $0xc] sm:$0x3]
    %v2183 = vsel %vm2175, %v2008, %v2182
    %2184 = vst [vmem:[#allocation2 + $0xc] sm:$0x3] %v2183
    %v2185 = vld [vmem:[#allocation2 + $0x10] sm:$0xe]
    %v2186 = vsel %vm2169, %v2016, %v2185
    %2187 = vst [vmem:[#allocation2 + $0x10] sm:$0xe] %v2186
    %v2188 = vld [vmem:[#allocation2 + $0x14] sm:$0x3]
    %v2189 = vsel %vm2175, %v2017, %v2188
    %2190 = vst [vmem:[#allocation2 + $0x14] sm:$0x3] %v2189
    %v2191 = vld [vmem:[#allocation2 + $0x18] sm:$0xe]
    %v2192 = vsel %vm2169, %v2025, %v2191
    %2193 = vst [vmem:[#allocation2 + $0x18] sm:$0xe] %v2192
    %v2194 = vld [vmem:[#allocation2 + $0x1c] sm:$0x3]
    %v2195 = vsel %vm2175, %v2026, %v2194
    %2196 = vst [vmem:[#allocation2 + $0x1c] sm:$0x3] %v2195
    %v2197 = vld [vmem:[#allocation2 + $0x20] sm:$0xe]
    %v2198 = vsel %vm2169, %v2034, %v2197
    %2199 = vst [vmem:[#allocation2 + $0x20] sm:$0xe] %v2198
    %v2200 = vld [vmem:[#allocation2 + $0x24] sm:$0x3]
    %v2201 = vsel %vm2175, %v2035, %v2200
    %2202 = vst [vmem:[#allocation2 + $0x24] sm:$0x3] %v2201
    %v2203 = vld [vmem:[#allocation2 + $0x28] sm:$0xe]
    %v2204 = vsel %vm2169, %v2043, %v2203
    %2205 = vst [vmem:[#allocation2 + $0x28] sm:$0xe] %v2204
    %v2206 = vld [vmem:[#allocation2 + $0x2c] sm:$0x3]
    %v2207 = vsel %vm2175, %v2044, %v2206
    %2208 = vst [vmem:[#allocation2 + $0x2c] sm:$0x3] %v2207
    %v2209 = vld [vmem:[#allocation2 + $0x30] sm:$0xe]
    %v2210 = vsel %vm2169, %v2052, %v2209
    %2211 = vst [vmem:[#allocation2 + $0x30] sm:$0xe] %v2210
    %v2212 = vld [vmem:[#allocation2 + $0x34] sm:$0x3]
    %v2213 = vsel %vm2175, %v2053, %v2212
    %2214 = vst [vmem:[#allocation2 + $0x34] sm:$0x3] %v2213
    %v2215 = vld [vmem:[#allocation2 + $0x38] sm:$0xe]
    %v2216 = vsel %vm2169, %v2061, %v2215
    %2217 = vst [vmem:[#allocation2 + $0x38] sm:$0xe] %v2216
    %v2218 = vld [vmem:[#allocation2 + $0x3c] sm:$0x3]
    %v2219 = vsel %vm2175, %v2062, %v2218
    %2220 = vst [vmem:[#allocation2 + $0x3c] sm:$0x3] %v2219
    %v2221 = vld [vmem:[#allocation2 + $0x40] sm:$0xe]
    %v2222 = vsel %vm2169, %v2070, %v2221
    %2223 = vst [vmem:[#allocation2 + $0x40] sm:$0xe] %v2222
    %v2224 = vld [vmem:[#allocation2 + $0x44] sm:$0x3]
    %v2225 = vsel %vm2175, %v2071, %v2224
    %2226 = vst [vmem:[#allocation2 + $0x44] sm:$0x3] %v2225
    %v2227 = vld [vmem:[#allocation2 + $0x48] sm:$0xe]
    %v2228 = vsel %vm2169, %v2079, %v2227
    %2229 = vst [vmem:[#allocation2 + $0x48] sm:$0xe] %v2228
    %v2230 = vld [vmem:[#allocation2 + $0x4c] sm:$0x3]
    %v2231 = vsel %vm2175, %v2080, %v2230
    %2232 = vst [vmem:[#allocation2 + $0x4c] sm:$0x3] %v2231
    %v2233 = vld [vmem:[#allocation2 + $0x50] sm:$0xe]
    %v2234 = vsel %vm2169, %v2088, %v2233
    %2235 = vst [vmem:[#allocation2 + $0x50] sm:$0xe] %v2234
    %v2236 = vld [vmem:[#allocation2 + $0x54] sm:$0x3]
    %v2237 = vsel %vm2175, %v2089, %v2236
    %2238 = vst [vmem:[#allocation2 + $0x54] sm:$0x3] %v2237
    %v2239 = vld [vmem:[#allocation2 + $0x58] sm:$0xe]
    %v2240 = vsel %vm2169, %v2097, %v2239
    %2241 = vst [vmem:[#allocation2 + $0x58] sm:$0xe] %v2240
    %v2242 = vld [vmem:[#allocation2 + $0x5c] sm:$0x3]
    %v2243 = vsel %vm2175, %v2098, %v2242
    %2244 = vst [vmem:[#allocation2 + $0x5c] sm:$0x3] %v2243
    %v2245 = vld [vmem:[#allocation2 + $0x60] sm:$0xe]
    %v2246 = vsel %vm2169, %v2106, %v2245
    %2247 = vst [vmem:[#allocation2 + $0x60] sm:$0xe] %v2246
    %v2248 = vld [vmem:[#allocation2 + $0x64] sm:$0x3]
    %v2249 = vsel %vm2175, %v2107, %v2248
    %2250 = vst [vmem:[#allocation2 + $0x64] sm:$0x3] %v2249
    %v2251 = vld [vmem:[#allocation2 + $0x68] sm:$0xe]
    %v2252 = vsel %vm2169, %v2115, %v2251
    %2253 = vst [vmem:[#allocation2 + $0x68] sm:$0xe] %v2252
    %v2254 = vld [vmem:[#allocation2 + $0x6c] sm:$0x3]
    %v2255 = vsel %vm2175, %v2116, %v2254
    %2256 = vst [vmem:[#allocation2 + $0x6c] sm:$0x3] %v2255
    %v2257 = vld [vmem:[#allocation2 + $0x70] sm:$0xe]
    %v2258 = vsel %vm2169, %v2124, %v2257
    %2259 = vst [vmem:[#allocation2 + $0x70] sm:$0xe] %v2258
    %v2260 = vld [vmem:[#allocation2 + $0x74] sm:$0x3]
    %v2261 = vsel %vm2175, %v2125, %v2260
    %2262 = vst [vmem:[#allocation2 + $0x74] sm:$0x3] %v2261
    %v2263 = vld [vmem:[#allocation2 + $0x78] sm:$0xe]
    %v2264 = vsel %vm2169, %v2133, %v2263
    %2265 = vst [vmem:[#allocation2 + $0x78] sm:$0xe] %v2264
    %v2266 = vld [vmem:[#allocation2 + $0x7c] sm:$0x3]
    %v2267 = vsel %vm2175, %v2134, %v2266
    %2268 = vst [vmem:[#allocation2 + $0x7c] sm:$0x3] %v2267
    %v2269 = vld [vmem:[#allocation2] sm:$0xf]
    %v2270 = vld [vmem:[#allocation2 + $0x8] sm:$0xf]
    %v2271 = vld [vmem:[#allocation2 + $0x10] sm:$0xf]
    %v2272 = vld [vmem:[#allocation2 + $0x18] sm:$0xf]
    %v2273 = vld [vmem:[#allocation2 + $0x20] sm:$0xf]
    %v2274 = vld [vmem:[#allocation2 + $0x28] sm:$0xf]
    %v2275 = vld [vmem:[#allocation2 + $0x30] sm:$0xf]
    %v2276 = vld [vmem:[#allocation2 + $0x38] sm:$0xf]
    %v2277 = vld [vmem:[#allocation2 + $0x40] sm:$0xf]
    %v2278 = vld [vmem:[#allocation2 + $0x48] sm:$0xf]
    %v2279 = vld [vmem:[#allocation2 + $0x50] sm:$0xf]
    %v2280 = vld [vmem:[#allocation2 + $0x58] sm:$0xf]
    %v2281 = vld [vmem:[#allocation2 + $0x60] sm:$0xf]
    %v2282 = vld [vmem:[#allocation2 + $0x68] sm:$0xf]
    %v2283 = vld [vmem:[#allocation2 + $0x70] sm:$0xf]
    %v2284 = vld [vmem:[#allocation2 + $0x78] sm:$0xf]
    %2285 = vst [vmem:[#allocation4] sm:$0xf] %v2269
    %2286 = vst [vmem:[#allocation4 + $0x1c] sm:$0xf] %v2270
    %2287 = vst [vmem:[#allocation4 + $0x38] sm:$0xf] %v2271
    %2288 = vst [vmem:[#allocation4 + $0x54] sm:$0xf] %v2272
    %2289 = vst [vmem:[#allocation4 + $0x70] sm:$0xf] %v2273
    %2290 = vst [vmem:[#allocation4 + $0x8c] sm:$0xf] %v2274
    %2291 = vst [vmem:[#allocation4 + $0xa8] sm:$0xf] %v2275
    %2292 = vst [vmem:[#allocation4 + $0xc4] sm:$0xf] %v2276
    %2293 = vst [vmem:[#allocation4 + $0xe0] sm:$0xf] %v2277
    %2294 = vst [vmem:[#allocation4 + $0xfc] sm:$0xf] %v2278
    %2295 = vst [vmem:[#allocation4 + $0x118] sm:$0xf] %v2279
    %2296 = vst [vmem:[#allocation4 + $0x134] sm:$0xf] %v2280
    %2297 = vst [vmem:[#allocation4 + $0x150] sm:$0xf] %v2281
    %2298 = vst [vmem:[#allocation4 + $0x16c] sm:$0xf] %v2282
    %2299 = vst [vmem:[#allocation4 + $0x188] sm:$0xf] %v2283
    %2300 = vst [vmem:[#allocation4 + $0x1a4] sm:$0xf] %v2284
    %v2301 = vld [vmem:[#allocation2] sm:$0xf]
    %v2302 = vld [vmem:[#allocation2 + $0x4] sm:$0x1]
    %v2303 = vld [vmem:[#allocation2 + $0x8] sm:$0xf]
    %v2304 = vld [vmem:[#allocation2 + $0xc] sm:$0x1]
    %v2305 = vld [vmem:[#allocation2 + $0x10] sm:$0xf]
    %v2306 = vld [vmem:[#allocation2 + $0x14] sm:$0x1]
    %v2307 = vld [vmem:[#allocation2 + $0x18] sm:$0xf]
    %v2308 = vld [vmem:[#allocation2 + $0x1c] sm:$0x1]
    %v2309 = vld [vmem:[#allocation2 + $0x20] sm:$0xf]
    %v2310 = vld [vmem:[#allocation2 + $0x24] sm:$0x1]
    %v2311 = vld [vmem:[#allocation2 + $0x28] sm:$0xf]
    %v2312 = vld [vmem:[#allocation2 + $0x2c] sm:$0x1]
    %v2313 = vld [vmem:[#allocation2 + $0x30] sm:$0xf]
    %v2314 = vld [vmem:[#allocation2 + $0x34] sm:$0x1]
    %v2315 = vld [vmem:[#allocation2 + $0x38] sm:$0xf]
    %v2316 = vld [vmem:[#allocation2 + $0x3c] sm:$0x1]
    %v2317 = vld [vmem:[#allocation2 + $0x40] sm:$0xf]
    %v2318 = vld [vmem:[#allocation2 + $0x44] sm:$0x1]
    %v2319 = vld [vmem:[#allocation2 + $0x48] sm:$0xf]
    %v2320 = vld [vmem:[#allocation2 + $0x4c] sm:$0x1]
    %v2321 = vld [vmem:[#allocation2 + $0x50] sm:$0xf]
    %v2322 = vld [vmem:[#allocation2 + $0x54] sm:$0x1]
    %v2323 = vld [vmem:[#allocation2 + $0x58] sm:$0xf]
    %v2324 = vld [vmem:[#allocation2 + $0x5c] sm:$0x1]
    %v2325 = vld [vmem:[#allocation2 + $0x60] sm:$0xf]
    %v2326 = vld [vmem:[#allocation2 + $0x64] sm:$0x1]
    %v2327 = vld [vmem:[#allocation2 + $0x68] sm:$0xf]
    %v2328 = vld [vmem:[#allocation2 + $0x6c] sm:$0x1]
    %v2329 = vld [vmem:[#allocation2 + $0x70] sm:$0xf]
    %v2330 = vld [vmem:[#allocation2 + $0x74] sm:$0x1]
    %v2331 = vld [vmem:[#allocation2 + $0x78] sm:$0xf]
    %v2332 = vld [vmem:[#allocation2 + $0x7c] sm:$0x1]
    %vm2333 = vsmask.f32 3328
    %vm2334 = vsmask.f32 7440
    %vm2335 = vmor %vm2333, %vm2334
    %v2337 = vshrl.u32 %v2301, 16
    %v2339 = vrot.slane %v2337, 4
    %v2340 = vshll.u32 %v2301, 16
    %v2342 = vrot.slane %v2340, 5
    %v2343 = vor.u32 %v2339, %v2342
    %v2344 = vrot.slane %v2343, 4
    %v2346 = vshll.u32 %v2302, 16
    %v2348 = vrot.slane %v2346, 5
    %v2349 = vsel %vm2335, %v2344, %v2348
    %v2351 = vshrl.u32 %v2303, 16
    %v2353 = vrot.slane %v2351, 4
    %v2354 = vshll.u32 %v2303, 16
    %v2356 = vrot.slane %v2354, 5
    %v2357 = vor.u32 %v2353, %v2356
    %v2358 = vrot.slane %v2357, 4
    %v2360 = vshll.u32 %v2304, 16
    %v2362 = vrot.slane %v2360, 5
    %v2363 = vsel %vm2335, %v2358, %v2362
    %v2365 = vshrl.u32 %v2305, 16
    %v2367 = vrot.slane %v2365, 4
    %v2368 = vshll.u32 %v2305, 16
    %v2370 = vrot.slane %v2368, 5
    %v2371 = vor.u32 %v2367, %v2370
    %v2372 = vrot.slane %v2371, 4
    %v2374 = vshll.u32 %v2306, 16
    %v2376 = vrot.slane %v2374, 5
    %v2377 = vsel %vm2335, %v2372, %v2376
    %v2379 = vshrl.u32 %v2307, 16
    %v2381 = vrot.slane %v2379, 4
    %v2382 = vshll.u32 %v2307, 16
    %v2384 = vrot.slane %v2382, 5
    %v2385 = vor.u32 %v2381, %v2384
    %v2386 = vrot.slane %v2385, 4
    %v2388 = vshll.u32 %v2308, 16
    %v2390 = vrot.slane %v2388, 5
    %v2391 = vsel %vm2335, %v2386, %v2390
    %v2393 = vshrl.u32 %v2309, 16
    %v2395 = vrot.slane %v2393, 4
    %v2396 = vshll.u32 %v2309, 16
    %v2398 = vrot.slane %v2396, 5
    %v2399 = vor.u32 %v2395, %v2398
    %v2400 = vrot.slane %v2399, 4
    %v2402 = vshll.u32 %v2310, 16
    %v2404 = vrot.slane %v2402, 5
    %v2405 = vsel %vm2335, %v2400, %v2404
    %v2407 = vshrl.u32 %v2311, 16
    %v2409 = vrot.slane %v2407, 4
    %v2410 = vshll.u32 %v2311, 16
    %v2412 = vrot.slane %v2410, 5
    %v2413 = vor.u32 %v2409, %v2412
    %v2414 = vrot.slane %v2413, 4
    %v2416 = vshll.u32 %v2312, 16
    %v2418 = vrot.slane %v2416, 5
    %v2419 = vsel %vm2335, %v2414, %v2418
    %v2421 = vshrl.u32 %v2313, 16
    %v2423 = vrot.slane %v2421, 4
    %v2424 = vshll.u32 %v2313, 16
    %v2426 = vrot.slane %v2424, 5
    %v2427 = vor.u32 %v2423, %v2426
    %v2428 = vrot.slane %v2427, 4
    %v2430 = vshll.u32 %v2314, 16
    %v2432 = vrot.slane %v2430, 5
    %v2433 = vsel %vm2335, %v2428, %v2432
    %v2435 = vshrl.u32 %v2315, 16
    %v2437 = vrot.slane %v2435, 4
    %v2438 = vshll.u32 %v2315, 16
    %v2440 = vrot.slane %v2438, 5
    %v2441 = vor.u32 %v2437, %v2440
    %v2442 = vrot.slane %v2441, 4
    %v2444 = vshll.u32 %v2316, 16
    %v2446 = vrot.slane %v2444, 5
    %v2447 = vsel %vm2335, %v2442, %v2446
    %v2449 = vshrl.u32 %v2317, 16
    %v2451 = vrot.slane %v2449, 4
    %v2452 = vshll.u32 %v2317, 16
    %v2454 = vrot.slane %v2452, 5
    %v2455 = vor.u32 %v2451, %v2454
    %v2456 = vrot.slane %v2455, 4
    %v2458 = vshll.u32 %v2318, 16
    %v2460 = vrot.slane %v2458, 5
    %v2461 = vsel %vm2335, %v2456, %v2460
    %v2463 = vshrl.u32 %v2319, 16
    %v2465 = vrot.slane %v2463, 4
    %v2466 = vshll.u32 %v2319, 16
    %v2468 = vrot.slane %v2466, 5
    %v2469 = vor.u32 %v2465, %v2468
    %v2470 = vrot.slane %v2469, 4
    %v2472 = vshll.u32 %v2320, 16
    %v2474 = vrot.slane %v2472, 5
    %v2475 = vsel %vm2335, %v2470, %v2474
    %v2477 = vshrl.u32 %v2321, 16
    %v2479 = vrot.slane %v2477, 4
    %v2480 = vshll.u32 %v2321, 16
    %v2482 = vrot.slane %v2480, 5
    %v2483 = vor.u32 %v2479, %v2482
    %v2484 = vrot.slane %v2483, 4
    %v2486 = vshll.u32 %v2322, 16
    %v2488 = vrot.slane %v2486, 5
    %v2489 = vsel %vm2335, %v2484, %v2488
    %v2491 = vshrl.u32 %v2323, 16
    %v2493 = vrot.slane %v2491, 4
    %v2494 = vshll.u32 %v2323, 16
    %v2496 = vrot.slane %v2494, 5
    %v2497 = vor.u32 %v2493, %v2496
    %v2498 = vrot.slane %v2497, 4
    %v2500 = vshll.u32 %v2324, 16
    %v2502 = vrot.slane %v2500, 5
    %v2503 = vsel %vm2335, %v2498, %v2502
    %v2505 = vshrl.u32 %v2325, 16
    %v2507 = vrot.slane %v2505, 4
    %v2508 = vshll.u32 %v2325, 16
    %v2510 = vrot.slane %v2508, 5
    %v2511 = vor.u32 %v2507, %v2510
    %v2512 = vrot.slane %v2511, 4
    %v2514 = vshll.u32 %v2326, 16
    %v2516 = vrot.slane %v2514, 5
    %v2517 = vsel %vm2335, %v2512, %v2516
    %v2519 = vshrl.u32 %v2327, 16
    %v2521 = vrot.slane %v2519, 4
    %v2522 = vshll.u32 %v2327, 16
    %v2524 = vrot.slane %v2522, 5
    %v2525 = vor.u32 %v2521, %v2524
    %v2526 = vrot.slane %v2525, 4
    %v2528 = vshll.u32 %v2328, 16
    %v2530 = vrot.slane %v2528, 5
    %v2531 = vsel %vm2335, %v2526, %v2530
    %v2533 = vshrl.u32 %v2329, 16
    %v2535 = vrot.slane %v2533, 4
    %v2536 = vshll.u32 %v2329, 16
    %v2538 = vrot.slane %v2536, 5
    %v2539 = vor.u32 %v2535, %v2538
    %v2540 = vrot.slane %v2539, 4
    %v2542 = vshll.u32 %v2330, 16
    %v2544 = vrot.slane %v2542, 5
    %v2545 = vsel %vm2335, %v2540, %v2544
    %v2547 = vshrl.u32 %v2331, 16
    %v2549 = vrot.slane %v2547, 4
    %v2550 = vshll.u32 %v2331, 16
    %v2552 = vrot.slane %v2550, 5
    %v2553 = vor.u32 %v2549, %v2552
    %v2554 = vrot.slane %v2553, 4
    %v2556 = vshll.u32 %v2332, 16
    %v2558 = vrot.slane %v2556, 5
    %v2559 = vsel %vm2335, %v2554, %v2558
    %2576 = vst [vmem:[#allocation4 + $0x4] sm:$0xf] %v2349
    %2577 = vst [vmem:[#allocation4 + $0x20] sm:$0xf] %v2363
    %2578 = vst [vmem:[#allocation4 + $0x3c] sm:$0xf] %v2377
    %2579 = vst [vmem:[#allocation4 + $0x58] sm:$0xf] %v2391
    %2580 = vst [vmem:[#allocation4 + $0x74] sm:$0xf] %v2405
    %2581 = vst [vmem:[#allocation4 + $0x90] sm:$0xf] %v2419
    %2582 = vst [vmem:[#allocation4 + $0xac] sm:$0xf] %v2433
    %2583 = vst [vmem:[#allocation4 + $0xc8] sm:$0xf] %v2447
    %2584 = vst [vmem:[#allocation4 + $0xe4] sm:$0xf] %v2461
    %2585 = vst [vmem:[#allocation4 + $0x100] sm:$0xf] %v2475
    %2586 = vst [vmem:[#allocation4 + $0x11c] sm:$0xf] %v2489
    %2587 = vst [vmem:[#allocation4 + $0x138] sm:$0xf] %v2503
    %2588 = vst [vmem:[#allocation4 + $0x154] sm:$0xf] %v2517
    %2589 = vst [vmem:[#allocation4 + $0x170] sm:$0xf] %v2531
    %2590 = vst [vmem:[#allocation4 + $0x18c] sm:$0xf] %v2545
    %2591 = vst [vmem:[#allocation4 + $0x1a8] sm:$0xf] %v2559
    %v2592 = vld [vmem:[#allocation2] sm:$0xe]
    %v2593 = vld [vmem:[#allocation2 + $0x4] sm:$0x1]
    %v2594 = vld [vmem:[#allocation2 + $0x8] sm:$0xe]
    %v2595 = vld [vmem:[#allocation2 + $0xc] sm:$0x1]
    %v2596 = vld [vmem:[#allocation2 + $0x10] sm:$0xe]
    %v2597 = vld [vmem:[#allocation2 + $0x14] sm:$0x1]
    %v2598 = vld [vmem:[#allocation2 + $0x18] sm:$0xe]
    %v2599 = vld [vmem:[#allocation2 + $0x1c] sm:$0x1]
    %v2600 = vld [vmem:[#allocation2 + $0x20] sm:$0xe]
    %v2601 = vld [vmem:[#allocation2 + $0x24] sm:$0x1]
    %v2602 = vld [vmem:[#allocation2 + $0x28] sm:$0xe]
    %v2603 = vld [vmem:[#allocation2 + $0x2c] sm:$0x1]
    %v2604 = vld [vmem:[#allocation2 + $0x30] sm:$0xe]
    %v2605 = vld [vmem:[#allocation2 + $0x34] sm:$0x1]
    %v2606 = vld [vmem:[#allocation2 + $0x38] sm:$0xe]
    %v2607 = vld [vmem:[#allocation2 + $0x3c] sm:$0x1]
    %v2608 = vld [vmem:[#allocation2 + $0x40] sm:$0xe]
    %v2609 = vld [vmem:[#allocation2 + $0x44] sm:$0x1]
    %v2610 = vld [vmem:[#allocation2 + $0x48] sm:$0xe]
    %v2611 = vld [vmem:[#allocation2 + $0x4c] sm:$0x1]
    %v2612 = vld [vmem:[#allocation2 + $0x50] sm:$0xe]
    %v2613 = vld [vmem:[#allocation2 + $0x54] sm:$0x1]
    %v2614 = vld [vmem:[#allocation2 + $0x58] sm:$0xe]
    %v2615 = vld [vmem:[#allocation2 + $0x5c] sm:$0x1]
    %v2616 = vld [vmem:[#allocation2 + $0x60] sm:$0xe]
    %v2617 = vld [vmem:[#allocation2 + $0x64] sm:$0x1]
    %v2618 = vld [vmem:[#allocation2 + $0x68] sm:$0xe]
    %v2619 = vld [vmem:[#allocation2 + $0x6c] sm:$0x1]
    %v2620 = vld [vmem:[#allocation2 + $0x70] sm:$0xe]
    %v2621 = vld [vmem:[#allocation2 + $0x74] sm:$0x1]
    %v2622 = vld [vmem:[#allocation2 + $0x78] sm:$0xe]
    %v2623 = vld [vmem:[#allocation2 + $0x7c] sm:$0x1]
    %vm2656 = vcmask 1042432
    %vm2657 = vcmask 1046532
    %vm2658 = vmor %vm2656, %vm2657
    %v2659 = vrot.slane %v2592, 5
    %v2660 = vrot.slane %v2659, 4
    %v2661 = vrot.slane %v2593, 5
    %v2662 = vsel %vm2658, %v2660, %v2661
    %v2663 = vrot.slane %v2594, 5
    %v2664 = vrot.slane %v2663, 4
    %v2665 = vrot.slane %v2595, 5
    %v2666 = vsel %vm2658, %v2664, %v2665
    %v2667 = vrot.slane %v2596, 5
    %v2668 = vrot.slane %v2667, 4
    %v2669 = vrot.slane %v2597, 5
    %v2670 = vsel %vm2658, %v2668, %v2669
    %v2671 = vrot.slane %v2598, 5
    %v2672 = vrot.slane %v2671, 4
    %v2673 = vrot.slane %v2599, 5
    %v2674 = vsel %vm2658, %v2672, %v2673
    %v2675 = vrot.slane %v2600, 5
    %v2676 = vrot.slane %v2675, 4
    %v2677 = vrot.slane %v2601, 5
    %v2678 = vsel %vm2658, %v2676, %v2677
    %v2679 = vrot.slane %v2602, 5
    %v2680 = vrot.slane %v2679, 4
    %v2681 = vrot.slane %v2603, 5
    %v2682 = vsel %vm2658, %v2680, %v2681
    %v2683 = vrot.slane %v2604, 5
    %v2684 = vrot.slane %v2683, 4
    %v2685 = vrot.slane %v2605, 5
    %v2686 = vsel %vm2658, %v2684, %v2685
    %v2687 = vrot.slane %v2606, 5
    %v2688 = vrot.slane %v2687, 4
    %v2689 = vrot.slane %v2607, 5
    %v2690 = vsel %vm2658, %v2688, %v2689
    %v2691 = vrot.slane %v2608, 5
    %v2692 = vrot.slane %v2691, 4
    %v2693 = vrot.slane %v2609, 5
    %v2694 = vsel %vm2658, %v2692, %v2693
    %v2695 = vrot.slane %v2610, 5
    %v2696 = vrot.slane %v2695, 4
    %v2697 = vrot.slane %v2611, 5
    %v2698 = vsel %vm2658, %v2696, %v2697
    %v2699 = vrot.slane %v2612, 5
    %v2700 = vrot.slane %v2699, 4
    %v2701 = vrot.slane %v2613, 5
    %v2702 = vsel %vm2658, %v2700, %v2701
    %v2703 = vrot.slane %v2614, 5
    %v2704 = vrot.slane %v2703, 4
    %v2705 = vrot.slane %v2615, 5
    %v2706 = vsel %vm2658, %v2704, %v2705
    %v2707 = vrot.slane %v2616, 5
    %v2708 = vrot.slane %v2707, 4
    %v2709 = vrot.slane %v2617, 5
    %v2710 = vsel %vm2658, %v2708, %v2709
    %v2711 = vrot.slane %v2618, 5
    %v2712 = vrot.slane %v2711, 4
    %v2713 = vrot.slane %v2619, 5
    %v2714 = vsel %vm2658, %v2712, %v2713
    %v2715 = vrot.slane %v2620, 5
    %v2716 = vrot.slane %v2715, 4
    %v2717 = vrot.slane %v2621, 5
    %v2718 = vsel %vm2658, %v2716, %v2717
    %v2719 = vrot.slane %v2622, 5
    %v2720 = vrot.slane %v2719, 4
    %v2721 = vrot.slane %v2623, 5
    %v2722 = vsel %vm2658, %v2720, %v2721
    %2739 = vst [vmem:[#allocation4 + $0x8] sm:$0xf] %v2662
    %2740 = vst [vmem:[#allocation4 + $0x24] sm:$0xf] %v2666
    %2741 = vst [vmem:[#allocation4 + $0x40] sm:$0xf] %v2670
    %2742 = vst [vmem:[#allocation4 + $0x5c] sm:$0xf] %v2674
    %2743 = vst [vmem:[#allocation4 + $0x78] sm:$0xf] %v2678
    %2744 = vst [vmem:[#allocation4 + $0x94] sm:$0xf] %v2682
    %2745 = vst [vmem:[#allocation4 + $0xb0] sm:$0xf] %v2686
    %2746 = vst [vmem:[#allocation4 + $0xcc] sm:$0xf] %v2690
    %2747 = vst [vmem:[#allocation4 + $0xe8] sm:$0xf] %v2694
    %2748 = vst [vmem:[#allocation4 + $0x104] sm:$0xf] %v2698
    %2749 = vst [vmem:[#allocation4 + $0x120] sm:$0xf] %v2702
    %2750 = vst [vmem:[#allocation4 + $0x13c] sm:$0xf] %v2706
    %2751 = vst [vmem:[#allocation4 + $0x158] sm:$0xf] %v2710
    %2752 = vst [vmem:[#allocation4 + $0x174] sm:$0xf] %v2714
    %2753 = vst [vmem:[#allocation4 + $0x190] sm:$0xf] %v2718
    %2754 = vst [vmem:[#allocation4 + $0x1ac] sm:$0xf] %v2722
    %v2755 = vld [vmem:[#allocation2] sm:$0xe]
    %v2756 = vld [vmem:[#allocation2 + $0x4] sm:$0x3]
    %v2757 = vld [vmem:[#allocation2 + $0x8] sm:$0xe]
    %v2758 = vld [vmem:[#allocation2 + $0xc] sm:$0x3]
    %v2759 = vld [vmem:[#allocation2 + $0x10] sm:$0xe]
    %v2760 = vld [vmem:[#allocation2 + $0x14] sm:$0x3]
    %v2761 = vld [vmem:[#allocation2 + $0x18] sm:$0xe]
    %v2762 = vld [vmem:[#allocation2 + $0x1c] sm:$0x3]
    %v2763 = vld [vmem:[#allocation2 + $0x20] sm:$0xe]
    %v2764 = vld [vmem:[#allocation2 + $0x24] sm:$0x3]
    %v2765 = vld [vmem:[#allocation2 + $0x28] sm:$0xe]
    %v2766 = vld [vmem:[#allocation2 + $0x2c] sm:$0x3]
    %v2767 = vld [vmem:[#allocation2 + $0x30] sm:$0xe]
    %v2768 = vld [vmem:[#allocation2 + $0x34] sm:$0x3]
    %v2769 = vld [vmem:[#allocation2 + $0x38] sm:$0xe]
    %v2770 = vld [vmem:[#allocation2 + $0x3c] sm:$0x3]
    %v2771 = vld [vmem:[#allocation2 + $0x40] sm:$0xe]
    %v2772 = vld [vmem:[#allocation2 + $0x44] sm:$0x3]
    %v2773 = vld [vmem:[#allocation2 + $0x48] sm:$0xe]
    %v2774 = vld [vmem:[#allocation2 + $0x4c] sm:$0x3]
    %v2775 = vld [vmem:[#allocation2 + $0x50] sm:$0xe]
    %v2776 = vld [vmem:[#allocation2 + $0x54] sm:$0x3]
    %v2777 = vld [vmem:[#allocation2 + $0x58] sm:$0xe]
    %v2778 = vld [vmem:[#allocation2 + $0x5c] sm:$0x3]
    %v2779 = vld [vmem:[#allocation2 + $0x60] sm:$0xe]
    %v2780 = vld [vmem:[#allocation2 + $0x64] sm:$0x3]
    %v2781 = vld [vmem:[#allocation2 + $0x68] sm:$0xe]
    %v2782 = vld [vmem:[#allocation2 + $0x6c] sm:$0x3]
    %v2783 = vld [vmem:[#allocation2 + $0x70] sm:$0xe]
    %v2784 = vld [vmem:[#allocation2 + $0x74] sm:$0x3]
    %v2785 = vld [vmem:[#allocation2 + $0x78] sm:$0xe]
    %v2786 = vld [vmem:[#allocation2 + $0x7c] sm:$0x3]
    %vm2787 = vsmask.f32 2304
    %vm2788 = vsmask.f32 6416
    %vm2789 = vmor %vm2787, %vm2788
    %v2791 = vshrl.u32 %v2755, 16
    %v2793 = vrot.slane %v2791, 5
    %v2794 = vshll.u32 %v2755, 16
    %v2796 = vrot.slane %v2794, 6
    %v2797 = vor.u32 %v2793, %v2796
    %v2798 = vrot.slane %v2797, 4
    %v2800 = vshrl.u32 %v2756, 16
    %v2802 = vrot.slane %v2800, 5
    %v2803 = vshll.u32 %v2756, 16
    %v2805 = vrot.slane %v2803, 6
    %v2806 = vor.u32 %v2802, %v2805
    %v2807 = vsel %vm2789, %v2798, %v2806
    %v2809 = vshrl.u32 %v2757, 16
    %v2811 = vrot.slane %v2809, 5
    %v2812 = vshll.u32 %v2757, 16
    %v2814 = vrot.slane %v2812, 6
    %v2815 = vor.u32 %v2811, %v2814
    %v2816 = vrot.slane %v2815, 4
    %v2818 = vshrl.u32 %v2758, 16
    %v2820 = vrot.slane %v2818, 5
    %v2821 = vshll.u32 %v2758, 16
    %v2823 = vrot.slane %v2821, 6
    %v2824 = vor.u32 %v2820, %v2823
    %v2825 = vsel %vm2789, %v2816, %v2824
    %v2827 = vshrl.u32 %v2759, 16
    %v2829 = vrot.slane %v2827, 5
    %v2830 = vshll.u32 %v2759, 16
    %v2832 = vrot.slane %v2830, 6
    %v2833 = vor.u32 %v2829, %v2832
    %v2834 = vrot.slane %v2833, 4
    %v2836 = vshrl.u32 %v2760, 16
    %v2838 = vrot.slane %v2836, 5
    %v2839 = vshll.u32 %v2760, 16
    %v2841 = vrot.slane %v2839, 6
    %v2842 = vor.u32 %v2838, %v2841
    %v2843 = vsel %vm2789, %v2834, %v2842
    %v2845 = vshrl.u32 %v2761, 16
    %v2847 = vrot.slane %v2845, 5
    %v2848 = vshll.u32 %v2761, 16
    %v2850 = vrot.slane %v2848, 6
    %v2851 = vor.u32 %v2847, %v2850
    %v2852 = vrot.slane %v2851, 4
    %v2854 = vshrl.u32 %v2762, 16
    %v2856 = vrot.slane %v2854, 5
    %v2857 = vshll.u32 %v2762, 16
    %v2859 = vrot.slane %v2857, 6
    %v2860 = vor.u32 %v2856, %v2859
    %v2861 = vsel %vm2789, %v2852, %v2860
    %v2863 = vshrl.u32 %v2763, 16
    %v2865 = vrot.slane %v2863, 5
    %v2866 = vshll.u32 %v2763, 16
    %v2868 = vrot.slane %v2866, 6
    %v2869 = vor.u32 %v2865, %v2868
    %v2870 = vrot.slane %v2869, 4
    %v2872 = vshrl.u32 %v2764, 16
    %v2874 = vrot.slane %v2872, 5
    %v2875 = vshll.u32 %v2764, 16
    %v2877 = vrot.slane %v2875, 6
    %v2878 = vor.u32 %v2874, %v2877
    %v2879 = vsel %vm2789, %v2870, %v2878
    %v2881 = vshrl.u32 %v2765, 16
    %v2883 = vrot.slane %v2881, 5
    %v2884 = vshll.u32 %v2765, 16
    %v2886 = vrot.slane %v2884, 6
    %v2887 = vor.u32 %v2883, %v2886
    %v2888 = vrot.slane %v2887, 4
    %v2890 = vshrl.u32 %v2766, 16
    %v2892 = vrot.slane %v2890, 5
    %v2893 = vshll.u32 %v2766, 16
    %v2895 = vrot.slane %v2893, 6
    %v2896 = vor.u32 %v2892, %v2895
    %v2897 = vsel %vm2789, %v2888, %v2896
    %v2899 = vshrl.u32 %v2767, 16
    %v2901 = vrot.slane %v2899, 5
    %v2902 = vshll.u32 %v2767, 16
    %v2904 = vrot.slane %v2902, 6
    %v2905 = vor.u32 %v2901, %v2904
    %v2906 = vrot.slane %v2905, 4
    %v2908 = vshrl.u32 %v2768, 16
    %v2910 = vrot.slane %v2908, 5
    %v2911 = vshll.u32 %v2768, 16
    %v2913 = vrot.slane %v2911, 6
    %v2914 = vor.u32 %v2910, %v2913
    %v2915 = vsel %vm2789, %v2906, %v2914
    %v2917 = vshrl.u32 %v2769, 16
    %v2919 = vrot.slane %v2917, 5
    %v2920 = vshll.u32 %v2769, 16
    %v2922 = vrot.slane %v2920, 6
    %v2923 = vor.u32 %v2919, %v2922
    %v2924 = vrot.slane %v2923, 4
    %v2926 = vshrl.u32 %v2770, 16
    %v2928 = vrot.slane %v2926, 5
    %v2929 = vshll.u32 %v2770, 16
    %v2931 = vrot.slane %v2929, 6
    %v2932 = vor.u32 %v2928, %v2931
    %v2933 = vsel %vm2789, %v2924, %v2932
    %v2935 = vshrl.u32 %v2771, 16
    %v2937 = vrot.slane %v2935, 5
    %v2938 = vshll.u32 %v2771, 16
    %v2940 = vrot.slane %v2938, 6
    %v2941 = vor.u32 %v2937, %v2940
    %v2942 = vrot.slane %v2941, 4
    %v2944 = vshrl.u32 %v2772, 16
    %v2946 = vrot.slane %v2944, 5
    %v2947 = vshll.u32 %v2772, 16
    %v2949 = vrot.slane %v2947, 6
    %v2950 = vor.u32 %v2946, %v2949
    %v2951 = vsel %vm2789, %v2942, %v2950
    %v2953 = vshrl.u32 %v2773, 16
    %v2955 = vrot.slane %v2953, 5
    %v2956 = vshll.u32 %v2773, 16
    %v2958 = vrot.slane %v2956, 6
    %v2959 = vor.u32 %v2955, %v2958
    %v2960 = vrot.slane %v2959, 4
    %v2962 = vshrl.u32 %v2774, 16
    %v2964 = vrot.slane %v2962, 5
    %v2965 = vshll.u32 %v2774, 16
    %v2967 = vrot.slane %v2965, 6
    %v2968 = vor.u32 %v2964, %v2967
    %v2969 = vsel %vm2789, %v2960, %v2968
    %v2971 = vshrl.u32 %v2775, 16
    %v2973 = vrot.slane %v2971, 5
    %v2974 = vshll.u32 %v2775, 16
    %v2976 = vrot.slane %v2974, 6
    %v2977 = vor.u32 %v2973, %v2976
    %v2978 = vrot.slane %v2977, 4
    %v2980 = vshrl.u32 %v2776, 16
    %v2982 = vrot.slane %v2980, 5
    %v2983 = vshll.u32 %v2776, 16
    %v2985 = vrot.slane %v2983, 6
    %v2986 = vor.u32 %v2982, %v2985
    %v2987 = vsel %vm2789, %v2978, %v2986
    %v2989 = vshrl.u32 %v2777, 16
    %v2991 = vrot.slane %v2989, 5
    %v2992 = vshll.u32 %v2777, 16
    %v2994 = vrot.slane %v2992, 6
    %v2995 = vor.u32 %v2991, %v2994
    %v2996 = vrot.slane %v2995, 4
    %v2998 = vshrl.u32 %v2778, 16
    %v3000 = vrot.slane %v2998, 5
    %v3001 = vshll.u32 %v2778, 16
    %v3003 = vrot.slane %v3001, 6
    %v3004 = vor.u32 %v3000, %v3003
    %v3005 = vsel %vm2789, %v2996, %v3004
    %v3007 = vshrl.u32 %v2779, 16
    %v3009 = vrot.slane %v3007, 5
    %v3010 = vshll.u32 %v2779, 16
    %v3012 = vrot.slane %v3010, 6
    %v3013 = vor.u32 %v3009, %v3012
    %v3014 = vrot.slane %v3013, 4
    %v3016 = vshrl.u32 %v2780, 16
    %v3018 = vrot.slane %v3016, 5
    %v3019 = vshll.u32 %v2780, 16
    %v3021 = vrot.slane %v3019, 6
    %v3022 = vor.u32 %v3018, %v3021
    %v3023 = vsel %vm2789, %v3014, %v3022
    %v3025 = vshrl.u32 %v2781, 16
    %v3027 = vrot.slane %v3025, 5
    %v3028 = vshll.u32 %v2781, 16
    %v3030 = vrot.slane %v3028, 6
    %v3031 = vor.u32 %v3027, %v3030
    %v3032 = vrot.slane %v3031, 4
    %v3034 = vshrl.u32 %v2782, 16
    %v3036 = vrot.slane %v3034, 5
    %v3037 = vshll.u32 %v2782, 16
    %v3039 = vrot.slane %v3037, 6
    %v3040 = vor.u32 %v3036, %v3039
    %v3041 = vsel %vm2789, %v3032, %v3040
    %v3043 = vshrl.u32 %v2783, 16
    %v3045 = vrot.slane %v3043, 5
    %v3046 = vshll.u32 %v2783, 16
    %v3048 = vrot.slane %v3046, 6
    %v3049 = vor.u32 %v3045, %v3048
    %v3050 = vrot.slane %v3049, 4
    %v3052 = vshrl.u32 %v2784, 16
    %v3054 = vrot.slane %v3052, 5
    %v3055 = vshll.u32 %v2784, 16
    %v3057 = vrot.slane %v3055, 6
    %v3058 = vor.u32 %v3054, %v3057
    %v3059 = vsel %vm2789, %v3050, %v3058
    %v3061 = vshrl.u32 %v2785, 16
    %v3063 = vrot.slane %v3061, 5
    %v3064 = vshll.u32 %v2785, 16
    %v3066 = vrot.slane %v3064, 6
    %v3067 = vor.u32 %v3063, %v3066
    %v3068 = vrot.slane %v3067, 4
    %v3070 = vshrl.u32 %v2786, 16
    %v3072 = vrot.slane %v3070, 5
    %v3073 = vshll.u32 %v2786, 16
    %v3075 = vrot.slane %v3073, 6
    %v3076 = vor.u32 %v3072, %v3075
    %v3077 = vsel %vm2789, %v3068, %v3076
    %3094 = vst [vmem:[#allocation4 + $0xc] sm:$0xf] %v2807
    %3095 = vst [vmem:[#allocation4 + $0x28] sm:$0xf] %v2825
    %3096 = vst [vmem:[#allocation4 + $0x44] sm:$0xf] %v2843
    %3097 = vst [vmem:[#allocation4 + $0x60] sm:$0xf] %v2861
    %3098 = vst [vmem:[#allocation4 + $0x7c] sm:$0xf] %v2879
    %3099 = vst [vmem:[#allocation4 + $0x98] sm:$0xf] %v2897
    %3100 = vst [vmem:[#allocation4 + $0xb4] sm:$0xf] %v2915
    %3101 = vst [vmem:[#allocation4 + $0xd0] sm:$0xf] %v2933
    %3102 = vst [vmem:[#allocation4 + $0xec] sm:$0xf] %v2951
    %3103 = vst [vmem:[#allocation4 + $0x108] sm:$0xf] %v2969
    %3104 = vst [vmem:[#allocation4 + $0x124] sm:$0xf] %v2987
    %3105 = vst [vmem:[#allocation4 + $0x140] sm:$0xf] %v3005
    %3106 = vst [vmem:[#allocation4 + $0x15c] sm:$0xf] %v3023
    %3107 = vst [vmem:[#allocation4 + $0x178] sm:$0xf] %v3041
    %3108 = vst [vmem:[#allocation4 + $0x194] sm:$0xf] %v3059
    %3109 = vst [vmem:[#allocation4 + $0x1b0] sm:$0xf] %v3077
    %v3110 = vld [vmem:[#allocation2] sm:$0xc]
    %v3111 = vld [vmem:[#allocation2 + $0x4] sm:$0x3]
    %v3112 = vld [vmem:[#allocation2 + $0x8] sm:$0xc]
    %v3113 = vld [vmem:[#allocation2 + $0xc] sm:$0x3]
    %v3114 = vld [vmem:[#allocation2 + $0x10] sm:$0xc]
    %v3115 = vld [vmem:[#allocation2 + $0x14] sm:$0x3]
    %v3116 = vld [vmem:[#allocation2 + $0x18] sm:$0xc]
    %v3117 = vld [vmem:[#allocation2 + $0x1c] sm:$0x3]
    %v3118 = vld [vmem:[#allocation2 + $0x20] sm:$0xc]
    %v3119 = vld [vmem:[#allocation2 + $0x24] sm:$0x3]
    %v3120 = vld [vmem:[#allocation2 + $0x28] sm:$0xc]
    %v3121 = vld [vmem:[#allocation2 + $0x2c] sm:$0x3]
    %v3122 = vld [vmem:[#allocation2 + $0x30] sm:$0xc]
    %v3123 = vld [vmem:[#allocation2 + $0x34] sm:$0x3]
    %v3124 = vld [vmem:[#allocation2 + $0x38] sm:$0xc]
    %v3125 = vld [vmem:[#allocation2 + $0x3c] sm:$0x3]
    %v3126 = vld [vmem:[#allocation2 + $0x40] sm:$0xc]
    %v3127 = vld [vmem:[#allocation2 + $0x44] sm:$0x3]
    %v3128 = vld [vmem:[#allocation2 + $0x48] sm:$0xc]
    %v3129 = vld [vmem:[#allocation2 + $0x4c] sm:$0x3]
    %v3130 = vld [vmem:[#allocation2 + $0x50] sm:$0xc]
    %v3131 = vld [vmem:[#allocation2 + $0x54] sm:$0x3]
    %v3132 = vld [vmem:[#allocation2 + $0x58] sm:$0xc]
    %v3133 = vld [vmem:[#allocation2 + $0x5c] sm:$0x3]
    %v3134 = vld [vmem:[#allocation2 + $0x60] sm:$0xc]
    %v3135 = vld [vmem:[#allocation2 + $0x64] sm:$0x3]
    %v3136 = vld [vmem:[#allocation2 + $0x68] sm:$0xc]
    %v3137 = vld [vmem:[#allocation2 + $0x6c] sm:$0x3]
    %v3138 = vld [vmem:[#allocation2 + $0x70] sm:$0xc]
    %v3139 = vld [vmem:[#allocation2 + $0x74] sm:$0x3]
    %v3140 = vld [vmem:[#allocation2 + $0x78] sm:$0xc]
    %v3141 = vld [vmem:[#allocation2 + $0x7c] sm:$0x3]
    %vm3174 = vcmask 1045508
    %vm3175 = vmor %vm2173, %vm3174
    %v3176 = vrot.slane %v3110, 6
    %v3177 = vrot.slane %v3176, 4
    %v3178 = vrot.slane %v3111, 6
    %v3179 = vsel %vm3175, %v3177, %v3178
    %v3180 = vrot.slane %v3112, 6
    %v3181 = vrot.slane %v3180, 4
    %v3182 = vrot.slane %v3113, 6
    %v3183 = vsel %vm3175, %v3181, %v3182
    %v3184 = vrot.slane %v3114, 6
    %v3185 = vrot.slane %v3184, 4
    %v3186 = vrot.slane %v3115, 6
    %v3187 = vsel %vm3175, %v3185, %v3186
    %v3188 = vrot.slane %v3116, 6
    %v3189 = vrot.slane %v3188, 4
    %v3190 = vrot.slane %v3117, 6
    %v3191 = vsel %vm3175, %v3189, %v3190
    %v3192 = vrot.slane %v3118, 6
    %v3193 = vrot.slane %v3192, 4
    %v3194 = vrot.slane %v3119, 6
    %v3195 = vsel %vm3175, %v3193, %v3194
    %v3196 = vrot.slane %v3120, 6
    %v3197 = vrot.slane %v3196, 4
    %v3198 = vrot.slane %v3121, 6
    %v3199 = vsel %vm3175, %v3197, %v3198
    %v3200 = vrot.slane %v3122, 6
    %v3201 = vrot.slane %v3200, 4
    %v3202 = vrot.slane %v3123, 6
    %v3203 = vsel %vm3175, %v3201, %v3202
    %v3204 = vrot.slane %v3124, 6
    %v3205 = vrot.slane %v3204, 4
    %v3206 = vrot.slane %v3125, 6
    %v3207 = vsel %vm3175, %v3205, %v3206
    %v3208 = vrot.slane %v3126, 6
    %v3209 = vrot.slane %v3208, 4
    %v3210 = vrot.slane %v3127, 6
    %v3211 = vsel %vm3175, %v3209, %v3210
    %v3212 = vrot.slane %v3128, 6
    %v3213 = vrot.slane %v3212, 4
    %v3214 = vrot.slane %v3129, 6
    %v3215 = vsel %vm3175, %v3213, %v3214
    %v3216 = vrot.slane %v3130, 6
    %v3217 = vrot.slane %v3216, 4
    %v3218 = vrot.slane %v3131, 6
    %v3219 = vsel %vm3175, %v3217, %v3218
    %v3220 = vrot.slane %v3132, 6
    %v3221 = vrot.slane %v3220, 4
    %v3222 = vrot.slane %v3133, 6
    %v3223 = vsel %vm3175, %v3221, %v3222
    %v3224 = vrot.slane %v3134, 6
    %v3225 = vrot.slane %v3224, 4
    %v3226 = vrot.slane %v3135, 6
    %v3227 = vsel %vm3175, %v3225, %v3226
    %v3228 = vrot.slane %v3136, 6
    %v3229 = vrot.slane %v3228, 4
    %v3230 = vrot.slane %v3137, 6
    %v3231 = vsel %vm3175, %v3229, %v3230
    %v3232 = vrot.slane %v3138, 6
    %v3233 = vrot.slane %v3232, 4
    %v3234 = vrot.slane %v3139, 6
    %v3235 = vsel %vm3175, %v3233, %v3234
    %v3236 = vrot.slane %v3140, 6
    %v3237 = vrot.slane %v3236, 4
    %v3238 = vrot.slane %v3141, 6
    %v3239 = vsel %vm3175, %v3237, %v3238
    %3256 = vst [vmem:[#allocation4 + $0x10] sm:$0xf] %v3179
    %3257 = vst [vmem:[#allocation4 + $0x2c] sm:$0xf] %v3183
    %3258 = vst [vmem:[#allocation4 + $0x48] sm:$0xf] %v3187
    %3259 = vst [vmem:[#allocation4 + $0x64] sm:$0xf] %v3191
    %3260 = vst [vmem:[#allocation4 + $0x80] sm:$0xf] %v3195
    %3261 = vst [vmem:[#allocation4 + $0x9c] sm:$0xf] %v3199
    %3262 = vst [vmem:[#allocation4 + $0xb8] sm:$0xf] %v3203
    %3263 = vst [vmem:[#allocation4 + $0xd4] sm:$0xf] %v3207
    %3264 = vst [vmem:[#allocation4 + $0xf0] sm:$0xf] %v3211
    %3265 = vst [vmem:[#allocation4 + $0x10c] sm:$0xf] %v3215
    %3266 = vst [vmem:[#allocation4 + $0x128] sm:$0xf] %v3219
    %3267 = vst [vmem:[#allocation4 + $0x144] sm:$0xf] %v3223
    %3268 = vst [vmem:[#allocation4 + $0x160] sm:$0xf] %v3227
    %3269 = vst [vmem:[#allocation4 + $0x17c] sm:$0xf] %v3231
    %3270 = vst [vmem:[#allocation4 + $0x198] sm:$0xf] %v3235
    %3271 = vst [vmem:[#allocation4 + $0x1b4] sm:$0xf] %v3239
    %v3272 = vld [vmem:[#allocation2] sm:$0xc]
    %v3273 = vld [vmem:[#allocation2 + $0x4] sm:$0x7]
    %v3274 = vld [vmem:[#allocation2 + $0x8] sm:$0xc]
    %v3275 = vld [vmem:[#allocation2 + $0xc] sm:$0x7]
    %v3276 = vld [vmem:[#allocation2 + $0x10] sm:$0xc]
    %v3277 = vld [vmem:[#allocation2 + $0x14] sm:$0x7]
    %v3278 = vld [vmem:[#allocation2 + $0x18] sm:$0xc]
    %v3279 = vld [vmem:[#allocation2 + $0x1c] sm:$0x7]
    %v3280 = vld [vmem:[#allocation2 + $0x20] sm:$0xc]
    %v3281 = vld [vmem:[#allocation2 + $0x24] sm:$0x7]
    %v3282 = vld [vmem:[#allocation2 + $0x28] sm:$0xc]
    %v3283 = vld [vmem:[#allocation2 + $0x2c] sm:$0x7]
    %v3284 = vld [vmem:[#allocation2 + $0x30] sm:$0xc]
    %v3285 = vld [vmem:[#allocation2 + $0x34] sm:$0x7]
    %v3286 = vld [vmem:[#allocation2 + $0x38] sm:$0xc]
    %v3287 = vld [vmem:[#allocation2 + $0x3c] sm:$0x7]
    %v3288 = vld [vmem:[#allocation2 + $0x40] sm:$0xc]
    %v3289 = vld [vmem:[#allocation2 + $0x44] sm:$0x7]
    %v3290 = vld [vmem:[#allocation2 + $0x48] sm:$0xc]
    %v3291 = vld [vmem:[#allocation2 + $0x4c] sm:$0x7]
    %v3292 = vld [vmem:[#allocation2 + $0x50] sm:$0xc]
    %v3293 = vld [vmem:[#allocation2 + $0x54] sm:$0x7]
    %v3294 = vld [vmem:[#allocation2 + $0x58] sm:$0xc]
    %v3295 = vld [vmem:[#allocation2 + $0x5c] sm:$0x7]
    %v3296 = vld [vmem:[#allocation2 + $0x60] sm:$0xc]
    %v3297 = vld [vmem:[#allocation2 + $0x64] sm:$0x7]
    %v3298 = vld [vmem:[#allocation2 + $0x68] sm:$0xc]
    %v3299 = vld [vmem:[#allocation2 + $0x6c] sm:$0x7]
    %v3300 = vld [vmem:[#allocation2 + $0x70] sm:$0xc]
    %v3301 = vld [vmem:[#allocation2 + $0x74] sm:$0x7]
    %v3302 = vld [vmem:[#allocation2 + $0x78] sm:$0xc]
    %v3303 = vld [vmem:[#allocation2 + $0x7c] sm:$0x7]
    %vm3304 = vsmask.f32 5392
    %vm3305 = vmor %vm2174, %vm3304
    %v3307 = vshrl.u32 %v3272, 16
    %v3309 = vrot.slane %v3307, 6
    %v3310 = vshll.u32 %v3272, 16
    %v3312 = vrot.slane %v3310, 7
    %v3313 = vor.u32 %v3309, %v3312
    %v3314 = vrot.slane %v3313, 4
    %v3316 = vshrl.u32 %v3273, 16
    %v3318 = vrot.slane %v3316, 6
    %v3319 = vshll.u32 %v3273, 16
    %v3321 = vrot.slane %v3319, 7
    %v3322 = vor.u32 %v3318, %v3321
    %v3323 = vsel %vm3305, %v3314, %v3322
    %v3325 = vshrl.u32 %v3274, 16
    %v3327 = vrot.slane %v3325, 6
    %v3328 = vshll.u32 %v3274, 16
    %v3330 = vrot.slane %v3328, 7
    %v3331 = vor.u32 %v3327, %v3330
    %v3332 = vrot.slane %v3331, 4
    %v3334 = vshrl.u32 %v3275, 16
    %v3336 = vrot.slane %v3334, 6
    %v3337 = vshll.u32 %v3275, 16
    %v3339 = vrot.slane %v3337, 7
    %v3340 = vor.u32 %v3336, %v3339
    %v3341 = vsel %vm3305, %v3332, %v3340
    %v3343 = vshrl.u32 %v3276, 16
    %v3345 = vrot.slane %v3343, 6
    %v3346 = vshll.u32 %v3276, 16
    %v3348 = vrot.slane %v3346, 7
    %v3349 = vor.u32 %v3345, %v3348
    %v3350 = vrot.slane %v3349, 4
    %v3352 = vshrl.u32 %v3277, 16
    %v3354 = vrot.slane %v3352, 6
    %v3355 = vshll.u32 %v3277, 16
    %v3357 = vrot.slane %v3355, 7
    %v3358 = vor.u32 %v3354, %v3357
    %v3359 = vsel %vm3305, %v3350, %v3358
    %v3361 = vshrl.u32 %v3278, 16
    %v3363 = vrot.slane %v3361, 6
    %v3364 = vshll.u32 %v3278, 16
    %v3366 = vrot.slane %v3364, 7
    %v3367 = vor.u32 %v3363, %v3366
    %v3368 = vrot.slane %v3367, 4
    %v3370 = vshrl.u32 %v3279, 16
    %v3372 = vrot.slane %v3370, 6
    %v3373 = vshll.u32 %v3279, 16
    %v3375 = vrot.slane %v3373, 7
    %v3376 = vor.u32 %v3372, %v3375
    %v3377 = vsel %vm3305, %v3368, %v3376
    %v3379 = vshrl.u32 %v3280, 16
    %v3381 = vrot.slane %v3379, 6
    %v3382 = vshll.u32 %v3280, 16
    %v3384 = vrot.slane %v3382, 7
    %v3385 = vor.u32 %v3381, %v3384
    %v3386 = vrot.slane %v3385, 4
    %v3388 = vshrl.u32 %v3281, 16
    %v3390 = vrot.slane %v3388, 6
    %v3391 = vshll.u32 %v3281, 16
    %v3393 = vrot.slane %v3391, 7
    %v3394 = vor.u32 %v3390, %v3393
    %v3395 = vsel %vm3305, %v3386, %v3394
    %v3397 = vshrl.u32 %v3282, 16
    %v3399 = vrot.slane %v3397, 6
    %v3400 = vshll.u32 %v3282, 16
    %v3402 = vrot.slane %v3400, 7
    %v3403 = vor.u32 %v3399, %v3402
    %v3404 = vrot.slane %v3403, 4
    %v3406 = vshrl.u32 %v3283, 16
    %v3408 = vrot.slane %v3406, 6
    %v3409 = vshll.u32 %v3283, 16
    %v3411 = vrot.slane %v3409, 7
    %v3412 = vor.u32 %v3408, %v3411
    %v3413 = vsel %vm3305, %v3404, %v3412
    %v3415 = vshrl.u32 %v3284, 16
    %v3417 = vrot.slane %v3415, 6
    %v3418 = vshll.u32 %v3284, 16
    %v3420 = vrot.slane %v3418, 7
    %v3421 = vor.u32 %v3417, %v3420
    %v3422 = vrot.slane %v3421, 4
    %v3424 = vshrl.u32 %v3285, 16
    %v3426 = vrot.slane %v3424, 6
    %v3427 = vshll.u32 %v3285, 16
    %v3429 = vrot.slane %v3427, 7
    %v3430 = vor.u32 %v3426, %v3429
    %v3431 = vsel %vm3305, %v3422, %v3430
    %v3433 = vshrl.u32 %v3286, 16
    %v3435 = vrot.slane %v3433, 6
    %v3436 = vshll.u32 %v3286, 16
    %v3438 = vrot.slane %v3436, 7
    %v3439 = vor.u32 %v3435, %v3438
    %v3440 = vrot.slane %v3439, 4
    %v3442 = vshrl.u32 %v3287, 16
    %v3444 = vrot.slane %v3442, 6
    %v3445 = vshll.u32 %v3287, 16
    %v3447 = vrot.slane %v3445, 7
    %v3448 = vor.u32 %v3444, %v3447
    %v3449 = vsel %vm3305, %v3440, %v3448
    %v3451 = vshrl.u32 %v3288, 16
    %v3453 = vrot.slane %v3451, 6
    %v3454 = vshll.u32 %v3288, 16
    %v3456 = vrot.slane %v3454, 7
    %v3457 = vor.u32 %v3453, %v3456
    %v3458 = vrot.slane %v3457, 4
    %v3460 = vshrl.u32 %v3289, 16
    %v3462 = vrot.slane %v3460, 6
    %v3463 = vshll.u32 %v3289, 16
    %v3465 = vrot.slane %v3463, 7
    %v3466 = vor.u32 %v3462, %v3465
    %v3467 = vsel %vm3305, %v3458, %v3466
    %v3469 = vshrl.u32 %v3290, 16
    %v3471 = vrot.slane %v3469, 6
    %v3472 = vshll.u32 %v3290, 16
    %v3474 = vrot.slane %v3472, 7
    %v3475 = vor.u32 %v3471, %v3474
    %v3476 = vrot.slane %v3475, 4
    %v3478 = vshrl.u32 %v3291, 16
    %v3480 = vrot.slane %v3478, 6
    %v3481 = vshll.u32 %v3291, 16
    %v3483 = vrot.slane %v3481, 7
    %v3484 = vor.u32 %v3480, %v3483
    %v3485 = vsel %vm3305, %v3476, %v3484
    %v3487 = vshrl.u32 %v3292, 16
    %v3489 = vrot.slane %v3487, 6
    %v3490 = vshll.u32 %v3292, 16
    %v3492 = vrot.slane %v3490, 7
    %v3493 = vor.u32 %v3489, %v3492
    %v3494 = vrot.slane %v3493, 4
    %v3496 = vshrl.u32 %v3293, 16
    %v3498 = vrot.slane %v3496, 6
    %v3499 = vshll.u32 %v3293, 16
    %v3501 = vrot.slane %v3499, 7
    %v3502 = vor.u32 %v3498, %v3501
    %v3503 = vsel %vm3305, %v3494, %v3502
    %v3505 = vshrl.u32 %v3294, 16
    %v3507 = vrot.slane %v3505, 6
    %v3508 = vshll.u32 %v3294, 16
    %v3510 = vrot.slane %v3508, 7
    %v3511 = vor.u32 %v3507, %v3510
    %v3512 = vrot.slane %v3511, 4
    %v3514 = vshrl.u32 %v3295, 16
    %v3516 = vrot.slane %v3514, 6
    %v3517 = vshll.u32 %v3295, 16
    %v3519 = vrot.slane %v3517, 7
    %v3520 = vor.u32 %v3516, %v3519
    %v3521 = vsel %vm3305, %v3512, %v3520
    %v3523 = vshrl.u32 %v3296, 16
    %v3525 = vrot.slane %v3523, 6
    %v3526 = vshll.u32 %v3296, 16
    %v3528 = vrot.slane %v3526, 7
    %v3529 = vor.u32 %v3525, %v3528
    %v3530 = vrot.slane %v3529, 4
    %v3532 = vshrl.u32 %v3297, 16
    %v3534 = vrot.slane %v3532, 6
    %v3535 = vshll.u32 %v3297, 16
    %v3537 = vrot.slane %v3535, 7
    %v3538 = vor.u32 %v3534, %v3537
    %v3539 = vsel %vm3305, %v3530, %v3538
    %v3541 = vshrl.u32 %v3298, 16
    %v3543 = vrot.slane %v3541, 6
    %v3544 = vshll.u32 %v3298, 16
    %v3546 = vrot.slane %v3544, 7
    %v3547 = vor.u32 %v3543, %v3546
    %v3548 = vrot.slane %v3547, 4
    %v3550 = vshrl.u32 %v3299, 16
    %v3552 = vrot.slane %v3550, 6
    %v3553 = vshll.u32 %v3299, 16
    %v3555 = vrot.slane %v3553, 7
    %v3556 = vor.u32 %v3552, %v3555
    %v3557 = vsel %vm3305, %v3548, %v3556
    %v3559 = vshrl.u32 %v3300, 16
    %v3561 = vrot.slane %v3559, 6
    %v3562 = vshll.u32 %v3300, 16
    %v3564 = vrot.slane %v3562, 7
    %v3565 = vor.u32 %v3561, %v3564
    %v3566 = vrot.slane %v3565, 4
    %v3568 = vshrl.u32 %v3301, 16
    %v3570 = vrot.slane %v3568, 6
    %v3571 = vshll.u32 %v3301, 16
    %v3573 = vrot.slane %v3571, 7
    %v3574 = vor.u32 %v3570, %v3573
    %v3575 = vsel %vm3305, %v3566, %v3574
    %v3577 = vshrl.u32 %v3302, 16
    %v3579 = vrot.slane %v3577, 6
    %v3580 = vshll.u32 %v3302, 16
    %v3582 = vrot.slane %v3580, 7
    %v3583 = vor.u32 %v3579, %v3582
    %v3584 = vrot.slane %v3583, 4
    %v3586 = vshrl.u32 %v3303, 16
    %v3588 = vrot.slane %v3586, 6
    %v3589 = vshll.u32 %v3303, 16
    %v3591 = vrot.slane %v3589, 7
    %v3592 = vor.u32 %v3588, %v3591
    %v3593 = vsel %vm3305, %v3584, %v3592
    %3610 = vst [vmem:[#allocation4 + $0x14] sm:$0xf] %v3323
    %3611 = vst [vmem:[#allocation4 + $0x30] sm:$0xf] %v3341
    %3612 = vst [vmem:[#allocation4 + $0x4c] sm:$0xf] %v3359
    %3613 = vst [vmem:[#allocation4 + $0x68] sm:$0xf] %v3377
    %3614 = vst [vmem:[#allocation4 + $0x84] sm:$0xf] %v3395
    %3615 = vst [vmem:[#allocation4 + $0xa0] sm:$0xf] %v3413
    %3616 = vst [vmem:[#allocation4 + $0xbc] sm:$0xf] %v3431
    %3617 = vst [vmem:[#allocation4 + $0xd8] sm:$0xf] %v3449
    %3618 = vst [vmem:[#allocation4 + $0xf4] sm:$0xf] %v3467
    %3619 = vst [vmem:[#allocation4 + $0x110] sm:$0xf] %v3485
    %3620 = vst [vmem:[#allocation4 + $0x12c] sm:$0xf] %v3503
    %3621 = vst [vmem:[#allocation4 + $0x148] sm:$0xf] %v3521
    %3622 = vst [vmem:[#allocation4 + $0x164] sm:$0xf] %v3539
    %3623 = vst [vmem:[#allocation4 + $0x180] sm:$0xf] %v3557
    %3624 = vst [vmem:[#allocation4 + $0x19c] sm:$0xf] %v3575
    %3625 = vst [vmem:[#allocation4 + $0x1b8] sm:$0xf] %v3593
    %v3626 = vld [vmem:[#allocation2] sm:$0x8]
    %v3627 = vld [vmem:[#allocation2 + $0x4] sm:$0x7]
    %v3628 = vld [vmem:[#allocation2 + $0x8] sm:$0x8]
    %v3629 = vld [vmem:[#allocation2 + $0xc] sm:$0x7]
    %v3630 = vld [vmem:[#allocation2 + $0x10] sm:$0x8]
    %v3631 = vld [vmem:[#allocation2 + $0x14] sm:$0x7]
    %v3632 = vld [vmem:[#allocation2 + $0x18] sm:$0x8]
    %v3633 = vld [vmem:[#allocation2 + $0x1c] sm:$0x7]
    %v3634 = vld [vmem:[#allocation2 + $0x20] sm:$0x8]
    %v3635 = vld [vmem:[#allocation2 + $0x24] sm:$0x7]
    %v3636 = vld [vmem:[#allocation2 + $0x28] sm:$0x8]
    %v3637 = vld [vmem:[#allocation2 + $0x2c] sm:$0x7]
    %v3638 = vld [vmem:[#allocation2 + $0x30] sm:$0x8]
    %v3639 = vld [vmem:[#allocation2 + $0x34] sm:$0x7]
    %v3640 = vld [vmem:[#allocation2 + $0x38] sm:$0x8]
    %v3641 = vld [vmem:[#allocation2 + $0x3c] sm:$0x7]
    %v3642 = vld [vmem:[#allocation2 + $0x40] sm:$0x8]
    %v3643 = vld [vmem:[#allocation2 + $0x44] sm:$0x7]
    %v3644 = vld [vmem:[#allocation2 + $0x48] sm:$0x8]
    %v3645 = vld [vmem:[#allocation2 + $0x4c] sm:$0x7]
    %v3646 = vld [vmem:[#allocation2 + $0x50] sm:$0x8]
    %v3647 = vld [vmem:[#allocation2 + $0x54] sm:$0x7]
    %v3648 = vld [vmem:[#allocation2 + $0x58] sm:$0x8]
    %v3649 = vld [vmem:[#allocation2 + $0x5c] sm:$0x7]
    %v3650 = vld [vmem:[#allocation2 + $0x60] sm:$0x8]
    %v3651 = vld [vmem:[#allocation2 + $0x64] sm:$0x7]
    %v3652 = vld [vmem:[#allocation2 + $0x68] sm:$0x8]
    %v3653 = vld [vmem:[#allocation2 + $0x6c] sm:$0x7]
    %v3654 = vld [vmem:[#allocation2 + $0x70] sm:$0x8]
    %v3655 = vld [vmem:[#allocation2 + $0x74] sm:$0x7]
    %v3656 = vld [vmem:[#allocation2 + $0x78] sm:$0x8]
    %v3657 = vld [vmem:[#allocation2 + $0x7c] sm:$0x7]
    %vm3690 = vcmask 1040384
    %vm3691 = vcmask 1044484
    %vm3692 = vmor %vm3690, %vm3691
    %v3693 = vrot.slane %v3626, 7
    %v3694 = vrot.slane %v3693, 4
    %v3695 = vrot.slane %v3627, 7
    %v3696 = vsel %vm3692, %v3694, %v3695
    %v3697 = vrot.slane %v3628, 7
    %v3698 = vrot.slane %v3697, 4
    %v3699 = vrot.slane %v3629, 7
    %v3700 = vsel %vm3692, %v3698, %v3699
    %v3701 = vrot.slane %v3630, 7
    %v3702 = vrot.slane %v3701, 4
    %v3703 = vrot.slane %v3631, 7
    %v3704 = vsel %vm3692, %v3702, %v3703
    %v3705 = vrot.slane %v3632, 7
    %v3706 = vrot.slane %v3705, 4
    %v3707 = vrot.slane %v3633, 7
    %v3708 = vsel %vm3692, %v3706, %v3707
    %v3709 = vrot.slane %v3634, 7
    %v3710 = vrot.slane %v3709, 4
    %v3711 = vrot.slane %v3635, 7
    %v3712 = vsel %vm3692, %v3710, %v3711
    %v3713 = vrot.slane %v3636, 7
    %v3714 = vrot.slane %v3713, 4
    %v3715 = vrot.slane %v3637, 7
    %v3716 = vsel %vm3692, %v3714, %v3715
    %v3717 = vrot.slane %v3638, 7
    %v3718 = vrot.slane %v3717, 4
    %v3719 = vrot.slane %v3639, 7
    %v3720 = vsel %vm3692, %v3718, %v3719
    %v3721 = vrot.slane %v3640, 7
    %v3722 = vrot.slane %v3721, 4
    %v3723 = vrot.slane %v3641, 7
    %v3724 = vsel %vm3692, %v3722, %v3723
    %v3725 = vrot.slane %v3642, 7
    %v3726 = vrot.slane %v3725, 4
    %v3727 = vrot.slane %v3643, 7
    %v3728 = vsel %vm3692, %v3726, %v3727
    %v3729 = vrot.slane %v3644, 7
    %v3730 = vrot.slane %v3729, 4
    %v3731 = vrot.slane %v3645, 7
    %v3732 = vsel %vm3692, %v3730, %v3731
    %v3733 = vrot.slane %v3646, 7
    %v3734 = vrot.slane %v3733, 4
    %v3735 = vrot.slane %v3647, 7
    %v3736 = vsel %vm3692, %v3734, %v3735
    %v3737 = vrot.slane %v3648, 7
    %v3738 = vrot.slane %v3737, 4
    %v3739 = vrot.slane %v3649, 7
    %v3740 = vsel %vm3692, %v3738, %v3739
    %v3741 = vrot.slane %v3650, 7
    %v3742 = vrot.slane %v3741, 4
    %v3743 = vrot.slane %v3651, 7
    %v3744 = vsel %vm3692, %v3742, %v3743
    %v3745 = vrot.slane %v3652, 7
    %v3746 = vrot.slane %v3745, 4
    %v3747 = vrot.slane %v3653, 7
    %v3748 = vsel %vm3692, %v3746, %v3747
    %v3749 = vrot.slane %v3654, 7
    %v3750 = vrot.slane %v3749, 4
    %v3751 = vrot.slane %v3655, 7
    %v3752 = vsel %vm3692, %v3750, %v3751
    %v3753 = vrot.slane %v3656, 7
    %v3754 = vrot.slane %v3753, 4
    %v3755 = vrot.slane %v3657, 7
    %v3756 = vsel %vm3692, %v3754, %v3755
    %3773 = vst [vmem:[#allocation4 + $0x18] sm:$0xf] %v3696
    %3774 = vst [vmem:[#allocation4 + $0x34] sm:$0xf] %v3700
    %3775 = vst [vmem:[#allocation4 + $0x50] sm:$0xf] %v3704
    %3776 = vst [vmem:[#allocation4 + $0x6c] sm:$0xf] %v3708
    %3777 = vst [vmem:[#allocation4 + $0x88] sm:$0xf] %v3712
    %3778 = vst [vmem:[#allocation4 + $0xa4] sm:$0xf] %v3716
    %3779 = vst [vmem:[#allocation4 + $0xc0] sm:$0xf] %v3720
    %3780 = vst [vmem:[#allocation4 + $0xdc] sm:$0xf] %v3724
    %3781 = vst [vmem:[#allocation4 + $0xf8] sm:$0xf] %v3728
    %3782 = vst [vmem:[#allocation4 + $0x114] sm:$0xf] %v3732
    %3783 = vst [vmem:[#allocation4 + $0x130] sm:$0xf] %v3736
    %3784 = vst [vmem:[#allocation4 + $0x14c] sm:$0xf] %v3740
    %3785 = vst [vmem:[#allocation4 + $0x168] sm:$0xf] %v3744
    %3786 = vst [vmem:[#allocation4 + $0x184] sm:$0xf] %v3748
    %3787 = vst [vmem:[#allocation4 + $0x1a0] sm:$0xf] %v3752
    %3788 = vst [vmem:[#allocation4 + $0x1bc] sm:$0xf] %v3756
    %v3789 = vld [vmem:[#allocation4] sm:$0xff]
    %v3790 = vld [vmem:[#allocation4 + $0x8] sm:$0xff]
    %v3791 = vld [vmem:[#allocation4 + $0x10] sm:$0xff]
    %v3792 = vld [vmem:[#allocation4 + $0x18] sm:$0xf]
    %v3793 = vld [vmem:[#allocation4 + $0x1c] sm:$0xff]
    %v3794 = vld [vmem:[#allocation4 + $0x24] sm:$0xff]
    %v3795 = vld [vmem:[#allocation4 + $0x2c] sm:$0xff]
    %v3796 = vld [vmem:[#allocation4 + $0x34] sm:$0xf]
    %v3797 = vld [vmem:[#allocation4 + $0x38] sm:$0xff]
    %v3798 = vld [vmem:[#allocation4 + $0x40] sm:$0xff]
    %v3799 = vld [vmem:[#allocation4 + $0x48] sm:$0xff]
    %v3800 = vld [vmem:[#allocation4 + $0x50] sm:$0xf]
    %v3801 = vld [vmem:[#allocation4 + $0x54] sm:$0xff]
    %v3802 = vld [vmem:[#allocation4 + $0x5c] sm:$0xff]
    %v3803 = vld [vmem:[#allocation4 + $0x64] sm:$0xff]
    %v3804 = vld [vmem:[#allocation4 + $0x6c] sm:$0xf]
    %v3805 = vld [vmem:[#allocation4 + $0x70] sm:$0xff]
    %v3806 = vld [vmem:[#allocation4 + $0x78] sm:$0xff]
    %v3807 = vld [vmem:[#allocation4 + $0x80] sm:$0xff]
    %v3808 = vld [vmem:[#allocation4 + $0x88] sm:$0xf]
    %v3809 = vld [vmem:[#allocation4 + $0x8c] sm:$0xff]
    %v3810 = vld [vmem:[#allocation4 + $0x94] sm:$0xff]
    %v3811 = vld [vmem:[#allocation4 + $0x9c] sm:$0xff]
    %v3812 = vld [vmem:[#allocation4 + $0xa4] sm:$0xf]
    %v3813 = vld [vmem:[#allocation4 + $0xa8] sm:$0xff]
    %v3814 = vld [vmem:[#allocation4 + $0xb0] sm:$0xff]
    %v3815 = vld [vmem:[#allocation4 + $0xb8] sm:$0xff]
    %v3816 = vld [vmem:[#allocation4 + $0xc0] sm:$0xf]
    %v3817 = vld [vmem:[#allocation4 + $0xc4] sm:$0xff]
    %v3818 = vld [vmem:[#allocation4 + $0xcc] sm:$0xff]
    %v3819 = vld [vmem:[#allocation4 + $0xd4] sm:$0xff]
    %v3820 = vld [vmem:[#allocation4 + $0xdc] sm:$0xf]
    %v3821 = vld [vmem:[#allocation4 + $0xe0] sm:$0xff]
    %v3822 = vld [vmem:[#allocation4 + $0xe8] sm:$0xff]
    %v3823 = vld [vmem:[#allocation4 + $0xf0] sm:$0xff]
    %v3824 = vld [vmem:[#allocation4 + $0xf8] sm:$0xf]
    %v3825 = vld [vmem:[#allocation4 + $0xfc] sm:$0xff]
    %v3826 = vld [vmem:[#allocation4 + $0x104] sm:$0xff]
    %v3827 = vld [vmem:[#allocation4 + $0x10c] sm:$0xff]
    %v3828 = vld [vmem:[#allocation4 + $0x114] sm:$0xf]
    %v3829 = vld [vmem:[#allocation4 + $0x118] sm:$0xff]
    %v3830 = vld [vmem:[#allocation4 + $0x120] sm:$0xff]
    %v3831 = vld [vmem:[#allocation4 + $0x128] sm:$0xff]
    %v3832 = vld [vmem:[#allocation4 + $0x130] sm:$0xf]
    %v3833 = vld [vmem:[#allocation4 + $0x134] sm:$0xff]
    %v3834 = vld [vmem:[#allocation4 + $0x13c] sm:$0xff]
    %v3835 = vld [vmem:[#allocation4 + $0x144] sm:$0xff]
    %v3836 = vld [vmem:[#allocation4 + $0x14c] sm:$0xf]
    %v3837 = vld [vmem:[#allocation4 + $0x150] sm:$0xff]
    %v3838 = vld [vmem:[#allocation4 + $0x158] sm:$0xff]
    %v3839 = vld [vmem:[#allocation4 + $0x160] sm:$0xff]
    %v3840 = vld [vmem:[#allocation4 + $0x168] sm:$0xf]
    %v3841 = vld [vmem:[#allocation4 + $0x16c] sm:$0xff]
    %v3842 = vld [vmem:[#allocation4 + $0x174] sm:$0xff]
    %v3843 = vld [vmem:[#allocation4 + $0x17c] sm:$0xff]
    %v3844 = vld [vmem:[#allocation4 + $0x184] sm:$0xf]
    %v3845 = vld [vmem:[#allocation4 + $0x188] sm:$0xff]
    %v3846 = vld [vmem:[#allocation4 + $0x190] sm:$0xff]
    %v3847 = vld [vmem:[#allocation4 + $0x198] sm:$0xff]
    %v3848 = vld [vmem:[#allocation4 + $0x1a0] sm:$0xf]
    %v3849 = vld [vmem:[#allocation4 + $0x1a4] sm:$0xff]
    %v3850 = vld [vmem:[#allocation4 + $0x1ac] sm:$0xff]
    %v3851 = vld [vmem:[#allocation4 + $0x1b4] sm:$0xff]
    %v3852 = vld [vmem:[#allocation4 + $0x1bc] sm:$0xf]
    %v3853 = vld [vmem:[#allocation11] sm:$0xf]
    %v3854 = vld [vmem:[#allocation11 + $0x4] sm:$0xf]
    %v3855 = vld [vmem:[#allocation11 + $0x8] sm:$0xf]
    %v3856 = vld [vmem:[#allocation11 + $0xc] sm:$0xf]
    %v3857 = vld [vmem:[#allocation11 + $0x10] sm:$0xf]
    %v3858 = vld [vmem:[#allocation11 + $0x14] sm:$0xf]
    %v3859 = vld [vmem:[#allocation11 + $0x18] sm:$0xf]
    %v3860 = vld [vmem:[#allocation11 + $0x1c] sm:$0xf]
    %v3861 = vld [vmem:[#allocation11 + $0x20] sm:$0xf]
    %v3862 = vld [vmem:[#allocation11 + $0x24] sm:$0xf]
    %v3863 = vld [vmem:[#allocation11 + $0x28] sm:$0xf]
    %v3864 = vld [vmem:[#allocation11 + $0x2c] sm:$0xf]
    %v3865 = vld [vmem:[#allocation11 + $0x30] sm:$0xf]
    %v3866 = vld [vmem:[#allocation11 + $0x34] sm:$0xf]
    %v3867 = vld [vmem:[#allocation11 + $0x38] sm:$0xf]
    %v3868 = vld [vmem:[#allocation11 + $0x3c] sm:$0xf]
    %v3869 = vld [vmem:[#allocation11 + $0x40] sm:$0xf]
    %v3870 = vld [vmem:[#allocation11 + $0x44] sm:$0xf]
    %v3871 = vld [vmem:[#allocation11 + $0x48] sm:$0xf]
    %v3872 = vld [vmem:[#allocation11 + $0x4c] sm:$0xf]
    %v3873 = vld [vmem:[#allocation11 + $0x50] sm:$0xf]
    %v3874 = vld [vmem:[#allocation11 + $0x54] sm:$0xf]
    %v3875 = vld [vmem:[#allocation11 + $0x58] sm:$0xf]
    %v3876 = vld [vmem:[#allocation11 + $0x5c] sm:$0xf]
    %v3877 = vld [vmem:[#allocation11 + $0x60] sm:$0xf]
    %v3878 = vld [vmem:[#allocation11 + $0x64] sm:$0xf]
    %v3879 = vld [vmem:[#allocation11 + $0x68] sm:$0xf]
    %v3880 = vld [vmem:[#allocation11 + $0x6c] sm:$0xf]
    %v3881 = vld [vmem:[#allocation11 + $0x70] sm:$0xf]
    %v3882 = vld [vmem:[#allocation11 + $0x74] sm:$0xf]
    %v3883 = vld [vmem:[#allocation11 + $0x78] sm:$0xf]
    %v3884 = vld [vmem:[#allocation11 + $0x7c] sm:$0xf]
    %v3885 = vld [vmem:[#allocation11 + $0x80] sm:$0xf]
    %v3886 = vld [vmem:[#allocation11 + $0x84] sm:$0xf]
    %v3887 = vld [vmem:[#allocation11 + $0x88] sm:$0xf]
    %v3888 = vld [vmem:[#allocation11 + $0x8c] sm:$0xf]
    %v3889 = vld [vmem:[#allocation11 + $0x90] sm:$0xf]
    %v3890 = vld [vmem:[#allocation11 + $0x94] sm:$0xf]
    %v3891 = vld [vmem:[#allocation11 + $0x98] sm:$0xf]
    %v3892 = vld [vmem:[#allocation11 + $0x9c] sm:$0xf]
    %v3893 = vld [vmem:[#allocation11 + $0xa0] sm:$0xf]
    %v3894 = vld [vmem:[#allocation11 + $0xa4] sm:$0xf]
    %v3895 = vld [vmem:[#allocation11 + $0xa8] sm:$0xf]
    %v3896 = vld [vmem:[#allocation11 + $0xac] sm:$0xf]
    %v3897 = vld [vmem:[#allocation11 + $0xb0] sm:$0xf]
    %v3898 = vld [vmem:[#allocation11 + $0xb4] sm:$0xf]
    %v3899 = vld [vmem:[#allocation11 + $0xb8] sm:$0xf]
    %v3900 = vld [vmem:[#allocation11 + $0xbc] sm:$0xf]
    %v3901 = vld [vmem:[#allocation11 + $0xc0] sm:$0xf]
    %v3902 = vld [vmem:[#allocation11 + $0xc4] sm:$0xf]
    %v3903 = vld [vmem:[#allocation11 + $0xc8] sm:$0xf]
    %v3904 = vld [vmem:[#allocation11 + $0xcc] sm:$0xf]
    %v3905 = vld [vmem:[#allocation11 + $0xd0] sm:$0xf]
    %v3906 = vld [vmem:[#allocation11 + $0xd4] sm:$0xf]
    %v3907 = vld [vmem:[#allocation11 + $0xd8] sm:$0xf]
    %v3908 = vld [vmem:[#allocation11 + $0xdc] sm:$0xf]
    %v3909 = vld [vmem:[#allocation11 + $0xe0] sm:$0xf]
    %v3910 = vld [vmem:[#allocation11 + $0xe4] sm:$0xf]
    %v3911 = vld [vmem:[#allocation11 + $0xe8] sm:$0xf]
    %v3912 = vld [vmem:[#allocation11 + $0xec] sm:$0xf]
    %v3913 = vld [vmem:[#allocation11 + $0xf0] sm:$0xf]
    %v3914 = vld [vmem:[#allocation11 + $0xf4] sm:$0xf]
    %v3915 = vld [vmem:[#allocation11 + $0xf8] sm:$0xf]
    %v3916 = vld [vmem:[#allocation11 + $0xfc] sm:$0xf]
    %v3917 = vld [vmem:[#allocation11 + $0x100] sm:$0xf]
    %v3918 = vld [vmem:[#allocation11 + $0x104] sm:$0xf]
    %v3919 = vld [vmem:[#allocation11 + $0x108] sm:$0xf]
    %v3920 = vld [vmem:[#allocation11 + $0x10c] sm:$0xf]
    %v3921 = vld [vmem:[#allocation11 + $0x110] sm:$0xf]
    %v3922 = vld [vmem:[#allocation11 + $0x114] sm:$0xf]
    %v3923 = vld [vmem:[#allocation11 + $0x118] sm:$0xf]
    %v3924 = vld [vmem:[#allocation11 + $0x11c] sm:$0xf]
    %v3925 = vld [vmem:[#allocation11 + $0x120] sm:$0xf]
    %v3926 = vld [vmem:[#allocation11 + $0x124] sm:$0xf]
    %v3927 = vld [vmem:[#allocation11 + $0x128] sm:$0xf]
    %v3928 = vld [vmem:[#allocation11 + $0x12c] sm:$0xf]
    %v3929 = vld [vmem:[#allocation11 + $0x130] sm:$0xf]
    %v3930 = vld [vmem:[#allocation11 + $0x134] sm:$0xf]
    %v3931 = vld [vmem:[#allocation11 + $0x138] sm:$0xf]
    %v3932 = vld [vmem:[#allocation11 + $0x13c] sm:$0xf]
    %v3933 = vld [vmem:[#allocation11 + $0x140] sm:$0xf]
    %v3934 = vld [vmem:[#allocation11 + $0x144] sm:$0xf]
    %v3935 = vld [vmem:[#allocation11 + $0x148] sm:$0xf]
    %v3936 = vld [vmem:[#allocation11 + $0x14c] sm:$0xf]
    %v3937 = vld [vmem:[#allocation11 + $0x150] sm:$0xf]
    %v3938 = vld [vmem:[#allocation11 + $0x154] sm:$0xf]
    %v3939 = vld [vmem:[#allocation11 + $0x158] sm:$0xf]
    %v3940 = vld [vmem:[#allocation11 + $0x15c] sm:$0xf]
    %v3941 = vld [vmem:[#allocation11 + $0x160] sm:$0xf]
    %v3942 = vld [vmem:[#allocation11 + $0x164] sm:$0xf]
    %v3943 = vld [vmem:[#allocation11 + $0x168] sm:$0xf]
    %v3944 = vld [vmem:[#allocation11 + $0x16c] sm:$0xf]
    %v3945 = vld [vmem:[#allocation11 + $0x170] sm:$0xf]
    %v3946 = vld [vmem:[#allocation11 + $0x174] sm:$0xf]
    %v3947 = vld [vmem:[#allocation11 + $0x178] sm:$0xf]
    %v3948 = vld [vmem:[#allocation11 + $0x17c] sm:$0xf]
    %v3949 = vld [vmem:[#allocation11 + $0x180] sm:$0xf]
    %v3950 = vld [vmem:[#allocation11 + $0x184] sm:$0xf]
    %v3951 = vld [vmem:[#allocation11 + $0x188] sm:$0xf]
    %v3952 = vld [vmem:[#allocation11 + $0x18c] sm:$0xf]
    %v3953 = vld [vmem:[#allocation11 + $0x190] sm:$0xf]
    %v3954 = vld [vmem:[#allocation11 + $0x194] sm:$0xf]
    %v3955 = vld [vmem:[#allocation11 + $0x198] sm:$0xf]
    %v3956 = vld [vmem:[#allocation11 + $0x19c] sm:$0xf]
    %v3957 = vld [vmem:[#allocation11 + $0x1a0] sm:$0xf]
    %v3958 = vld [vmem:[#allocation11 + $0x1a4] sm:$0xf]
    %v3959 = vld [vmem:[#allocation11 + $0x1a8] sm:$0xf]
    %v3960 = vld [vmem:[#allocation11 + $0x1ac] sm:$0xf]
    %v3961 = vld [vmem:[#allocation11 + $0x1b0] sm:$0xf]
    %v3962 = vld [vmem:[#allocation11 + $0x1b4] sm:$0xf]
    %v3963 = vld [vmem:[#allocation11 + $0x1b8] sm:$0xf]
    %v3964 = vld [vmem:[#allocation11 + $0x1bc] sm:$0xf]
    %v3965 = vld [vmem:[#allocation17 + $0x2] sm:$0x1]
    %v3966 = vperm.slane %v3965, 0
    %v4031 = vunpack.c.l.b16 %v3789
    %v4032 = vunpack.c.h.b16 %v3789
    %v4033 = vunpack.c.l.b16 %v3790
    %v4034 = vunpack.c.h.b16 %v3790
    %v4035 = vunpack.c.l.b16 %v3791
    %v4036 = vunpack.c.h.b16 %v3791
    %v4037 = vunpack.c.l.b16 %v3792
    %v4038 = vunpack.c.l.b16 %v3793
    %v4039 = vunpack.c.h.b16 %v3793
    %v4040 = vunpack.c.l.b16 %v3794
    %v4041 = vunpack.c.h.b16 %v3794
    %v4042 = vunpack.c.l.b16 %v3795
    %v4043 = vunpack.c.h.b16 %v3795
    %v4044 = vunpack.c.l.b16 %v3796
    %v4045 = vunpack.c.l.b16 %v3797
    %v4046 = vunpack.c.h.b16 %v3797
    %v4047 = vunpack.c.l.b16 %v3798
    %v4048 = vunpack.c.h.b16 %v3798
    %v4049 = vunpack.c.l.b16 %v3799
    %v4050 = vunpack.c.h.b16 %v3799
    %v4051 = vunpack.c.l.b16 %v3800
    %v4052 = vunpack.c.l.b16 %v3801
    %v4053 = vunpack.c.h.b16 %v3801
    %v4054 = vunpack.c.l.b16 %v3802
    %v4055 = vunpack.c.h.b16 %v3802
    %v4056 = vunpack.c.l.b16 %v3803
    %v4057 = vunpack.c.h.b16 %v3803
    %v4058 = vunpack.c.l.b16 %v3804
    %v4059 = vunpack.c.l.b16 %v3805
    %v4060 = vunpack.c.h.b16 %v3805
    %v4061 = vunpack.c.l.b16 %v3806
    %v4062 = vunpack.c.h.b16 %v3806
    %v4063 = vunpack.c.l.b16 %v3807
    %v4064 = vunpack.c.h.b16 %v3807
    %v4065 = vunpack.c.l.b16 %v3808
    %v4066 = vunpack.c.l.b16 %v3809
    %v4067 = vunpack.c.h.b16 %v3809
    %v4068 = vunpack.c.l.b16 %v3810
    %v4069 = vunpack.c.h.b16 %v3810
    %v4070 = vunpack.c.l.b16 %v3811
    %v4071 = vunpack.c.h.b16 %v3811
    %v4072 = vunpack.c.l.b16 %v3812
    %v4073 = vunpack.c.l.b16 %v3813
    %v4074 = vunpack.c.h.b16 %v3813
    %v4075 = vunpack.c.l.b16 %v3814
    %v4076 = vunpack.c.h.b16 %v3814
    %v4077 = vunpack.c.l.b16 %v3815
    %v4078 = vunpack.c.h.b16 %v3815
    %v4079 = vunpack.c.l.b16 %v3816
    %v4080 = vunpack.c.l.b16 %v3817
    %v4081 = vunpack.c.h.b16 %v3817
    %v4082 = vunpack.c.l.b16 %v3818
    %v4083 = vunpack.c.h.b16 %v3818
    %v4084 = vunpack.c.l.b16 %v3819
    %v4085 = vunpack.c.h.b16 %v3819
    %v4086 = vunpack.c.l.b16 %v3820
    %v4087 = vunpack.c.l.b16 %v3821
    %v4088 = vunpack.c.h.b16 %v3821
    %v4089 = vunpack.c.l.b16 %v3822
    %v4090 = vunpack.c.h.b16 %v3822
    %v4091 = vunpack.c.l.b16 %v3823
    %v4092 = vunpack.c.h.b16 %v3823
    %v4093 = vunpack.c.l.b16 %v3824
    %v4094 = vunpack.c.l.b16 %v3825
    %v4095 = vunpack.c.h.b16 %v3825
    %v4096 = vunpack.c.l.b16 %v3826
    %v4097 = vunpack.c.h.b16 %v3826
    %v4098 = vunpack.c.l.b16 %v3827
    %v4099 = vunpack.c.h.b16 %v3827
    %v4100 = vunpack.c.l.b16 %v3828
    %v4101 = vunpack.c.l.b16 %v3829
    %v4102 = vunpack.c.h.b16 %v3829
    %v4103 = vunpack.c.l.b16 %v3830
    %v4104 = vunpack.c.h.b16 %v3830
    %v4105 = vunpack.c.l.b16 %v3831
    %v4106 = vunpack.c.h.b16 %v3831
    %v4107 = vunpack.c.l.b16 %v3832
    %v4108 = vunpack.c.l.b16 %v3833
    %v4109 = vunpack.c.h.b16 %v3833
    %v4110 = vunpack.c.l.b16 %v3834
    %v4111 = vunpack.c.h.b16 %v3834
    %v4112 = vunpack.c.l.b16 %v3835
    %v4113 = vunpack.c.h.b16 %v3835
    %v4114 = vunpack.c.l.b16 %v3836
    %v4115 = vunpack.c.l.b16 %v3837
    %v4116 = vunpack.c.h.b16 %v3837
    %v4117 = vunpack.c.l.b16 %v3838
    %v4118 = vunpack.c.h.b16 %v3838
    %v4119 = vunpack.c.l.b16 %v3839
    %v4120 = vunpack.c.h.b16 %v3839
    %v4121 = vunpack.c.l.b16 %v3840
    %v4122 = vunpack.c.l.b16 %v3841
    %v4123 = vunpack.c.h.b16 %v3841
    %v4124 = vunpack.c.l.b16 %v3842
    %v4125 = vunpack.c.h.b16 %v3842
    %v4126 = vunpack.c.l.b16 %v3843
    %v4127 = vunpack.c.h.b16 %v3843
    %v4128 = vunpack.c.l.b16 %v3844
    %v4129 = vunpack.c.l.b16 %v3845
    %v4130 = vunpack.c.h.b16 %v3845
    %v4131 = vunpack.c.l.b16 %v3846
    %v4132 = vunpack.c.h.b16 %v3846
    %v4133 = vunpack.c.l.b16 %v3847
    %v4134 = vunpack.c.h.b16 %v3847
    %v4135 = vunpack.c.l.b16 %v3848
    %v4136 = vunpack.c.l.b16 %v3849
    %v4137 = vunpack.c.h.b16 %v3849
    %v4138 = vunpack.c.l.b16 %v3850
    %v4139 = vunpack.c.h.b16 %v3850
    %v4140 = vunpack.c.l.b16 %v3851
    %v4141 = vunpack.c.h.b16 %v3851
    %v4142 = vunpack.c.l.b16 %v3852
    %v4143 = vpack.c.b16 %v4038, %v4031
    %v4144 = vpack.c.b16 %v4039, %v4032
    %v4145 = vpack.c.b16 %v4040, %v4033
    %v4146 = vpack.c.b16 %v4041, %v4034
    %v4147 = vpack.c.b16 %v4042, %v4035
    %v4148 = vpack.c.b16 %v4043, %v4036
    %v4149 = vpack.c.b16 %v4044, %v4037
    %v4150 = vpack.c.b16 %v4052, %v4045
    %v4151 = vpack.c.b16 %v4053, %v4046
    %v4152 = vpack.c.b16 %v4054, %v4047
    %v4153 = vpack.c.b16 %v4055, %v4048
    %v4154 = vpack.c.b16 %v4056, %v4049
    %v4155 = vpack.c.b16 %v4057, %v4050
    %v4156 = vpack.c.b16 %v4058, %v4051
    %v4157 = vpack.c.b16 %v4066, %v4059
    %v4158 = vpack.c.b16 %v4067, %v4060
    %v4159 = vpack.c.b16 %v4068, %v4061
    %v4160 = vpack.c.b16 %v4069, %v4062
    %v4161 = vpack.c.b16 %v4070, %v4063
    %v4162 = vpack.c.b16 %v4071, %v4064
    %v4163 = vpack.c.b16 %v4072, %v4065
    %v4164 = vpack.c.b16 %v4080, %v4073
    %v4165 = vpack.c.b16 %v4081, %v4074
    %v4166 = vpack.c.b16 %v4082, %v4075
    %v4167 = vpack.c.b16 %v4083, %v4076
    %v4168 = vpack.c.b16 %v4084, %v4077
    %v4169 = vpack.c.b16 %v4085, %v4078
    %v4170 = vpack.c.b16 %v4086, %v4079
    %v4171 = vpack.c.b16 %v4094, %v4087
    %v4172 = vpack.c.b16 %v4095, %v4088
    %v4173 = vpack.c.b16 %v4096, %v4089
    %v4174 = vpack.c.b16 %v4097, %v4090
    %v4175 = vpack.c.b16 %v4098, %v4091
    %v4176 = vpack.c.b16 %v4099, %v4092
    %v4177 = vpack.c.b16 %v4100, %v4093
    %v4178 = vpack.c.b16 %v4108, %v4101
    %v4179 = vpack.c.b16 %v4109, %v4102
    %v4180 = vpack.c.b16 %v4110, %v4103
    %v4181 = vpack.c.b16 %v4111, %v4104
    %v4182 = vpack.c.b16 %v4112, %v4105
    %v4183 = vpack.c.b16 %v4113, %v4106
    %v4184 = vpack.c.b16 %v4114, %v4107
    %v4185 = vpack.c.b16 %v4122, %v4115
    %v4186 = vpack.c.b16 %v4123, %v4116
    %v4187 = vpack.c.b16 %v4124, %v4117
    %v4188 = vpack.c.b16 %v4125, %v4118
    %v4189 = vpack.c.b16 %v4126, %v4119
    %v4190 = vpack.c.b16 %v4127, %v4120
    %v4191 = vpack.c.b16 %v4128, %v4121
    %v4192 = vpack.c.b16 %v4136, %v4129
    %v4193 = vpack.c.b16 %v4137, %v4130
    %v4194 = vpack.c.b16 %v4138, %v4131
    %v4195 = vpack.c.b16 %v4139, %v4132
    %v4196 = vpack.c.b16 %v4140, %v4133
    %v4197 = vpack.c.b16 %v4141, %v4134
    %v4198 = vpack.c.b16 %v4142, %v4135
    %v4367 = vunpack.c.l.b16 %v3853
    %v4368 = vunpack.c.l.b16 %v3854
    %v4369 = vunpack.c.l.b16 %v3855
    %v4370 = vunpack.c.l.b16 %v3856
    %v4371 = vunpack.c.l.b16 %v3857
    %v4372 = vunpack.c.l.b16 %v3858
    %v4373 = vunpack.c.l.b16 %v3859
    %v4374 = vunpack.c.l.b16 %v3860
    %v4375 = vunpack.c.l.b16 %v3861
    %v4376 = vunpack.c.l.b16 %v3862
    %v4377 = vunpack.c.l.b16 %v3863
    %v4378 = vunpack.c.l.b16 %v3864
    %v4379 = vunpack.c.l.b16 %v3865
    %v4380 = vunpack.c.l.b16 %v3866
    %v4381 = vunpack.c.l.b16 %v3867
    %v4382 = vunpack.c.l.b16 %v3868
    %v4383 = vunpack.c.l.b16 %v3869
    %v4384 = vunpack.c.l.b16 %v3870
    %v4385 = vunpack.c.l.b16 %v3871
    %v4386 = vunpack.c.l.b16 %v3872
    %v4387 = vunpack.c.l.b16 %v3873
    %v4388 = vunpack.c.l.b16 %v3874
    %v4389 = vunpack.c.l.b16 %v3875
    %v4390 = vunpack.c.l.b16 %v3876
    %v4391 = vunpack.c.l.b16 %v3877
    %v4392 = vunpack.c.l.b16 %v3878
    %v4393 = vunpack.c.l.b16 %v3879
    %v4394 = vunpack.c.l.b16 %v3880
    %v4395 = vunpack.c.l.b16 %v3881
    %v4396 = vunpack.c.l.b16 %v3882
    %v4397 = vunpack.c.l.b16 %v3883
    %v4398 = vunpack.c.l.b16 %v3884
    %v4399 = vunpack.c.l.b16 %v3885
    %v4400 = vunpack.c.l.b16 %v3886
    %v4401 = vunpack.c.l.b16 %v3887
    %v4402 = vunpack.c.l.b16 %v3888
    %v4403 = vunpack.c.l.b16 %v3889
    %v4404 = vunpack.c.l.b16 %v3890
    %v4405 = vunpack.c.l.b16 %v3891
    %v4406 = vunpack.c.l.b16 %v3892
    %v4407 = vunpack.c.l.b16 %v3893
    %v4408 = vunpack.c.l.b16 %v3894
    %v4409 = vunpack.c.l.b16 %v3895
    %v4410 = vunpack.c.l.b16 %v3896
    %v4411 = vunpack.c.l.b16 %v3897
    %v4412 = vunpack.c.l.b16 %v3898
    %v4413 = vunpack.c.l.b16 %v3899
    %v4414 = vunpack.c.l.b16 %v3900
    %v4415 = vunpack.c.l.b16 %v3901
    %v4416 = vunpack.c.l.b16 %v3902
    %v4417 = vunpack.c.l.b16 %v3903
    %v4418 = vunpack.c.l.b16 %v3904
    %v4419 = vunpack.c.l.b16 %v3905
    %v4420 = vunpack.c.l.b16 %v3906
    %v4421 = vunpack.c.l.b16 %v3907
    %v4422 = vunpack.c.l.b16 %v3908
    %v4423 = vunpack.c.l.b16 %v3909
    %v4424 = vunpack.c.l.b16 %v3910
    %v4425 = vunpack.c.l.b16 %v3911
    %v4426 = vunpack.c.l.b16 %v3912
    %v4427 = vunpack.c.l.b16 %v3913
    %v4428 = vunpack.c.l.b16 %v3914
    %v4429 = vunpack.c.l.b16 %v3915
    %v4430 = vunpack.c.l.b16 %v3916
    %v4431 = vunpack.c.l.b16 %v3917
    %v4432 = vunpack.c.l.b16 %v3918
    %v4433 = vunpack.c.l.b16 %v3919
    %v4434 = vunpack.c.l.b16 %v3920
    %v4435 = vunpack.c.l.b16 %v3921
    %v4436 = vunpack.c.l.b16 %v3922
    %v4437 = vunpack.c.l.b16 %v3923
    %v4438 = vunpack.c.l.b16 %v3924
    %v4439 = vunpack.c.l.b16 %v3925
    %v4440 = vunpack.c.l.b16 %v3926
    %v4441 = vunpack.c.l.b16 %v3927
    %v4442 = vunpack.c.l.b16 %v3928
    %v4443 = vunpack.c.l.b16 %v3929
    %v4444 = vunpack.c.l.b16 %v3930
    %v4445 = vunpack.c.l.b16 %v3931
    %v4446 = vunpack.c.l.b16 %v3932
    %v4447 = vunpack.c.l.b16 %v3933
    %v4448 = vunpack.c.l.b16 %v3934
    %v4449 = vunpack.c.l.b16 %v3935
    %v4450 = vunpack.c.l.b16 %v3936
    %v4451 = vunpack.c.l.b16 %v3937
    %v4452 = vunpack.c.l.b16 %v3938
    %v4453 = vunpack.c.l.b16 %v3939
    %v4454 = vunpack.c.l.b16 %v3940
    %v4455 = vunpack.c.l.b16 %v3941
    %v4456 = vunpack.c.l.b16 %v3942
    %v4457 = vunpack.c.l.b16 %v3943
    %v4458 = vunpack.c.l.b16 %v3944
    %v4459 = vunpack.c.l.b16 %v3945
    %v4460 = vunpack.c.l.b16 %v3946
    %v4461 = vunpack.c.l.b16 %v3947
    %v4462 = vunpack.c.l.b16 %v3948
    %v4463 = vunpack.c.l.b16 %v3949
    %v4464 = vunpack.c.l.b16 %v3950
    %v4465 = vunpack.c.l.b16 %v3951
    %v4466 = vunpack.c.l.b16 %v3952
    %v4467 = vunpack.c.l.b16 %v3953
    %v4468 = vunpack.c.l.b16 %v3954
    %v4469 = vunpack.c.l.b16 %v3955
    %v4470 = vunpack.c.l.b16 %v3956
    %v4471 = vunpack.c.l.b16 %v3957
    %v4472 = vunpack.c.l.b16 %v3958
    %v4473 = vunpack.c.l.b16 %v3959
    %v4474 = vunpack.c.l.b16 %v3960
    %v4475 = vunpack.c.l.b16 %v3961
    %v4476 = vunpack.c.l.b16 %v3962
    %v4477 = vunpack.c.l.b16 %v3963
    %v4478 = vunpack.c.l.b16 %v3964
    %v4479 = vpack.c.b16 %v4368, %v4367
    %v4480 = vpack.c.b16 %v4370, %v4369
    %v4481 = vpack.c.b16 %v4372, %v4371
    %v4482 = vpack.c.b16 %v4374, %v4373
    %v4483 = vpack.c.b16 %v4376, %v4375
    %v4484 = vpack.c.b16 %v4378, %v4377
    %v4485 = vpack.c.b16 %v4380, %v4379
    %v4486 = vpack.c.b16 %v4382, %v4381
    %v4487 = vpack.c.b16 %v4384, %v4383
    %v4488 = vpack.c.b16 %v4386, %v4385
    %v4489 = vpack.c.b16 %v4388, %v4387
    %v4490 = vpack.c.b16 %v4390, %v4389
    %v4491 = vpack.c.b16 %v4392, %v4391
    %v4492 = vpack.c.b16 %v4394, %v4393
    %v4493 = vpack.c.b16 %v4396, %v4395
    %v4494 = vpack.c.b16 %v4398, %v4397
    %v4495 = vpack.c.b16 %v4400, %v4399
    %v4496 = vpack.c.b16 %v4402, %v4401
    %v4497 = vpack.c.b16 %v4404, %v4403
    %v4498 = vpack.c.b16 %v4406, %v4405
    %v4499 = vpack.c.b16 %v4408, %v4407
    %v4500 = vpack.c.b16 %v4410, %v4409
    %v4501 = vpack.c.b16 %v4412, %v4411
    %v4502 = vpack.c.b16 %v4414, %v4413
    %v4503 = vpack.c.b16 %v4416, %v4415
    %v4504 = vpack.c.b16 %v4418, %v4417
    %v4505 = vpack.c.b16 %v4420, %v4419
    %v4506 = vpack.c.b16 %v4422, %v4421
    %v4507 = vpack.c.b16 %v4424, %v4423
    %v4508 = vpack.c.b16 %v4426, %v4425
    %v4509 = vpack.c.b16 %v4428, %v4427
    %v4510 = vpack.c.b16 %v4430, %v4429
    %v4511 = vpack.c.b16 %v4432, %v4431
    %v4512 = vpack.c.b16 %v4434, %v4433
    %v4513 = vpack.c.b16 %v4436, %v4435
    %v4514 = vpack.c.b16 %v4438, %v4437
    %v4515 = vpack.c.b16 %v4440, %v4439
    %v4516 = vpack.c.b16 %v4442, %v4441
    %v4517 = vpack.c.b16 %v4444, %v4443
    %v4518 = vpack.c.b16 %v4446, %v4445
    %v4519 = vpack.c.b16 %v4448, %v4447
    %v4520 = vpack.c.b16 %v4450, %v4449
    %v4521 = vpack.c.b16 %v4452, %v4451
    %v4522 = vpack.c.b16 %v4454, %v4453
    %v4523 = vpack.c.b16 %v4456, %v4455
    %v4524 = vpack.c.b16 %v4458, %v4457
    %v4525 = vpack.c.b16 %v4460, %v4459
    %v4526 = vpack.c.b16 %v4462, %v4461
    %v4527 = vpack.c.b16 %v4464, %v4463
    %v4528 = vpack.c.b16 %v4466, %v4465
    %v4529 = vpack.c.b16 %v4468, %v4467
    %v4530 = vpack.c.b16 %v4470, %v4469
    %v4531 = vpack.c.b16 %v4472, %v4471
    %v4532 = vpack.c.b16 %v4474, %v4473
    %v4533 = vpack.c.b16 %v4476, %v4475
    %v4534 = vpack.c.b16 %v4478, %v4477
    %4591 = vmatpush.bf16.msra.mxu0 %v4486
    %4592 = vmatpush.bf16.msra.mxu0 %v4485
    %4593 = vmatpush.bf16.msra.mxu0 %v4484
    %4594 = vmatpush.bf16.msra.mxu0 %v4483
    %4595 = vmatpush.bf16.msra.mxu0 %v4482
    %4596 = vmatpush.bf16.msra.mxu0 %v4481
    %4597 = vmatpush.bf16.msra.mxu0 %v4480
    %4598 = vmatpush.bf16.msra.mxu0 %v4479
    %4599 = vmatmul.bf16.gmra.mxu0 %v4143
    %v4600 = vpop.f32.mrf.mxu0
    %v4601 = vadd.f32 %v3966, %v4600
    %v4602 = vpop.f32.mrf.mxu0
    %v4603 = vadd.f32 %v3966, %v4602
    %4604 = vmatmul.bf16.gmra.mxu0 %v4150
    %v4605 = vpop.f32.mrf.mxu0
    %v4606 = vadd.f32 %v3966, %v4605
    %v4607 = vpop.f32.mrf.mxu0
    %v4608 = vadd.f32 %v3966, %v4607
    %4609 = vmatmul.bf16.gmra.mxu0 %v4157
    %v4610 = vpop.f32.mrf.mxu0
    %v4611 = vadd.f32 %v3966, %v4610
    %v4612 = vpop.f32.mrf.mxu0
    %v4613 = vadd.f32 %v3966, %v4612
    %4614 = vmatmul.bf16.gmra.mxu0 %v4164
    %v4615 = vpop.f32.mrf.mxu0
    %v4616 = vadd.f32 %v3966, %v4615
    %v4617 = vpop.f32.mrf.mxu0
    %v4618 = vadd.f32 %v3966, %v4617
    %4619 = vmatmul.bf16.gmra.mxu0 %v4171
    %v4620 = vpop.f32.mrf.mxu0
    %v4621 = vadd.f32 %v3966, %v4620
    %v4622 = vpop.f32.mrf.mxu0
    %v4623 = vadd.f32 %v3966, %v4622
    %4624 = vmatmul.bf16.gmra.mxu0 %v4178
    %v4625 = vpop.f32.mrf.mxu0
    %v4626 = vadd.f32 %v3966, %v4625
    %v4627 = vpop.f32.mrf.mxu0
    %v4628 = vadd.f32 %v3966, %v4627
    %4629 = vmatmul.bf16.gmra.mxu0 %v4185
    %v4630 = vpop.f32.mrf.mxu0
    %v4631 = vadd.f32 %v3966, %v4630
    %v4632 = vpop.f32.mrf.mxu0
    %v4633 = vadd.f32 %v3966, %v4632
    %4634 = vmatmul.bf16.gmra.mxu0 %v4192
    %v4635 = vpop.f32.mrf.mxu0
    %v4636 = vadd.f32 %v3966, %v4635
    %v4637 = vpop.f32.mrf.mxu0
    %v4638 = vadd.f32 %v3966, %v4637
    %4639 = vdwg.mxu0
    %4640 = vmatpush.bf16.msra.mxu0 %v4494
    %4641 = vmatpush.bf16.msra.mxu0 %v4493
    %4642 = vmatpush.bf16.msra.mxu0 %v4492
    %4643 = vmatpush.bf16.msra.mxu0 %v4491
    %4644 = vmatpush.bf16.msra.mxu0 %v4490
    %4645 = vmatpush.bf16.msra.mxu0 %v4489
    %4646 = vmatpush.bf16.msra.mxu0 %v4488
    %4647 = vmatpush.bf16.msra.mxu0 %v4487
    %4648 = vmatmul.bf16.gmra.mxu0 %v4144
    %v4649 = vpop.f32.mrf.mxu0
    %v4650 = vadd.f32 %v4601, %v4649
    %v4651 = vpop.f32.mrf.mxu0
    %v4652 = vadd.f32 %v4603, %v4651
    %4653 = vmatmul.bf16.gmra.mxu0 %v4151
    %v4654 = vpop.f32.mrf.mxu0
    %v4655 = vadd.f32 %v4606, %v4654
    %v4656 = vpop.f32.mrf.mxu0
    %v4657 = vadd.f32 %v4608, %v4656
    %4658 = vmatmul.bf16.gmra.mxu0 %v4158
    %v4659 = vpop.f32.mrf.mxu0
    %v4660 = vadd.f32 %v4611, %v4659
    %v4661 = vpop.f32.mrf.mxu0
    %v4662 = vadd.f32 %v4613, %v4661
    %4663 = vmatmul.bf16.gmra.mxu0 %v4165
    %v4664 = vpop.f32.mrf.mxu0
    %v4665 = vadd.f32 %v4616, %v4664
    %v4666 = vpop.f32.mrf.mxu0
    %v4667 = vadd.f32 %v4618, %v4666
    %4668 = vmatmul.bf16.gmra.mxu0 %v4172
    %v4669 = vpop.f32.mrf.mxu0
    %v4670 = vadd.f32 %v4621, %v4669
    %v4671 = vpop.f32.mrf.mxu0
    %v4672 = vadd.f32 %v4623, %v4671
    %4673 = vmatmul.bf16.gmra.mxu0 %v4179
    %v4674 = vpop.f32.mrf.mxu0
    %v4675 = vadd.f32 %v4626, %v4674
    %v4676 = vpop.f32.mrf.mxu0
    %v4677 = vadd.f32 %v4628, %v4676
    %4678 = vmatmul.bf16.gmra.mxu0 %v4186
    %v4679 = vpop.f32.mrf.mxu0
    %v4680 = vadd.f32 %v4631, %v4679
    %v4681 = vpop.f32.mrf.mxu0
    %v4682 = vadd.f32 %v4633, %v4681
    %4683 = vmatmul.bf16.gmra.mxu0 %v4193
    %v4684 = vpop.f32.mrf.mxu0
    %v4685 = vadd.f32 %v4636, %v4684
    %v4686 = vpop.f32.mrf.mxu0
    %v4687 = vadd.f32 %v4638, %v4686
    %4688 = vdwg.mxu0
    %4689 = vmatpush.bf16.msra.mxu0 %v4502
    %4690 = vmatpush.bf16.msra.mxu0 %v4501
    %4691 = vmatpush.bf16.msra.mxu0 %v4500
    %4692 = vmatpush.bf16.msra.mxu0 %v4499
    %4693 = vmatpush.bf16.msra.mxu0 %v4498
    %4694 = vmatpush.bf16.msra.mxu0 %v4497
    %4695 = vmatpush.bf16.msra.mxu0 %v4496
    %4696 = vmatpush.bf16.msra.mxu0 %v4495
    %4697 = vmatmul.bf16.gmra.mxu0 %v4145
    %v4698 = vpop.f32.mrf.mxu0
    %v4699 = vadd.f32 %v4650, %v4698
    %v4700 = vpop.f32.mrf.mxu0
    %v4701 = vadd.f32 %v4652, %v4700
    %4702 = vmatmul.bf16.gmra.mxu0 %v4152
    %v4703 = vpop.f32.mrf.mxu0
    %v4704 = vadd.f32 %v4655, %v4703
    %v4705 = vpop.f32.mrf.mxu0
    %v4706 = vadd.f32 %v4657, %v4705
    %4707 = vmatmul.bf16.gmra.mxu0 %v4159
    %v4708 = vpop.f32.mrf.mxu0
    %v4709 = vadd.f32 %v4660, %v4708
    %v4710 = vpop.f32.mrf.mxu0
    %v4711 = vadd.f32 %v4662, %v4710
    %4712 = vmatmul.bf16.gmra.mxu0 %v4166
    %v4713 = vpop.f32.mrf.mxu0
    %v4714 = vadd.f32 %v4665, %v4713
    %v4715 = vpop.f32.mrf.mxu0
    %v4716 = vadd.f32 %v4667, %v4715
    %4717 = vmatmul.bf16.gmra.mxu0 %v4173
    %v4718 = vpop.f32.mrf.mxu0
    %v4719 = vadd.f32 %v4670, %v4718
    %v4720 = vpop.f32.mrf.mxu0
    %v4721 = vadd.f32 %v4672, %v4720
    %4722 = vmatmul.bf16.gmra.mxu0 %v4180
    %v4723 = vpop.f32.mrf.mxu0
    %v4724 = vadd.f32 %v4675, %v4723
    %v4725 = vpop.f32.mrf.mxu0
    %v4726 = vadd.f32 %v4677, %v4725
    %4727 = vmatmul.bf16.gmra.mxu0 %v4187
    %v4728 = vpop.f32.mrf.mxu0
    %v4729 = vadd.f32 %v4680, %v4728
    %v4730 = vpop.f32.mrf.mxu0
    %v4731 = vadd.f32 %v4682, %v4730
    %4732 = vmatmul.bf16.gmra.mxu0 %v4194
    %v4733 = vpop.f32.mrf.mxu0
    %v4734 = vadd.f32 %v4685, %v4733
    %v4735 = vpop.f32.mrf.mxu0
    %v4736 = vadd.f32 %v4687, %v4735
    %4737 = vdwg.mxu0
    %4738 = vmatpush.bf16.msra.mxu0 %v4510
    %4739 = vmatpush.bf16.msra.mxu0 %v4509
    %4740 = vmatpush.bf16.msra.mxu0 %v4508
    %4741 = vmatpush.bf16.msra.mxu0 %v4507
    %4742 = vmatpush.bf16.msra.mxu0 %v4506
    %4743 = vmatpush.bf16.msra.mxu0 %v4505
    %4744 = vmatpush.bf16.msra.mxu0 %v4504
    %4745 = vmatpush.bf16.msra.mxu0 %v4503
    %4746 = vmatmul.bf16.gmra.mxu0 %v4146
    %v4747 = vpop.f32.mrf.mxu0
    %v4748 = vadd.f32 %v4699, %v4747
    %v4749 = vpop.f32.mrf.mxu0
    %v4750 = vadd.f32 %v4701, %v4749
    %4751 = vmatmul.bf16.gmra.mxu0 %v4153
    %v4752 = vpop.f32.mrf.mxu0
    %v4753 = vadd.f32 %v4704, %v4752
    %v4754 = vpop.f32.mrf.mxu0
    %v4755 = vadd.f32 %v4706, %v4754
    %4756 = vmatmul.bf16.gmra.mxu0 %v4160
    %v4757 = vpop.f32.mrf.mxu0
    %v4758 = vadd.f32 %v4709, %v4757
    %v4759 = vpop.f32.mrf.mxu0
    %v4760 = vadd.f32 %v4711, %v4759
    %4761 = vmatmul.bf16.gmra.mxu0 %v4167
    %v4762 = vpop.f32.mrf.mxu0
    %v4763 = vadd.f32 %v4714, %v4762
    %v4764 = vpop.f32.mrf.mxu0
    %v4765 = vadd.f32 %v4716, %v4764
    %4766 = vmatmul.bf16.gmra.mxu0 %v4174
    %v4767 = vpop.f32.mrf.mxu0
    %v4768 = vadd.f32 %v4719, %v4767
    %v4769 = vpop.f32.mrf.mxu0
    %v4770 = vadd.f32 %v4721, %v4769
    %4771 = vmatmul.bf16.gmra.mxu0 %v4181
    %v4772 = vpop.f32.mrf.mxu0
    %v4773 = vadd.f32 %v4724, %v4772
    %v4774 = vpop.f32.mrf.mxu0
    %v4775 = vadd.f32 %v4726, %v4774
    %4776 = vmatmul.bf16.gmra.mxu0 %v4188
    %v4777 = vpop.f32.mrf.mxu0
    %v4778 = vadd.f32 %v4729, %v4777
    %v4779 = vpop.f32.mrf.mxu0
    %v4780 = vadd.f32 %v4731, %v4779
    %4781 = vmatmul.bf16.gmra.mxu0 %v4195
    %v4782 = vpop.f32.mrf.mxu0
    %v4783 = vadd.f32 %v4734, %v4782
    %v4784 = vpop.f32.mrf.mxu0
    %v4785 = vadd.f32 %v4736, %v4784
    %4786 = vdwg.mxu0
    %4787 = vmatpush.bf16.msra.mxu0 %v4518
    %4788 = vmatpush.bf16.msra.mxu0 %v4517
    %4789 = vmatpush.bf16.msra.mxu0 %v4516
    %4790 = vmatpush.bf16.msra.mxu0 %v4515
    %4791 = vmatpush.bf16.msra.mxu0 %v4514
    %4792 = vmatpush.bf16.msra.mxu0 %v4513
    %4793 = vmatpush.bf16.msra.mxu0 %v4512
    %4794 = vmatpush.bf16.msra.mxu0 %v4511
    %4795 = vmatmul.bf16.gmra.mxu0 %v4147
    %v4796 = vpop.f32.mrf.mxu0
    %v4797 = vadd.f32 %v4748, %v4796
    %v4798 = vpop.f32.mrf.mxu0
    %v4799 = vadd.f32 %v4750, %v4798
    %4800 = vmatmul.bf16.gmra.mxu0 %v4154
    %v4801 = vpop.f32.mrf.mxu0
    %v4802 = vadd.f32 %v4753, %v4801
    %v4803 = vpop.f32.mrf.mxu0
    %v4804 = vadd.f32 %v4755, %v4803
    %4805 = vmatmul.bf16.gmra.mxu0 %v4161
    %v4806 = vpop.f32.mrf.mxu0
    %v4807 = vadd.f32 %v4758, %v4806
    %v4808 = vpop.f32.mrf.mxu0
    %v4809 = vadd.f32 %v4760, %v4808
    %4810 = vmatmul.bf16.gmra.mxu0 %v4168
    %v4811 = vpop.f32.mrf.mxu0
    %v4812 = vadd.f32 %v4763, %v4811
    %v4813 = vpop.f32.mrf.mxu0
    %v4814 = vadd.f32 %v4765, %v4813
    %4815 = vmatmul.bf16.gmra.mxu0 %v4175
    %v4816 = vpop.f32.mrf.mxu0
    %v4817 = vadd.f32 %v4768, %v4816
    %v4818 = vpop.f32.mrf.mxu0
    %v4819 = vadd.f32 %v4770, %v4818
    %4820 = vmatmul.bf16.gmra.mxu0 %v4182
    %v4821 = vpop.f32.mrf.mxu0
    %v4822 = vadd.f32 %v4773, %v4821
    %v4823 = vpop.f32.mrf.mxu0
    %v4824 = vadd.f32 %v4775, %v4823
    %4825 = vmatmul.bf16.gmra.mxu0 %v4189
    %v4826 = vpop.f32.mrf.mxu0
    %v4827 = vadd.f32 %v4778, %v4826
    %v4828 = vpop.f32.mrf.mxu0
    %v4829 = vadd.f32 %v4780, %v4828
    %4830 = vmatmul.bf16.gmra.mxu0 %v4196
    %v4831 = vpop.f32.mrf.mxu0
    %v4832 = vadd.f32 %v4783, %v4831
    %v4833 = vpop.f32.mrf.mxu0
    %v4834 = vadd.f32 %v4785, %v4833
    %4835 = vdwg.mxu0
    %4836 = vmatpush.bf16.msra.mxu0 %v4526
    %4837 = vmatpush.bf16.msra.mxu0 %v4525
    %4838 = vmatpush.bf16.msra.mxu0 %v4524
    %4839 = vmatpush.bf16.msra.mxu0 %v4523
    %4840 = vmatpush.bf16.msra.mxu0 %v4522
    %4841 = vmatpush.bf16.msra.mxu0 %v4521
    %4842 = vmatpush.bf16.msra.mxu0 %v4520
    %4843 = vmatpush.bf16.msra.mxu0 %v4519
    %4844 = vmatmul.bf16.gmra.mxu0 %v4148
    %v4845 = vpop.f32.mrf.mxu0
    %v4846 = vadd.f32 %v4797, %v4845
    %v4847 = vpop.f32.mrf.mxu0
    %v4848 = vadd.f32 %v4799, %v4847
    %4849 = vmatmul.bf16.gmra.mxu0 %v4155
    %v4850 = vpop.f32.mrf.mxu0
    %v4851 = vadd.f32 %v4802, %v4850
    %v4852 = vpop.f32.mrf.mxu0
    %v4853 = vadd.f32 %v4804, %v4852
    %4854 = vmatmul.bf16.gmra.mxu0 %v4162
    %v4855 = vpop.f32.mrf.mxu0
    %v4856 = vadd.f32 %v4807, %v4855
    %v4857 = vpop.f32.mrf.mxu0
    %v4858 = vadd.f32 %v4809, %v4857
    %4859 = vmatmul.bf16.gmra.mxu0 %v4169
    %v4860 = vpop.f32.mrf.mxu0
    %v4861 = vadd.f32 %v4812, %v4860
    %v4862 = vpop.f32.mrf.mxu0
    %v4863 = vadd.f32 %v4814, %v4862
    %4864 = vmatmul.bf16.gmra.mxu0 %v4176
    %v4865 = vpop.f32.mrf.mxu0
    %v4866 = vadd.f32 %v4817, %v4865
    %v4867 = vpop.f32.mrf.mxu0
    %v4868 = vadd.f32 %v4819, %v4867
    %4869 = vmatmul.bf16.gmra.mxu0 %v4183
    %v4870 = vpop.f32.mrf.mxu0
    %v4871 = vadd.f32 %v4822, %v4870
    %v4872 = vpop.f32.mrf.mxu0
    %v4873 = vadd.f32 %v4824, %v4872
    %4874 = vmatmul.bf16.gmra.mxu0 %v4190
    %v4875 = vpop.f32.mrf.mxu0
    %v4876 = vadd.f32 %v4827, %v4875
    %v4877 = vpop.f32.mrf.mxu0
    %v4878 = vadd.f32 %v4829, %v4877
    %4879 = vmatmul.bf16.gmra.mxu0 %v4197
    %v4880 = vpop.f32.mrf.mxu0
    %v4881 = vadd.f32 %v4832, %v4880
    %v4882 = vpop.f32.mrf.mxu0
    %v4883 = vadd.f32 %v4834, %v4882
    %4884 = vdwg.mxu0
    %4885 = vmatpush.bf16.msra.mxu0 %v4534
    %4886 = vmatpush.bf16.msra.mxu0 %v4533
    %4887 = vmatpush.bf16.msra.mxu0 %v4532
    %4888 = vmatpush.bf16.msra.mxu0 %v4531
    %4889 = vmatpush.bf16.msra.mxu0 %v4530
    %4890 = vmatpush.bf16.msra.mxu0 %v4529
    %4891 = vmatpush.bf16.msra.mxu0 %v4528
    %4892 = vmatpush.bf16.msra.mxu0 %v4527
    %4893 = vmatmul.bf16.gmra.mxu0 %v4149
    %v4894 = vpop.f32.mrf.mxu0
    %v4895 = vadd.f32 %v4846, %v4894
    %v4896 = vpop.f32.mrf.mxu0
    %v4897 = vadd.f32 %v4848, %v4896
    %4898 = vmatmul.bf16.gmra.mxu0 %v4156
    %v4899 = vpop.f32.mrf.mxu0
    %v4900 = vadd.f32 %v4851, %v4899
    %v4901 = vpop.f32.mrf.mxu0
    %v4902 = vadd.f32 %v4853, %v4901
    %4903 = vmatmul.bf16.gmra.mxu0 %v4163
    %v4904 = vpop.f32.mrf.mxu0
    %v4905 = vadd.f32 %v4856, %v4904
    %v4906 = vpop.f32.mrf.mxu0
    %v4907 = vadd.f32 %v4858, %v4906
    %4908 = vmatmul.bf16.gmra.mxu0 %v4170
    %v4909 = vpop.f32.mrf.mxu0
    %v4910 = vadd.f32 %v4861, %v4909
    %v4911 = vpop.f32.mrf.mxu0
    %v4912 = vadd.f32 %v4863, %v4911
    %4913 = vmatmul.bf16.gmra.mxu0 %v4177
    %v4914 = vpop.f32.mrf.mxu0
    %v4915 = vadd.f32 %v4866, %v4914
    %v4916 = vpop.f32.mrf.mxu0
    %v4917 = vadd.f32 %v4868, %v4916
    %4918 = vmatmul.bf16.gmra.mxu0 %v4184
    %v4919 = vpop.f32.mrf.mxu0
    %v4920 = vadd.f32 %v4871, %v4919
    %v4921 = vpop.f32.mrf.mxu0
    %v4922 = vadd.f32 %v4873, %v4921
    %4923 = vmatmul.bf16.gmra.mxu0 %v4191
    %v4924 = vpop.f32.mrf.mxu0
    %v4925 = vadd.f32 %v4876, %v4924
    %v4926 = vpop.f32.mrf.mxu0
    %v4927 = vadd.f32 %v4878, %v4926
    %4928 = vmatmul.bf16.gmra.mxu0 %v4198
    %v4929 = vpop.f32.mrf.mxu0
    %v4930 = vadd.f32 %v4881, %v4929
    %v4931 = vpop.f32.mrf.mxu0
    %v4932 = vadd.f32 %v4883, %v4931
    %4933 = vdwg.mxu0
    %v4934 = vmax.f32 %v4895, 0.0
    %v4935 = vmax.f32 %v4897, 0.0
    %v4936 = vmax.f32 %v4900, 0.0
    %v4937 = vmax.f32 %v4902, 0.0
    %v4938 = vmax.f32 %v4905, 0.0
    %v4939 = vmax.f32 %v4907, 0.0
    %v4940 = vmax.f32 %v4910, 0.0
    %v4941 = vmax.f32 %v4912, 0.0
    %v4942 = vmax.f32 %v4915, 0.0
    %v4943 = vmax.f32 %v4917, 0.0
    %v4944 = vmax.f32 %v4920, 0.0
    %v4945 = vmax.f32 %v4922, 0.0
    %v4946 = vmax.f32 %v4925, 0.0
    %v4947 = vmax.f32 %v4927, 0.0
    %v4948 = vmax.f32 %v4930, 0.0
    %v4949 = vmax.f32 %v4932, 0.0
    %v4950 = vpack.c.bf16 %v4934, %v4934
    %v4951 = vpack.c.bf16 %v4935, %v4935
    %v4952 = vpack.c.bf16 %v4936, %v4936
    %v4953 = vpack.c.bf16 %v4937, %v4937
    %v4954 = vpack.c.bf16 %v4938, %v4938
    %v4955 = vpack.c.bf16 %v4939, %v4939
    %v4956 = vpack.c.bf16 %v4940, %v4940
    %v4957 = vpack.c.bf16 %v4941, %v4941
    %v4958 = vpack.c.bf16 %v4942, %v4942
    %v4959 = vpack.c.bf16 %v4943, %v4943
    %v4960 = vpack.c.bf16 %v4944, %v4944
    %v4961 = vpack.c.bf16 %v4945, %v4945
    %v4962 = vpack.c.bf16 %v4946, %v4946
    %v4963 = vpack.c.bf16 %v4947, %v4947
    %v4964 = vpack.c.bf16 %v4948, %v4948
    %v4965 = vpack.c.bf16 %v4949, %v4949
    %4966 = vst [vmem:[#allocation3] sm:$0xf] 0
    %4967 = vst [vmem:[#allocation3 + $0x4] sm:$0xf] 0
    %4968 = vst [vmem:[#allocation3 + $0x8] sm:$0xf] 0
    %4969 = vst [vmem:[#allocation3 + $0xc] sm:$0xf] 0
    %4970 = vst [vmem:[#allocation3 + $0x10] sm:$0xf] 0
    %4971 = vst [vmem:[#allocation3 + $0x14] sm:$0xf] 0
    %4972 = vst [vmem:[#allocation3 + $0x18] sm:$0xf] 0
    %4973 = vst [vmem:[#allocation3 + $0x1c] sm:$0xf] 0
    %4974 = vst [vmem:[#allocation3 + $0x20] sm:$0xf] 0
    %4975 = vst [vmem:[#allocation3 + $0x24] sm:$0xf] 0
    %4976 = vst [vmem:[#allocation3 + $0x28] sm:$0xf] 0
    %4977 = vst [vmem:[#allocation3 + $0x2c] sm:$0xf] 0
    %4978 = vst [vmem:[#allocation3 + $0x30] sm:$0xf] 0
    %4979 = vst [vmem:[#allocation3 + $0x34] sm:$0xf] 0
    %4980 = vst [vmem:[#allocation3 + $0x38] sm:$0xf] 0
    %4981 = vst [vmem:[#allocation3 + $0x3c] sm:$0xf] 0
    %4982 = vst [vmem:[#allocation3 + $0x40] sm:$0xf] 0
    %4983 = vst [vmem:[#allocation3 + $0x44] sm:$0xf] 0
    %4984 = vst [vmem:[#allocation3 + $0x48] sm:$0xf] 0
    %4985 = vst [vmem:[#allocation3 + $0x4c] sm:$0xf] 0
    %4986 = vst [vmem:[#allocation3 + $0x50] sm:$0xf] 0
    %4987 = vst [vmem:[#allocation3 + $0x54] sm:$0xf] 0
    %4988 = vst [vmem:[#allocation3 + $0x58] sm:$0xf] 0
    %4989 = vst [vmem:[#allocation3 + $0x5c] sm:$0xf] 0
    %4990 = vst [vmem:[#allocation3 + $0x60] sm:$0xf] 0
    %4991 = vst [vmem:[#allocation3 + $0x64] sm:$0xf] 0
    %4992 = vst [vmem:[#allocation3 + $0x68] sm:$0xf] 0
    %4993 = vst [vmem:[#allocation3 + $0x6c] sm:$0xf] 0
    %4994 = vst [vmem:[#allocation3 + $0x70] sm:$0xf] 0
    %4995 = vst [vmem:[#allocation3 + $0x74] sm:$0xf] 0
    %4996 = vst [vmem:[#allocation3 + $0x78] sm:$0xf] 0
    %4997 = vst [vmem:[#allocation3 + $0x7c] sm:$0xf] 0
    %s4998 = scalar_lea.vmem [#allocation3], 12
    %4999 = vst [vmem:[%s4998] sm:$0xf] %v4950
    %5000 = vst [vmem:[%s4998 + $0x4] sm:$0xf] %v4951
    %5001 = vst [vmem:[%s4998 + $0x8] sm:$0xf] %v4952
    %5002 = vst [vmem:[%s4998 + $0xc] sm:$0xf] %v4953
    %5003 = vst [vmem:[%s4998 + $0x10] sm:$0xf] %v4954
    %5004 = vst [vmem:[%s4998 + $0x14] sm:$0xf] %v4955
    %5005 = vst [vmem:[%s4998 + $0x18] sm:$0xf] %v4956
    %5006 = vst [vmem:[%s4998 + $0x1c] sm:$0xf] %v4957
    %5007 = vst [vmem:[%s4998 + $0x40] sm:$0xf] %v4958
    %5008 = vst [vmem:[%s4998 + $0x44] sm:$0xf] %v4959
    %5009 = vst [vmem:[%s4998 + $0x48] sm:$0xf] %v4960
    %5010 = vst [vmem:[%s4998 + $0x4c] sm:$0xf] %v4961
    %5011 = vst [vmem:[%s4998 + $0x50] sm:$0xf] %v4962
    %5012 = vst [vmem:[%s4998 + $0x54] sm:$0xf] %v4963
    %5013 = vst [vmem:[%s4998 + $0x58] sm:$0xf] %v4964
    %5014 = vst [vmem:[%s4998 + $0x5c] sm:$0xf] %v4965
    %v5015 = vld [vmem:[#allocation3] sm:$0xf]
    %v5016 = vld [vmem:[#allocation3 + $0x4] sm:$0xf]
    %v5017 = vld [vmem:[#allocation3 + $0x8] sm:$0xf]
    %v5018 = vld [vmem:[#allocation3 + $0xc] sm:$0xf]
    %v5019 = vld [vmem:[#allocation3 + $0x10] sm:$0xf]
    %v5020 = vld [vmem:[#allocation3 + $0x14] sm:$0xf]
    %v5021 = vld [vmem:[#allocation3 + $0x18] sm:$0xf]
    %v5022 = vld [vmem:[#allocation3 + $0x1c] sm:$0xf]
    %v5023 = vld [vmem:[#allocation3 + $0x40] sm:$0xf]
    %v5024 = vld [vmem:[#allocation3 + $0x44] sm:$0xf]
    %v5025 = vld [vmem:[#allocation3 + $0x48] sm:$0xf]
    %v5026 = vld [vmem:[#allocation3 + $0x4c] sm:$0xf]
    %v5027 = vld [vmem:[#allocation3 + $0x50] sm:$0xf]
    %v5028 = vld [vmem:[#allocation3 + $0x54] sm:$0xf]
    %v5029 = vld [vmem:[#allocation3 + $0x58] sm:$0xf]
    %v5030 = vld [vmem:[#allocation3 + $0x5c] sm:$0xf]
    %5031 = vst [vmem:[#allocation4] sm:$0xf] %v5015
    %5032 = vst [vmem:[#allocation4 + $0x1c] sm:$0xf] %v5016
    %5033 = vst [vmem:[#allocation4 + $0x38] sm:$0xf] %v5017
    %5034 = vst [vmem:[#allocation4 + $0x54] sm:$0xf] %v5018
    %5035 = vst [vmem:[#allocation4 + $0x70] sm:$0xf] %v5019
    %5036 = vst [vmem:[#allocation4 + $0x8c] sm:$0xf] %v5020
    %5037 = vst [vmem:[#allocation4 + $0xa8] sm:$0xf] %v5021
    %5038 = vst [vmem:[#allocation4 + $0xc4] sm:$0xf] %v5022
    %5039 = vst [vmem:[#allocation4 + $0xe0] sm:$0xf] %v5023
    %5040 = vst [vmem:[#allocation4 + $0xfc] sm:$0xf] %v5024
    %5041 = vst [vmem:[#allocation4 + $0x118] sm:$0xf] %v5025
    %5042 = vst [vmem:[#allocation4 + $0x134] sm:$0xf] %v5026
    %5043 = vst [vmem:[#allocation4 + $0x150] sm:$0xf] %v5027
    %5044 = vst [vmem:[#allocation4 + $0x16c] sm:$0xf] %v5028
    %5045 = vst [vmem:[#allocation4 + $0x188] sm:$0xf] %v5029
    %5046 = vst [vmem:[#allocation4 + $0x1a4] sm:$0xf] %v5030
    %s5047 = scalar_lea.vmem [#allocation3], 4
    %v5048 = vld [vmem:[%s5047] sm:$0xf]
    %v5049 = vld [vmem:[%s5047 + $0x4] sm:$0xf]
    %v5050 = vld [vmem:[%s5047 + $0x8] sm:$0xf]
    %v5051 = vld [vmem:[%s5047 + $0xc] sm:$0xf]
    %v5052 = vld [vmem:[%s5047 + $0x10] sm:$0xf]
    %v5053 = vld [vmem:[%s5047 + $0x14] sm:$0xf]
    %v5054 = vld [vmem:[%s5047 + $0x18] sm:$0xf]
    %v5055 = vld [vmem:[%s5047 + $0x1c] sm:$0xf]
    %v5056 = vld [vmem:[%s5047 + $0x40] sm:$0xf]
    %v5057 = vld [vmem:[%s5047 + $0x44] sm:$0xf]
    %v5058 = vld [vmem:[%s5047 + $0x48] sm:$0xf]
    %v5059 = vld [vmem:[%s5047 + $0x4c] sm:$0xf]
    %v5060 = vld [vmem:[%s5047 + $0x50] sm:$0xf]
    %v5061 = vld [vmem:[%s5047 + $0x54] sm:$0xf]
    %v5062 = vld [vmem:[%s5047 + $0x58] sm:$0xf]
    %v5063 = vld [vmem:[%s5047 + $0x5c] sm:$0xf]
    %5064 = vst [vmem:[#allocation4 + $0x4] sm:$0xf] %v5048
    %5065 = vst [vmem:[#allocation4 + $0x20] sm:$0xf] %v5049
    %5066 = vst [vmem:[#allocation4 + $0x3c] sm:$0xf] %v5050
    %5067 = vst [vmem:[#allocation4 + $0x58] sm:$0xf] %v5051
    %5068 = vst [vmem:[#allocation4 + $0x74] sm:$0xf] %v5052
    %5069 = vst [vmem:[#allocation4 + $0x90] sm:$0xf] %v5053
    %5070 = vst [vmem:[#allocation4 + $0xac] sm:$0xf] %v5054
    %5071 = vst [vmem:[#allocation4 + $0xc8] sm:$0xf] %v5055
    %5072 = vst [vmem:[#allocation4 + $0xe4] sm:$0xf] %v5056
    %5073 = vst [vmem:[#allocation4 + $0x100] sm:$0xf] %v5057
    %5074 = vst [vmem:[#allocation4 + $0x11c] sm:$0xf] %v5058
    %5075 = vst [vmem:[#allocation4 + $0x138] sm:$0xf] %v5059
    %5076 = vst [vmem:[#allocation4 + $0x154] sm:$0xf] %v5060
    %5077 = vst [vmem:[#allocation4 + $0x170] sm:$0xf] %v5061
    %5078 = vst [vmem:[#allocation4 + $0x18c] sm:$0xf] %v5062
    %5079 = vst [vmem:[#allocation4 + $0x1a8] sm:$0xf] %v5063
    %s5080 = scalar_lea.vmem [#allocation3], 8
    %v5081 = vld [vmem:[%s5080] sm:$0xf]
    %v5082 = vld [vmem:[%s5080 + $0x4] sm:$0xf]
    %v5083 = vld [vmem:[%s5080 + $0x8] sm:$0xf]
    %v5084 = vld [vmem:[%s5080 + $0xc] sm:$0xf]
    %v5085 = vld [vmem:[%s5080 + $0x10] sm:$0xf]
    %v5086 = vld [vmem:[%s5080 + $0x14] sm:$0xf]
    %v5087 = vld [vmem:[%s5080 + $0x18] sm:$0xf]
    %v5088 = vld [vmem:[%s5080 + $0x1c] sm:$0xf]
    %v5089 = vld [vmem:[%s5080 + $0x40] sm:$0xf]
    %v5090 = vld [vmem:[%s5080 + $0x44] sm:$0xf]
    %v5091 = vld [vmem:[%s5080 + $0x48] sm:$0xf]
    %v5092 = vld [vmem:[%s5080 + $0x4c] sm:$0xf]
    %v5093 = vld [vmem:[%s5080 + $0x50] sm:$0xf]
    %v5094 = vld [vmem:[%s5080 + $0x54] sm:$0xf]
    %v5095 = vld [vmem:[%s5080 + $0x58] sm:$0xf]
    %v5096 = vld [vmem:[%s5080 + $0x5c] sm:$0xf]
    %5097 = vst [vmem:[#allocation4 + $0x8] sm:$0xf] %v5081
    %5098 = vst [vmem:[#allocation4 + $0x24] sm:$0xf] %v5082
    %5099 = vst [vmem:[#allocation4 + $0x40] sm:$0xf] %v5083
    %5100 = vst [vmem:[#allocation4 + $0x5c] sm:$0xf] %v5084
    %5101 = vst [vmem:[#allocation4 + $0x78] sm:$0xf] %v5085
    %5102 = vst [vmem:[#allocation4 + $0x94] sm:$0xf] %v5086
    %5103 = vst [vmem:[#allocation4 + $0xb0] sm:$0xf] %v5087
    %5104 = vst [vmem:[#allocation4 + $0xcc] sm:$0xf] %v5088
    %5105 = vst [vmem:[#allocation4 + $0xe8] sm:$0xf] %v5089
    %5106 = vst [vmem:[#allocation4 + $0x104] sm:$0xf] %v5090
    %5107 = vst [vmem:[#allocation4 + $0x120] sm:$0xf] %v5091
    %5108 = vst [vmem:[#allocation4 + $0x13c] sm:$0xf] %v5092
    %5109 = vst [vmem:[#allocation4 + $0x158] sm:$0xf] %v5093
    %5110 = vst [vmem:[#allocation4 + $0x174] sm:$0xf] %v5094
    %5111 = vst [vmem:[#allocation4 + $0x190] sm:$0xf] %v5095
    %5112 = vst [vmem:[#allocation4 + $0x1ac] sm:$0xf] %v5096
    %v5113 = vld [vmem:[%s4998] sm:$0xf]
    %v5114 = vld [vmem:[%s4998 + $0x4] sm:$0xf]
    %v5115 = vld [vmem:[%s4998 + $0x8] sm:$0xf]
    %v5116 = vld [vmem:[%s4998 + $0xc] sm:$0xf]
    %v5117 = vld [vmem:[%s4998 + $0x10] sm:$0xf]
    %v5118 = vld [vmem:[%s4998 + $0x14] sm:$0xf]
    %v5119 = vld [vmem:[%s4998 + $0x18] sm:$0xf]
    %v5120 = vld [vmem:[%s4998 + $0x1c] sm:$0xf]
    %v5121 = vld [vmem:[%s4998 + $0x40] sm:$0xf]
    %v5122 = vld [vmem:[%s4998 + $0x44] sm:$0xf]
    %v5123 = vld [vmem:[%s4998 + $0x48] sm:$0xf]
    %v5124 = vld [vmem:[%s4998 + $0x4c] sm:$0xf]
    %v5125 = vld [vmem:[%s4998 + $0x50] sm:$0xf]
    %v5126 = vld [vmem:[%s4998 + $0x54] sm:$0xf]
    %v5127 = vld [vmem:[%s4998 + $0x58] sm:$0xf]
    %v5128 = vld [vmem:[%s4998 + $0x5c] sm:$0xf]
    %5129 = vst [vmem:[#allocation4 + $0xc] sm:$0xf] %v5113
    %5130 = vst [vmem:[#allocation4 + $0x28] sm:$0xf] %v5114
    %5131 = vst [vmem:[#allocation4 + $0x44] sm:$0xf] %v5115
    %5132 = vst [vmem:[#allocation4 + $0x60] sm:$0xf] %v5116
    %5133 = vst [vmem:[#allocation4 + $0x7c] sm:$0xf] %v5117
    %5134 = vst [vmem:[#allocation4 + $0x98] sm:$0xf] %v5118
    %5135 = vst [vmem:[#allocation4 + $0xb4] sm:$0xf] %v5119
    %5136 = vst [vmem:[#allocation4 + $0xd0] sm:$0xf] %v5120
    %5137 = vst [vmem:[#allocation4 + $0xec] sm:$0xf] %v5121
    %5138 = vst [vmem:[#allocation4 + $0x108] sm:$0xf] %v5122
    %5139 = vst [vmem:[#allocation4 + $0x124] sm:$0xf] %v5123
    %5140 = vst [vmem:[#allocation4 + $0x140] sm:$0xf] %v5124
    %5141 = vst [vmem:[#allocation4 + $0x15c] sm:$0xf] %v5125
    %5142 = vst [vmem:[#allocation4 + $0x178] sm:$0xf] %v5126
    %5143 = vst [vmem:[#allocation4 + $0x194] sm:$0xf] %v5127
    %5144 = vst [vmem:[#allocation4 + $0x1b0] sm:$0xf] %v5128
    %s5145 = scalar_lea.vmem [#allocation3], 16
    %v5146 = vld [vmem:[%s5145] sm:$0xf]
    %v5147 = vld [vmem:[%s5145 + $0x4] sm:$0xf]
    %v5148 = vld [vmem:[%s5145 + $0x8] sm:$0xf]
    %v5149 = vld [vmem:[%s5145 + $0xc] sm:$0xf]
    %v5150 = vld [vmem:[%s5145 + $0x10] sm:$0xf]
    %v5151 = vld [vmem:[%s5145 + $0x14] sm:$0xf]
    %v5152 = vld [vmem:[%s5145 + $0x18] sm:$0xf]
    %v5153 = vld [vmem:[%s5145 + $0x1c] sm:$0xf]
    %v5154 = vld [vmem:[%s5145 + $0x40] sm:$0xf]
    %v5155 = vld [vmem:[%s5145 + $0x44] sm:$0xf]
    %v5156 = vld [vmem:[%s5145 + $0x48] sm:$0xf]
    %v5157 = vld [vmem:[%s5145 + $0x4c] sm:$0xf]
    %v5158 = vld [vmem:[%s5145 + $0x50] sm:$0xf]
    %v5159 = vld [vmem:[%s5145 + $0x54] sm:$0xf]
    %v5160 = vld [vmem:[%s5145 + $0x58] sm:$0xf]
    %v5161 = vld [vmem:[%s5145 + $0x5c] sm:$0xf]
    %5162 = vst [vmem:[#allocation4 + $0x10] sm:$0xf] %v5146
    %5163 = vst [vmem:[#allocation4 + $0x2c] sm:$0xf] %v5147
    %5164 = vst [vmem:[#allocation4 + $0x48] sm:$0xf] %v5148
    %5165 = vst [vmem:[#allocation4 + $0x64] sm:$0xf] %v5149
    %5166 = vst [vmem:[#allocation4 + $0x80] sm:$0xf] %v5150
    %5167 = vst [vmem:[#allocation4 + $0x9c] sm:$0xf] %v5151
    %5168 = vst [vmem:[#allocation4 + $0xb8] sm:$0xf] %v5152
    %5169 = vst [vmem:[#allocation4 + $0xd4] sm:$0xf] %v5153
    %5170 = vst [vmem:[#allocation4 + $0xf0] sm:$0xf] %v5154
    %5171 = vst [vmem:[#allocation4 + $0x10c] sm:$0xf] %v5155
    %5172 = vst [vmem:[#allocation4 + $0x128] sm:$0xf] %v5156
    %5173 = vst [vmem:[#allocation4 + $0x144] sm:$0xf] %v5157
    %5174 = vst [vmem:[#allocation4 + $0x160] sm:$0xf] %v5158
    %5175 = vst [vmem:[#allocation4 + $0x17c] sm:$0xf] %v5159
    %5176 = vst [vmem:[#allocation4 + $0x198] sm:$0xf] %v5160
    %5177 = vst [vmem:[#allocation4 + $0x1b4] sm:$0xf] %v5161
    %s5178 = scalar_lea.vmem [#allocation3], 20
    %v5179 = vld [vmem:[%s5178] sm:$0xf]
    %v5180 = vld [vmem:[%s5178 + $0x4] sm:$0xf]
    %v5181 = vld [vmem:[%s5178 + $0x8] sm:$0xf]
    %v5182 = vld [vmem:[%s5178 + $0xc] sm:$0xf]
    %v5183 = vld [vmem:[%s5178 + $0x10] sm:$0xf]
    %v5184 = vld [vmem:[%s5178 + $0x14] sm:$0xf]
    %v5185 = vld [vmem:[%s5178 + $0x18] sm:$0xf]
    %v5186 = vld [vmem:[%s5178 + $0x1c] sm:$0xf]
    %v5187 = vld [vmem:[%s5178 + $0x40] sm:$0xf]
    %v5188 = vld [vmem:[%s5178 + $0x44] sm:$0xf]
    %v5189 = vld [vmem:[%s5178 + $0x48] sm:$0xf]
    %v5190 = vld [vmem:[%s5178 + $0x4c] sm:$0xf]
    %v5191 = vld [vmem:[%s5178 + $0x50] sm:$0xf]
    %v5192 = vld [vmem:[%s5178 + $0x54] sm:$0xf]
    %v5193 = vld [vmem:[%s5178 + $0x58] sm:$0xf]
    %v5194 = vld [vmem:[%s5178 + $0x5c] sm:$0xf]
    %5195 = vst [vmem:[#allocation4 + $0x14] sm:$0xf] %v5179
    %5196 = vst [vmem:[#allocation4 + $0x30] sm:$0xf] %v5180
    %5197 = vst [vmem:[#allocation4 + $0x4c] sm:$0xf] %v5181
    %5198 = vst [vmem:[#allocation4 + $0x68] sm:$0xf] %v5182
    %5199 = vst [vmem:[#allocation4 + $0x84] sm:$0xf] %v5183
    %5200 = vst [vmem:[#allocation4 + $0xa0] sm:$0xf] %v5184
    %5201 = vst [vmem:[#allocation4 + $0xbc] sm:$0xf] %v5185
    %5202 = vst [vmem:[#allocation4 + $0xd8] sm:$0xf] %v5186
    %5203 = vst [vmem:[#allocation4 + $0xf4] sm:$0xf] %v5187
    %5204 = vst [vmem:[#allocation4 + $0x110] sm:$0xf] %v5188
    %5205 = vst [vmem:[#allocation4 + $0x12c] sm:$0xf] %v5189
    %5206 = vst [vmem:[#allocation4 + $0x148] sm:$0xf] %v5190
    %5207 = vst [vmem:[#allocation4 + $0x164] sm:$0xf] %v5191
    %5208 = vst [vmem:[#allocation4 + $0x180] sm:$0xf] %v5192
    %5209 = vst [vmem:[#allocation4 + $0x19c] sm:$0xf] %v5193
    %5210 = vst [vmem:[#allocation4 + $0x1b8] sm:$0xf] %v5194
    %s5211 = scalar_lea.vmem [#allocation3], 24
    %v5212 = vld [vmem:[%s5211] sm:$0xf]
    %v5213 = vld [vmem:[%s5211 + $0x4] sm:$0xf]
    %v5214 = vld [vmem:[%s5211 + $0x8] sm:$0xf]
    %v5215 = vld [vmem:[%s5211 + $0xc] sm:$0xf]
    %v5216 = vld [vmem:[%s5211 + $0x10] sm:$0xf]
    %v5217 = vld [vmem:[%s5211 + $0x14] sm:$0xf]
    %v5218 = vld [vmem:[%s5211 + $0x18] sm:$0xf]
    %v5219 = vld [vmem:[%s5211 + $0x1c] sm:$0xf]
    %v5220 = vld [vmem:[%s5211 + $0x40] sm:$0xf]
    %v5221 = vld [vmem:[%s5211 + $0x44] sm:$0xf]
    %v5222 = vld [vmem:[%s5211 + $0x48] sm:$0xf]
    %v5223 = vld [vmem:[%s5211 + $0x4c] sm:$0xf]
    %v5224 = vld [vmem:[%s5211 + $0x50] sm:$0xf]
    %v5225 = vld [vmem:[%s5211 + $0x54] sm:$0xf]
    %v5226 = vld [vmem:[%s5211 + $0x58] sm:$0xf]
    %v5227 = vld [vmem:[%s5211 + $0x5c] sm:$0xf]
    %5228 = vst [vmem:[#allocation4 + $0x18] sm:$0xf] %v5212
    %5229 = vst [vmem:[#allocation4 + $0x34] sm:$0xf] %v5213
    %5230 = vst [vmem:[#allocation4 + $0x50] sm:$0xf] %v5214
    %5231 = vst [vmem:[#allocation4 + $0x6c] sm:$0xf] %v5215
    %5232 = vst [vmem:[#allocation4 + $0x88] sm:$0xf] %v5216
    %5233 = vst [vmem:[#allocation4 + $0xa4] sm:$0xf] %v5217
    %5234 = vst [vmem:[#allocation4 + $0xc0] sm:$0xf] %v5218
    %5235 = vst [vmem:[#allocation4 + $0xdc] sm:$0xf] %v5219
    %5236 = vst [vmem:[#allocation4 + $0xf8] sm:$0xf] %v5220
    %5237 = vst [vmem:[#allocation4 + $0x114] sm:$0xf] %v5221
    %5238 = vst [vmem:[#allocation4 + $0x130] sm:$0xf] %v5222
    %5239 = vst [vmem:[#allocation4 + $0x14c] sm:$0xf] %v5223
    %5240 = vst [vmem:[#allocation4 + $0x168] sm:$0xf] %v5224
    %5241 = vst [vmem:[#allocation4 + $0x184] sm:$0xf] %v5225
    %5242 = vst [vmem:[#allocation4 + $0x1a0] sm:$0xf] %v5226
    %5243 = vst [vmem:[#allocation4 + $0x1bc] sm:$0xf] %v5227
    %v5244 = vld [vmem:[#allocation4] sm:$0xff]
    %v5245 = vld [vmem:[#allocation4 + $0x8] sm:$0xff]
    %v5246 = vld [vmem:[#allocation4 + $0x10] sm:$0xff]
    %v5247 = vld [vmem:[#allocation4 + $0x18] sm:$0xf]
    %v5248 = vld [vmem:[#allocation4 + $0x1c] sm:$0xff]
    %v5249 = vld [vmem:[#allocation4 + $0x24] sm:$0xff]
    %v5250 = vld [vmem:[#allocation4 + $0x2c] sm:$0xff]
    %v5251 = vld [vmem:[#allocation4 + $0x34] sm:$0xf]
    %v5252 = vld [vmem:[#allocation4 + $0x38] sm:$0xff]
    %v5253 = vld [vmem:[#allocation4 + $0x40] sm:$0xff]
    %v5254 = vld [vmem:[#allocation4 + $0x48] sm:$0xff]
    %v5255 = vld [vmem:[#allocation4 + $0x50] sm:$0xf]
    %v5256 = vld [vmem:[#allocation4 + $0x54] sm:$0xff]
    %v5257 = vld [vmem:[#allocation4 + $0x5c] sm:$0xff]
    %v5258 = vld [vmem:[#allocation4 + $0x64] sm:$0xff]
    %v5259 = vld [vmem:[#allocation4 + $0x6c] sm:$0xf]
    %v5260 = vld [vmem:[#allocation4 + $0x70] sm:$0xff]
    %v5261 = vld [vmem:[#allocation4 + $0x78] sm:$0xff]
    %v5262 = vld [vmem:[#allocation4 + $0x80] sm:$0xff]
    %v5263 = vld [vmem:[#allocation4 + $0x88] sm:$0xf]
    %v5264 = vld [vmem:[#allocation4 + $0x8c] sm:$0xff]
    %v5265 = vld [vmem:[#allocation4 + $0x94] sm:$0xff]
    %v5266 = vld [vmem:[#allocation4 + $0x9c] sm:$0xff]
    %v5267 = vld [vmem:[#allocation4 + $0xa4] sm:$0xf]
    %v5268 = vld [vmem:[#allocation4 + $0xa8] sm:$0xff]
    %v5269 = vld [vmem:[#allocation4 + $0xb0] sm:$0xff]
    %v5270 = vld [vmem:[#allocation4 + $0xb8] sm:$0xff]
    %v5271 = vld [vmem:[#allocation4 + $0xc0] sm:$0xf]
    %v5272 = vld [vmem:[#allocation4 + $0xc4] sm:$0xff]
    %v5273 = vld [vmem:[#allocation4 + $0xcc] sm:$0xff]
    %v5274 = vld [vmem:[#allocation4 + $0xd4] sm:$0xff]
    %v5275 = vld [vmem:[#allocation4 + $0xdc] sm:$0xf]
    %v5276 = vld [vmem:[#allocation4 + $0xe0] sm:$0xff]
    %v5277 = vld [vmem:[#allocation4 + $0xe8] sm:$0xff]
    %v5278 = vld [vmem:[#allocation4 + $0xf0] sm:$0xff]
    %v5279 = vld [vmem:[#allocation4 + $0xf8] sm:$0xf]
    %v5280 = vld [vmem:[#allocation4 + $0xfc] sm:$0xff]
    %v5281 = vld [vmem:[#allocation4 + $0x104] sm:$0xff]
    %v5282 = vld [vmem:[#allocation4 + $0x10c] sm:$0xff]
    %v5283 = vld [vmem:[#allocation4 + $0x114] sm:$0xf]
    %v5284 = vld [vmem:[#allocation4 + $0x118] sm:$0xff]
    %v5285 = vld [vmem:[#allocation4 + $0x120] sm:$0xff]
    %v5286 = vld [vmem:[#allocation4 + $0x128] sm:$0xff]
    %v5287 = vld [vmem:[#allocation4 + $0x130] sm:$0xf]
    %v5288 = vld [vmem:[#allocation4 + $0x134] sm:$0xff]
    %v5289 = vld [vmem:[#allocation4 + $0x13c] sm:$0xff]
    %v5290 = vld [vmem:[#allocation4 + $0x144] sm:$0xff]
    %v5291 = vld [vmem:[#allocation4 + $0x14c] sm:$0xf]
    %v5292 = vld [vmem:[#allocation4 + $0x150] sm:$0xff]
    %v5293 = vld [vmem:[#allocation4 + $0x158] sm:$0xff]
    %v5294 = vld [vmem:[#allocation4 + $0x160] sm:$0xff]
    %v5295 = vld [vmem:[#allocation4 + $0x168] sm:$0xf]
    %v5296 = vld [vmem:[#allocation4 + $0x16c] sm:$0xff]
    %v5297 = vld [vmem:[#allocation4 + $0x174] sm:$0xff]
    %v5298 = vld [vmem:[#allocation4 + $0x17c] sm:$0xff]
    %v5299 = vld [vmem:[#allocation4 + $0x184] sm:$0xf]
    %v5300 = vld [vmem:[#allocation4 + $0x188] sm:$0xff]
    %v5301 = vld [vmem:[#allocation4 + $0x190] sm:$0xff]
    %v5302 = vld [vmem:[#allocation4 + $0x198] sm:$0xff]
    %v5303 = vld [vmem:[#allocation4 + $0x1a0] sm:$0xf]
    %v5304 = vld [vmem:[#allocation4 + $0x1a4] sm:$0xff]
    %v5305 = vld [vmem:[#allocation4 + $0x1ac] sm:$0xff]
    %v5306 = vld [vmem:[#allocation4 + $0x1b4] sm:$0xff]
    %v5307 = vld [vmem:[#allocation4 + $0x1bc] sm:$0xf]
    %v5308 = vld [vmem:[#allocation13] sm:$0xf]
    %v5309 = vld [vmem:[#allocation13 + $0x4] sm:$0xf]
    %v5310 = vld [vmem:[#allocation13 + $0x8] sm:$0xf]
    %v5311 = vld [vmem:[#allocation13 + $0xc] sm:$0xf]
    %v5312 = vld [vmem:[#allocation13 + $0x10] sm:$0xf]
    %v5313 = vld [vmem:[#allocation13 + $0x14] sm:$0xf]
    %v5314 = vld [vmem:[#allocation13 + $0x18] sm:$0xf]
    %v5315 = vld [vmem:[#allocation13 + $0x1c] sm:$0xf]
    %v5316 = vld [vmem:[#allocation13 + $0x20] sm:$0xf]
    %v5317 = vld [vmem:[#allocation13 + $0x24] sm:$0xf]
    %v5318 = vld [vmem:[#allocation13 + $0x28] sm:$0xf]
    %v5319 = vld [vmem:[#allocation13 + $0x2c] sm:$0xf]
    %v5320 = vld [vmem:[#allocation13 + $0x30] sm:$0xf]
    %v5321 = vld [vmem:[#allocation13 + $0x34] sm:$0xf]
    %v5322 = vld [vmem:[#allocation13 + $0x38] sm:$0xf]
    %v5323 = vld [vmem:[#allocation13 + $0x3c] sm:$0xf]
    %v5324 = vld [vmem:[#allocation13 + $0x40] sm:$0xf]
    %v5325 = vld [vmem:[#allocation13 + $0x44] sm:$0xf]
    %v5326 = vld [vmem:[#allocation13 + $0x48] sm:$0xf]
    %v5327 = vld [vmem:[#allocation13 + $0x4c] sm:$0xf]
    %v5328 = vld [vmem:[#allocation13 + $0x50] sm:$0xf]
    %v5329 = vld [vmem:[#allocation13 + $0x54] sm:$0xf]
    %v5330 = vld [vmem:[#allocation13 + $0x58] sm:$0xf]
    %v5331 = vld [vmem:[#allocation13 + $0x5c] sm:$0xf]
    %v5332 = vld [vmem:[#allocation13 + $0x60] sm:$0xf]
    %v5333 = vld [vmem:[#allocation13 + $0x64] sm:$0xf]
    %v5334 = vld [vmem:[#allocation13 + $0x68] sm:$0xf]
    %v5335 = vld [vmem:[#allocation13 + $0x6c] sm:$0xf]
    %v5336 = vld [vmem:[#allocation13 + $0x70] sm:$0xf]
    %v5337 = vld [vmem:[#allocation13 + $0x74] sm:$0xf]
    %v5338 = vld [vmem:[#allocation13 + $0x78] sm:$0xf]
    %v5339 = vld [vmem:[#allocation13 + $0x7c] sm:$0xf]
    %v5340 = vld [vmem:[#allocation13 + $0x80] sm:$0xf]
    %v5341 = vld [vmem:[#allocation13 + $0x84] sm:$0xf]
    %v5342 = vld [vmem:[#allocation13 + $0x88] sm:$0xf]
    %v5343 = vld [vmem:[#allocation13 + $0x8c] sm:$0xf]
    %v5344 = vld [vmem:[#allocation13 + $0x90] sm:$0xf]
    %v5345 = vld [vmem:[#allocation13 + $0x94] sm:$0xf]
    %v5346 = vld [vmem:[#allocation13 + $0x98] sm:$0xf]
    %v5347 = vld [vmem:[#allocation13 + $0x9c] sm:$0xf]
    %v5348 = vld [vmem:[#allocation13 + $0xa0] sm:$0xf]
    %v5349 = vld [vmem:[#allocation13 + $0xa4] sm:$0xf]
    %v5350 = vld [vmem:[#allocation13 + $0xa8] sm:$0xf]
    %v5351 = vld [vmem:[#allocation13 + $0xac] sm:$0xf]
    %v5352 = vld [vmem:[#allocation13 + $0xb0] sm:$0xf]
    %v5353 = vld [vmem:[#allocation13 + $0xb4] sm:$0xf]
    %v5354 = vld [vmem:[#allocation13 + $0xb8] sm:$0xf]
    %v5355 = vld [vmem:[#allocation13 + $0xbc] sm:$0xf]
    %v5356 = vld [vmem:[#allocation13 + $0xc0] sm:$0xf]
    %v5357 = vld [vmem:[#allocation13 + $0xc4] sm:$0xf]
    %v5358 = vld [vmem:[#allocation13 + $0xc8] sm:$0xf]
    %v5359 = vld [vmem:[#allocation13 + $0xcc] sm:$0xf]
    %v5360 = vld [vmem:[#allocation13 + $0xd0] sm:$0xf]
    %v5361 = vld [vmem:[#allocation13 + $0xd4] sm:$0xf]
    %v5362 = vld [vmem:[#allocation13 + $0xd8] sm:$0xf]
    %v5363 = vld [vmem:[#allocation13 + $0xdc] sm:$0xf]
    %v5364 = vld [vmem:[#allocation13 + $0xe0] sm:$0xf]
    %v5365 = vld [vmem:[#allocation13 + $0xe4] sm:$0xf]
    %v5366 = vld [vmem:[#allocation13 + $0xe8] sm:$0xf]
    %v5367 = vld [vmem:[#allocation13 + $0xec] sm:$0xf]
    %v5368 = vld [vmem:[#allocation13 + $0xf0] sm:$0xf]
    %v5369 = vld [vmem:[#allocation13 + $0xf4] sm:$0xf]
    %v5370 = vld [vmem:[#allocation13 + $0xf8] sm:$0xf]
    %v5371 = vld [vmem:[#allocation13 + $0xfc] sm:$0xf]
    %v5372 = vld [vmem:[#allocation13 + $0x100] sm:$0xf]
    %v5373 = vld [vmem:[#allocation13 + $0x104] sm:$0xf]
    %v5374 = vld [vmem:[#allocation13 + $0x108] sm:$0xf]
    %v5375 = vld [vmem:[#allocation13 + $0x10c] sm:$0xf]
    %v5376 = vld [vmem:[#allocation13 + $0x110] sm:$0xf]
    %v5377 = vld [vmem:[#allocation13 + $0x114] sm:$0xf]
    %v5378 = vld [vmem:[#allocation13 + $0x118] sm:$0xf]
    %v5379 = vld [vmem:[#allocation13 + $0x11c] sm:$0xf]
    %v5380 = vld [vmem:[#allocation13 + $0x120] sm:$0xf]
    %v5381 = vld [vmem:[#allocation13 + $0x124] sm:$0xf]
    %v5382 = vld [vmem:[#allocation13 + $0x128] sm:$0xf]
    %v5383 = vld [vmem:[#allocation13 + $0x12c] sm:$0xf]
    %v5384 = vld [vmem:[#allocation13 + $0x130] sm:$0xf]
    %v5385 = vld [vmem:[#allocation13 + $0x134] sm:$0xf]
    %v5386 = vld [vmem:[#allocation13 + $0x138] sm:$0xf]
    %v5387 = vld [vmem:[#allocation13 + $0x13c] sm:$0xf]
    %v5388 = vld [vmem:[#allocation13 + $0x140] sm:$0xf]
    %v5389 = vld [vmem:[#allocation13 + $0x144] sm:$0xf]
    %v5390 = vld [vmem:[#allocation13 + $0x148] sm:$0xf]
    %v5391 = vld [vmem:[#allocation13 + $0x14c] sm:$0xf]
    %v5392 = vld [vmem:[#allocation13 + $0x150] sm:$0xf]
    %v5393 = vld [vmem:[#allocation13 + $0x154] sm:$0xf]
    %v5394 = vld [vmem:[#allocation13 + $0x158] sm:$0xf]
    %v5395 = vld [vmem:[#allocation13 + $0x15c] sm:$0xf]
    %v5396 = vld [vmem:[#allocation13 + $0x160] sm:$0xf]
    %v5397 = vld [vmem:[#allocation13 + $0x164] sm:$0xf]
    %v5398 = vld [vmem:[#allocation13 + $0x168] sm:$0xf]
    %v5399 = vld [vmem:[#allocation13 + $0x16c] sm:$0xf]
    %v5400 = vld [vmem:[#allocation13 + $0x170] sm:$0xf]
    %v5401 = vld [vmem:[#allocation13 + $0x174] sm:$0xf]
    %v5402 = vld [vmem:[#allocation13 + $0x178] sm:$0xf]
    %v5403 = vld [vmem:[#allocation13 + $0x17c] sm:$0xf]
    %v5404 = vld [vmem:[#allocation13 + $0x180] sm:$0xf]
    %v5405 = vld [vmem:[#allocation13 + $0x184] sm:$0xf]
    %v5406 = vld [vmem:[#allocation13 + $0x188] sm:$0xf]
    %v5407 = vld [vmem:[#allocation13 + $0x18c] sm:$0xf]
    %v5408 = vld [vmem:[#allocation13 + $0x190] sm:$0xf]
    %v5409 = vld [vmem:[#allocation13 + $0x194] sm:$0xf]
    %v5410 = vld [vmem:[#allocation13 + $0x198] sm:$0xf]
    %v5411 = vld [vmem:[#allocation13 + $0x19c] sm:$0xf]
    %v5412 = vld [vmem:[#allocation13 + $0x1a0] sm:$0xf]
    %v5413 = vld [vmem:[#allocation13 + $0x1a4] sm:$0xf]
    %v5414 = vld [vmem:[#allocation13 + $0x1a8] sm:$0xf]
    %v5415 = vld [vmem:[#allocation13 + $0x1ac] sm:$0xf]
    %v5416 = vld [vmem:[#allocation13 + $0x1b0] sm:$0xf]
    %v5417 = vld [vmem:[#allocation13 + $0x1b4] sm:$0xf]
    %v5418 = vld [vmem:[#allocation13 + $0x1b8] sm:$0xf]
    %v5419 = vld [vmem:[#allocation13 + $0x1bc] sm:$0xf]
    %v5420 = vld [vmem:[#allocation17 + $0x3] sm:$0x1]
    %v5421 = vperm.slane %v5420, 0
    %v5486 = vunpack.c.l.b16 %v5244
    %v5487 = vunpack.c.h.b16 %v5244
    %v5488 = vunpack.c.l.b16 %v5245
    %v5489 = vunpack.c.h.b16 %v5245
    %v5490 = vunpack.c.l.b16 %v5246
    %v5491 = vunpack.c.h.b16 %v5246
    %v5492 = vunpack.c.l.b16 %v5247
    %v5493 = vunpack.c.l.b16 %v5248
    %v5494 = vunpack.c.h.b16 %v5248
    %v5495 = vunpack.c.l.b16 %v5249
    %v5496 = vunpack.c.h.b16 %v5249
    %v5497 = vunpack.c.l.b16 %v5250
    %v5498 = vunpack.c.h.b16 %v5250
    %v5499 = vunpack.c.l.b16 %v5251
    %v5500 = vunpack.c.l.b16 %v5252
    %v5501 = vunpack.c.h.b16 %v5252
    %v5502 = vunpack.c.l.b16 %v5253
    %v5503 = vunpack.c.h.b16 %v5253
    %v5504 = vunpack.c.l.b16 %v5254
    %v5505 = vunpack.c.h.b16 %v5254
    %v5506 = vunpack.c.l.b16 %v5255
    %v5507 = vunpack.c.l.b16 %v5256
    %v5508 = vunpack.c.h.b16 %v5256
    %v5509 = vunpack.c.l.b16 %v5257
    %v5510 = vunpack.c.h.b16 %v5257
    %v5511 = vunpack.c.l.b16 %v5258
    %v5512 = vunpack.c.h.b16 %v5258
    %v5513 = vunpack.c.l.b16 %v5259
    %v5514 = vunpack.c.l.b16 %v5260
    %v5515 = vunpack.c.h.b16 %v5260
    %v5516 = vunpack.c.l.b16 %v5261
    %v5517 = vunpack.c.h.b16 %v5261
    %v5518 = vunpack.c.l.b16 %v5262
    %v5519 = vunpack.c.h.b16 %v5262
    %v5520 = vunpack.c.l.b16 %v5263
    %v5521 = vunpack.c.l.b16 %v5264
    %v5522 = vunpack.c.h.b16 %v5264
    %v5523 = vunpack.c.l.b16 %v5265
    %v5524 = vunpack.c.h.b16 %v5265
    %v5525 = vunpack.c.l.b16 %v5266
    %v5526 = vunpack.c.h.b16 %v5266
    %v5527 = vunpack.c.l.b16 %v5267
    %v5528 = vunpack.c.l.b16 %v5268
    %v5529 = vunpack.c.h.b16 %v5268
    %v5530 = vunpack.c.l.b16 %v5269
    %v5531 = vunpack.c.h.b16 %v5269
    %v5532 = vunpack.c.l.b16 %v5270
    %v5533 = vunpack.c.h.b16 %v5270
    %v5534 = vunpack.c.l.b16 %v5271
    %v5535 = vunpack.c.l.b16 %v5272
    %v5536 = vunpack.c.h.b16 %v5272
    %v5537 = vunpack.c.l.b16 %v5273
    %v5538 = vunpack.c.h.b16 %v5273
    %v5539 = vunpack.c.l.b16 %v5274
    %v5540 = vunpack.c.h.b16 %v5274
    %v5541 = vunpack.c.l.b16 %v5275
    %v5542 = vunpack.c.l.b16 %v5276
    %v5543 = vunpack.c.h.b16 %v5276
    %v5544 = vunpack.c.l.b16 %v5277
    %v5545 = vunpack.c.h.b16 %v5277
    %v5546 = vunpack.c.l.b16 %v5278
    %v5547 = vunpack.c.h.b16 %v5278
    %v5548 = vunpack.c.l.b16 %v5279
    %v5549 = vunpack.c.l.b16 %v5280
    %v5550 = vunpack.c.h.b16 %v5280
    %v5551 = vunpack.c.l.b16 %v5281
    %v5552 = vunpack.c.h.b16 %v5281
    %v5553 = vunpack.c.l.b16 %v5282
    %v5554 = vunpack.c.h.b16 %v5282
    %v5555 = vunpack.c.l.b16 %v5283
    %v5556 = vunpack.c.l.b16 %v5284
    %v5557 = vunpack.c.h.b16 %v5284
    %v5558 = vunpack.c.l.b16 %v5285
    %v5559 = vunpack.c.h.b16 %v5285
    %v5560 = vunpack.c.l.b16 %v5286
    %v5561 = vunpack.c.h.b16 %v5286
    %v5562 = vunpack.c.l.b16 %v5287
    %v5563 = vunpack.c.l.b16 %v5288
    %v5564 = vunpack.c.h.b16 %v5288
    %v5565 = vunpack.c.l.b16 %v5289
    %v5566 = vunpack.c.h.b16 %v5289
    %v5567 = vunpack.c.l.b16 %v5290
    %v5568 = vunpack.c.h.b16 %v5290
    %v5569 = vunpack.c.l.b16 %v5291
    %v5570 = vunpack.c.l.b16 %v5292
    %v5571 = vunpack.c.h.b16 %v5292
    %v5572 = vunpack.c.l.b16 %v5293
    %v5573 = vunpack.c.h.b16 %v5293
    %v5574 = vunpack.c.l.b16 %v5294
    %v5575 = vunpack.c.h.b16 %v5294
    %v5576 = vunpack.c.l.b16 %v5295
    %v5577 = vunpack.c.l.b16 %v5296
    %v5578 = vunpack.c.h.b16 %v5296
    %v5579 = vunpack.c.l.b16 %v5297
    %v5580 = vunpack.c.h.b16 %v5297
    %v5581 = vunpack.c.l.b16 %v5298
    %v5582 = vunpack.c.h.b16 %v5298
    %v5583 = vunpack.c.l.b16 %v5299
    %v5584 = vunpack.c.l.b16 %v5300
    %v5585 = vunpack.c.h.b16 %v5300
    %v5586 = vunpack.c.l.b16 %v5301
    %v5587 = vunpack.c.h.b16 %v5301
    %v5588 = vunpack.c.l.b16 %v5302
    %v5589 = vunpack.c.h.b16 %v5302
    %v5590 = vunpack.c.l.b16 %v5303
    %v5591 = vunpack.c.l.b16 %v5304
    %v5592 = vunpack.c.h.b16 %v5304
    %v5593 = vunpack.c.l.b16 %v5305
    %v5594 = vunpack.c.h.b16 %v5305
    %v5595 = vunpack.c.l.b16 %v5306
    %v5596 = vunpack.c.h.b16 %v5306
    %v5597 = vunpack.c.l.b16 %v5307
    %v5598 = vpack.c.b16 %v5493, %v5486
    %v5599 = vpack.c.b16 %v5494, %v5487
    %v5600 = vpack.c.b16 %v5495, %v5488
    %v5601 = vpack.c.b16 %v5496, %v5489
    %v5602 = vpack.c.b16 %v5497, %v5490
    %v5603 = vpack.c.b16 %v5498, %v5491
    %v5604 = vpack.c.b16 %v5499, %v5492
    %v5605 = vpack.c.b16 %v5507, %v5500
    %v5606 = vpack.c.b16 %v5508, %v5501
    %v5607 = vpack.c.b16 %v5509, %v5502
    %v5608 = vpack.c.b16 %v5510, %v5503
    %v5609 = vpack.c.b16 %v5511, %v5504
    %v5610 = vpack.c.b16 %v5512, %v5505
    %v5611 = vpack.c.b16 %v5513, %v5506
    %v5612 = vpack.c.b16 %v5521, %v5514
    %v5613 = vpack.c.b16 %v5522, %v5515
    %v5614 = vpack.c.b16 %v5523, %v5516
    %v5615 = vpack.c.b16 %v5524, %v5517
    %v5616 = vpack.c.b16 %v5525, %v5518
    %v5617 = vpack.c.b16 %v5526, %v5519
    %v5618 = vpack.c.b16 %v5527, %v5520
    %v5619 = vpack.c.b16 %v5535, %v5528
    %v5620 = vpack.c.b16 %v5536, %v5529
    %v5621 = vpack.c.b16 %v5537, %v5530
    %v5622 = vpack.c.b16 %v5538, %v5531
    %v5623 = vpack.c.b16 %v5539, %v5532
    %v5624 = vpack.c.b16 %v5540, %v5533
    %v5625 = vpack.c.b16 %v5541, %v5534
    %v5626 = vpack.c.b16 %v5549, %v5542
    %v5627 = vpack.c.b16 %v5550, %v5543
    %v5628 = vpack.c.b16 %v5551, %v5544
    %v5629 = vpack.c.b16 %v5552, %v5545
    %v5630 = vpack.c.b16 %v5553, %v5546
    %v5631 = vpack.c.b16 %v5554, %v5547
    %v5632 = vpack.c.b16 %v5555, %v5548
    %v5633 = vpack.c.b16 %v5563, %v5556
    %v5634 = vpack.c.b16 %v5564, %v5557
    %v5635 = vpack.c.b16 %v5565, %v5558
    %v5636 = vpack.c.b16 %v5566, %v5559
    %v5637 = vpack.c.b16 %v5567, %v5560
    %v5638 = vpack.c.b16 %v5568, %v5561
    %v5639 = vpack.c.b16 %v5569, %v5562
    %v5640 = vpack.c.b16 %v5577, %v5570
    %v5641 = vpack.c.b16 %v5578, %v5571
    %v5642 = vpack.c.b16 %v5579, %v5572
    %v5643 = vpack.c.b16 %v5580, %v5573
    %v5644 = vpack.c.b16 %v5581, %v5574
    %v5645 = vpack.c.b16 %v5582, %v5575
    %v5646 = vpack.c.b16 %v5583, %v5576
    %v5647 = vpack.c.b16 %v5591, %v5584
    %v5648 = vpack.c.b16 %v5592, %v5585
    %v5649 = vpack.c.b16 %v5593, %v5586
    %v5650 = vpack.c.b16 %v5594, %v5587
    %v5651 = vpack.c.b16 %v5595, %v5588
    %v5652 = vpack.c.b16 %v5596, %v5589
    %v5653 = vpack.c.b16 %v5597, %v5590
    %v5822 = vunpack.c.l.b16 %v5308
    %v5823 = vunpack.c.l.b16 %v5309
    %v5824 = vunpack.c.l.b16 %v5310
    %v5825 = vunpack.c.l.b16 %v5311
    %v5826 = vunpack.c.l.b16 %v5312
    %v5827 = vunpack.c.l.b16 %v5313
    %v5828 = vunpack.c.l.b16 %v5314
    %v5829 = vunpack.c.l.b16 %v5315
    %v5830 = vunpack.c.l.b16 %v5316
    %v5831 = vunpack.c.l.b16 %v5317
    %v5832 = vunpack.c.l.b16 %v5318
    %v5833 = vunpack.c.l.b16 %v5319
    %v5834 = vunpack.c.l.b16 %v5320
    %v5835 = vunpack.c.l.b16 %v5321
    %v5836 = vunpack.c.l.b16 %v5322
    %v5837 = vunpack.c.l.b16 %v5323
    %v5838 = vunpack.c.l.b16 %v5324
    %v5839 = vunpack.c.l.b16 %v5325
    %v5840 = vunpack.c.l.b16 %v5326
    %v5841 = vunpack.c.l.b16 %v5327
    %v5842 = vunpack.c.l.b16 %v5328
    %v5843 = vunpack.c.l.b16 %v5329
    %v5844 = vunpack.c.l.b16 %v5330
    %v5845 = vunpack.c.l.b16 %v5331
    %v5846 = vunpack.c.l.b16 %v5332
    %v5847 = vunpack.c.l.b16 %v5333
    %v5848 = vunpack.c.l.b16 %v5334
    %v5849 = vunpack.c.l.b16 %v5335
    %v5850 = vunpack.c.l.b16 %v5336
    %v5851 = vunpack.c.l.b16 %v5337
    %v5852 = vunpack.c.l.b16 %v5338
    %v5853 = vunpack.c.l.b16 %v5339
    %v5854 = vunpack.c.l.b16 %v5340
    %v5855 = vunpack.c.l.b16 %v5341
    %v5856 = vunpack.c.l.b16 %v5342
    %v5857 = vunpack.c.l.b16 %v5343
    %v5858 = vunpack.c.l.b16 %v5344
    %v5859 = vunpack.c.l.b16 %v5345
    %v5860 = vunpack.c.l.b16 %v5346
    %v5861 = vunpack.c.l.b16 %v5347
    %v5862 = vunpack.c.l.b16 %v5348
    %v5863 = vunpack.c.l.b16 %v5349
    %v5864 = vunpack.c.l.b16 %v5350
    %v5865 = vunpack.c.l.b16 %v5351
    %v5866 = vunpack.c.l.b16 %v5352
    %v5867 = vunpack.c.l.b16 %v5353
    %v5868 = vunpack.c.l.b16 %v5354
    %v5869 = vunpack.c.l.b16 %v5355
    %v5870 = vunpack.c.l.b16 %v5356
    %v5871 = vunpack.c.l.b16 %v5357
    %v5872 = vunpack.c.l.b16 %v5358
    %v5873 = vunpack.c.l.b16 %v5359
    %v5874 = vunpack.c.l.b16 %v5360
    %v5875 = vunpack.c.l.b16 %v5361
    %v5876 = vunpack.c.l.b16 %v5362
    %v5877 = vunpack.c.l.b16 %v5363
    %v5878 = vunpack.c.l.b16 %v5364
    %v5879 = vunpack.c.l.b16 %v5365
    %v5880 = vunpack.c.l.b16 %v5366
    %v5881 = vunpack.c.l.b16 %v5367
    %v5882 = vunpack.c.l.b16 %v5368
    %v5883 = vunpack.c.l.b16 %v5369
    %v5884 = vunpack.c.l.b16 %v5370
    %v5885 = vunpack.c.l.b16 %v5371
    %v5886 = vunpack.c.l.b16 %v5372
    %v5887 = vunpack.c.l.b16 %v5373
    %v5888 = vunpack.c.l.b16 %v5374
    %v5889 = vunpack.c.l.b16 %v5375
    %v5890 = vunpack.c.l.b16 %v5376
    %v5891 = vunpack.c.l.b16 %v5377
    %v5892 = vunpack.c.l.b16 %v5378
    %v5893 = vunpack.c.l.b16 %v5379
    %v5894 = vunpack.c.l.b16 %v5380
    %v5895 = vunpack.c.l.b16 %v5381
    %v5896 = vunpack.c.l.b16 %v5382
    %v5897 = vunpack.c.l.b16 %v5383
    %v5898 = vunpack.c.l.b16 %v5384
    %v5899 = vunpack.c.l.b16 %v5385
    %v5900 = vunpack.c.l.b16 %v5386
    %v5901 = vunpack.c.l.b16 %v5387
    %v5902 = vunpack.c.l.b16 %v5388
    %v5903 = vunpack.c.l.b16 %v5389
    %v5904 = vunpack.c.l.b16 %v5390
    %v5905 = vunpack.c.l.b16 %v5391
    %v5906 = vunpack.c.l.b16 %v5392
    %v5907 = vunpack.c.l.b16 %v5393
    %v5908 = vunpack.c.l.b16 %v5394
    %v5909 = vunpack.c.l.b16 %v5395
    %v5910 = vunpack.c.l.b16 %v5396
    %v5911 = vunpack.c.l.b16 %v5397
    %v5912 = vunpack.c.l.b16 %v5398
    %v5913 = vunpack.c.l.b16 %v5399
    %v5914 = vunpack.c.l.b16 %v5400
    %v5915 = vunpack.c.l.b16 %v5401
    %v5916 = vunpack.c.l.b16 %v5402
    %v5917 = vunpack.c.l.b16 %v5403
    %v5918 = vunpack.c.l.b16 %v5404
    %v5919 = vunpack.c.l.b16 %v5405
    %v5920 = vunpack.c.l.b16 %v5406
    %v5921 = vunpack.c.l.b16 %v5407
    %v5922 = vunpack.c.l.b16 %v5408
    %v5923 = vunpack.c.l.b16 %v5409
    %v5924 = vunpack.c.l.b16 %v5410
    %v5925 = vunpack.c.l.b16 %v5411
    %v5926 = vunpack.c.l.b16 %v5412
    %v5927 = vunpack.c.l.b16 %v5413
    %v5928 = vunpack.c.l.b16 %v5414
    %v5929 = vunpack.c.l.b16 %v5415
    %v5930 = vunpack.c.l.b16 %v5416
    %v5931 = vunpack.c.l.b16 %v5417
    %v5932 = vunpack.c.l.b16 %v5418
    %v5933 = vunpack.c.l.b16 %v5419
    %v5934 = vpack.c.b16 %v5823, %v5822
    %v5935 = vpack.c.b16 %v5825, %v5824
    %v5936 = vpack.c.b16 %v5827, %v5826
    %v5937 = vpack.c.b16 %v5829, %v5828
    %v5938 = vpack.c.b16 %v5831, %v5830
    %v5939 = vpack.c.b16 %v5833, %v5832
    %v5940 = vpack.c.b16 %v5835, %v5834
    %v5941 = vpack.c.b16 %v5837, %v5836
    %v5942 = vpack.c.b16 %v5839, %v5838
    %v5943 = vpack.c.b16 %v5841, %v5840
    %v5944 = vpack.c.b16 %v5843, %v5842
    %v5945 = vpack.c.b16 %v5845, %v5844
    %v5946 = vpack.c.b16 %v5847, %v5846
    %v5947 = vpack.c.b16 %v5849, %v5848
    %v5948 = vpack.c.b16 %v5851, %v5850
    %v5949 = vpack.c.b16 %v5853, %v5852
    %v5950 = vpack.c.b16 %v5855, %v5854
    %v5951 = vpack.c.b16 %v5857, %v5856
    %v5952 = vpack.c.b16 %v5859, %v5858
    %v5953 = vpack.c.b16 %v5861, %v5860
    %v5954 = vpack.c.b16 %v5863, %v5862
    %v5955 = vpack.c.b16 %v5865, %v5864
    %v5956 = vpack.c.b16 %v5867, %v5866
    %v5957 = vpack.c.b16 %v5869, %v5868
    %v5958 = vpack.c.b16 %v5871, %v5870
    %v5959 = vpack.c.b16 %v5873, %v5872
    %v5960 = vpack.c.b16 %v5875, %v5874
    %v5961 = vpack.c.b16 %v5877, %v5876
    %v5962 = vpack.c.b16 %v5879, %v5878
    %v5963 = vpack.c.b16 %v5881, %v5880
    %v5964 = vpack.c.b16 %v5883, %v5882
    %v5965 = vpack.c.b16 %v5885, %v5884
    %v5966 = vpack.c.b16 %v5887, %v5886
    %v5967 = vpack.c.b16 %v5889, %v5888
    %v5968 = vpack.c.b16 %v5891, %v5890
    %v5969 = vpack.c.b16 %v5893, %v5892
    %v5970 = vpack.c.b16 %v5895, %v5894
    %v5971 = vpack.c.b16 %v5897, %v5896
    %v5972 = vpack.c.b16 %v5899, %v5898
    %v5973 = vpack.c.b16 %v5901, %v5900
    %v5974 = vpack.c.b16 %v5903, %v5902
    %v5975 = vpack.c.b16 %v5905, %v5904
    %v5976 = vpack.c.b16 %v5907, %v5906
    %v5977 = vpack.c.b16 %v5909, %v5908
    %v5978 = vpack.c.b16 %v5911, %v5910
    %v5979 = vpack.c.b16 %v5913, %v5912
    %v5980 = vpack.c.b16 %v5915, %v5914
    %v5981 = vpack.c.b16 %v5917, %v5916
    %v5982 = vpack.c.b16 %v5919, %v5918
    %v5983 = vpack.c.b16 %v5921, %v5920
    %v5984 = vpack.c.b16 %v5923, %v5922
    %v5985 = vpack.c.b16 %v5925, %v5924
    %v5986 = vpack.c.b16 %v5927, %v5926
    %v5987 = vpack.c.b16 %v5929, %v5928
    %v5988 = vpack.c.b16 %v5931, %v5930
    %v5989 = vpack.c.b16 %v5933, %v5932
    %6046 = vmatpush.bf16.msra.mxu0 %v5941
    %6047 = vmatpush.bf16.msra.mxu0 %v5940
    %6048 = vmatpush.bf16.msra.mxu0 %v5939
    %6049 = vmatpush.bf16.msra.mxu0 %v5938
    %6050 = vmatpush.bf16.msra.mxu0 %v5937
    %6051 = vmatpush.bf16.msra.mxu0 %v5936
    %6052 = vmatpush.bf16.msra.mxu0 %v5935
    %6053 = vmatpush.bf16.msra.mxu0 %v5934
    %6054 = vmatmul.bf16.gmra.mxu0 %v5598
    %v6055 = vpop.f32.mrf.mxu0
    %v6056 = vadd.f32 %v5421, %v6055
    %v6057 = vpop.f32.mrf.mxu0
    %v6058 = vadd.f32 %v5421, %v6057
    %6059 = vmatmul.bf16.gmra.mxu0 %v5605
    %v6060 = vpop.f32.mrf.mxu0
    %v6061 = vadd.f32 %v5421, %v6060
    %v6062 = vpop.f32.mrf.mxu0
    %v6063 = vadd.f32 %v5421, %v6062
    %6064 = vmatmul.bf16.gmra.mxu0 %v5612
    %v6065 = vpop.f32.mrf.mxu0
    %v6066 = vadd.f32 %v5421, %v6065
    %v6067 = vpop.f32.mrf.mxu0
    %v6068 = vadd.f32 %v5421, %v6067
    %6069 = vmatmul.bf16.gmra.mxu0 %v5619
    %v6070 = vpop.f32.mrf.mxu0
    %v6071 = vadd.f32 %v5421, %v6070
    %v6072 = vpop.f32.mrf.mxu0
    %v6073 = vadd.f32 %v5421, %v6072
    %6074 = vmatmul.bf16.gmra.mxu0 %v5626
    %v6075 = vpop.f32.mrf.mxu0
    %v6076 = vadd.f32 %v5421, %v6075
    %v6077 = vpop.f32.mrf.mxu0
    %v6078 = vadd.f32 %v5421, %v6077
    %6079 = vmatmul.bf16.gmra.mxu0 %v5633
    %v6080 = vpop.f32.mrf.mxu0
    %v6081 = vadd.f32 %v5421, %v6080
    %v6082 = vpop.f32.mrf.mxu0
    %v6083 = vadd.f32 %v5421, %v6082
    %6084 = vmatmul.bf16.gmra.mxu0 %v5640
    %v6085 = vpop.f32.mrf.mxu0
    %v6086 = vadd.f32 %v5421, %v6085
    %v6087 = vpop.f32.mrf.mxu0
    %v6088 = vadd.f32 %v5421, %v6087
    %6089 = vmatmul.bf16.gmra.mxu0 %v5647
    %v6090 = vpop.f32.mrf.mxu0
    %v6091 = vadd.f32 %v5421, %v6090
    %v6092 = vpop.f32.mrf.mxu0
    %v6093 = vadd.f32 %v5421, %v6092
    %6094 = vdwg.mxu0
    %6095 = vmatpush.bf16.msra.mxu0 %v5949
    %6096 = vmatpush.bf16.msra.mxu0 %v5948
    %6097 = vmatpush.bf16.msra.mxu0 %v5947
    %6098 = vmatpush.bf16.msra.mxu0 %v5946
    %6099 = vmatpush.bf16.msra.mxu0 %v5945
    %6100 = vmatpush.bf16.msra.mxu0 %v5944
    %6101 = vmatpush.bf16.msra.mxu0 %v5943
    %6102 = vmatpush.bf16.msra.mxu0 %v5942
    %6103 = vmatmul.bf16.gmra.mxu0 %v5599
    %v6104 = vpop.f32.mrf.mxu0
    %v6105 = vadd.f32 %v6056, %v6104
    %v6106 = vpop.f32.mrf.mxu0
    %v6107 = vadd.f32 %v6058, %v6106
    %6108 = vmatmul.bf16.gmra.mxu0 %v5606
    %v6109 = vpop.f32.mrf.mxu0
    %v6110 = vadd.f32 %v6061, %v6109
    %v6111 = vpop.f32.mrf.mxu0
    %v6112 = vadd.f32 %v6063, %v6111
    %6113 = vmatmul.bf16.gmra.mxu0 %v5613
    %v6114 = vpop.f32.mrf.mxu0
    %v6115 = vadd.f32 %v6066, %v6114
    %v6116 = vpop.f32.mrf.mxu0
    %v6117 = vadd.f32 %v6068, %v6116
    %6118 = vmatmul.bf16.gmra.mxu0 %v5620
    %v6119 = vpop.f32.mrf.mxu0
    %v6120 = vadd.f32 %v6071, %v6119
    %v6121 = vpop.f32.mrf.mxu0
    %v6122 = vadd.f32 %v6073, %v6121
    %6123 = vmatmul.bf16.gmra.mxu0 %v5627
    %v6124 = vpop.f32.mrf.mxu0
    %v6125 = vadd.f32 %v6076, %v6124
    %v6126 = vpop.f32.mrf.mxu0
    %v6127 = vadd.f32 %v6078, %v6126
    %6128 = vmatmul.bf16.gmra.mxu0 %v5634
    %v6129 = vpop.f32.mrf.mxu0
    %v6130 = vadd.f32 %v6081, %v6129
    %v6131 = vpop.f32.mrf.mxu0
    %v6132 = vadd.f32 %v6083, %v6131
    %6133 = vmatmul.bf16.gmra.mxu0 %v5641
    %v6134 = vpop.f32.mrf.mxu0
    %v6135 = vadd.f32 %v6086, %v6134
    %v6136 = vpop.f32.mrf.mxu0
    %v6137 = vadd.f32 %v6088, %v6136
    %6138 = vmatmul.bf16.gmra.mxu0 %v5648
    %v6139 = vpop.f32.mrf.mxu0
    %v6140 = vadd.f32 %v6091, %v6139
    %v6141 = vpop.f32.mrf.mxu0
    %v6142 = vadd.f32 %v6093, %v6141
    %6143 = vdwg.mxu0
    %6144 = vmatpush.bf16.msra.mxu0 %v5957
    %6145 = vmatpush.bf16.msra.mxu0 %v5956
    %6146 = vmatpush.bf16.msra.mxu0 %v5955
    %6147 = vmatpush.bf16.msra.mxu0 %v5954
    %6148 = vmatpush.bf16.msra.mxu0 %v5953
    %6149 = vmatpush.bf16.msra.mxu0 %v5952
    %6150 = vmatpush.bf16.msra.mxu0 %v5951
    %6151 = vmatpush.bf16.msra.mxu0 %v5950
    %6152 = vmatmul.bf16.gmra.mxu0 %v5600
    %v6153 = vpop.f32.mrf.mxu0
    %v6154 = vadd.f32 %v6105, %v6153
    %v6155 = vpop.f32.mrf.mxu0
    %v6156 = vadd.f32 %v6107, %v6155
    %6157 = vmatmul.bf16.gmra.mxu0 %v5607
    %v6158 = vpop.f32.mrf.mxu0
    %v6159 = vadd.f32 %v6110, %v6158
    %v6160 = vpop.f32.mrf.mxu0
    %v6161 = vadd.f32 %v6112, %v6160
    %6162 = vmatmul.bf16.gmra.mxu0 %v5614
    %v6163 = vpop.f32.mrf.mxu0
    %v6164 = vadd.f32 %v6115, %v6163
    %v6165 = vpop.f32.mrf.mxu0
    %v6166 = vadd.f32 %v6117, %v6165
    %6167 = vmatmul.bf16.gmra.mxu0 %v5621
    %v6168 = vpop.f32.mrf.mxu0
    %v6169 = vadd.f32 %v6120, %v6168
    %v6170 = vpop.f32.mrf.mxu0
    %v6171 = vadd.f32 %v6122, %v6170
    %6172 = vmatmul.bf16.gmra.mxu0 %v5628
    %v6173 = vpop.f32.mrf.mxu0
    %v6174 = vadd.f32 %v6125, %v6173
    %v6175 = vpop.f32.mrf.mxu0
    %v6176 = vadd.f32 %v6127, %v6175
    %6177 = vmatmul.bf16.gmra.mxu0 %v5635
    %v6178 = vpop.f32.mrf.mxu0
    %v6179 = vadd.f32 %v6130, %v6178
    %v6180 = vpop.f32.mrf.mxu0
    %v6181 = vadd.f32 %v6132, %v6180
    %6182 = vmatmul.bf16.gmra.mxu0 %v5642
    %v6183 = vpop.f32.mrf.mxu0
    %v6184 = vadd.f32 %v6135, %v6183
    %v6185 = vpop.f32.mrf.mxu0
    %v6186 = vadd.f32 %v6137, %v6185
    %6187 = vmatmul.bf16.gmra.mxu0 %v5649
    %v6188 = vpop.f32.mrf.mxu0
    %v6189 = vadd.f32 %v6140, %v6188
    %v6190 = vpop.f32.mrf.mxu0
    %v6191 = vadd.f32 %v6142, %v6190
    %6192 = vdwg.mxu0
    %6193 = vmatpush.bf16.msra.mxu0 %v5965
    %6194 = vmatpush.bf16.msra.mxu0 %v5964
    %6195 = vmatpush.bf16.msra.mxu0 %v5963
    %6196 = vmatpush.bf16.msra.mxu0 %v5962
    %6197 = vmatpush.bf16.msra.mxu0 %v5961
    %6198 = vmatpush.bf16.msra.mxu0 %v5960
    %6199 = vmatpush.bf16.msra.mxu0 %v5959
    %6200 = vmatpush.bf16.msra.mxu0 %v5958
    %6201 = vmatmul.bf16.gmra.mxu0 %v5601
    %v6202 = vpop.f32.mrf.mxu0
    %v6203 = vadd.f32 %v6154, %v6202
    %v6204 = vpop.f32.mrf.mxu0
    %v6205 = vadd.f32 %v6156, %v6204
    %6206 = vmatmul.bf16.gmra.mxu0 %v5608
    %v6207 = vpop.f32.mrf.mxu0
    %v6208 = vadd.f32 %v6159, %v6207
    %v6209 = vpop.f32.mrf.mxu0
    %v6210 = vadd.f32 %v6161, %v6209
    %6211 = vmatmul.bf16.gmra.mxu0 %v5615
    %v6212 = vpop.f32.mrf.mxu0
    %v6213 = vadd.f32 %v6164, %v6212
    %v6214 = vpop.f32.mrf.mxu0
    %v6215 = vadd.f32 %v6166, %v6214
    %6216 = vmatmul.bf16.gmra.mxu0 %v5622
    %v6217 = vpop.f32.mrf.mxu0
    %v6218 = vadd.f32 %v6169, %v6217
    %v6219 = vpop.f32.mrf.mxu0
    %v6220 = vadd.f32 %v6171, %v6219
    %6221 = vmatmul.bf16.gmra.mxu0 %v5629
    %v6222 = vpop.f32.mrf.mxu0
    %v6223 = vadd.f32 %v6174, %v6222
    %v6224 = vpop.f32.mrf.mxu0
    %v6225 = vadd.f32 %v6176, %v6224
    %6226 = vmatmul.bf16.gmra.mxu0 %v5636
    %v6227 = vpop.f32.mrf.mxu0
    %v6228 = vadd.f32 %v6179, %v6227
    %v6229 = vpop.f32.mrf.mxu0
    %v6230 = vadd.f32 %v6181, %v6229
    %6231 = vmatmul.bf16.gmra.mxu0 %v5643
    %v6232 = vpop.f32.mrf.mxu0
    %v6233 = vadd.f32 %v6184, %v6232
    %v6234 = vpop.f32.mrf.mxu0
    %v6235 = vadd.f32 %v6186, %v6234
    %6236 = vmatmul.bf16.gmra.mxu0 %v5650
    %v6237 = vpop.f32.mrf.mxu0
    %v6238 = vadd.f32 %v6189, %v6237
    %v6239 = vpop.f32.mrf.mxu0
    %v6240 = vadd.f32 %v6191, %v6239
    %6241 = vdwg.mxu0
    %6242 = vmatpush.bf16.msra.mxu0 %v5973
    %6243 = vmatpush.bf16.msra.mxu0 %v5972
    %6244 = vmatpush.bf16.msra.mxu0 %v5971
    %6245 = vmatpush.bf16.msra.mxu0 %v5970
    %6246 = vmatpush.bf16.msra.mxu0 %v5969
    %6247 = vmatpush.bf16.msra.mxu0 %v5968
    %6248 = vmatpush.bf16.msra.mxu0 %v5967
    %6249 = vmatpush.bf16.msra.mxu0 %v5966
    %6250 = vmatmul.bf16.gmra.mxu0 %v5602
    %v6251 = vpop.f32.mrf.mxu0
    %v6252 = vadd.f32 %v6203, %v6251
    %v6253 = vpop.f32.mrf.mxu0
    %v6254 = vadd.f32 %v6205, %v6253
    %6255 = vmatmul.bf16.gmra.mxu0 %v5609
    %v6256 = vpop.f32.mrf.mxu0
    %v6257 = vadd.f32 %v6208, %v6256
    %v6258 = vpop.f32.mrf.mxu0
    %v6259 = vadd.f32 %v6210, %v6258
    %6260 = vmatmul.bf16.gmra.mxu0 %v5616
    %v6261 = vpop.f32.mrf.mxu0
    %v6262 = vadd.f32 %v6213, %v6261
    %v6263 = vpop.f32.mrf.mxu0
    %v6264 = vadd.f32 %v6215, %v6263
    %6265 = vmatmul.bf16.gmra.mxu0 %v5623
    %v6266 = vpop.f32.mrf.mxu0
    %v6267 = vadd.f32 %v6218, %v6266
    %v6268 = vpop.f32.mrf.mxu0
    %v6269 = vadd.f32 %v6220, %v6268
    %6270 = vmatmul.bf16.gmra.mxu0 %v5630
    %v6271 = vpop.f32.mrf.mxu0
    %v6272 = vadd.f32 %v6223, %v6271
    %v6273 = vpop.f32.mrf.mxu0
    %v6274 = vadd.f32 %v6225, %v6273
    %6275 = vmatmul.bf16.gmra.mxu0 %v5637
    %v6276 = vpop.f32.mrf.mxu0
    %v6277 = vadd.f32 %v6228, %v6276
    %v6278 = vpop.f32.mrf.mxu0
    %v6279 = vadd.f32 %v6230, %v6278
    %6280 = vmatmul.bf16.gmra.mxu0 %v5644
    %v6281 = vpop.f32.mrf.mxu0
    %v6282 = vadd.f32 %v6233, %v6281
    %v6283 = vpop.f32.mrf.mxu0
    %v6284 = vadd.f32 %v6235, %v6283
    %6285 = vmatmul.bf16.gmra.mxu0 %v5651
    %v6286 = vpop.f32.mrf.mxu0
    %v6287 = vadd.f32 %v6238, %v6286
    %v6288 = vpop.f32.mrf.mxu0
    %v6289 = vadd.f32 %v6240, %v6288
    %6290 = vdwg.mxu0
    %6291 = vmatpush.bf16.msra.mxu0 %v5981
    %6292 = vmatpush.bf16.msra.mxu0 %v5980
    %6293 = vmatpush.bf16.msra.mxu0 %v5979
    %6294 = vmatpush.bf16.msra.mxu0 %v5978
    %6295 = vmatpush.bf16.msra.mxu0 %v5977
    %6296 = vmatpush.bf16.msra.mxu0 %v5976
    %6297 = vmatpush.bf16.msra.mxu0 %v5975
    %6298 = vmatpush.bf16.msra.mxu0 %v5974
    %6299 = vmatmul.bf16.gmra.mxu0 %v5603
    %v6300 = vpop.f32.mrf.mxu0
    %v6301 = vadd.f32 %v6252, %v6300
    %v6302 = vpop.f32.mrf.mxu0
    %v6303 = vadd.f32 %v6254, %v6302
    %6304 = vmatmul.bf16.gmra.mxu0 %v5610
    %v6305 = vpop.f32.mrf.mxu0
    %v6306 = vadd.f32 %v6257, %v6305
    %v6307 = vpop.f32.mrf.mxu0
    %v6308 = vadd.f32 %v6259, %v6307
    %6309 = vmatmul.bf16.gmra.mxu0 %v5617
    %v6310 = vpop.f32.mrf.mxu0
    %v6311 = vadd.f32 %v6262, %v6310
    %v6312 = vpop.f32.mrf.mxu0
    %v6313 = vadd.f32 %v6264, %v6312
    %6314 = vmatmul.bf16.gmra.mxu0 %v5624
    %v6315 = vpop.f32.mrf.mxu0
    %v6316 = vadd.f32 %v6267, %v6315
    %v6317 = vpop.f32.mrf.mxu0
    %v6318 = vadd.f32 %v6269, %v6317
    %6319 = vmatmul.bf16.gmra.mxu0 %v5631
    %v6320 = vpop.f32.mrf.mxu0
    %v6321 = vadd.f32 %v6272, %v6320
    %v6322 = vpop.f32.mrf.mxu0
    %v6323 = vadd.f32 %v6274, %v6322
    %6324 = vmatmul.bf16.gmra.mxu0 %v5638
    %v6325 = vpop.f32.mrf.mxu0
    %v6326 = vadd.f32 %v6277, %v6325
    %v6327 = vpop.f32.mrf.mxu0
    %v6328 = vadd.f32 %v6279, %v6327
    %6329 = vmatmul.bf16.gmra.mxu0 %v5645
    %v6330 = vpop.f32.mrf.mxu0
    %v6331 = vadd.f32 %v6282, %v6330
    %v6332 = vpop.f32.mrf.mxu0
    %v6333 = vadd.f32 %v6284, %v6332
    %6334 = vmatmul.bf16.gmra.mxu0 %v5652
    %v6335 = vpop.f32.mrf.mxu0
    %v6336 = vadd.f32 %v6287, %v6335
    %v6337 = vpop.f32.mrf.mxu0
    %v6338 = vadd.f32 %v6289, %v6337
    %6339 = vdwg.mxu0
    %6340 = vmatpush.bf16.msra.mxu0 %v5989
    %6341 = vmatpush.bf16.msra.mxu0 %v5988
    %6342 = vmatpush.bf16.msra.mxu0 %v5987
    %6343 = vmatpush.bf16.msra.mxu0 %v5986
    %6344 = vmatpush.bf16.msra.mxu0 %v5985
    %6345 = vmatpush.bf16.msra.mxu0 %v5984
    %6346 = vmatpush.bf16.msra.mxu0 %v5983
    %6347 = vmatpush.bf16.msra.mxu0 %v5982
    %6348 = vmatmul.bf16.gmra.mxu0 %v5604
    %v6349 = vpop.f32.mrf.mxu0
    %v6350 = vadd.f32 %v6301, %v6349
    %v6351 = vpop.f32.mrf.mxu0
    %v6352 = vadd.f32 %v6303, %v6351
    %6353 = vmatmul.bf16.gmra.mxu0 %v5611
    %v6354 = vpop.f32.mrf.mxu0
    %v6355 = vadd.f32 %v6306, %v6354
    %v6356 = vpop.f32.mrf.mxu0
    %v6357 = vadd.f32 %v6308, %v6356
    %6358 = vmatmul.bf16.gmra.mxu0 %v5618
    %v6359 = vpop.f32.mrf.mxu0
    %v6360 = vadd.f32 %v6311, %v6359
    %v6361 = vpop.f32.mrf.mxu0
    %v6362 = vadd.f32 %v6313, %v6361
    %6363 = vmatmul.bf16.gmra.mxu0 %v5625
    %v6364 = vpop.f32.mrf.mxu0
    %v6365 = vadd.f32 %v6316, %v6364
    %v6366 = vpop.f32.mrf.mxu0
    %v6367 = vadd.f32 %v6318, %v6366
    %6368 = vmatmul.bf16.gmra.mxu0 %v5632
    %v6369 = vpop.f32.mrf.mxu0
    %v6370 = vadd.f32 %v6321, %v6369
    %v6371 = vpop.f32.mrf.mxu0
    %v6372 = vadd.f32 %v6323, %v6371
    %6373 = vmatmul.bf16.gmra.mxu0 %v5639
    %v6374 = vpop.f32.mrf.mxu0
    %v6375 = vadd.f32 %v6326, %v6374
    %v6376 = vpop.f32.mrf.mxu0
    %v6377 = vadd.f32 %v6328, %v6376
    %6378 = vmatmul.bf16.gmra.mxu0 %v5646
    %v6379 = vpop.f32.mrf.mxu0
    %v6380 = vadd.f32 %v6331, %v6379
    %v6381 = vpop.f32.mrf.mxu0
    %v6382 = vadd.f32 %v6333, %v6381
    %6383 = vmatmul.bf16.gmra.mxu0 %v5653
    %v6384 = vpop.f32.mrf.mxu0
    %v6385 = vadd.f32 %v6336, %v6384
    %v6386 = vpop.f32.mrf.mxu0
    %v6387 = vadd.f32 %v6338, %v6386
    %6388 = vdwg.mxu0
    %v6389 = vmax.f32 %v6350, 0.0
    %v6390 = vmax.f32 %v6352, 0.0
    %v6391 = vmax.f32 %v6355, 0.0
    %v6392 = vmax.f32 %v6357, 0.0
    %v6393 = vmax.f32 %v6360, 0.0
    %v6394 = vmax.f32 %v6362, 0.0
    %v6395 = vmax.f32 %v6365, 0.0
    %v6396 = vmax.f32 %v6367, 0.0
    %v6397 = vmax.f32 %v6370, 0.0
    %v6398 = vmax.f32 %v6372, 0.0
    %v6399 = vmax.f32 %v6375, 0.0
    %v6400 = vmax.f32 %v6377, 0.0
    %v6401 = vmax.f32 %v6380, 0.0
    %v6402 = vmax.f32 %v6382, 0.0
    %v6403 = vmax.f32 %v6385, 0.0
    %v6404 = vmax.f32 %v6387, 0.0
    %v6405 = vpack.c.bf16 %v1119, %v1118
    %v6406 = vpack.c.bf16 %v1121, %v1120
    %v6407 = vpack.c.bf16 %v1123, %v1122
    %v6408 = vpack.c.bf16 %v1125, %v1124
    %v6409 = vpack.c.bf16 %v1127, %v1126
    %v6410 = vpack.c.bf16 %v1129, %v1128
    %v6411 = vpack.c.bf16 %v1131, %v1130
    %v6412 = vpack.c.bf16 %v1133, %v1132
    %v6413 = vld [vmem:[#allocation14] sm:$0xff]
    %v6414 = vld [vmem:[#allocation14 + $0x8] sm:$0xff]
    %v6415 = vld [vmem:[#allocation14 + $0x10] sm:$0xff]
    %v6416 = vld [vmem:[#allocation14 + $0x18] sm:$0xf]
    %v6417 = vld [vmem:[#allocation14 + $0x1c] sm:$0xff]
    %v6418 = vld [vmem:[#allocation14 + $0x24] sm:$0xff]
    %v6419 = vld [vmem:[#allocation14 + $0x2c] sm:$0xff]
    %v6420 = vld [vmem:[#allocation14 + $0x34] sm:$0xf]
    %v6421 = vld [vmem:[#allocation14 + $0x38] sm:$0xff]
    %v6422 = vld [vmem:[#allocation14 + $0x40] sm:$0xff]
    %v6423 = vld [vmem:[#allocation14 + $0x48] sm:$0xff]
    %v6424 = vld [vmem:[#allocation14 + $0x50] sm:$0xf]
    %v6425 = vld [vmem:[#allocation14 + $0x54] sm:$0xff]
    %v6426 = vld [vmem:[#allocation14 + $0x5c] sm:$0xff]
    %v6427 = vld [vmem:[#allocation14 + $0x64] sm:$0xff]
    %v6428 = vld [vmem:[#allocation14 + $0x6c] sm:$0xf]
    %v6429 = vld [vmem:[#allocation14 + $0x70] sm:$0xff]
    %v6430 = vld [vmem:[#allocation14 + $0x78] sm:$0xff]
    %v6431 = vld [vmem:[#allocation14 + $0x80] sm:$0xff]
    %v6432 = vld [vmem:[#allocation14 + $0x88] sm:$0xf]
    %v6433 = vld [vmem:[#allocation14 + $0x8c] sm:$0xff]
    %v6434 = vld [vmem:[#allocation14 + $0x94] sm:$0xff]
    %v6435 = vld [vmem:[#allocation14 + $0x9c] sm:$0xff]
    %v6436 = vld [vmem:[#allocation14 + $0xa4] sm:$0xf]
    %v6437 = vld [vmem:[#allocation14 + $0xa8] sm:$0xff]
    %v6438 = vld [vmem:[#allocation14 + $0xb0] sm:$0xff]
    %v6439 = vld [vmem:[#allocation14 + $0xb8] sm:$0xff]
    %v6440 = vld [vmem:[#allocation14 + $0xc0] sm:$0xf]
    %v6441 = vld [vmem:[#allocation14 + $0xc4] sm:$0xff]
    %v6442 = vld [vmem:[#allocation14 + $0xcc] sm:$0xff]
    %v6443 = vld [vmem:[#allocation14 + $0xd4] sm:$0xff]
    %v6444 = vld [vmem:[#allocation14 + $0xdc] sm:$0xf]
    %v6445 = vld [vmem:[#allocation14 + $0xe0] sm:$0xff]
    %v6446 = vld [vmem:[#allocation14 + $0xe8] sm:$0xff]
    %v6447 = vld [vmem:[#allocation14 + $0xf0] sm:$0xff]
    %v6448 = vld [vmem:[#allocation14 + $0xf8] sm:$0xf]
    %v6449 = vld [vmem:[#allocation14 + $0xfc] sm:$0xff]
    %v6450 = vld [vmem:[#allocation14 + $0x104] sm:$0xff]
    %v6451 = vld [vmem:[#allocation14 + $0x10c] sm:$0xff]
    %v6452 = vld [vmem:[#allocation14 + $0x114] sm:$0xf]
    %v6453 = vld [vmem:[#allocation14 + $0x118] sm:$0xff]
    %v6454 = vld [vmem:[#allocation14 + $0x120] sm:$0xff]
    %v6455 = vld [vmem:[#allocation14 + $0x128] sm:$0xff]
    %v6456 = vld [vmem:[#allocation14 + $0x130] sm:$0xf]
    %v6457 = vld [vmem:[#allocation14 + $0x134] sm:$0xff]
    %v6458 = vld [vmem:[#allocation14 + $0x13c] sm:$0xff]
    %v6459 = vld [vmem:[#allocation14 + $0x144] sm:$0xff]
    %v6460 = vld [vmem:[#allocation14 + $0x14c] sm:$0xf]
    %v6461 = vld [vmem:[#allocation14 + $0x150] sm:$0xff]
    %v6462 = vld [vmem:[#allocation14 + $0x158] sm:$0xff]
    %v6463 = vld [vmem:[#allocation14 + $0x160] sm:$0xff]
    %v6464 = vld [vmem:[#allocation14 + $0x168] sm:$0xf]
    %v6465 = vld [vmem:[#allocation14 + $0x16c] sm:$0xff]
    %v6466 = vld [vmem:[#allocation14 + $0x174] sm:$0xff]
    %v6467 = vld [vmem:[#allocation14 + $0x17c] sm:$0xff]
    %v6468 = vld [vmem:[#allocation14 + $0x184] sm:$0xf]
    %v6469 = vld [vmem:[#allocation14 + $0x188] sm:$0xff]
    %v6470 = vld [vmem:[#allocation14 + $0x190] sm:$0xff]
    %v6471 = vld [vmem:[#allocation14 + $0x198] sm:$0xff]
    %v6472 = vld [vmem:[#allocation14 + $0x1a0] sm:$0xf]
    %v6473 = vld [vmem:[#allocation14 + $0x1a4] sm:$0xff]
    %v6474 = vld [vmem:[#allocation14 + $0x1ac] sm:$0xff]
    %v6475 = vld [vmem:[#allocation14 + $0x1b4] sm:$0xff]
    %v6476 = vld [vmem:[#allocation14 + $0x1bc] sm:$0xf]
    %v6477 = vpack.c.bf16 %v6390, %v6389
    %v6478 = vpack.c.bf16 %v6392, %v6391
    %v6479 = vpack.c.bf16 %v6394, %v6393
    %v6480 = vpack.c.bf16 %v6396, %v6395
    %v6481 = vpack.c.bf16 %v6398, %v6397
    %v6482 = vpack.c.bf16 %v6400, %v6399
    %v6483 = vpack.c.bf16 %v6402, %v6401
    %v6484 = vpack.c.bf16 %v6404, %v6403
    %v6485 = vld [vmem:[#allocation16] sm:$0xff]
    %v6486 = vld [vmem:[#allocation16 + $0x8] sm:$0xff]
    %v6487 = vld [vmem:[#allocation16 + $0x10] sm:$0xff]
    %v6488 = vld [vmem:[#allocation16 + $0x18] sm:$0xf]
    %v6489 = vld [vmem:[#allocation16 + $0x1c] sm:$0xff]
    %v6490 = vld [vmem:[#allocation16 + $0x24] sm:$0xff]
    %v6491 = vld [vmem:[#allocation16 + $0x2c] sm:$0xff]
    %v6492 = vld [vmem:[#allocation16 + $0x34] sm:$0xf]
    %v6493 = vld [vmem:[#allocation16 + $0x38] sm:$0xff]
    %v6494 = vld [vmem:[#allocation16 + $0x40] sm:$0xff]
    %v6495 = vld [vmem:[#allocation16 + $0x48] sm:$0xff]
    %v6496 = vld [vmem:[#allocation16 + $0x50] sm:$0xf]
    %v6497 = vld [vmem:[#allocation16 + $0x54] sm:$0xff]
    %v6498 = vld [vmem:[#allocation16 + $0x5c] sm:$0xff]
    %v6499 = vld [vmem:[#allocation16 + $0x64] sm:$0xff]
    %v6500 = vld [vmem:[#allocation16 + $0x6c] sm:$0xf]
    %v6501 = vld [vmem:[#allocation16 + $0x70] sm:$0xff]
    %v6502 = vld [vmem:[#allocation16 + $0x78] sm:$0xff]
    %v6503 = vld [vmem:[#allocation16 + $0x80] sm:$0xff]
    %v6504 = vld [vmem:[#allocation16 + $0x88] sm:$0xf]
    %v6505 = vld [vmem:[#allocation16 + $0x8c] sm:$0xff]
    %v6506 = vld [vmem:[#allocation16 + $0x94] sm:$0xff]
    %v6507 = vld [vmem:[#allocation16 + $0x9c] sm:$0xff]
    %v6508 = vld [vmem:[#allocation16 + $0xa4] sm:$0xf]
    %v6509 = vld [vmem:[#allocation16 + $0xa8] sm:$0xff]
    %v6510 = vld [vmem:[#allocation16 + $0xb0] sm:$0xff]
    %v6511 = vld [vmem:[#allocation16 + $0xb8] sm:$0xff]
    %v6512 = vld [vmem:[#allocation16 + $0xc0] sm:$0xf]
    %v6513 = vld [vmem:[#allocation16 + $0xc4] sm:$0xff]
    %v6514 = vld [vmem:[#allocation16 + $0xcc] sm:$0xff]
    %v6515 = vld [vmem:[#allocation16 + $0xd4] sm:$0xff]
    %v6516 = vld [vmem:[#allocation16 + $0xdc] sm:$0xf]
    %v6517 = vld [vmem:[#allocation16 + $0xe0] sm:$0xff]
    %v6518 = vld [vmem:[#allocation16 + $0xe8] sm:$0xff]
    %v6519 = vld [vmem:[#allocation16 + $0xf0] sm:$0xff]
    %v6520 = vld [vmem:[#allocation16 + $0xf8] sm:$0xf]
    %v6521 = vld [vmem:[#allocation16 + $0xfc] sm:$0xff]
    %v6522 = vld [vmem:[#allocation16 + $0x104] sm:$0xff]
    %v6523 = vld [vmem:[#allocation16 + $0x10c] sm:$0xff]
    %v6524 = vld [vmem:[#allocation16 + $0x114] sm:$0xf]
    %v6525 = vld [vmem:[#allocation16 + $0x118] sm:$0xff]
    %v6526 = vld [vmem:[#allocation16 + $0x120] sm:$0xff]
    %v6527 = vld [vmem:[#allocation16 + $0x128] sm:$0xff]
    %v6528 = vld [vmem:[#allocation16 + $0x130] sm:$0xf]
    %v6529 = vld [vmem:[#allocation16 + $0x134] sm:$0xff]
    %v6530 = vld [vmem:[#allocation16 + $0x13c] sm:$0xff]
    %v6531 = vld [vmem:[#allocation16 + $0x144] sm:$0xff]
    %v6532 = vld [vmem:[#allocation16 + $0x14c] sm:$0xf]
    %v6533 = vld [vmem:[#allocation16 + $0x150] sm:$0xff]
    %v6534 = vld [vmem:[#allocation16 + $0x158] sm:$0xff]
    %v6535 = vld [vmem:[#allocation16 + $0x160] sm:$0xff]
    %v6536 = vld [vmem:[#allocation16 + $0x168] sm:$0xf]
    %v6537 = vld [vmem:[#allocation16 + $0x16c] sm:$0xff]
    %v6538 = vld [vmem:[#allocation16 + $0x174] sm:$0xff]
    %v6539 = vld [vmem:[#allocation16 + $0x17c] sm:$0xff]
    %v6540 = vld [vmem:[#allocation16 + $0x184] sm:$0xf]
    %v6541 = vld [vmem:[#allocation16 + $0x188] sm:$0xff]
    %v6542 = vld [vmem:[#allocation16 + $0x190] sm:$0xff]
    %v6543 = vld [vmem:[#allocation16 + $0x198] sm:$0xff]
    %v6544 = vld [vmem:[#allocation16 + $0x1a0] sm:$0xf]
    %v6545 = vld [vmem:[#allocation16 + $0x1a4] sm:$0xff]
    %v6546 = vld [vmem:[#allocation16 + $0x1ac] sm:$0xff]
    %v6547 = vld [vmem:[#allocation16 + $0x1b4] sm:$0xff]
    %v6548 = vld [vmem:[#allocation16 + $0x1bc] sm:$0xf]
    %v6613 = vunpack.c.l.b16 %v6485
    %v6614 = vunpack.c.h.b16 %v6485
    %v6615 = vunpack.c.l.b16 %v6486
    %v6616 = vunpack.c.h.b16 %v6486
    %v6617 = vunpack.c.l.b16 %v6487
    %v6618 = vunpack.c.h.b16 %v6487
    %v6619 = vunpack.c.l.b16 %v6488
    %v6620 = vunpack.c.l.b16 %v6489
    %v6621 = vunpack.c.h.b16 %v6489
    %v6622 = vunpack.c.l.b16 %v6490
    %v6623 = vunpack.c.h.b16 %v6490
    %v6624 = vunpack.c.l.b16 %v6491
    %v6625 = vunpack.c.h.b16 %v6491
    %v6626 = vunpack.c.l.b16 %v6492
    %v6627 = vunpack.c.l.b16 %v6493
    %v6628 = vunpack.c.h.b16 %v6493
    %v6629 = vunpack.c.l.b16 %v6494
    %v6630 = vunpack.c.h.b16 %v6494
    %v6631 = vunpack.c.l.b16 %v6495
    %v6632 = vunpack.c.h.b16 %v6495
    %v6633 = vunpack.c.l.b16 %v6496
    %v6634 = vunpack.c.l.b16 %v6497
    %v6635 = vunpack.c.h.b16 %v6497
    %v6636 = vunpack.c.l.b16 %v6498
    %v6637 = vunpack.c.h.b16 %v6498
    %v6638 = vunpack.c.l.b16 %v6499
    %v6639 = vunpack.c.h.b16 %v6499
    %v6640 = vunpack.c.l.b16 %v6500
    %v6641 = vunpack.c.l.b16 %v6501
    %v6642 = vunpack.c.h.b16 %v6501
    %v6643 = vunpack.c.l.b16 %v6502
    %v6644 = vunpack.c.h.b16 %v6502
    %v6645 = vunpack.c.l.b16 %v6503
    %v6646 = vunpack.c.h.b16 %v6503
    %v6647 = vunpack.c.l.b16 %v6504
    %v6648 = vunpack.c.l.b16 %v6505
    %v6649 = vunpack.c.h.b16 %v6505
    %v6650 = vunpack.c.l.b16 %v6506
    %v6651 = vunpack.c.h.b16 %v6506
    %v6652 = vunpack.c.l.b16 %v6507
    %v6653 = vunpack.c.h.b16 %v6507
    %v6654 = vunpack.c.l.b16 %v6508
    %v6655 = vunpack.c.l.b16 %v6509
    %v6656 = vunpack.c.h.b16 %v6509
    %v6657 = vunpack.c.l.b16 %v6510
    %v6658 = vunpack.c.h.b16 %v6510
    %v6659 = vunpack.c.l.b16 %v6511
    %v6660 = vunpack.c.h.b16 %v6511
    %v6661 = vunpack.c.l.b16 %v6512
    %v6662 = vunpack.c.l.b16 %v6513
    %v6663 = vunpack.c.h.b16 %v6513
    %v6664 = vunpack.c.l.b16 %v6514
    %v6665 = vunpack.c.h.b16 %v6514
    %v6666 = vunpack.c.l.b16 %v6515
    %v6667 = vunpack.c.h.b16 %v6515
    %v6668 = vunpack.c.l.b16 %v6516
    %v6669 = vunpack.c.l.b16 %v6517
    %v6670 = vunpack.c.h.b16 %v6517
    %v6671 = vunpack.c.l.b16 %v6518
    %v6672 = vunpack.c.h.b16 %v6518
    %v6673 = vunpack.c.l.b16 %v6519
    %v6674 = vunpack.c.h.b16 %v6519
    %v6675 = vunpack.c.l.b16 %v6520
    %v6676 = vunpack.c.l.b16 %v6521
    %v6677 = vunpack.c.h.b16 %v6521
    %v6678 = vunpack.c.l.b16 %v6522
    %v6679 = vunpack.c.h.b16 %v6522
    %v6680 = vunpack.c.l.b16 %v6523
    %v6681 = vunpack.c.h.b16 %v6523
    %v6682 = vunpack.c.l.b16 %v6524
    %v6683 = vunpack.c.l.b16 %v6525
    %v6684 = vunpack.c.h.b16 %v6525
    %v6685 = vunpack.c.l.b16 %v6526
    %v6686 = vunpack.c.h.b16 %v6526
    %v6687 = vunpack.c.l.b16 %v6527
    %v6688 = vunpack.c.h.b16 %v6527
    %v6689 = vunpack.c.l.b16 %v6528
    %v6690 = vunpack.c.l.b16 %v6529
    %v6691 = vunpack.c.h.b16 %v6529
    %v6692 = vunpack.c.l.b16 %v6530
    %v6693 = vunpack.c.h.b16 %v6530
    %v6694 = vunpack.c.l.b16 %v6531
    %v6695 = vunpack.c.h.b16 %v6531
    %v6696 = vunpack.c.l.b16 %v6532
    %v6697 = vunpack.c.l.b16 %v6533
    %v6698 = vunpack.c.h.b16 %v6533
    %v6699 = vunpack.c.l.b16 %v6534
    %v6700 = vunpack.c.h.b16 %v6534
    %v6701 = vunpack.c.l.b16 %v6535
    %v6702 = vunpack.c.h.b16 %v6535
    %v6703 = vunpack.c.l.b16 %v6536
    %v6704 = vunpack.c.l.b16 %v6537
    %v6705 = vunpack.c.h.b16 %v6537
    %v6706 = vunpack.c.l.b16 %v6538
    %v6707 = vunpack.c.h.b16 %v6538
    %v6708 = vunpack.c.l.b16 %v6539
    %v6709 = vunpack.c.h.b16 %v6539
    %v6710 = vunpack.c.l.b16 %v6540
    %v6711 = vunpack.c.l.b16 %v6541
    %v6712 = vunpack.c.h.b16 %v6541
    %v6713 = vunpack.c.l.b16 %v6542
    %v6714 = vunpack.c.h.b16 %v6542
    %v6715 = vunpack.c.l.b16 %v6543
    %v6716 = vunpack.c.h.b16 %v6543
    %v6717 = vunpack.c.l.b16 %v6544
    %v6718 = vunpack.c.l.b16 %v6545
    %v6719 = vunpack.c.h.b16 %v6545
    %v6720 = vunpack.c.l.b16 %v6546
    %v6721 = vunpack.c.h.b16 %v6546
    %v6722 = vunpack.c.l.b16 %v6547
    %v6723 = vunpack.c.h.b16 %v6547
    %v6724 = vunpack.c.l.b16 %v6548
    %v6725 = vpack.c.b16 %v6620, %v6613
    %v6726 = vpack.c.b16 %v6621, %v6614
    %v6727 = vpack.c.b16 %v6622, %v6615
    %v6728 = vpack.c.b16 %v6623, %v6616
    %v6729 = vpack.c.b16 %v6624, %v6617
    %v6730 = vpack.c.b16 %v6625, %v6618
    %v6731 = vpack.c.b16 %v6626, %v6619
    %v6732 = vpack.c.b16 %v6634, %v6627
    %v6733 = vpack.c.b16 %v6635, %v6628
    %v6734 = vpack.c.b16 %v6636, %v6629
    %v6735 = vpack.c.b16 %v6637, %v6630
    %v6736 = vpack.c.b16 %v6638, %v6631
    %v6737 = vpack.c.b16 %v6639, %v6632
    %v6738 = vpack.c.b16 %v6640, %v6633
    %v6739 = vpack.c.b16 %v6648, %v6641
    %v6740 = vpack.c.b16 %v6649, %v6642
    %v6741 = vpack.c.b16 %v6650, %v6643
    %v6742 = vpack.c.b16 %v6651, %v6644
    %v6743 = vpack.c.b16 %v6652, %v6645
    %v6744 = vpack.c.b16 %v6653, %v6646
    %v6745 = vpack.c.b16 %v6654, %v6647
    %v6746 = vpack.c.b16 %v6662, %v6655
    %v6747 = vpack.c.b16 %v6663, %v6656
    %v6748 = vpack.c.b16 %v6664, %v6657
    %v6749 = vpack.c.b16 %v6665, %v6658
    %v6750 = vpack.c.b16 %v6666, %v6659
    %v6751 = vpack.c.b16 %v6667, %v6660
    %v6752 = vpack.c.b16 %v6668, %v6661
    %v6753 = vpack.c.b16 %v6676, %v6669
    %v6754 = vpack.c.b16 %v6677, %v6670
    %v6755 = vpack.c.b16 %v6678, %v6671
    %v6756 = vpack.c.b16 %v6679, %v6672
    %v6757 = vpack.c.b16 %v6680, %v6673
    %v6758 = vpack.c.b16 %v6681, %v6674
    %v6759 = vpack.c.b16 %v6682, %v6675
    %v6760 = vpack.c.b16 %v6690, %v6683
    %v6761 = vpack.c.b16 %v6691, %v6684
    %v6762 = vpack.c.b16 %v6692, %v6685
    %v6763 = vpack.c.b16 %v6693, %v6686
    %v6764 = vpack.c.b16 %v6694, %v6687
    %v6765 = vpack.c.b16 %v6695, %v6688
    %v6766 = vpack.c.b16 %v6696, %v6689
    %v6767 = vpack.c.b16 %v6704, %v6697
    %v6768 = vpack.c.b16 %v6705, %v6698
    %v6769 = vpack.c.b16 %v6706, %v6699
    %v6770 = vpack.c.b16 %v6707, %v6700
    %v6771 = vpack.c.b16 %v6708, %v6701
    %v6772 = vpack.c.b16 %v6709, %v6702
    %v6773 = vpack.c.b16 %v6710, %v6703
    %v6774 = vpack.c.b16 %v6718, %v6711
    %v6775 = vpack.c.b16 %v6719, %v6712
    %v6776 = vpack.c.b16 %v6720, %v6713
    %v6777 = vpack.c.b16 %v6721, %v6714
    %v6778 = vpack.c.b16 %v6722, %v6715
    %v6779 = vpack.c.b16 %v6723, %v6716
    %v6780 = vpack.c.b16 %v6724, %v6717
    %6837 = vmatpush.bf16.msra.mxu0 %v6774
    %6838 = vmatpush.bf16.msra.mxu0 %v6767
    %6839 = vmatpush.bf16.msra.mxu0 %v6760
    %6840 = vmatpush.bf16.msra.mxu0 %v6753
    %6841 = vmatpush.bf16.msra.mxu0 %v6746
    %6842 = vmatpush.bf16.msra.mxu0 %v6739
    %6843 = vmatpush.bf16.msra.mxu0 %v6732
    %6844 = vmatpush.bf16.msra.mxu0 %v6725
    %6845 = vmatmul.bf16.gmra.mxu0 %v6477
    %v6846 = vpop.f32.mrf.mxu0
    %v6847 = vadd.f32 0.0, %v6846
    %v6848 = vpop.f32.mrf.mxu0
    %v6849 = vadd.f32 0.0, %v6848
    %6850 = vmatmul.bf16.gmra.mxu0 %v6478
    %v6851 = vpop.f32.mrf.mxu0
    %v6852 = vadd.f32 0.0, %v6851
    %v6853 = vpop.f32.mrf.mxu0
    %v6854 = vadd.f32 0.0, %v6853
    %6855 = vmatmul.bf16.gmra.mxu0 %v6479
    %v6856 = vpop.f32.mrf.mxu0
    %v6857 = vadd.f32 0.0, %v6856
    %v6858 = vpop.f32.mrf.mxu0
    %v6859 = vadd.f32 0.0, %v6858
    %6860 = vmatmul.bf16.gmra.mxu0 %v6480
    %v6861 = vpop.f32.mrf.mxu0
    %v6862 = vadd.f32 0.0, %v6861
    %v6863 = vpop.f32.mrf.mxu0
    %v6864 = vadd.f32 0.0, %v6863
    %6865 = vmatmul.bf16.gmra.mxu0 %v6481
    %v6866 = vpop.f32.mrf.mxu0
    %v6867 = vadd.f32 0.0, %v6866
    %v6868 = vpop.f32.mrf.mxu0
    %v6869 = vadd.f32 0.0, %v6868
    %6870 = vmatmul.bf16.gmra.mxu0 %v6482
    %v6871 = vpop.f32.mrf.mxu0
    %v6872 = vadd.f32 0.0, %v6871
    %v6873 = vpop.f32.mrf.mxu0
    %v6874 = vadd.f32 0.0, %v6873
    %6875 = vmatmul.bf16.gmra.mxu0 %v6483
    %v6876 = vpop.f32.mrf.mxu0
    %v6877 = vadd.f32 0.0, %v6876
    %v6878 = vpop.f32.mrf.mxu0
    %v6879 = vadd.f32 0.0, %v6878
    %6880 = vmatmul.bf16.gmra.mxu0 %v6484
    %v6881 = vpop.f32.mrf.mxu0
    %v6882 = vadd.f32 0.0, %v6881
    %v6883 = vpop.f32.mrf.mxu0
    %v6884 = vadd.f32 0.0, %v6883
    %6885 = vdwg.mxu0
    %6886 = vmatpush.bf16.msra.mxu0 %v6775
    %6887 = vmatpush.bf16.msra.mxu0 %v6768
    %6888 = vmatpush.bf16.msra.mxu0 %v6761
    %6889 = vmatpush.bf16.msra.mxu0 %v6754
    %6890 = vmatpush.bf16.msra.mxu0 %v6747
    %6891 = vmatpush.bf16.msra.mxu0 %v6740
    %6892 = vmatpush.bf16.msra.mxu0 %v6733
    %6893 = vmatpush.bf16.msra.mxu0 %v6726
    %6894 = vmatmul.bf16.gmra.mxu0 %v6477
    %v6895 = vpop.f32.mrf.mxu0
    %v6896 = vadd.f32 0.0, %v6895
    %v6897 = vpop.f32.mrf.mxu0
    %v6898 = vadd.f32 0.0, %v6897
    %6899 = vmatmul.bf16.gmra.mxu0 %v6478
    %v6900 = vpop.f32.mrf.mxu0
    %v6901 = vadd.f32 0.0, %v6900
    %v6902 = vpop.f32.mrf.mxu0
    %v6903 = vadd.f32 0.0, %v6902
    %6904 = vmatmul.bf16.gmra.mxu0 %v6479
    %v6905 = vpop.f32.mrf.mxu0
    %v6906 = vadd.f32 0.0, %v6905
    %v6907 = vpop.f32.mrf.mxu0
    %v6908 = vadd.f32 0.0, %v6907
    %6909 = vmatmul.bf16.gmra.mxu0 %v6480
    %v6910 = vpop.f32.mrf.mxu0
    %v6911 = vadd.f32 0.0, %v6910
    %v6912 = vpop.f32.mrf.mxu0
    %v6913 = vadd.f32 0.0, %v6912
    %6914 = vmatmul.bf16.gmra.mxu0 %v6481
    %v6915 = vpop.f32.mrf.mxu0
    %v6916 = vadd.f32 0.0, %v6915
    %v6917 = vpop.f32.mrf.mxu0
    %v6918 = vadd.f32 0.0, %v6917
    %6919 = vmatmul.bf16.gmra.mxu0 %v6482
    %v6920 = vpop.f32.mrf.mxu0
    %v6921 = vadd.f32 0.0, %v6920
    %v6922 = vpop.f32.mrf.mxu0
    %v6923 = vadd.f32 0.0, %v6922
    %6924 = vmatmul.bf16.gmra.mxu0 %v6483
    %v6925 = vpop.f32.mrf.mxu0
    %v6926 = vadd.f32 0.0, %v6925
    %v6927 = vpop.f32.mrf.mxu0
    %v6928 = vadd.f32 0.0, %v6927
    %6929 = vmatmul.bf16.gmra.mxu0 %v6484
    %v6930 = vpop.f32.mrf.mxu0
    %v6931 = vadd.f32 0.0, %v6930
    %v6932 = vpop.f32.mrf.mxu0
    %v6933 = vadd.f32 0.0, %v6932
    %6934 = vdwg.mxu0
    %6935 = vmatpush.bf16.msra.mxu0 %v6776
    %6936 = vmatpush.bf16.msra.mxu0 %v6769
    %6937 = vmatpush.bf16.msra.mxu0 %v6762
    %6938 = vmatpush.bf16.msra.mxu0 %v6755
    %6939 = vmatpush.bf16.msra.mxu0 %v6748
    %6940 = vmatpush.bf16.msra.mxu0 %v6741
    %6941 = vmatpush.bf16.msra.mxu0 %v6734
    %6942 = vmatpush.bf16.msra.mxu0 %v6727
    %6943 = vmatmul.bf16.gmra.mxu0 %v6477
    %v6944 = vpop.f32.mrf.mxu0
    %v6945 = vadd.f32 0.0, %v6944
    %v6946 = vpop.f32.mrf.mxu0
    %v6947 = vadd.f32 0.0, %v6946
    %6948 = vmatmul.bf16.gmra.mxu0 %v6478
    %v6949 = vpop.f32.mrf.mxu0
    %v6950 = vadd.f32 0.0, %v6949
    %v6951 = vpop.f32.mrf.mxu0
    %v6952 = vadd.f32 0.0, %v6951
    %6953 = vmatmul.bf16.gmra.mxu0 %v6479
    %v6954 = vpop.f32.mrf.mxu0
    %v6955 = vadd.f32 0.0, %v6954
    %v6956 = vpop.f32.mrf.mxu0
    %v6957 = vadd.f32 0.0, %v6956
    %6958 = vmatmul.bf16.gmra.mxu0 %v6480
    %v6959 = vpop.f32.mrf.mxu0
    %v6960 = vadd.f32 0.0, %v6959
    %v6961 = vpop.f32.mrf.mxu0
    %v6962 = vadd.f32 0.0, %v6961
    %6963 = vmatmul.bf16.gmra.mxu0 %v6481
    %v6964 = vpop.f32.mrf.mxu0
    %v6965 = vadd.f32 0.0, %v6964
    %v6966 = vpop.f32.mrf.mxu0
    %v6967 = vadd.f32 0.0, %v6966
    %6968 = vmatmul.bf16.gmra.mxu0 %v6482
    %v6969 = vpop.f32.mrf.mxu0
    %v6970 = vadd.f32 0.0, %v6969
    %v6971 = vpop.f32.mrf.mxu0
    %v6972 = vadd.f32 0.0, %v6971
    %6973 = vmatmul.bf16.gmra.mxu0 %v6483
    %v6974 = vpop.f32.mrf.mxu0
    %v6975 = vadd.f32 0.0, %v6974
    %v6976 = vpop.f32.mrf.mxu0
    %v6977 = vadd.f32 0.0, %v6976
    %6978 = vmatmul.bf16.gmra.mxu0 %v6484
    %v6979 = vpop.f32.mrf.mxu0
    %v6980 = vadd.f32 0.0, %v6979
    %v6981 = vpop.f32.mrf.mxu0
    %v6982 = vadd.f32 0.0, %v6981
    %6983 = vdwg.mxu0
    %6984 = vmatpush.bf16.msra.mxu0 %v6777
    %6985 = vmatpush.bf16.msra.mxu0 %v6770
    %6986 = vmatpush.bf16.msra.mxu0 %v6763
    %6987 = vmatpush.bf16.msra.mxu0 %v6756
    %6988 = vmatpush.bf16.msra.mxu0 %v6749
    %6989 = vmatpush.bf16.msra.mxu0 %v6742
    %6990 = vmatpush.bf16.msra.mxu0 %v6735
    %6991 = vmatpush.bf16.msra.mxu0 %v6728
    %6992 = vmatmul.bf16.gmra.mxu0 %v6477
    %v6993 = vpop.f32.mrf.mxu0
    %v6994 = vadd.f32 0.0, %v6993
    %v6995 = vpop.f32.mrf.mxu0
    %v6996 = vadd.f32 0.0, %v6995
    %6997 = vmatmul.bf16.gmra.mxu0 %v6478
    %v6998 = vpop.f32.mrf.mxu0
    %v6999 = vadd.f32 0.0, %v6998
    %v7000 = vpop.f32.mrf.mxu0
    %v7001 = vadd.f32 0.0, %v7000
    %7002 = vmatmul.bf16.gmra.mxu0 %v6479
    %v7003 = vpop.f32.mrf.mxu0
    %v7004 = vadd.f32 0.0, %v7003
    %v7005 = vpop.f32.mrf.mxu0
    %v7006 = vadd.f32 0.0, %v7005
    %7007 = vmatmul.bf16.gmra.mxu0 %v6480
    %v7008 = vpop.f32.mrf.mxu0
    %v7009 = vadd.f32 0.0, %v7008
    %v7010 = vpop.f32.mrf.mxu0
    %v7011 = vadd.f32 0.0, %v7010
    %7012 = vmatmul.bf16.gmra.mxu0 %v6481
    %v7013 = vpop.f32.mrf.mxu0
    %v7014 = vadd.f32 0.0, %v7013
    %v7015 = vpop.f32.mrf.mxu0
    %v7016 = vadd.f32 0.0, %v7015
    %7017 = vmatmul.bf16.gmra.mxu0 %v6482
    %v7018 = vpop.f32.mrf.mxu0
    %v7019 = vadd.f32 0.0, %v7018
    %v7020 = vpop.f32.mrf.mxu0
    %v7021 = vadd.f32 0.0, %v7020
    %7022 = vmatmul.bf16.gmra.mxu0 %v6483
    %v7023 = vpop.f32.mrf.mxu0
    %v7024 = vadd.f32 0.0, %v7023
    %v7025 = vpop.f32.mrf.mxu0
    %v7026 = vadd.f32 0.0, %v7025
    %7027 = vmatmul.bf16.gmra.mxu0 %v6484
    %v7028 = vpop.f32.mrf.mxu0
    %v7029 = vadd.f32 0.0, %v7028
    %v7030 = vpop.f32.mrf.mxu0
    %v7031 = vadd.f32 0.0, %v7030
    %7032 = vdwg.mxu0
    %7033 = vmatpush.bf16.msra.mxu0 %v6778
    %7034 = vmatpush.bf16.msra.mxu0 %v6771
    %7035 = vmatpush.bf16.msra.mxu0 %v6764
    %7036 = vmatpush.bf16.msra.mxu0 %v6757
    %7037 = vmatpush.bf16.msra.mxu0 %v6750
    %7038 = vmatpush.bf16.msra.mxu0 %v6743
    %7039 = vmatpush.bf16.msra.mxu0 %v6736
    %7040 = vmatpush.bf16.msra.mxu0 %v6729
    %7041 = vmatmul.bf16.gmra.mxu0 %v6477
    %v7042 = vpop.f32.mrf.mxu0
    %v7043 = vadd.f32 0.0, %v7042
    %v7044 = vpop.f32.mrf.mxu0
    %v7045 = vadd.f32 0.0, %v7044
    %7046 = vmatmul.bf16.gmra.mxu0 %v6478
    %v7047 = vpop.f32.mrf.mxu0
    %v7048 = vadd.f32 0.0, %v7047
    %v7049 = vpop.f32.mrf.mxu0
    %v7050 = vadd.f32 0.0, %v7049
    %7051 = vmatmul.bf16.gmra.mxu0 %v6479
    %v7052 = vpop.f32.mrf.mxu0
    %v7053 = vadd.f32 0.0, %v7052
    %v7054 = vpop.f32.mrf.mxu0
    %v7055 = vadd.f32 0.0, %v7054
    %7056 = vmatmul.bf16.gmra.mxu0 %v6480
    %v7057 = vpop.f32.mrf.mxu0
    %v7058 = vadd.f32 0.0, %v7057
    %v7059 = vpop.f32.mrf.mxu0
    %v7060 = vadd.f32 0.0, %v7059
    %7061 = vmatmul.bf16.gmra.mxu0 %v6481
    %v7062 = vpop.f32.mrf.mxu0
    %v7063 = vadd.f32 0.0, %v7062
    %v7064 = vpop.f32.mrf.mxu0
    %v7065 = vadd.f32 0.0, %v7064
    %7066 = vmatmul.bf16.gmra.mxu0 %v6482
    %v7067 = vpop.f32.mrf.mxu0
    %v7068 = vadd.f32 0.0, %v7067
    %v7069 = vpop.f32.mrf.mxu0
    %v7070 = vadd.f32 0.0, %v7069
    %7071 = vmatmul.bf16.gmra.mxu0 %v6483
    %v7072 = vpop.f32.mrf.mxu0
    %v7073 = vadd.f32 0.0, %v7072
    %v7074 = vpop.f32.mrf.mxu0
    %v7075 = vadd.f32 0.0, %v7074
    %7076 = vmatmul.bf16.gmra.mxu0 %v6484
    %v7077 = vpop.f32.mrf.mxu0
    %v7078 = vadd.f32 0.0, %v7077
    %v7079 = vpop.f32.mrf.mxu0
    %v7080 = vadd.f32 0.0, %v7079
    %7081 = vdwg.mxu0
    %7082 = vmatpush.bf16.msra.mxu0 %v6779
    %7083 = vmatpush.bf16.msra.mxu0 %v6772
    %7084 = vmatpush.bf16.msra.mxu0 %v6765
    %7085 = vmatpush.bf16.msra.mxu0 %v6758
    %7086 = vmatpush.bf16.msra.mxu0 %v6751
    %7087 = vmatpush.bf16.msra.mxu0 %v6744
    %7088 = vmatpush.bf16.msra.mxu0 %v6737
    %7089 = vmatpush.bf16.msra.mxu0 %v6730
    %7090 = vmatmul.bf16.gmra.mxu0 %v6477
    %v7091 = vpop.f32.mrf.mxu0
    %v7092 = vadd.f32 0.0, %v7091
    %v7093 = vpop.f32.mrf.mxu0
    %v7094 = vadd.f32 0.0, %v7093
    %7095 = vmatmul.bf16.gmra.mxu0 %v6478
    %v7096 = vpop.f32.mrf.mxu0
    %v7097 = vadd.f32 0.0, %v7096
    %v7098 = vpop.f32.mrf.mxu0
    %v7099 = vadd.f32 0.0, %v7098
    %7100 = vmatmul.bf16.gmra.mxu0 %v6479
    %v7101 = vpop.f32.mrf.mxu0
    %v7102 = vadd.f32 0.0, %v7101
    %v7103 = vpop.f32.mrf.mxu0
    %v7104 = vadd.f32 0.0, %v7103
    %7105 = vmatmul.bf16.gmra.mxu0 %v6480
    %v7106 = vpop.f32.mrf.mxu0
    %v7107 = vadd.f32 0.0, %v7106
    %v7108 = vpop.f32.mrf.mxu0
    %v7109 = vadd.f32 0.0, %v7108
    %7110 = vmatmul.bf16.gmra.mxu0 %v6481
    %v7111 = vpop.f32.mrf.mxu0
    %v7112 = vadd.f32 0.0, %v7111
    %v7113 = vpop.f32.mrf.mxu0
    %v7114 = vadd.f32 0.0, %v7113
    %7115 = vmatmul.bf16.gmra.mxu0 %v6482
    %v7116 = vpop.f32.mrf.mxu0
    %v7117 = vadd.f32 0.0, %v7116
    %v7118 = vpop.f32.mrf.mxu0
    %v7119 = vadd.f32 0.0, %v7118
    %7120 = vmatmul.bf16.gmra.mxu0 %v6483
    %v7121 = vpop.f32.mrf.mxu0
    %v7122 = vadd.f32 0.0, %v7121
    %v7123 = vpop.f32.mrf.mxu0
    %v7124 = vadd.f32 0.0, %v7123
    %7125 = vmatmul.bf16.gmra.mxu0 %v6484
    %v7126 = vpop.f32.mrf.mxu0
    %v7127 = vadd.f32 0.0, %v7126
    %v7128 = vpop.f32.mrf.mxu0
    %v7129 = vadd.f32 0.0, %v7128
    %7130 = vdwg.mxu0
    %7131 = vmatpush.bf16.msra.mxu0 %v6780
    %7132 = vmatpush.bf16.msra.mxu0 %v6773
    %7133 = vmatpush.bf16.msra.mxu0 %v6766
    %7134 = vmatpush.bf16.msra.mxu0 %v6759
    %7135 = vmatpush.bf16.msra.mxu0 %v6752
    %7136 = vmatpush.bf16.msra.mxu0 %v6745
    %7137 = vmatpush.bf16.msra.mxu0 %v6738
    %7138 = vmatpush.bf16.msra.mxu0 %v6731
    %7139 = vmatmul.bf16.gmra.mxu0 %v6477
    %v7140 = vpop.f32.mrf.mxu0
    %v7141 = vadd.f32 0.0, %v7140
    %v7142 = vpop.f32.mrf.mxu0
    %v7143 = vadd.f32 0.0, %v7142
    %7144 = vmatmul.bf16.gmra.mxu0 %v6478
    %v7145 = vpop.f32.mrf.mxu0
    %v7146 = vadd.f32 0.0, %v7145
    %v7147 = vpop.f32.mrf.mxu0
    %v7148 = vadd.f32 0.0, %v7147
    %7149 = vmatmul.bf16.gmra.mxu0 %v6479
    %v7150 = vpop.f32.mrf.mxu0
    %v7151 = vadd.f32 0.0, %v7150
    %v7152 = vpop.f32.mrf.mxu0
    %v7153 = vadd.f32 0.0, %v7152
    %7154 = vmatmul.bf16.gmra.mxu0 %v6480
    %v7155 = vpop.f32.mrf.mxu0
    %v7156 = vadd.f32 0.0, %v7155
    %v7157 = vpop.f32.mrf.mxu0
    %v7158 = vadd.f32 0.0, %v7157
    %7159 = vmatmul.bf16.gmra.mxu0 %v6481
    %v7160 = vpop.f32.mrf.mxu0
    %v7161 = vadd.f32 0.0, %v7160
    %v7162 = vpop.f32.mrf.mxu0
    %v7163 = vadd.f32 0.0, %v7162
    %7164 = vmatmul.bf16.gmra.mxu0 %v6482
    %v7165 = vpop.f32.mrf.mxu0
    %v7166 = vadd.f32 0.0, %v7165
    %v7167 = vpop.f32.mrf.mxu0
    %v7168 = vadd.f32 0.0, %v7167
    %7169 = vmatmul.bf16.gmra.mxu0 %v6483
    %v7170 = vpop.f32.mrf.mxu0
    %v7171 = vadd.f32 0.0, %v7170
    %v7172 = vpop.f32.mrf.mxu0
    %v7173 = vadd.f32 0.0, %v7172
    %7174 = vmatmul.bf16.gmra.mxu0 %v6484
    %v7175 = vpop.f32.mrf.mxu0
    %v7176 = vadd.f32 0.0, %v7175
    %v7177 = vpop.f32.mrf.mxu0
    %v7178 = vadd.f32 0.0, %v7177
    %7179 = vdwg.mxu0
    %v7244 = vunpack.c.l.b16 %v6413
    %v7245 = vunpack.c.h.b16 %v6413
    %v7246 = vunpack.c.l.b16 %v6414
    %v7247 = vunpack.c.h.b16 %v6414
    %v7248 = vunpack.c.l.b16 %v6415
    %v7249 = vunpack.c.h.b16 %v6415
    %v7250 = vunpack.c.l.b16 %v6416
    %v7251 = vunpack.c.l.b16 %v6417
    %v7252 = vunpack.c.h.b16 %v6417
    %v7253 = vunpack.c.l.b16 %v6418
    %v7254 = vunpack.c.h.b16 %v6418
    %v7255 = vunpack.c.l.b16 %v6419
    %v7256 = vunpack.c.h.b16 %v6419
    %v7257 = vunpack.c.l.b16 %v6420
    %v7258 = vunpack.c.l.b16 %v6421
    %v7259 = vunpack.c.h.b16 %v6421
    %v7260 = vunpack.c.l.b16 %v6422
    %v7261 = vunpack.c.h.b16 %v6422
    %v7262 = vunpack.c.l.b16 %v6423
    %v7263 = vunpack.c.h.b16 %v6423
    %v7264 = vunpack.c.l.b16 %v6424
    %v7265 = vunpack.c.l.b16 %v6425
    %v7266 = vunpack.c.h.b16 %v6425
    %v7267 = vunpack.c.l.b16 %v6426
    %v7268 = vunpack.c.h.b16 %v6426
    %v7269 = vunpack.c.l.b16 %v6427
    %v7270 = vunpack.c.h.b16 %v6427
    %v7271 = vunpack.c.l.b16 %v6428
    %v7272 = vunpack.c.l.b16 %v6429
    %v7273 = vunpack.c.h.b16 %v6429
    %v7274 = vunpack.c.l.b16 %v6430
    %v7275 = vunpack.c.h.b16 %v6430
    %v7276 = vunpack.c.l.b16 %v6431
    %v7277 = vunpack.c.h.b16 %v6431
    %v7278 = vunpack.c.l.b16 %v6432
    %v7279 = vunpack.c.l.b16 %v6433
    %v7280 = vunpack.c.h.b16 %v6433
    %v7281 = vunpack.c.l.b16 %v6434
    %v7282 = vunpack.c.h.b16 %v6434
    %v7283 = vunpack.c.l.b16 %v6435
    %v7284 = vunpack.c.h.b16 %v6435
    %v7285 = vunpack.c.l.b16 %v6436
    %v7286 = vunpack.c.l.b16 %v6437
    %v7287 = vunpack.c.h.b16 %v6437
    %v7288 = vunpack.c.l.b16 %v6438
    %v7289 = vunpack.c.h.b16 %v6438
    %v7290 = vunpack.c.l.b16 %v6439
    %v7291 = vunpack.c.h.b16 %v6439
    %v7292 = vunpack.c.l.b16 %v6440
    %v7293 = vunpack.c.l.b16 %v6441
    %v7294 = vunpack.c.h.b16 %v6441
    %v7295 = vunpack.c.l.b16 %v6442
    %v7296 = vunpack.c.h.b16 %v6442
    %v7297 = vunpack.c.l.b16 %v6443
    %v7298 = vunpack.c.h.b16 %v6443
    %v7299 = vunpack.c.l.b16 %v6444
    %v7300 = vunpack.c.l.b16 %v6445
    %v7301 = vunpack.c.h.b16 %v6445
    %v7302 = vunpack.c.l.b16 %v6446
    %v7303 = vunpack.c.h.b16 %v6446
    %v7304 = vunpack.c.l.b16 %v6447
    %v7305 = vunpack.c.h.b16 %v6447
    %v7306 = vunpack.c.l.b16 %v6448
    %v7307 = vunpack.c.l.b16 %v6449
    %v7308 = vunpack.c.h.b16 %v6449
    %v7309 = vunpack.c.l.b16 %v6450
    %v7310 = vunpack.c.h.b16 %v6450
    %v7311 = vunpack.c.l.b16 %v6451
    %v7312 = vunpack.c.h.b16 %v6451
    %v7313 = vunpack.c.l.b16 %v6452
    %v7314 = vunpack.c.l.b16 %v6453
    %v7315 = vunpack.c.h.b16 %v6453
    %v7316 = vunpack.c.l.b16 %v6454
    %v7317 = vunpack.c.h.b16 %v6454
    %v7318 = vunpack.c.l.b16 %v6455
    %v7319 = vunpack.c.h.b16 %v6455
    %v7320 = vunpack.c.l.b16 %v6456
    %v7321 = vunpack.c.l.b16 %v6457
    %v7322 = vunpack.c.h.b16 %v6457
    %v7323 = vunpack.c.l.b16 %v6458
    %v7324 = vunpack.c.h.b16 %v6458
    %v7325 = vunpack.c.l.b16 %v6459
    %v7326 = vunpack.c.h.b16 %v6459
    %v7327 = vunpack.c.l.b16 %v6460
    %v7328 = vunpack.c.l.b16 %v6461
    %v7329 = vunpack.c.h.b16 %v6461
    %v7330 = vunpack.c.l.b16 %v6462
    %v7331 = vunpack.c.h.b16 %v6462
    %v7332 = vunpack.c.l.b16 %v6463
    %v7333 = vunpack.c.h.b16 %v6463
    %v7334 = vunpack.c.l.b16 %v6464
    %v7335 = vunpack.c.l.b16 %v6465
    %v7336 = vunpack.c.h.b16 %v6465
    %v7337 = vunpack.c.l.b16 %v6466
    %v7338 = vunpack.c.h.b16 %v6466
    %v7339 = vunpack.c.l.b16 %v6467
    %v7340 = vunpack.c.h.b16 %v6467
    %v7341 = vunpack.c.l.b16 %v6468
    %v7342 = vunpack.c.l.b16 %v6469
    %v7343 = vunpack.c.h.b16 %v6469
    %v7344 = vunpack.c.l.b16 %v6470
    %v7345 = vunpack.c.h.b16 %v6470
    %v7346 = vunpack.c.l.b16 %v6471
    %v7347 = vunpack.c.h.b16 %v6471
    %v7348 = vunpack.c.l.b16 %v6472
    %v7349 = vunpack.c.l.b16 %v6473
    %v7350 = vunpack.c.h.b16 %v6473
    %v7351 = vunpack.c.l.b16 %v6474
    %v7352 = vunpack.c.h.b16 %v6474
    %v7353 = vunpack.c.l.b16 %v6475
    %v7354 = vunpack.c.h.b16 %v6475
    %v7355 = vunpack.c.l.b16 %v6476
    %v7356 = vpack.c.b16 %v7251, %v7244
    %v7357 = vpack.c.b16 %v7252, %v7245
    %v7358 = vpack.c.b16 %v7253, %v7246
    %v7359 = vpack.c.b16 %v7254, %v7247
    %v7360 = vpack.c.b16 %v7255, %v7248
    %v7361 = vpack.c.b16 %v7256, %v7249
    %v7362 = vpack.c.b16 %v7257, %v7250
    %v7363 = vpack.c.b16 %v7265, %v7258
    %v7364 = vpack.c.b16 %v7266, %v7259
    %v7365 = vpack.c.b16 %v7267, %v7260
    %v7366 = vpack.c.b16 %v7268, %v7261
    %v7367 = vpack.c.b16 %v7269, %v7262
    %v7368 = vpack.c.b16 %v7270, %v7263
    %v7369 = vpack.c.b16 %v7271, %v7264
    %v7370 = vpack.c.b16 %v7279, %v7272
    %v7371 = vpack.c.b16 %v7280, %v7273
    %v7372 = vpack.c.b16 %v7281, %v7274
    %v7373 = vpack.c.b16 %v7282, %v7275
    %v7374 = vpack.c.b16 %v7283, %v7276
    %v7375 = vpack.c.b16 %v7284, %v7277
    %v7376 = vpack.c.b16 %v7285, %v7278
    %v7377 = vpack.c.b16 %v7293, %v7286
    %v7378 = vpack.c.b16 %v7294, %v7287
    %v7379 = vpack.c.b16 %v7295, %v7288
    %v7380 = vpack.c.b16 %v7296, %v7289
    %v7381 = vpack.c.b16 %v7297, %v7290
    %v7382 = vpack.c.b16 %v7298, %v7291
    %v7383 = vpack.c.b16 %v7299, %v7292
    %v7384 = vpack.c.b16 %v7307, %v7300
    %v7385 = vpack.c.b16 %v7308, %v7301
    %v7386 = vpack.c.b16 %v7309, %v7302
    %v7387 = vpack.c.b16 %v7310, %v7303
    %v7388 = vpack.c.b16 %v7311, %v7304
    %v7389 = vpack.c.b16 %v7312, %v7305
    %v7390 = vpack.c.b16 %v7313, %v7306
    %v7391 = vpack.c.b16 %v7321, %v7314
    %v7392 = vpack.c.b16 %v7322, %v7315
    %v7393 = vpack.c.b16 %v7323, %v7316
    %v7394 = vpack.c.b16 %v7324, %v7317
    %v7395 = vpack.c.b16 %v7325, %v7318
    %v7396 = vpack.c.b16 %v7326, %v7319
    %v7397 = vpack.c.b16 %v7327, %v7320
    %v7398 = vpack.c.b16 %v7335, %v7328
    %v7399 = vpack.c.b16 %v7336, %v7329
    %v7400 = vpack.c.b16 %v7337, %v7330
    %v7401 = vpack.c.b16 %v7338, %v7331
    %v7402 = vpack.c.b16 %v7339, %v7332
    %v7403 = vpack.c.b16 %v7340, %v7333
    %v7404 = vpack.c.b16 %v7341, %v7334
    %v7405 = vpack.c.b16 %v7349, %v7342
    %v7406 = vpack.c.b16 %v7350, %v7343
    %v7407 = vpack.c.b16 %v7351, %v7344
    %v7408 = vpack.c.b16 %v7352, %v7345
    %v7409 = vpack.c.b16 %v7353, %v7346
    %v7410 = vpack.c.b16 %v7354, %v7347
    %v7411 = vpack.c.b16 %v7355, %v7348
    %7468 = vmatpush.bf16.msra.mxu0 %v7405
    %7469 = vmatpush.bf16.msra.mxu0 %v7398
    %7470 = vmatpush.bf16.msra.mxu0 %v7391
    %7471 = vmatpush.bf16.msra.mxu0 %v7384
    %7472 = vmatpush.bf16.msra.mxu0 %v7377
    %7473 = vmatpush.bf16.msra.mxu0 %v7370
    %7474 = vmatpush.bf16.msra.mxu0 %v7363
    %7475 = vmatpush.bf16.msra.mxu0 %v7356
    %7476 = vmatmul.bf16.gmra.mxu0 %v6405
    %v7477 = vpop.f32.mrf.mxu0
    %v7478 = vadd.f32 %v6847, %v7477
    %v7479 = vpop.f32.mrf.mxu0
    %v7480 = vadd.f32 %v6849, %v7479
    %7481 = vmatmul.bf16.gmra.mxu0 %v6406
    %v7482 = vpop.f32.mrf.mxu0
    %v7483 = vadd.f32 %v6852, %v7482
    %v7484 = vpop.f32.mrf.mxu0
    %v7485 = vadd.f32 %v6854, %v7484
    %7486 = vmatmul.bf16.gmra.mxu0 %v6407
    %v7487 = vpop.f32.mrf.mxu0
    %v7488 = vadd.f32 %v6857, %v7487
    %v7489 = vpop.f32.mrf.mxu0
    %v7490 = vadd.f32 %v6859, %v7489
    %7491 = vmatmul.bf16.gmra.mxu0 %v6408
    %v7492 = vpop.f32.mrf.mxu0
    %v7493 = vadd.f32 %v6862, %v7492
    %v7494 = vpop.f32.mrf.mxu0
    %v7495 = vadd.f32 %v6864, %v7494
    %7496 = vmatmul.bf16.gmra.mxu0 %v6409
    %v7497 = vpop.f32.mrf.mxu0
    %v7498 = vadd.f32 %v6867, %v7497
    %v7499 = vpop.f32.mrf.mxu0
    %v7500 = vadd.f32 %v6869, %v7499
    %7501 = vmatmul.bf16.gmra.mxu0 %v6410
    %v7502 = vpop.f32.mrf.mxu0
    %v7503 = vadd.f32 %v6872, %v7502
    %v7504 = vpop.f32.mrf.mxu0
    %v7505 = vadd.f32 %v6874, %v7504
    %7506 = vmatmul.bf16.gmra.mxu0 %v6411
    %v7507 = vpop.f32.mrf.mxu0
    %v7508 = vadd.f32 %v6877, %v7507
    %v7509 = vpop.f32.mrf.mxu0
    %v7510 = vadd.f32 %v6879, %v7509
    %7511 = vmatmul.bf16.gmra.mxu0 %v6412
    %v7512 = vpop.f32.mrf.mxu0
    %v7513 = vadd.f32 %v6882, %v7512
    %v7514 = vpop.f32.mrf.mxu0
    %v7515 = vadd.f32 %v6884, %v7514
    %7516 = vdwg.mxu0
    %7517 = vmatpush.bf16.msra.mxu0 %v7406
    %7518 = vmatpush.bf16.msra.mxu0 %v7399
    %7519 = vmatpush.bf16.msra.mxu0 %v7392
    %7520 = vmatpush.bf16.msra.mxu0 %v7385
    %7521 = vmatpush.bf16.msra.mxu0 %v7378
    %7522 = vmatpush.bf16.msra.mxu0 %v7371
    %7523 = vmatpush.bf16.msra.mxu0 %v7364
    %7524 = vmatpush.bf16.msra.mxu0 %v7357
    %7525 = vmatmul.bf16.gmra.mxu0 %v6405
    %v7526 = vpop.f32.mrf.mxu0
    %v7527 = vadd.f32 %v6896, %v7526
    %v7528 = vpop.f32.mrf.mxu0
    %v7529 = vadd.f32 %v6898, %v7528
    %7530 = vmatmul.bf16.gmra.mxu0 %v6406
    %v7531 = vpop.f32.mrf.mxu0
    %v7532 = vadd.f32 %v6901, %v7531
    %v7533 = vpop.f32.mrf.mxu0
    %v7534 = vadd.f32 %v6903, %v7533
    %7535 = vmatmul.bf16.gmra.mxu0 %v6407
    %v7536 = vpop.f32.mrf.mxu0
    %v7537 = vadd.f32 %v6906, %v7536
    %v7538 = vpop.f32.mrf.mxu0
    %v7539 = vadd.f32 %v6908, %v7538
    %7540 = vmatmul.bf16.gmra.mxu0 %v6408
    %v7541 = vpop.f32.mrf.mxu0
    %v7542 = vadd.f32 %v6911, %v7541
    %v7543 = vpop.f32.mrf.mxu0
    %v7544 = vadd.f32 %v6913, %v7543
    %7545 = vmatmul.bf16.gmra.mxu0 %v6409
    %v7546 = vpop.f32.mrf.mxu0
    %v7547 = vadd.f32 %v6916, %v7546
    %v7548 = vpop.f32.mrf.mxu0
    %v7549 = vadd.f32 %v6918, %v7548
    %7550 = vmatmul.bf16.gmra.mxu0 %v6410
    %v7551 = vpop.f32.mrf.mxu0
    %v7552 = vadd.f32 %v6921, %v7551
    %v7553 = vpop.f32.mrf.mxu0
    %v7554 = vadd.f32 %v6923, %v7553
    %7555 = vmatmul.bf16.gmra.mxu0 %v6411
    %v7556 = vpop.f32.mrf.mxu0
    %v7557 = vadd.f32 %v6926, %v7556
    %v7558 = vpop.f32.mrf.mxu0
    %v7559 = vadd.f32 %v6928, %v7558
    %7560 = vmatmul.bf16.gmra.mxu0 %v6412
    %v7561 = vpop.f32.mrf.mxu0
    %v7562 = vadd.f32 %v6931, %v7561
    %v7563 = vpop.f32.mrf.mxu0
    %v7564 = vadd.f32 %v6933, %v7563
    %7565 = vdwg.mxu0
    %7566 = vmatpush.bf16.msra.mxu0 %v7407
    %7567 = vmatpush.bf16.msra.mxu0 %v7400
    %7568 = vmatpush.bf16.msra.mxu0 %v7393
    %7569 = vmatpush.bf16.msra.mxu0 %v7386
    %7570 = vmatpush.bf16.msra.mxu0 %v7379
    %7571 = vmatpush.bf16.msra.mxu0 %v7372
    %7572 = vmatpush.bf16.msra.mxu0 %v7365
    %7573 = vmatpush.bf16.msra.mxu0 %v7358
    %7574 = vmatmul.bf16.gmra.mxu0 %v6405
    %v7575 = vpop.f32.mrf.mxu0
    %v7576 = vadd.f32 %v6945, %v7575
    %v7577 = vpop.f32.mrf.mxu0
    %v7578 = vadd.f32 %v6947, %v7577
    %7579 = vmatmul.bf16.gmra.mxu0 %v6406
    %v7580 = vpop.f32.mrf.mxu0
    %v7581 = vadd.f32 %v6950, %v7580
    %v7582 = vpop.f32.mrf.mxu0
    %v7583 = vadd.f32 %v6952, %v7582
    %7584 = vmatmul.bf16.gmra.mxu0 %v6407
    %v7585 = vpop.f32.mrf.mxu0
    %v7586 = vadd.f32 %v6955, %v7585
    %v7587 = vpop.f32.mrf.mxu0
    %v7588 = vadd.f32 %v6957, %v7587
    %7589 = vmatmul.bf16.gmra.mxu0 %v6408
    %v7590 = vpop.f32.mrf.mxu0
    %v7591 = vadd.f32 %v6960, %v7590
    %v7592 = vpop.f32.mrf.mxu0
    %v7593 = vadd.f32 %v6962, %v7592
    %7594 = vmatmul.bf16.gmra.mxu0 %v6409
    %v7595 = vpop.f32.mrf.mxu0
    %v7596 = vadd.f32 %v6965, %v7595
    %v7597 = vpop.f32.mrf.mxu0
    %v7598 = vadd.f32 %v6967, %v7597
    %7599 = vmatmul.bf16.gmra.mxu0 %v6410
    %v7600 = vpop.f32.mrf.mxu0
    %v7601 = vadd.f32 %v6970, %v7600
    %v7602 = vpop.f32.mrf.mxu0
    %v7603 = vadd.f32 %v6972, %v7602
    %7604 = vmatmul.bf16.gmra.mxu0 %v6411
    %v7605 = vpop.f32.mrf.mxu0
    %v7606 = vadd.f32 %v6975, %v7605
    %v7607 = vpop.f32.mrf.mxu0
    %v7608 = vadd.f32 %v6977, %v7607
    %7609 = vmatmul.bf16.gmra.mxu0 %v6412
    %v7610 = vpop.f32.mrf.mxu0
    %v7611 = vadd.f32 %v6980, %v7610
    %v7612 = vpop.f32.mrf.mxu0
    %v7613 = vadd.f32 %v6982, %v7612
    %7614 = vdwg.mxu0
    %7615 = vmatpush.bf16.msra.mxu0 %v7408
    %7616 = vmatpush.bf16.msra.mxu0 %v7401
    %7617 = vmatpush.bf16.msra.mxu0 %v7394
    %7618 = vmatpush.bf16.msra.mxu0 %v7387
    %7619 = vmatpush.bf16.msra.mxu0 %v7380
    %7620 = vmatpush.bf16.msra.mxu0 %v7373
    %7621 = vmatpush.bf16.msra.mxu0 %v7366
    %7622 = vmatpush.bf16.msra.mxu0 %v7359
    %7623 = vmatmul.bf16.gmra.mxu0 %v6405
    %v7624 = vpop.f32.mrf.mxu0
    %v7625 = vadd.f32 %v6994, %v7624
    %v7626 = vpop.f32.mrf.mxu0
    %v7627 = vadd.f32 %v6996, %v7626
    %7628 = vmatmul.bf16.gmra.mxu0 %v6406
    %v7629 = vpop.f32.mrf.mxu0
    %v7630 = vadd.f32 %v6999, %v7629
    %v7631 = vpop.f32.mrf.mxu0
    %v7632 = vadd.f32 %v7001, %v7631
    %7633 = vmatmul.bf16.gmra.mxu0 %v6407
    %v7634 = vpop.f32.mrf.mxu0
    %v7635 = vadd.f32 %v7004, %v7634
    %v7636 = vpop.f32.mrf.mxu0
    %v7637 = vadd.f32 %v7006, %v7636
    %7638 = vmatmul.bf16.gmra.mxu0 %v6408
    %v7639 = vpop.f32.mrf.mxu0
    %v7640 = vadd.f32 %v7009, %v7639
    %v7641 = vpop.f32.mrf.mxu0
    %v7642 = vadd.f32 %v7011, %v7641
    %7643 = vmatmul.bf16.gmra.mxu0 %v6409
    %v7644 = vpop.f32.mrf.mxu0
    %v7645 = vadd.f32 %v7014, %v7644
    %v7646 = vpop.f32.mrf.mxu0
    %v7647 = vadd.f32 %v7016, %v7646
    %7648 = vmatmul.bf16.gmra.mxu0 %v6410
    %v7649 = vpop.f32.mrf.mxu0
    %v7650 = vadd.f32 %v7019, %v7649
    %v7651 = vpop.f32.mrf.mxu0
    %v7652 = vadd.f32 %v7021, %v7651
    %7653 = vmatmul.bf16.gmra.mxu0 %v6411
    %v7654 = vpop.f32.mrf.mxu0
    %v7655 = vadd.f32 %v7024, %v7654
    %v7656 = vpop.f32.mrf.mxu0
    %v7657 = vadd.f32 %v7026, %v7656
    %7658 = vmatmul.bf16.gmra.mxu0 %v6412
    %v7659 = vpop.f32.mrf.mxu0
    %v7660 = vadd.f32 %v7029, %v7659
    %v7661 = vpop.f32.mrf.mxu0
    %v7662 = vadd.f32 %v7031, %v7661
    %7663 = vdwg.mxu0
    %7664 = vmatpush.bf16.msra.mxu0 %v7409
    %7665 = vmatpush.bf16.msra.mxu0 %v7402
    %7666 = vmatpush.bf16.msra.mxu0 %v7395
    %7667 = vmatpush.bf16.msra.mxu0 %v7388
    %7668 = vmatpush.bf16.msra.mxu0 %v7381
    %7669 = vmatpush.bf16.msra.mxu0 %v7374
    %7670 = vmatpush.bf16.msra.mxu0 %v7367
    %7671 = vmatpush.bf16.msra.mxu0 %v7360
    %7672 = vmatmul.bf16.gmra.mxu0 %v6405
    %v7673 = vpop.f32.mrf.mxu0
    %v7674 = vadd.f32 %v7043, %v7673
    %v7675 = vpop.f32.mrf.mxu0
    %v7676 = vadd.f32 %v7045, %v7675
    %7677 = vmatmul.bf16.gmra.mxu0 %v6406
    %v7678 = vpop.f32.mrf.mxu0
    %v7679 = vadd.f32 %v7048, %v7678
    %v7680 = vpop.f32.mrf.mxu0
    %v7681 = vadd.f32 %v7050, %v7680
    %7682 = vmatmul.bf16.gmra.mxu0 %v6407
    %v7683 = vpop.f32.mrf.mxu0
    %v7684 = vadd.f32 %v7053, %v7683
    %v7685 = vpop.f32.mrf.mxu0
    %v7686 = vadd.f32 %v7055, %v7685
    %7687 = vmatmul.bf16.gmra.mxu0 %v6408
    %v7688 = vpop.f32.mrf.mxu0
    %v7689 = vadd.f32 %v7058, %v7688
    %v7690 = vpop.f32.mrf.mxu0
    %v7691 = vadd.f32 %v7060, %v7690
    %7692 = vmatmul.bf16.gmra.mxu0 %v6409
    %v7693 = vpop.f32.mrf.mxu0
    %v7694 = vadd.f32 %v7063, %v7693
    %v7695 = vpop.f32.mrf.mxu0
    %v7696 = vadd.f32 %v7065, %v7695
    %7697 = vmatmul.bf16.gmra.mxu0 %v6410
    %v7698 = vpop.f32.mrf.mxu0
    %v7699 = vadd.f32 %v7068, %v7698
    %v7700 = vpop.f32.mrf.mxu0
    %v7701 = vadd.f32 %v7070, %v7700
    %7702 = vmatmul.bf16.gmra.mxu0 %v6411
    %v7703 = vpop.f32.mrf.mxu0
    %v7704 = vadd.f32 %v7073, %v7703
    %v7705 = vpop.f32.mrf.mxu0
    %v7706 = vadd.f32 %v7075, %v7705
    %7707 = vmatmul.bf16.gmra.mxu0 %v6412
    %v7708 = vpop.f32.mrf.mxu0
    %v7709 = vadd.f32 %v7078, %v7708
    %v7710 = vpop.f32.mrf.mxu0
    %v7711 = vadd.f32 %v7080, %v7710
    %7712 = vdwg.mxu0
    %7713 = vmatpush.bf16.msra.mxu0 %v7410
    %7714 = vmatpush.bf16.msra.mxu0 %v7403
    %7715 = vmatpush.bf16.msra.mxu0 %v7396
    %7716 = vmatpush.bf16.msra.mxu0 %v7389
    %7717 = vmatpush.bf16.msra.mxu0 %v7382
    %7718 = vmatpush.bf16.msra.mxu0 %v7375
    %7719 = vmatpush.bf16.msra.mxu0 %v7368
    %7720 = vmatpush.bf16.msra.mxu0 %v7361
    %7721 = vmatmul.bf16.gmra.mxu0 %v6405
    %v7722 = vpop.f32.mrf.mxu0
    %v7723 = vadd.f32 %v7092, %v7722
    %v7724 = vpop.f32.mrf.mxu0
    %v7725 = vadd.f32 %v7094, %v7724
    %7726 = vmatmul.bf16.gmra.mxu0 %v6406
    %v7727 = vpop.f32.mrf.mxu0
    %v7728 = vadd.f32 %v7097, %v7727
    %v7729 = vpop.f32.mrf.mxu0
    %v7730 = vadd.f32 %v7099, %v7729
    %7731 = vmatmul.bf16.gmra.mxu0 %v6407
    %v7732 = vpop.f32.mrf.mxu0
    %v7733 = vadd.f32 %v7102, %v7732
    %v7734 = vpop.f32.mrf.mxu0
    %v7735 = vadd.f32 %v7104, %v7734
    %7736 = vmatmul.bf16.gmra.mxu0 %v6408
    %v7737 = vpop.f32.mrf.mxu0
    %v7738 = vadd.f32 %v7107, %v7737
    %v7739 = vpop.f32.mrf.mxu0
    %v7740 = vadd.f32 %v7109, %v7739
    %7741 = vmatmul.bf16.gmra.mxu0 %v6409
    %v7742 = vpop.f32.mrf.mxu0
    %v7743 = vadd.f32 %v7112, %v7742
    %v7744 = vpop.f32.mrf.mxu0
    %v7745 = vadd.f32 %v7114, %v7744
    %7746 = vmatmul.bf16.gmra.mxu0 %v6410
    %v7747 = vpop.f32.mrf.mxu0
    %v7748 = vadd.f32 %v7117, %v7747
    %v7749 = vpop.f32.mrf.mxu0
    %v7750 = vadd.f32 %v7119, %v7749
    %7751 = vmatmul.bf16.gmra.mxu0 %v6411
    %v7752 = vpop.f32.mrf.mxu0
    %v7753 = vadd.f32 %v7122, %v7752
    %v7754 = vpop.f32.mrf.mxu0
    %v7755 = vadd.f32 %v7124, %v7754
    %7756 = vmatmul.bf16.gmra.mxu0 %v6412
    %v7757 = vpop.f32.mrf.mxu0
    %v7758 = vadd.f32 %v7127, %v7757
    %v7759 = vpop.f32.mrf.mxu0
    %v7760 = vadd.f32 %v7129, %v7759
    %7761 = vdwg.mxu0
    %7762 = vmatpush.bf16.msra.mxu0 %v7411
    %7763 = vmatpush.bf16.msra.mxu0 %v7404
    %7764 = vmatpush.bf16.msra.mxu0 %v7397
    %7765 = vmatpush.bf16.msra.mxu0 %v7390
    %7766 = vmatpush.bf16.msra.mxu0 %v7383
    %7767 = vmatpush.bf16.msra.mxu0 %v7376
    %7768 = vmatpush.bf16.msra.mxu0 %v7369
    %7769 = vmatpush.bf16.msra.mxu0 %v7362
    %7770 = vmatmul.bf16.gmra.mxu0 %v6405
    %v7771 = vpop.f32.mrf.mxu0
    %v7772 = vadd.f32 %v7141, %v7771
    %v7773 = vpop.f32.mrf.mxu0
    %v7774 = vadd.f32 %v7143, %v7773
    %7775 = vmatmul.bf16.gmra.mxu0 %v6406
    %v7776 = vpop.f32.mrf.mxu0
    %v7777 = vadd.f32 %v7146, %v7776
    %v7778 = vpop.f32.mrf.mxu0
    %v7779 = vadd.f32 %v7148, %v7778
    %7780 = vmatmul.bf16.gmra.mxu0 %v6407
    %v7781 = vpop.f32.mrf.mxu0
    %v7782 = vadd.f32 %v7151, %v7781
    %v7783 = vpop.f32.mrf.mxu0
    %v7784 = vadd.f32 %v7153, %v7783
    %7785 = vmatmul.bf16.gmra.mxu0 %v6408
    %v7786 = vpop.f32.mrf.mxu0
    %v7787 = vadd.f32 %v7156, %v7786
    %v7788 = vpop.f32.mrf.mxu0
    %v7789 = vadd.f32 %v7158, %v7788
    %7790 = vmatmul.bf16.gmra.mxu0 %v6409
    %v7791 = vpop.f32.mrf.mxu0
    %v7792 = vadd.f32 %v7161, %v7791
    %v7793 = vpop.f32.mrf.mxu0
    %v7794 = vadd.f32 %v7163, %v7793
    %7795 = vmatmul.bf16.gmra.mxu0 %v6410
    %v7796 = vpop.f32.mrf.mxu0
    %v7797 = vadd.f32 %v7166, %v7796
    %v7798 = vpop.f32.mrf.mxu0
    %v7799 = vadd.f32 %v7168, %v7798
    %7800 = vmatmul.bf16.gmra.mxu0 %v6411
    %v7801 = vpop.f32.mrf.mxu0
    %v7802 = vadd.f32 %v7171, %v7801
    %v7803 = vpop.f32.mrf.mxu0
    %v7804 = vadd.f32 %v7173, %v7803
    %7805 = vmatmul.bf16.gmra.mxu0 %v6412
    %v7806 = vpop.f32.mrf.mxu0
    %v7807 = vadd.f32 %v7176, %v7806
    %v7808 = vpop.f32.mrf.mxu0
    %v7809 = vadd.f32 %v7178, %v7808
    %7810 = vdwg.mxu0
    %v7811 = vld [vmem:[%s8] sm:$0xff]
    %v7813 = vperm.slane %v7811, 0
    %v7814 = vperm.slane %v7811, 1
    %v7815 = vperm.slane %v7811, 2
    %v7816 = vperm.slane %v7811, 3
    %v7817 = vperm.slane %v7811, 4
    %v7818 = vperm.slane %v7811, 5
    %v7819 = vperm.slane %v7811, 6
    %v7827 = vadd.f32 %v7478, %v7813
    %v7828 = vadd.f32 %v7527, %v7814
    %v7829 = vadd.f32 %v7576, %v7815
    %v7830 = vadd.f32 %v7625, %v7816
    %v7831 = vadd.f32 %v7674, %v7817
    %v7832 = vadd.f32 %v7723, %v7818
    %v7833 = vadd.f32 %v7772, %v7819
    %v7834 = vadd.f32 %v7480, %v7813
    %v7835 = vadd.f32 %v7529, %v7814
    %v7836 = vadd.f32 %v7578, %v7815
    %v7837 = vadd.f32 %v7627, %v7816
    %v7838 = vadd.f32 %v7676, %v7817
    %v7839 = vadd.f32 %v7725, %v7818
    %v7840 = vadd.f32 %v7774, %v7819
    %v7841 = vadd.f32 %v7483, %v7813
    %v7842 = vadd.f32 %v7532, %v7814
    %v7843 = vadd.f32 %v7581, %v7815
    %v7844 = vadd.f32 %v7630, %v7816
    %v7845 = vadd.f32 %v7679, %v7817
    %v7846 = vadd.f32 %v7728, %v7818
    %v7847 = vadd.f32 %v7777, %v7819
    %v7848 = vadd.f32 %v7485, %v7813
    %v7849 = vadd.f32 %v7534, %v7814
    %v7850 = vadd.f32 %v7583, %v7815
    %v7851 = vadd.f32 %v7632, %v7816
    %v7852 = vadd.f32 %v7681, %v7817
    %v7853 = vadd.f32 %v7730, %v7818
    %v7854 = vadd.f32 %v7779, %v7819
    %v7855 = vadd.f32 %v7488, %v7813
    %v7856 = vadd.f32 %v7537, %v7814
    %v7857 = vadd.f32 %v7586, %v7815
    %v7858 = vadd.f32 %v7635, %v7816
    %v7859 = vadd.f32 %v7684, %v7817
    %v7860 = vadd.f32 %v7733, %v7818
    %v7861 = vadd.f32 %v7782, %v7819
    %v7862 = vadd.f32 %v7490, %v7813
    %v7863 = vadd.f32 %v7539, %v7814
    %v7864 = vadd.f32 %v7588, %v7815
    %v7865 = vadd.f32 %v7637, %v7816
    %v7866 = vadd.f32 %v7686, %v7817
    %v7867 = vadd.f32 %v7735, %v7818
    %v7868 = vadd.f32 %v7784, %v7819
    %v7869 = vadd.f32 %v7493, %v7813
    %v7870 = vadd.f32 %v7542, %v7814
    %v7871 = vadd.f32 %v7591, %v7815
    %v7872 = vadd.f32 %v7640, %v7816
    %v7873 = vadd.f32 %v7689, %v7817
    %v7874 = vadd.f32 %v7738, %v7818
    %v7875 = vadd.f32 %v7787, %v7819
    %v7876 = vadd.f32 %v7495, %v7813
    %v7877 = vadd.f32 %v7544, %v7814
    %v7878 = vadd.f32 %v7593, %v7815
    %v7879 = vadd.f32 %v7642, %v7816
    %v7880 = vadd.f32 %v7691, %v7817
    %v7881 = vadd.f32 %v7740, %v7818
    %v7882 = vadd.f32 %v7789, %v7819
    %v7883 = vadd.f32 %v7498, %v7813
    %v7884 = vadd.f32 %v7547, %v7814
    %v7885 = vadd.f32 %v7596, %v7815
    %v7886 = vadd.f32 %v7645, %v7816
    %v7887 = vadd.f32 %v7694, %v7817
    %v7888 = vadd.f32 %v7743, %v7818
    %v7889 = vadd.f32 %v7792, %v7819
    %v7890 = vadd.f32 %v7500, %v7813
    %v7891 = vadd.f32 %v7549, %v7814
    %v7892 = vadd.f32 %v7598, %v7815
    %v7893 = vadd.f32 %v7647, %v7816
    %v7894 = vadd.f32 %v7696, %v7817
    %v7895 = vadd.f32 %v7745, %v7818
    %v7896 = vadd.f32 %v7794, %v7819
    %v7897 = vadd.f32 %v7503, %v7813
    %v7898 = vadd.f32 %v7552, %v7814
    %v7899 = vadd.f32 %v7601, %v7815
    %v7900 = vadd.f32 %v7650, %v7816
    %v7901 = vadd.f32 %v7699, %v7817
    %v7902 = vadd.f32 %v7748, %v7818
    %v7903 = vadd.f32 %v7797, %v7819
    %v7904 = vadd.f32 %v7505, %v7813
    %v7905 = vadd.f32 %v7554, %v7814
    %v7906 = vadd.f32 %v7603, %v7815
    %v7907 = vadd.f32 %v7652, %v7816
    %v7908 = vadd.f32 %v7701, %v7817
    %v7909 = vadd.f32 %v7750, %v7818
    %v7910 = vadd.f32 %v7799, %v7819
    %v7911 = vadd.f32 %v7508, %v7813
    %v7912 = vadd.f32 %v7557, %v7814
    %v7913 = vadd.f32 %v7606, %v7815
    %v7914 = vadd.f32 %v7655, %v7816
    %v7915 = vadd.f32 %v7704, %v7817
    %v7916 = vadd.f32 %v7753, %v7818
    %v7917 = vadd.f32 %v7802, %v7819
    %v7918 = vadd.f32 %v7510, %v7813
    %v7919 = vadd.f32 %v7559, %v7814
    %v7920 = vadd.f32 %v7608, %v7815
    %v7921 = vadd.f32 %v7657, %v7816
    %v7922 = vadd.f32 %v7706, %v7817
    %v7923 = vadd.f32 %v7755, %v7818
    %v7924 = vadd.f32 %v7804, %v7819
    %v7925 = vadd.f32 %v7513, %v7813
    %v7926 = vadd.f32 %v7562, %v7814
    %v7927 = vadd.f32 %v7611, %v7815
    %v7928 = vadd.f32 %v7660, %v7816
    %v7929 = vadd.f32 %v7709, %v7817
    %v7930 = vadd.f32 %v7758, %v7818
    %v7931 = vadd.f32 %v7807, %v7819
    %v7932 = vadd.f32 %v7515, %v7813
    %v7933 = vadd.f32 %v7564, %v7814
    %v7934 = vadd.f32 %v7613, %v7815
    %v7935 = vadd.f32 %v7662, %v7816
    %v7936 = vadd.f32 %v7711, %v7817
    %v7937 = vadd.f32 %v7760, %v7818
    %v7938 = vadd.f32 %v7809, %v7819
    %v7939 = vld [vmem:[#allocation5] sm:$0xff]
    %v7940 = vld [vmem:[#allocation5 + $0x8] sm:$0xff]
    %v7941 = vld [vmem:[#allocation5 + $0x10] sm:$0xff]
    %v7942 = vld [vmem:[#allocation5 + $0x18] sm:$0xff]
    %v7943 = vld [vmem:[#allocation5 + $0x20] sm:$0xff]
    %v7944 = vld [vmem:[#allocation5 + $0x28] sm:$0xff]
    %v7945 = vld [vmem:[#allocation5 + $0x30] sm:$0xff]
    %v7946 = vld [vmem:[#allocation5 + $0x38] sm:$0xff]
    %v7947 = vld [vmem:[#allocation5 + $0x40] sm:$0xff]
    %v7948 = vld [vmem:[#allocation5 + $0x48] sm:$0xff]
    %v7949 = vld [vmem:[#allocation5 + $0x50] sm:$0xff]
    %v7950 = vld [vmem:[#allocation5 + $0x58] sm:$0xff]
    %v7951 = vld [vmem:[#allocation5 + $0x60] sm:$0xff]
    %v7952 = vld [vmem:[#allocation5 + $0x68] sm:$0xff]
    %v7953 = vld [vmem:[#allocation5 + $0x70] sm:$0xff]
    %v7954 = vld [vmem:[#allocation5 + $0x78] sm:$0xff]
    %v7955 = vld [vmem:[#allocation5 + $0x80] sm:$0xff]
    %v7956 = vld [vmem:[#allocation5 + $0x88] sm:$0xff]
    %v7957 = vld [vmem:[#allocation5 + $0x90] sm:$0xff]
    %v7958 = vld [vmem:[#allocation5 + $0x98] sm:$0xff]
    %v7959 = vld [vmem:[#allocation5 + $0xa0] sm:$0xff]
    %v7960 = vld [vmem:[#allocation5 + $0xa8] sm:$0xff]
    %v7961 = vld [vmem:[#allocation5 + $0xb0] sm:$0xff]
    %v7962 = vld [vmem:[#allocation5 + $0xb8] sm:$0xff]
    %v7963 = vld [vmem:[#allocation5 + $0xc0] sm:$0xff]
    %v7964 = vld [vmem:[#allocation5 + $0xc8] sm:$0xff]
    %v7965 = vld [vmem:[#allocation5 + $0xd0] sm:$0xff]
    %v7966 = vld [vmem:[#allocation5 + $0xd8] sm:$0xff]
    %v7967 = vld [vmem:[#allocation5 + $0xe0] sm:$0xff]
    %v7968 = vld [vmem:[#allocation5 + $0xe8] sm:$0xff]
    %v7969 = vld [vmem:[#allocation5 + $0xf0] sm:$0xff]
    %v7970 = vld [vmem:[#allocation5 + $0xf8] sm:$0xff]
    %v7971 = vld [vmem:[#allocation5 + $0x100] sm:$0xff]
    %v7972 = vld [vmem:[#allocation5 + $0x108] sm:$0xff]
    %v7973 = vld [vmem:[#allocation5 + $0x110] sm:$0xff]
    %v7974 = vld [vmem:[#allocation5 + $0x118] sm:$0xff]
    %v7975 = vld [vmem:[#allocation5 + $0x120] sm:$0xff]
    %v7976 = vld [vmem:[#allocation5 + $0x128] sm:$0xff]
    %v7977 = vld [vmem:[#allocation5 + $0x130] sm:$0xff]
    %v7978 = vld [vmem:[#allocation5 + $0x138] sm:$0xff]
    %v7979 = vld [vmem:[#allocation5 + $0x140] sm:$0xff]
    %v7980 = vld [vmem:[#allocation5 + $0x148] sm:$0xff]
    %v7981 = vld [vmem:[#allocation5 + $0x150] sm:$0xff]
    %v7982 = vld [vmem:[#allocation5 + $0x158] sm:$0xff]
    %v7983 = vld [vmem:[#allocation5 + $0x160] sm:$0xff]
    %v7984 = vld [vmem:[#allocation5 + $0x168] sm:$0xff]
    %v7985 = vld [vmem:[#allocation5 + $0x170] sm:$0xff]
    %v7986 = vld [vmem:[#allocation5 + $0x178] sm:$0xff]
    %v7987 = vld [vmem:[#allocation5 + $0x180] sm:$0xff]
    %v7988 = vld [vmem:[#allocation5 + $0x188] sm:$0xff]
    %v7989 = vld [vmem:[#allocation5 + $0x190] sm:$0xff]
    %v7990 = vld [vmem:[#allocation5 + $0x198] sm:$0xff]
    %v7991 = vld [vmem:[#allocation5 + $0x1a0] sm:$0xff]
    %v7992 = vld [vmem:[#allocation5 + $0x1a8] sm:$0xff]
    %v7993 = vld [vmem:[#allocation5 + $0x1b0] sm:$0xff]
    %v7994 = vld [vmem:[#allocation5 + $0x1b8] sm:$0xff]
    %v7995 = vld [vmem:[#allocation5 + $0x1c0] sm:$0xff]
    %v7996 = vld [vmem:[#allocation5 + $0x1c8] sm:$0xff]
    %v7997 = vld [vmem:[#allocation5 + $0x1d0] sm:$0xff]
    %v7998 = vld [vmem:[#allocation5 + $0x1d8] sm:$0xff]
    %v7999 = vld [vmem:[#allocation5 + $0x1e0] sm:$0xff]
    %v8000 = vld [vmem:[#allocation5 + $0x1e8] sm:$0xff]
    %v8001 = vld [vmem:[#allocation5 + $0x1f0] sm:$0xff]
    %v8002 = vld [vmem:[#allocation5 + $0x1f8] sm:$0xff]
    %v8003 = vld [vmem:[#allocation5 + $0x200] sm:$0xff]
    %v8004 = vld [vmem:[#allocation5 + $0x208] sm:$0xff]
    %v8005 = vld [vmem:[#allocation5 + $0x210] sm:$0xff]
    %v8006 = vld [vmem:[#allocation5 + $0x218] sm:$0xff]
    %v8007 = vld [vmem:[#allocation5 + $0x220] sm:$0xff]
    %v8008 = vld [vmem:[#allocation5 + $0x228] sm:$0xff]
    %v8009 = vld [vmem:[#allocation5 + $0x230] sm:$0xff]
    %v8010 = vld [vmem:[#allocation5 + $0x238] sm:$0xff]
    %v8011 = vld [vmem:[#allocation5 + $0x240] sm:$0xff]
    %v8012 = vld [vmem:[#allocation5 + $0x248] sm:$0xff]
    %v8013 = vld [vmem:[#allocation5 + $0x250] sm:$0xff]
    %v8014 = vld [vmem:[#allocation5 + $0x258] sm:$0xff]
    %v8015 = vld [vmem:[#allocation5 + $0x260] sm:$0xff]
    %v8016 = vld [vmem:[#allocation5 + $0x268] sm:$0xff]
    %v8017 = vld [vmem:[#allocation5 + $0x270] sm:$0xff]
    %v8018 = vld [vmem:[#allocation5 + $0x278] sm:$0xff]
    %v8019 = vld [vmem:[#allocation5 + $0x280] sm:$0xff]
    %v8020 = vld [vmem:[#allocation5 + $0x288] sm:$0xff]
    %v8021 = vld [vmem:[#allocation5 + $0x290] sm:$0xff]
    %v8022 = vld [vmem:[#allocation5 + $0x298] sm:$0xff]
    %v8023 = vld [vmem:[#allocation5 + $0x2a0] sm:$0xff]
    %v8024 = vld [vmem:[#allocation5 + $0x2a8] sm:$0xff]
    %v8025 = vld [vmem:[#allocation5 + $0x2b0] sm:$0xff]
    %v8026 = vld [vmem:[#allocation5 + $0x2b8] sm:$0xff]
    %v8027 = vld [vmem:[#allocation5 + $0x2c0] sm:$0xff]
    %v8028 = vld [vmem:[#allocation5 + $0x2c8] sm:$0xff]
    %v8029 = vld [vmem:[#allocation5 + $0x2d0] sm:$0xff]
    %v8030 = vld [vmem:[#allocation5 + $0x2d8] sm:$0xff]
    %v8031 = vld [vmem:[#allocation5 + $0x2e0] sm:$0xff]
    %v8032 = vld [vmem:[#allocation5 + $0x2e8] sm:$0xff]
    %v8033 = vld [vmem:[#allocation5 + $0x2f0] sm:$0xff]
    %v8034 = vld [vmem:[#allocation5 + $0x2f8] sm:$0xff]
    %v8035 = vld [vmem:[#allocation5 + $0x300] sm:$0xff]
    %v8036 = vld [vmem:[#allocation5 + $0x308] sm:$0xff]
    %v8037 = vld [vmem:[#allocation5 + $0x310] sm:$0xff]
    %v8038 = vld [vmem:[#allocation5 + $0x318] sm:$0xff]
    %v8039 = vld [vmem:[#allocation5 + $0x320] sm:$0xff]
    %v8040 = vld [vmem:[#allocation5 + $0x328] sm:$0xff]
    %v8041 = vld [vmem:[#allocation5 + $0x330] sm:$0xff]
    %v8042 = vld [vmem:[#allocation5 + $0x338] sm:$0xff]
    %v8043 = vld [vmem:[#allocation5 + $0x340] sm:$0xff]
    %v8044 = vld [vmem:[#allocation5 + $0x348] sm:$0xff]
    %v8045 = vld [vmem:[#allocation5 + $0x350] sm:$0xff]
    %v8046 = vld [vmem:[#allocation5 + $0x358] sm:$0xff]
    %v8047 = vld [vmem:[#allocation5 + $0x360] sm:$0xff]
    %v8048 = vld [vmem:[#allocation5 + $0x368] sm:$0xff]
    %v8049 = vld [vmem:[#allocation5 + $0x370] sm:$0xff]
    %v8050 = vld [vmem:[#allocation5 + $0x378] sm:$0xff]
    %v8051 = vadd.f32 %v7827, %v7939
    %v8052 = vadd.f32 %v7828, %v7940
    %v8053 = vadd.f32 %v7829, %v7941
    %v8054 = vadd.f32 %v7830, %v7942
    %v8055 = vadd.f32 %v7831, %v7943
    %v8056 = vadd.f32 %v7832, %v7944
    %v8057 = vadd.f32 %v7833, %v7945
    %v8058 = vadd.f32 %v7834, %v7946
    %v8059 = vadd.f32 %v7835, %v7947
    %v8060 = vadd.f32 %v7836, %v7948
    %v8061 = vadd.f32 %v7837, %v7949
    %v8062 = vadd.f32 %v7838, %v7950
    %v8063 = vadd.f32 %v7839, %v7951
    %v8064 = vadd.f32 %v7840, %v7952
    %v8065 = vadd.f32 %v7841, %v7953
    %v8066 = vadd.f32 %v7842, %v7954
    %v8067 = vadd.f32 %v7843, %v7955
    %v8068 = vadd.f32 %v7844, %v7956
    %v8069 = vadd.f32 %v7845, %v7957
    %v8070 = vadd.f32 %v7846, %v7958
    %v8071 = vadd.f32 %v7847, %v7959
    %v8072 = vadd.f32 %v7848, %v7960
    %v8073 = vadd.f32 %v7849, %v7961
    %v8074 = vadd.f32 %v7850, %v7962
    %v8075 = vadd.f32 %v7851, %v7963
    %v8076 = vadd.f32 %v7852, %v7964
    %v8077 = vadd.f32 %v7853, %v7965
    %v8078 = vadd.f32 %v7854, %v7966
    %v8079 = vadd.f32 %v7855, %v7967
    %v8080 = vadd.f32 %v7856, %v7968
    %v8081 = vadd.f32 %v7857, %v7969
    %v8082 = vadd.f32 %v7858, %v7970
    %v8083 = vadd.f32 %v7859, %v7971
    %v8084 = vadd.f32 %v7860, %v7972
    %v8085 = vadd.f32 %v7861, %v7973
    %v8086 = vadd.f32 %v7862, %v7974
    %v8087 = vadd.f32 %v7863, %v7975
    %v8088 = vadd.f32 %v7864, %v7976
    %v8089 = vadd.f32 %v7865, %v7977
    %v8090 = vadd.f32 %v7866, %v7978
    %v8091 = vadd.f32 %v7867, %v7979
    %v8092 = vadd.f32 %v7868, %v7980
    %v8093 = vadd.f32 %v7869, %v7981
    %v8094 = vadd.f32 %v7870, %v7982
    %v8095 = vadd.f32 %v7871, %v7983
    %v8096 = vadd.f32 %v7872, %v7984
    %v8097 = vadd.f32 %v7873, %v7985
    %v8098 = vadd.f32 %v7874, %v7986
    %v8099 = vadd.f32 %v7875, %v7987
    %v8100 = vadd.f32 %v7876, %v7988
    %v8101 = vadd.f32 %v7877, %v7989
    %v8102 = vadd.f32 %v7878, %v7990
    %v8103 = vadd.f32 %v7879, %v7991
    %v8104 = vadd.f32 %v7880, %v7992
    %v8105 = vadd.f32 %v7881, %v7993
    %v8106 = vadd.f32 %v7882, %v7994
    %v8107 = vadd.f32 %v7883, %v7995
    %v8108 = vadd.f32 %v7884, %v7996
    %v8109 = vadd.f32 %v7885, %v7997
    %v8110 = vadd.f32 %v7886, %v7998
    %v8111 = vadd.f32 %v7887, %v7999
    %v8112 = vadd.f32 %v7888, %v8000
    %v8113 = vadd.f32 %v7889, %v8001
    %v8114 = vadd.f32 %v7890, %v8002
    %v8115 = vadd.f32 %v7891, %v8003
    %v8116 = vadd.f32 %v7892, %v8004
    %v8117 = vadd.f32 %v7893, %v8005
    %v8118 = vadd.f32 %v7894, %v8006
    %v8119 = vadd.f32 %v7895, %v8007
    %v8120 = vadd.f32 %v7896, %v8008
    %v8121 = vadd.f32 %v7897, %v8009
    %v8122 = vadd.f32 %v7898, %v8010
    %v8123 = vadd.f32 %v7899, %v8011
    %v8124 = vadd.f32 %v7900, %v8012
    %v8125 = vadd.f32 %v7901, %v8013
    %v8126 = vadd.f32 %v7902, %v8014
    %v8127 = vadd.f32 %v7903, %v8015
    %v8128 = vadd.f32 %v7904, %v8016
    %v8129 = vadd.f32 %v7905, %v8017
    %v8130 = vadd.f32 %v7906, %v8018
    %v8131 = vadd.f32 %v7907, %v8019
    %v8132 = vadd.f32 %v7908, %v8020
    %v8133 = vadd.f32 %v7909, %v8021
    %v8134 = vadd.f32 %v7910, %v8022
    %v8135 = vadd.f32 %v7911, %v8023
    %v8136 = vadd.f32 %v7912, %v8024
    %v8137 = vadd.f32 %v7913, %v8025
    %v8138 = vadd.f32 %v7914, %v8026
    %v8139 = vadd.f32 %v7915, %v8027
    %v8140 = vadd.f32 %v7916, %v8028
    %v8141 = vadd.f32 %v7917, %v8029
    %v8142 = vadd.f32 %v7918, %v8030
    %v8143 = vadd.f32 %v7919, %v8031
    %v8144 = vadd.f32 %v7920, %v8032
    %v8145 = vadd.f32 %v7921, %v8033
    %v8146 = vadd.f32 %v7922, %v8034
    %v8147 = vadd.f32 %v7923, %v8035
    %v8148 = vadd.f32 %v7924, %v8036
    %v8149 = vadd.f32 %v7925, %v8037
    %v8150 = vadd.f32 %v7926, %v8038
    %v8151 = vadd.f32 %v7927, %v8039
    %v8152 = vadd.f32 %v7928, %v8040
    %v8153 = vadd.f32 %v7929, %v8041
    %v8154 = vadd.f32 %v7930, %v8042
    %v8155 = vadd.f32 %v7931, %v8043
    %v8156 = vadd.f32 %v7932, %v8044
    %v8157 = vadd.f32 %v7933, %v8045
    %v8158 = vadd.f32 %v7934, %v8046
    %v8159 = vadd.f32 %v7935, %v8047
    %v8160 = vadd.f32 %v7936, %v8048
    %v8161 = vadd.f32 %v7937, %v8049
    %v8162 = vadd.f32 %v7938, %v8050
    %v8163 = vmax.f32 %v8051, 0.0
    %v8164 = vmax.f32 %v8052, 0.0
    %v8165 = vmax.f32 %v8053, 0.0
    %v8166 = vmax.f32 %v8054, 0.0
    %v8167 = vmax.f32 %v8055, 0.0
    %v8168 = vmax.f32 %v8056, 0.0
    %v8169 = vmax.f32 %v8057, 0.0
    %v8170 = vmax.f32 %v8058, 0.0
    %v8171 = vmax.f32 %v8059, 0.0
    %v8172 = vmax.f32 %v8060, 0.0
    %v8173 = vmax.f32 %v8061, 0.0
    %v8174 = vmax.f32 %v8062, 0.0
    %v8175 = vmax.f32 %v8063, 0.0
    %v8176 = vmax.f32 %v8064, 0.0
    %v8177 = vmax.f32 %v8065, 0.0
    %v8178 = vmax.f32 %v8066, 0.0
    %v8179 = vmax.f32 %v8067, 0.0
    %v8180 = vmax.f32 %v8068, 0.0
    %v8181 = vmax.f32 %v8069, 0.0
    %v8182 = vmax.f32 %v8070, 0.0
    %v8183 = vmax.f32 %v8071, 0.0
    %v8184 = vmax.f32 %v8072, 0.0
    %v8185 = vmax.f32 %v8073, 0.0
    %v8186 = vmax.f32 %v8074, 0.0
    %v8187 = vmax.f32 %v8075, 0.0
    %v8188 = vmax.f32 %v8076, 0.0
    %v8189 = vmax.f32 %v8077, 0.0
    %v8190 = vmax.f32 %v8078, 0.0
    %v8191 = vmax.f32 %v8079, 0.0
    %v8192 = vmax.f32 %v8080, 0.0
    %v8193 = vmax.f32 %v8081, 0.0
    %v8194 = vmax.f32 %v8082, 0.0
    %v8195 = vmax.f32 %v8083, 0.0
    %v8196 = vmax.f32 %v8084, 0.0
    %v8197 = vmax.f32 %v8085, 0.0
    %v8198 = vmax.f32 %v8086, 0.0
    %v8199 = vmax.f32 %v8087, 0.0
    %v8200 = vmax.f32 %v8088, 0.0
    %v8201 = vmax.f32 %v8089, 0.0
    %v8202 = vmax.f32 %v8090, 0.0
    %v8203 = vmax.f32 %v8091, 0.0
    %v8204 = vmax.f32 %v8092, 0.0
    %v8205 = vmax.f32 %v8093, 0.0
    %v8206 = vmax.f32 %v8094, 0.0
    %v8207 = vmax.f32 %v8095, 0.0
    %v8208 = vmax.f32 %v8096, 0.0
    %v8209 = vmax.f32 %v8097, 0.0
    %v8210 = vmax.f32 %v8098, 0.0
    %v8211 = vmax.f32 %v8099, 0.0
    %v8212 = vmax.f32 %v8100, 0.0
    %v8213 = vmax.f32 %v8101, 0.0
    %v8214 = vmax.f32 %v8102, 0.0
    %v8215 = vmax.f32 %v8103, 0.0
    %v8216 = vmax.f32 %v8104, 0.0
    %v8217 = vmax.f32 %v8105, 0.0
    %v8218 = vmax.f32 %v8106, 0.0
    %v8219 = vmax.f32 %v8107, 0.0
    %v8220 = vmax.f32 %v8108, 0.0
    %v8221 = vmax.f32 %v8109, 0.0
    %v8222 = vmax.f32 %v8110, 0.0
    %v8223 = vmax.f32 %v8111, 0.0
    %v8224 = vmax.f32 %v8112, 0.0
    %v8225 = vmax.f32 %v8113, 0.0
    %v8226 = vmax.f32 %v8114, 0.0
    %v8227 = vmax.f32 %v8115, 0.0
    %v8228 = vmax.f32 %v8116, 0.0
    %v8229 = vmax.f32 %v8117, 0.0
    %v8230 = vmax.f32 %v8118, 0.0
    %v8231 = vmax.f32 %v8119, 0.0
    %v8232 = vmax.f32 %v8120, 0.0
    %v8233 = vmax.f32 %v8121, 0.0
    %v8234 = vmax.f32 %v8122, 0.0
    %v8235 = vmax.f32 %v8123, 0.0
    %v8236 = vmax.f32 %v8124, 0.0
    %v8237 = vmax.f32 %v8125, 0.0
    %v8238 = vmax.f32 %v8126, 0.0
    %v8239 = vmax.f32 %v8127, 0.0
    %v8240 = vmax.f32 %v8128, 0.0
    %v8241 = vmax.f32 %v8129, 0.0
    %v8242 = vmax.f32 %v8130, 0.0
    %v8243 = vmax.f32 %v8131, 0.0
    %v8244 = vmax.f32 %v8132, 0.0
    %v8245 = vmax.f32 %v8133, 0.0
    %v8246 = vmax.f32 %v8134, 0.0
    %v8247 = vmax.f32 %v8135, 0.0
    %v8248 = vmax.f32 %v8136, 0.0
    %v8249 = vmax.f32 %v8137, 0.0
    %v8250 = vmax.f32 %v8138, 0.0
    %v8251 = vmax.f32 %v8139, 0.0
    %v8252 = vmax.f32 %v8140, 0.0
    %v8253 = vmax.f32 %v8141, 0.0
    %v8254 = vmax.f32 %v8142, 0.0
    %v8255 = vmax.f32 %v8143, 0.0
    %v8256 = vmax.f32 %v8144, 0.0
    %v8257 = vmax.f32 %v8145, 0.0
    %v8258 = vmax.f32 %v8146, 0.0
    %v8259 = vmax.f32 %v8147, 0.0
    %v8260 = vmax.f32 %v8148, 0.0
    %v8261 = vmax.f32 %v8149, 0.0
    %v8262 = vmax.f32 %v8150, 0.0
    %v8263 = vmax.f32 %v8151, 0.0
    %v8264 = vmax.f32 %v8152, 0.0
    %v8265 = vmax.f32 %v8153, 0.0
    %v8266 = vmax.f32 %v8154, 0.0
    %v8267 = vmax.f32 %v8155, 0.0
    %v8268 = vmax.f32 %v8156, 0.0
    %v8269 = vmax.f32 %v8157, 0.0
    %v8270 = vmax.f32 %v8158, 0.0
    %v8271 = vmax.f32 %v8159, 0.0
    %v8272 = vmax.f32 %v8160, 0.0
    %v8273 = vmax.f32 %v8161, 0.0
    %v8274 = vmax.f32 %v8162, 0.0
    %8275 = vst [vmem:[#allocation19] sm:$0xff] %v8163
    %8276 = vst [vmem:[#allocation19 + $0x8] sm:$0xff] %v8164
    %8277 = vst [vmem:[#allocation19 + $0x10] sm:$0xff] %v8165
    %8278 = vst [vmem:[#allocation19 + $0x18] sm:$0xff] %v8166
    %8279 = vst [vmem:[#allocation19 + $0x20] sm:$0xff] %v8167
    %8280 = vst [vmem:[#allocation19 + $0x28] sm:$0xff] %v8168
    %8281 = vst [vmem:[#allocation19 + $0x30] sm:$0xff] %v8169
    %8282 = vst [vmem:[#allocation19 + $0x38] sm:$0xff] %v8170
    %8283 = vst [vmem:[#allocation19 + $0x40] sm:$0xff] %v8171
    %8284 = vst [vmem:[#allocation19 + $0x48] sm:$0xff] %v8172
    %8285 = vst [vmem:[#allocation19 + $0x50] sm:$0xff] %v8173
    %8286 = vst [vmem:[#allocation19 + $0x58] sm:$0xff] %v8174
    %8287 = vst [vmem:[#allocation19 + $0x60] sm:$0xff] %v8175
    %8288 = vst [vmem:[#allocation19 + $0x68] sm:$0xff] %v8176
    %8289 = vst [vmem:[#allocation19 + $0x70] sm:$0xff] %v8177
    %8290 = vst [vmem:[#allocation19 + $0x78] sm:$0xff] %v8178
    %8291 = vst [vmem:[#allocation19 + $0x80] sm:$0xff] %v8179
    %8292 = vst [vmem:[#allocation19 + $0x88] sm:$0xff] %v8180
    %8293 = vst [vmem:[#allocation19 + $0x90] sm:$0xff] %v8181
    %8294 = vst [vmem:[#allocation19 + $0x98] sm:$0xff] %v8182
    %8295 = vst [vmem:[#allocation19 + $0xa0] sm:$0xff] %v8183
    %8296 = vst [vmem:[#allocation19 + $0xa8] sm:$0xff] %v8184
    %8297 = vst [vmem:[#allocation19 + $0xb0] sm:$0xff] %v8185
    %8298 = vst [vmem:[#allocation19 + $0xb8] sm:$0xff] %v8186
    %8299 = vst [vmem:[#allocation19 + $0xc0] sm:$0xff] %v8187
    %8300 = vst [vmem:[#allocation19 + $0xc8] sm:$0xff] %v8188
    %8301 = vst [vmem:[#allocation19 + $0xd0] sm:$0xff] %v8189
    %8302 = vst [vmem:[#allocation19 + $0xd8] sm:$0xff] %v8190
    %8303 = vst [vmem:[#allocation19 + $0xe0] sm:$0xff] %v8191
    %8304 = vst [vmem:[#allocation19 + $0xe8] sm:$0xff] %v8192
    %8305 = vst [vmem:[#allocation19 + $0xf0] sm:$0xff] %v8193
    %8306 = vst [vmem:[#allocation19 + $0xf8] sm:$0xff] %v8194
    %8307 = vst [vmem:[#allocation19 + $0x100] sm:$0xff] %v8195
    %8308 = vst [vmem:[#allocation19 + $0x108] sm:$0xff] %v8196
    %8309 = vst [vmem:[#allocation19 + $0x110] sm:$0xff] %v8197
    %8310 = vst [vmem:[#allocation19 + $0x118] sm:$0xff] %v8198
    %8311 = vst [vmem:[#allocation19 + $0x120] sm:$0xff] %v8199
    %8312 = vst [vmem:[#allocation19 + $0x128] sm:$0xff] %v8200
    %8313 = vst [vmem:[#allocation19 + $0x130] sm:$0xff] %v8201
    %8314 = vst [vmem:[#allocation19 + $0x138] sm:$0xff] %v8202
    %8315 = vst [vmem:[#allocation19 + $0x140] sm:$0xff] %v8203
    %8316 = vst [vmem:[#allocation19 + $0x148] sm:$0xff] %v8204
    %8317 = vst [vmem:[#allocation19 + $0x150] sm:$0xff] %v8205
    %8318 = vst [vmem:[#allocation19 + $0x158] sm:$0xff] %v8206
    %8319 = vst [vmem:[#allocation19 + $0x160] sm:$0xff] %v8207
    %8320 = vst [vmem:[#allocation19 + $0x168] sm:$0xff] %v8208
    %8321 = vst [vmem:[#allocation19 + $0x170] sm:$0xff] %v8209
    %8322 = vst [vmem:[#allocation19 + $0x178] sm:$0xff] %v8210
    %8323 = vst [vmem:[#allocation19 + $0x180] sm:$0xff] %v8211
    %8324 = vst [vmem:[#allocation19 + $0x188] sm:$0xff] %v8212
    %8325 = vst [vmem:[#allocation19 + $0x190] sm:$0xff] %v8213
    %8326 = vst [vmem:[#allocation19 + $0x198] sm:$0xff] %v8214
    %8327 = vst [vmem:[#allocation19 + $0x1a0] sm:$0xff] %v8215
    %8328 = vst [vmem:[#allocation19 + $0x1a8] sm:$0xff] %v8216
    %8329 = vst [vmem:[#allocation19 + $0x1b0] sm:$0xff] %v8217
    %8330 = vst [vmem:[#allocation19 + $0x1b8] sm:$0xff] %v8218
    %8331 = vst [vmem:[#allocation19 + $0x1c0] sm:$0xff] %v8219
    %8332 = vst [vmem:[#allocation19 + $0x1c8] sm:$0xff] %v8220
    %8333 = vst [vmem:[#allocation19 + $0x1d0] sm:$0xff] %v8221
    %8334 = vst [vmem:[#allocation19 + $0x1d8] sm:$0xff] %v8222
    %8335 = vst [vmem:[#allocation19 + $0x1e0] sm:$0xff] %v8223
    %8336 = vst [vmem:[#allocation19 + $0x1e8] sm:$0xff] %v8224
    %8337 = vst [vmem:[#allocation19 + $0x1f0] sm:$0xff] %v8225
    %8338 = vst [vmem:[#allocation19 + $0x1f8] sm:$0xff] %v8226
    %8339 = vst [vmem:[#allocation19 + $0x200] sm:$0xff] %v8227
    %8340 = vst [vmem:[#allocation19 + $0x208] sm:$0xff] %v8228
    %8341 = vst [vmem:[#allocation19 + $0x210] sm:$0xff] %v8229
    %8342 = vst [vmem:[#allocation19 + $0x218] sm:$0xff] %v8230
    %8343 = vst [vmem:[#allocation19 + $0x220] sm:$0xff] %v8231
    %8344 = vst [vmem:[#allocation19 + $0x228] sm:$0xff] %v8232
    %8345 = vst [vmem:[#allocation19 + $0x230] sm:$0xff] %v8233
    %8346 = vst [vmem:[#allocation19 + $0x238] sm:$0xff] %v8234
    %8347 = vst [vmem:[#allocation19 + $0x240] sm:$0xff] %v8235
    %8348 = vst [vmem:[#allocation19 + $0x248] sm:$0xff] %v8236
    %8349 = vst [vmem:[#allocation19 + $0x250] sm:$0xff] %v8237
    %8350 = vst [vmem:[#allocation19 + $0x258] sm:$0xff] %v8238
    %8351 = vst [vmem:[#allocation19 + $0x260] sm:$0xff] %v8239
    %8352 = vst [vmem:[#allocation19 + $0x268] sm:$0xff] %v8240
    %8353 = vst [vmem:[#allocation19 + $0x270] sm:$0xff] %v8241
    %8354 = vst [vmem:[#allocation19 + $0x278] sm:$0xff] %v8242
    %8355 = vst [vmem:[#allocation19 + $0x280] sm:$0xff] %v8243
    %8356 = vst [vmem:[#allocation19 + $0x288] sm:$0xff] %v8244
    %8357 = vst [vmem:[#allocation19 + $0x290] sm:$0xff] %v8245
    %8358 = vst [vmem:[#allocation19 + $0x298] sm:$0xff] %v8246
    %8359 = vst [vmem:[#allocation19 + $0x2a0] sm:$0xff] %v8247
    %8360 = vst [vmem:[#allocation19 + $0x2a8] sm:$0xff] %v8248
    %8361 = vst [vmem:[#allocation19 + $0x2b0] sm:$0xff] %v8249
    %8362 = vst [vmem:[#allocation19 + $0x2b8] sm:$0xff] %v8250
    %8363 = vst [vmem:[#allocation19 + $0x2c0] sm:$0xff] %v8251
    %8364 = vst [vmem:[#allocation19 + $0x2c8] sm:$0xff] %v8252
    %8365 = vst [vmem:[#allocation19 + $0x2d0] sm:$0xff] %v8253
    %8366 = vst [vmem:[#allocation19 + $0x2d8] sm:$0xff] %v8254
    %8367 = vst [vmem:[#allocation19 + $0x2e0] sm:$0xff] %v8255
    %8368 = vst [vmem:[#allocation19 + $0x2e8] sm:$0xff] %v8256
    %8369 = vst [vmem:[#allocation19 + $0x2f0] sm:$0xff] %v8257
    %8370 = vst [vmem:[#allocation19 + $0x2f8] sm:$0xff] %v8258
    %8371 = vst [vmem:[#allocation19 + $0x300] sm:$0xff] %v8259
    %8372 = vst [vmem:[#allocation19 + $0x308] sm:$0xff] %v8260
    %8373 = vst [vmem:[#allocation19 + $0x310] sm:$0xff] %v8261
    %8374 = vst [vmem:[#allocation19 + $0x318] sm:$0xff] %v8262
    %8375 = vst [vmem:[#allocation19 + $0x320] sm:$0xff] %v8263
    %8376 = vst [vmem:[#allocation19 + $0x328] sm:$0xff] %v8264
    %8377 = vst [vmem:[#allocation19 + $0x330] sm:$0xff] %v8265
    %8378 = vst [vmem:[#allocation19 + $0x338] sm:$0xff] %v8266
    %8379 = vst [vmem:[#allocation19 + $0x340] sm:$0xff] %v8267
    %8380 = vst [vmem:[#allocation19 + $0x348] sm:$0xff] %v8268
    %8381 = vst [vmem:[#allocation19 + $0x350] sm:$0xff] %v8269
    %8382 = vst [vmem:[#allocation19 + $0x358] sm:$0xff] %v8270
    %8383 = vst [vmem:[#allocation19 + $0x360] sm:$0xff] %v8271
    %8384 = vst [vmem:[#allocation19 + $0x368] sm:$0xff] %v8272
    %8385 = vst [vmem:[#allocation19 + $0x370] sm:$0xff] %v8273
    %8386 = vst [vmem:[#allocation19 + $0x378] sm:$0xff] %v8274
    // Predicated region
    $region70: #{tpu_custom_call.1} parent=1 // pred_check
      _
    $region71: #{tpu_custom_call.1} parent=1 // pred_check_branch
      %8388 = sbr.rel (0) target = $region73
    $region72: #{tpu_custom_call.1} parent=1 // pred_region
      %8390 = vsyncadd [#allocation7], 0
      %s8391 = sshll.u32 [#allocation19], 4
      %s8392 = int_to_ptr.vmem [resolvable:$true] %s8391
      %s8393 = sshll.u32 %s9, 4
      %s8394 = int_to_ptr.hbm [resolvable:$true] %s8393
      %8399 = dma.vmem_to_hbm [thread:$0]  %s8392, 14336, %s8394, [#allocation7], 896, 896, 56
    $region73: #{tpu_custom_call.1} parent=1 // pred_fallthru
      _
    // Predicated region
    $region74: #{tpu_custom_call.1} parent=1 // pred_check
      _
    $region75: #{tpu_custom_call.1} parent=1 // pred_check_branch
      %8401 = sbr.rel (0) target = $region77
    $region76: #{tpu_custom_call.1} parent=1 // pred_region
      %8403 = dma.done [#allocation7], 14336
    $region77: #{tpu_custom_call.1} parent=1 // pred_fallthru
      _
    %8404 = vsyncpa [#allocation6], 1
    %8405 = vsyncpa [#allocation9], 1
    %8406 = vsyncpa [#allocation12], 1
    %8407 = vsyncpa [#allocation15], 1
    %8408 = vsyncpa [#allocation18], 1
    %8409 = vsyncpa [#allocation7], 1

</llo_original>
